<compile_context>
chip_gen: v6e
topology: v6e:2x2x1
jax: 0.10.0
libtpu: 0.0.40
codegen_flags: <defaults>
</compile_context>

<pallas_src>
import functools

import jax
import jax.numpy as jnp
from jax.experimental import pallas as pl
from jax.experimental.pallas import tpu as pltpu

# ---------------------------------------------------------------------------
# Model dimensions (logical = PyTorch, *_P = lane-padded to multiples of 128)
# ---------------------------------------------------------------------------

BERT_HIDDEN = 768
MAX_SENT_LEN = 32
BERT_FLAT = BERT_HIDDEN * MAX_SENT_LEN          # 24576
RESNET_FEAT = 512                               # resnet18.fc.in_features
RESNET_OUT = 1000                               # replaced resnet.fc out
IMP_FEAT = 1000                                 # important_features_image
BERT_MID = BERT_FLAT // 100                     # 245
BERT_FIN = BERT_FLAT // 200                     # 122
NO_ACTIONS = 6
DQN_SZ = 100


def _rup(x, m=128):
    return ((x + m - 1) // m) * m


RESNET_OUT_P = _rup(RESNET_OUT)                 # 1024
IMP_FEAT_P = _rup(IMP_FEAT)                     # 1024
BERT_MID_P = _rup(BERT_MID)                     # 256
BERT_FIN_P = _rup(BERT_FIN)                     # 128
NO_ACTIONS_P = _rup(NO_ACTIONS)                 # 128
DQN_SZ_P = _rup(DQN_SZ)                         # 128
DQN_OUT_P = 128                                 # final scalar, lane-padded

TK = 8192                                       # K tile for bertfc[0]  (nk=3)
HEAD_DTYPE = jnp.bfloat16                       # head weights stay bf16


# ---------------------------------------------------------------------------
# Fused kernel: K-tiled bertfc[0] matmul + full head in the last-step epilogue
# ---------------------------------------------------------------------------

def _fused_forward_kernel(
        x_ref,                                   # [B, TK] f32 flat BERT hidden
        w1_ref, s1_ref, b1_ref,                  # bertfc[0]: int8 W, scale, b
        img_ref, act_ref,                        # resnet feats, padded action
        wrf_ref, brf_ref,                        # resnet.fc      512  -> 1024
        wfc1_ref, bfc1_ref,                      # fcResNet1     1024 -> 1024 (+ReLU)
        wb2_ref, bb2_ref,                        # bertfc[1]      256 -> 128
        wd1a_ref, wd1b_ref, wd1c_ref, bd1_ref,   # dqn[0] split  -> 128 (+ReLU)
        wd2_ref, bd2_ref,                        # dqn[1]         128 -> 128 (+ReLU)
        o_ref,                                   # [B, 128] out (q in lane 0)
        acc_ref):                                # [B, 256] f32 accumulator
    k = pl.program_id(0)
    bf16 = jnp.bfloat16

    @pl.when(k == 0)
    def _():
        acc_ref[...] = jnp.zeros_like(acc_ref)

    # HBM-bound phase: stream the 2 MiB int8 weight tile, dequantize on the
    # VPU (per-channel scale deferred to the epilogue), accumulate f32 on MXU.
    acc_ref[...] += jnp.dot(x_ref[...].astype(bf16),
                            w1_ref[...].astype(bf16),
                            preferred_element_type=jnp.float32)

    @pl.when(k == pl.num_programs(0) - 1)
    def _():
        def mm(a, w_ref):
            return jnp.dot(a.astype(bf16), w_ref[...],
                           preferred_element_type=jnp.float32)

        # bertfc[0] epilogue: per-output-channel dequant scale, bias, ReLU
        h = jnp.maximum(acc_ref[...] * s1_ref[...] + b1_ref[...], 0.0)

        # image branch: resnet.fc (no activation) then fcResNet1 (+ReLU)
        op = mm(img_ref[...], wrf_ref) + brf_ref[...]                 # [B,1024]
        opR1 = jnp.maximum(mm(op, wfc1_ref) + bfc1_ref[...], 0.0)     # [B,1024]

        # text branch: bertfc[1] (no activation)
        opR2 = mm(h, wb2_ref) + bb2_ref[...]                          # [B,128]

        # dqn head: cat([action, opR2, opR1]) @ Wd1 == sum of 3 row-block dots
        q = (mm(act_ref[...], wd1a_ref)
             + mm(opR2, wd1b_ref)
             + mm(opR1, wd1c_ref)
             + bd1_ref[...])
        q = jnp.maximum(q, 0.0)                                       # [B,128]
        q = jnp.maximum(mm(q, wd2_ref) + bd2_ref[...], 0.0)           # [B,128]
        o_ref[...] = q


def fused_forward(x_flat, img, act_p, p, *, tk=TK):
    """Full forward after the frozen backbones, in one pallas_call.

    x_flat: [B, 24576] f32, img: [B, 512] f32, act_p: [B, 128] f32.
    """
    B, K = x_flat.shape
    if K % tk != 0:
        tk = K
    nk = K // tk

    const = lambda k: (0, 0)
    in_specs = [
        pl.BlockSpec((B, tk), lambda k: (0, k)),            # x (f32, cast in-kernel)
        pl.BlockSpec((tk, BERT_MID_P), lambda k: (k, 0)),   # bertfc[0] int8 weight
        pl.BlockSpec((1, BERT_MID_P), const),               # bertfc[0] scale
        pl.BlockSpec((1, BERT_MID_P), const),               # bertfc[0] bias
        pl.BlockSpec((B, RESNET_FEAT), const),              # image features
        pl.BlockSpec((B, NO_ACTIONS_P), const),             # padded action
        pl.BlockSpec((RESNET_FEAT, RESNET_OUT_P), const),   # resnet.fc W
        pl.BlockSpec((1, RESNET_OUT_P), const),             # resnet.fc b
        pl.BlockSpec((RESNET_OUT_P, IMP_FEAT_P), const),    # fcResNet1 W
        pl.BlockSpec((1, IMP_FEAT_P), const),               # fcResNet1 b
        pl.BlockSpec((BERT_MID_P, BERT_FIN_P), const),      # bertfc[1] W
        pl.BlockSpec((1, BERT_FIN_P), const),               # bertfc[1] b
        pl.BlockSpec((NO_ACTIONS_P, DQN_SZ_P), const),      # dqn[0] W (action rows)
        pl.BlockSpec((BERT_FIN_P, DQN_SZ_P), const),        # dqn[0] W (opR2 rows)
        pl.BlockSpec((IMP_FEAT_P, DQN_SZ_P), const),        # dqn[0] W (opR1 rows)
        pl.BlockSpec((1, DQN_SZ_P), const),                 # dqn[0] b
        pl.BlockSpec((DQN_SZ_P, DQN_OUT_P), const),         # dqn[1] W
        pl.BlockSpec((1, DQN_OUT_P), const),                # dqn[1] b
    ]

    return pl.pallas_call(
        _fused_forward_kernel,
        out_shape=jax.ShapeDtypeStruct((B, DQN_OUT_P), jnp.float32),
        grid_spec=pltpu.PrefetchScalarGridSpec(
            num_scalar_prefetch=0,
            grid=(nk,),
            in_specs=in_specs,
            out_specs=pl.BlockSpec((B, DQN_OUT_P), lambda k: (0, 0)),
            scratch_shapes=[pltpu.VMEM((B, BERT_MID_P), jnp.float32)],
        ),
        compiler_params=pltpu.CompilerParams(
            dimension_semantics=("arbitrary",),
            # ~4 MB double-buffered int8 tiles + ~7 MB resident head weights
            # + small activation buffers; conservative for v7x's 64 MiB VMEM.
            vmem_limit_bytes=28 << 20,
        ),
    )(x_flat,
      p["bertfc1_w_q"], p["bertfc1_scale"], p["bertfc1_b"],
      img, act_p,
      p["resnet_fc_w"], p["resnet_fc_b"],
      p["fc1_w"], p["fc1_b"],
      p["bertfc2_w"], p["bertfc2_b"],
      p["dqn1_wa"], p["dqn1_wb"], p["dqn1_wc"], p["dqn1_b"],
      p["dqn2_w"], p["dqn2_b"])


# ---------------------------------------------------------------------------
# Parameter init (nn.Linear default U[-1/sqrt(fan_in), 1/sqrt(fan_in)]),
# padded / quantized ONCE here, never per forward call.
# ---------------------------------------------------------------------------

def _dense_init(key, fan_in, fan_out):
    kw, kb = jax.random.split(key)
    scale = 1.0 / float(fan_in) ** 0.5
    w = jax.random.uniform(kw, (fan_in, fan_out), jnp.float32, -scale, scale)
    b = jax.random.uniform(kb, (fan_out,), jnp.float32, -scale, scale)
    return w, b


def _pad(w, k_pad, n_pad):
    k, n = w.shape
    return jnp.pad(w, ((0, k_pad - k), (0, n_pad - n)))


def _pad_bias(b, n_pad):
    return jnp.pad(b, (0, n_pad - b.shape[0])).reshape(1, n_pad).astype(jnp.float32)


def _quant_int8(w):
    """Weight-only int8 quantization, per output channel (column)."""
    absmax = jnp.max(jnp.abs(w), axis=0, keepdims=True)
    scale = jnp.maximum(absmax, 1e-8) / 127.0
    w_q = jnp.clip(jnp.round(w / scale), -127.0, 127.0).astype(jnp.int8)
    return w_q, scale.astype(jnp.float32)


def init_params(key):
    keys = jax.random.split(key, 6)
    wrf, brf = _dense_init(keys[0], RESNET_FEAT, RESNET_OUT)
    wfc1, bfc1 = _dense_init(keys[1], RESNET_OUT, IMP_FEAT)
    wb1, bb1 = _dense_init(keys[2], BERT_FLAT, BERT_MID)
    wb2, bb2 = _dense_init(keys[3], BERT_MID, BERT_FIN)
    wd1, bd1 = _dense_init(keys[4], NO_ACTIONS + BERT_FIN + IMP_FEAT, DQN_SZ)
    wd2, bd2 = _dense_init(keys[5], DQN_SZ, 1)

    logical = dict(wrf=wrf, brf=brf, wfc1=wfc1, bfc1=bfc1, wb1=wb1, bb1=bb1,
                   wb2=wb2, bb2=bb2, wd1=wd1, bd1=bd1, wd2=wd2, bd2=bd2)

    p = {}
    # bertfc[0]: int8 weight-only quant (dominant 24576x256 HBM stream)
    w1q, s1 = _quant_int8(_pad(wb1, BERT_FLAT, BERT_MID_P))
    p["bertfc1_w_q"] = w1q
    p["bertfc1_scale"] = s1
    p["bertfc1_b"] = _pad_bias(bb1, BERT_MID_P)
    # head weights: bf16, zero-padded so every store / dot is lane-aligned
    p["resnet_fc_w"] = _pad(wrf, RESNET_FEAT, RESNET_OUT_P).astype(HEAD_DTYPE)
    p["resnet_fc_b"] = _pad_bias(brf, RESNET_OUT_P)
    p["fc1_w"] = _pad(wfc1, RESNET_OUT_P, IMP_FEAT_P).astype(HEAD_DTYPE)
    p["fc1_b"] = _pad_bias(bfc1, IMP_FEAT_P)
    p["bertfc2_w"] = _pad(wb2, BERT_MID_P, BERT_FIN_P).astype(HEAD_DTYPE)
    p["bertfc2_b"] = _pad_bias(bb2, BERT_FIN_P)
    # dqn[0]: split K rows to mirror torch.cat([action, opR2, opR1], dim=1)
    wa = wd1[:NO_ACTIONS]
    wb = wd1[NO_ACTIONS:NO_ACTIONS + BERT_FIN]
    wc = wd1[NO_ACTIONS + BERT_FIN:]
    p["dqn1_wa"] = _pad(wa, NO_ACTIONS_P, DQN_SZ_P).astype(HEAD_DTYPE)
    p["dqn1_wb"] = _pad(wb, BERT_FIN_P, DQN_SZ_P).astype(HEAD_DTYPE)
    p["dqn1_wc"] = _pad(wc, IMP_FEAT_P, DQN_SZ_P).astype(HEAD_DTYPE)
    p["dqn1_b"] = _pad_bias(bd1, DQN_SZ_P)
    p["dqn2_w"] = _pad(wd2, DQN_SZ_P, DQN_OUT_P).astype(HEAD_DTYPE)
    p["dqn2_b"] = _pad_bias(bd2, DQN_OUT_P)
    return p, logical


# ---------------------------------------------------------------------------
# Forward pass (mirrors NNModelNLP.forward after the frozen backbones)
# ---------------------------------------------------------------------------

def nn_model_nlp_forward(params, image_feat, text_hidden, action):
    B = image_feat.shape[0]
    # Flatten(BERT last hidden state): contiguous reshape (bitcast), no pad /
    # cast on the wrapper side -- the kernel reads f32 and casts in-kernel.
    x_flat = text_hidden.reshape(B, BERT_FLAT)
    # action is lane-padded 6 -> 128 (tiny) so the dqn[0] row-block dots use
    # aligned (128,128) weight tiles; image_feat (512) is already aligned.
    act_p = jnp.pad(action, ((0, 0), (0, NO_ACTIONS_P - action.shape[1])))
    q = fused_forward(x_flat, image_feat, act_p, params)   # [B, 128]
    return q[:, :1]


# ---------------------------------------------------------------------------
# Pure-JAX f32 reference (for tolerance checking the fused/quantized kernel)
# ---------------------------------------------------------------------------

def reference_forward(lp, image_feat, text_hidden, action):
    B = image_feat.shape[0]
    flat = text_hidden.reshape(B, BERT_FLAT)
    h = jax.nn.relu(flat @ lp["wb1"] + lp["bb1"])
    opR2 = h @ lp["wb2"] + lp["bb2"]
    op = image_feat @ lp["wrf"] + lp["brf"]
    opR1 = jax.nn.relu(op @ lp["wfc1"] + lp["bfc1"])
    x = jnp.concatenate([action, opR2, opR1], axis=1)
    q = jax.nn.relu(x @ lp["wd1"] + lp["bd1"])
    q = jax.nn.relu(q @ lp["wd2"] + lp["bd2"])
    return q


# ---------------------------------------------------------------------------

if __name__ == "__main__":
    B = 2
    key = jax.random.PRNGKey(0)
    kf, kt, ka, kp = jax.random.split(key, 4)

    # resnet18 avgpool features, BERT last hidden state, action vector
    image_feat = jax.random.normal(kf, (B, RESNET_FEAT), jnp.float32)
    text_hidden = jax.random.normal(kt, (B, MAX_SENT_LEN, BERT_HIDDEN),
                                    jnp.float32)
    action = jax.random.normal(ka, (B, NO_ACTIONS), jnp.float32)

    params, logical = init_params(kp)

    fwd = jax.jit(functools.partial(nn_model_nlp_forward, params))
    q = fwd(image_feat, text_hidden, action)
    jax.block_until_ready(q)

    assert q.shape == (B, 1), q.shape
    assert bool(jnp.all(q >= 0.0))          # dqn Sequential ends with ReLU

    # Tolerance check vs pure-JAX f32 reference (int8 bertfc[0] weights + bf16
    # head weights/activation casts -> loose absolute tolerance).
    q_ref = reference_forward(logical, image_feat, text_hidden, action)
    err = float(jnp.max(jnp.abs(q - q_ref)))
    tol = 5e-2 * max(1.0, float(jnp.max(jnp.abs(q_ref))))
    assert err < tol, f"max abs error {err} exceeds tolerance {tol}"

    print("KERNEL_OK")
</pallas_src>

<mosaic_0001>
module attributes {stable_mosaic.version = 11 : i64} {
  func.func @_fused_forward_kernel(%arg0: i32, %arg1: memref<2x8192xf32, #tpu.memory_space<vmem>>, %arg2: memref<8192x256xi8, #tpu.memory_space<vmem>>, %arg3: memref<1x256xf32, #tpu.memory_space<vmem>>, %arg4: memref<1x256xf32, #tpu.memory_space<vmem>>, %arg5: memref<2x512xf32, #tpu.memory_space<vmem>>, %arg6: memref<2x128xf32, #tpu.memory_space<vmem>>, %arg7: memref<512x1024xbf16, #tpu.memory_space<vmem>>, %arg8: memref<1x1024xf32, #tpu.memory_space<vmem>>, %arg9: memref<1024x1024xbf16, #tpu.memory_space<vmem>>, %arg10: memref<1x1024xf32, #tpu.memory_space<vmem>>, %arg11: memref<256x128xbf16, #tpu.memory_space<vmem>>, %arg12: memref<1x128xf32, #tpu.memory_space<vmem>>, %arg13: memref<128x128xbf16, #tpu.memory_space<vmem>>, %arg14: memref<128x128xbf16, #tpu.memory_space<vmem>>, %arg15: memref<1024x128xbf16, #tpu.memory_space<vmem>>, %arg16: memref<1x128xf32, #tpu.memory_space<vmem>>, %arg17: memref<128x128xbf16, #tpu.memory_space<vmem>>, %arg18: memref<1x128xf32, #tpu.memory_space<vmem>>, %arg19: memref<2x128xf32, #tpu.memory_space<vmem>>, %arg20: memref<2x256xf32, #tpu.memory_space<vmem>>) attributes {dimension_semantics = [#tpu.dimension_semantics<arbitrary>], iteration_bounds = array<i64: 3>, scalar_prefetch = 0 : i64, scratch_operands = 1 : i64, tpu.core_type = #tpu.core_type<tc>, window_params = [{transform_indices = @transform_0, window_bounds = array<i64: 2, 8192>}, {transform_indices = @transform_1, window_bounds = array<i64: 8192, 256>}, {pipeline_mode = #tpu.pipeline_mode<synchronous>, transform_indices = @transform_2, window_bounds = array<i64: 1, 256>}, {pipeline_mode = #tpu.pipeline_mode<synchronous>, transform_indices = @transform_3, window_bounds = array<i64: 1, 256>}, {pipeline_mode = #tpu.pipeline_mode<synchronous>, transform_indices = @transform_4, window_bounds = array<i64: 2, 512>}, {pipeline_mode = #tpu.pipeline_mode<synchronous>, transform_indices = @transform_5, window_bounds = array<i64: 2, 128>}, {pipeline_mode = #tpu.pipeline_mode<synchronous>, transform_indices = @transform_6, window_bounds = array<i64: 512, 1024>}, {pipeline_mode = #tpu.pipeline_mode<synchronous>, transform_indices = @transform_7, window_bounds = array<i64: 1, 1024>}, {pipeline_mode = #tpu.pipeline_mode<synchronous>, transform_indices = @transform_8, window_bounds = array<i64: 1024, 1024>}, {pipeline_mode = #tpu.pipeline_mode<synchronous>, transform_indices = @transform_9, window_bounds = array<i64: 1, 1024>}, {pipeline_mode = #tpu.pipeline_mode<synchronous>, transform_indices = @transform_10, window_bounds = array<i64: 256, 128>}, {pipeline_mode = #tpu.pipeline_mode<synchronous>, transform_indices = @transform_11, window_bounds = array<i64: 1, 128>}, {pipeline_mode = #tpu.pipeline_mode<synchronous>, transform_indices = @transform_12, window_bounds = array<i64: 128, 128>}, {pipeline_mode = #tpu.pipeline_mode<synchronous>, transform_indices = @transform_13, window_bounds = array<i64: 128, 128>}, {pipeline_mode = #tpu.pipeline_mode<synchronous>, transform_indices = @transform_14, window_bounds = array<i64: 1024, 128>}, {pipeline_mode = #tpu.pipeline_mode<synchronous>, transform_indices = @transform_15, window_bounds = array<i64: 1, 128>}, {pipeline_mode = #tpu.pipeline_mode<synchronous>, transform_indices = @transform_16, window_bounds = array<i64: 128, 128>}, {pipeline_mode = #tpu.pipeline_mode<synchronous>, transform_indices = @transform_17, window_bounds = array<i64: 1, 128>}, {pipeline_mode = #tpu.pipeline_mode<synchronous>, transform_indices = @transform_18, window_bounds = array<i64: 2, 128>}]} {
    %c0_i32 = arith.constant 0 : i32
    %0 = arith.cmpi eq, %arg0, %c0_i32 : i32
    %1 = arith.extui %0 : i1 to i32
    %c0_i32_0 = arith.constant 0 : i32
    %2 = arith.cmpi ne, %1, %c0_i32_0 : i32
    scf.if %2 {
      %cst_9 = arith.constant 0.000000e+00 : f32
      %14 = vector.broadcast %cst_9 : f32 to vector<2x256xf32>
      %c0_10 = arith.constant 0 : index
      %c0_11 = arith.constant 0 : index
      %15 = vector.load %arg20[%c0_10, %c0_11] : memref<2x256xf32, #tpu.memory_space<vmem>>, vector<2x256xf32>
      tpu.vector_store %arg20[%c0_10, %c0_11], %14 {strides = array<i32>} : memref<2x256xf32, #tpu.memory_space<vmem>>, vector<2x256xf32>,
    } else {
    }
    %c0 = arith.constant 0 : index
    %c0_1 = arith.constant 0 : index
    %3 = vector.load %arg20[%c0, %c0_1] : memref<2x256xf32, #tpu.memory_space<vmem>>, vector<2x256xf32>
    %c0_2 = arith.constant 0 : index
    %c0_3 = arith.constant 0 : index
    %4 = vector.load %arg1[%c0_2, %c0_3] : memref<2x8192xf32, #tpu.memory_space<vmem>>, vector<2x8192xf32>
    %5 = arith.truncf %4 : vector<2x8192xf32> to vector<2x8192xbf16>
    %c0_4 = arith.constant 0 : index
    %c0_5 = arith.constant 0 : index
    %6 = vector.load %arg2[%c0_4, %c0_5] : memref<8192x256xi8, #tpu.memory_space<vmem>>, vector<8192x256xi8>
    %7 = arith.sitofp %6 : vector<8192x256xi8> to vector<8192x256xbf16>
    %cst = arith.constant dense<0.000000e+00> : vector<2x256xf32>
    %8 = tpu.matmul %5, %7, %cst {dimension_numbers = #tpu.dot_dimension_numbers<[1], [0], [0], [1], [0, 0, 1, 1], [], []>} : vector<2x8192xbf16>, vector<8192x256xbf16>, vector<2x256xf32> -> vector<2x256xf32>
    %9 = arith.addf %3, %8 : vector<2x256xf32>
    %c0_6 = arith.constant 0 : index
    %c0_7 = arith.constant 0 : index
    %10 = vector.load %arg20[%c0_6, %c0_7] : memref<2x256xf32, #tpu.memory_space<vmem>>, vector<2x256xf32>
    tpu.vector_store %arg20[%c0_6, %c0_7], %9 {strides = array<i32>} : memref<2x256xf32, #tpu.memory_space<vmem>>, vector<2x256xf32>,
    %c2_i32 = arith.constant 2 : i32
    %11 = arith.cmpi eq, %arg0, %c2_i32 : i32
    %12 = arith.extui %11 : i1 to i32
    %c0_i32_8 = arith.constant 0 : i32
    %13 = arith.cmpi ne, %12, %c0_i32_8 : i32
    scf.if %13 {
      %c0_9 = arith.constant 0 : index
      %c0_10 = arith.constant 0 : index
      %14 = vector.load %arg20[%c0_9, %c0_10] : memref<2x256xf32, #tpu.memory_space<vmem>>, vector<2x256xf32>
      %c0_11 = arith.constant 0 : index
      %c0_12 = arith.constant 0 : index
      %15 = vector.load %arg3[%c0_11, %c0_12] : memref<1x256xf32, #tpu.memory_space<vmem>>, vector<1x256xf32>
      %16 = vector.broadcast %15 : vector<1x256xf32> to vector<2x256xf32>
      %17 = arith.mulf %14, %16 : vector<2x256xf32>
      %c0_13 = arith.constant 0 : index
      %c0_14 = arith.constant 0 : index
      %18 = vector.load %arg4[%c0_13, %c0_14] : memref<1x256xf32, #tpu.memory_space<vmem>>, vector<1x256xf32>
      %19 = vector.broadcast %18 : vector<1x256xf32> to vector<2x256xf32>
      %20 = arith.addf %17, %19 : vector<2x256xf32>
      %cst_15 = arith.constant 0.000000e+00 : f32
      %21 = vector.broadcast %cst_15 : f32 to vector<2x256xf32>
      %22 = arith.maximumf %20, %21 : vector<2x256xf32>
      %c0_16 = arith.constant 0 : index
      %c0_17 = arith.constant 0 : index
      %23 = vector.load %arg5[%c0_16, %c0_17] : memref<2x512xf32, #tpu.memory_space<vmem>>, vector<2x512xf32>
      %24 = arith.truncf %23 : vector<2x512xf32> to vector<2x512xbf16>
      %c0_18 = arith.constant 0 : index
      %c0_19 = arith.constant 0 : index
      %25 = vector.load %arg7[%c0_18, %c0_19] : memref<512x1024xbf16, #tpu.memory_space<vmem>>, vector<512x1024xbf16>
      %cst_20 = arith.constant dense<0.000000e+00> : vector<2x1024xf32>
      %26 = tpu.matmul %24, %25, %cst_20 {dimension_numbers = #tpu.dot_dimension_numbers<[1], [0], [0], [1], [0, 0, 1, 1], [], []>} : vector<2x512xbf16>, vector<512x1024xbf16>, vector<2x1024xf32> -> vector<2x1024xf32>
      %c0_21 = arith.constant 0 : index
      %c0_22 = arith.constant 0 : index
      %27 = vector.load %arg8[%c0_21, %c0_22] : memref<1x1024xf32, #tpu.memory_space<vmem>>, vector<1x1024xf32>
      %28 = vector.broadcast %27 : vector<1x1024xf32> to vector<2x1024xf32>
      %29 = arith.addf %26, %28 : vector<2x1024xf32>
      %30 = arith.truncf %29 : vector<2x1024xf32> to vector<2x1024xbf16>
      %c0_23 = arith.constant 0 : index
      %c0_24 = arith.constant 0 : index
      %31 = vector.load %arg9[%c0_23, %c0_24] : memref<1024x1024xbf16, #tpu.memory_space<vmem>>, vector<1024x1024xbf16>
      %cst_25 = arith.constant dense<0.000000e+00> : vector<2x1024xf32>
      %32 = tpu.matmul %30, %31, %cst_25 {dimension_numbers = #tpu.dot_dimension_numbers<[1], [0], [0], [1], [0, 0, 1, 1], [], []>} : vector<2x1024xbf16>, vector<1024x1024xbf16>, vector<2x1024xf32> -> vector<2x1024xf32>
      %c0_26 = arith.constant 0 : index
      %c0_27 = arith.constant 0 : index
      %33 = vector.load %arg10[%c0_26, %c0_27] : memref<1x1024xf32, #tpu.memory_space<vmem>>, vector<1x1024xf32>
      %34 = vector.broadcast %33 : vector<1x1024xf32> to vector<2x1024xf32>
      %35 = arith.addf %32, %34 : vector<2x1024xf32>
      %cst_28 = arith.constant 0.000000e+00 : f32
      %36 = vector.broadcast %cst_28 : f32 to vector<2x1024xf32>
      %37 = arith.maximumf %35, %36 : vector<2x1024xf32>
      %38 = arith.truncf %22 : vector<2x256xf32> to vector<2x256xbf16>
      %c0_29 = arith.constant 0 : index
      %c0_30 = arith.constant 0 : index
      %39 = vector.load %arg11[%c0_29, %c0_30] : memref<256x128xbf16, #tpu.memory_space<vmem>>, vector<256x128xbf16>
      %cst_31 = arith.constant dense<0.000000e+00> : vector<2x128xf32>
      %40 = tpu.matmul %38, %39, %cst_31 {dimension_numbers = #tpu.dot_dimension_numbers<[1], [0], [0], [1], [0, 0, 1, 1], [], []>} : vector<2x256xbf16>, vector<256x128xbf16>, vector<2x128xf32> -> vector<2x128xf32>
      %c0_32 = arith.constant 0 : index
      %c0_33 = arith.constant 0 : index
      %41 = vector.load %arg12[%c0_32, %c0_33] : memref<1x128xf32, #tpu.memory_space<vmem>>, vector<1x128xf32>
      %42 = vector.broadcast %41 : vector<1x128xf32> to vector<2x128xf32>
      %43 = arith.addf %40, %42 : vector<2x128xf32>
      %c0_34 = arith.constant 0 : index
      %c0_35 = arith.constant 0 : index
      %44 = vector.load %arg6[%c0_34, %c0_35] : memref<2x128xf32, #tpu.memory_space<vmem>>, vector<2x128xf32>
      %45 = arith.truncf %44 : vector<2x128xf32> to vector<2x128xbf16>
      %c0_36 = arith.constant 0 : index
      %c0_37 = arith.constant 0 : index
      %46 = vector.load %arg13[%c0_36, %c0_37] : memref<128x128xbf16, #tpu.memory_space<vmem>>, vector<128x128xbf16>
      %cst_38 = arith.constant dense<0.000000e+00> : vector<2x128xf32>
      %47 = tpu.matmul %45, %46, %cst_38 {dimension_numbers = #tpu.dot_dimension_numbers<[1], [0], [0], [1], [0, 0, 1, 1], [], []>} : vector<2x128xbf16>, vector<128x128xbf16>, vector<2x128xf32> -> vector<2x128xf32>
      %48 = arith.truncf %43 : vector<2x128xf32> to vector<2x128xbf16>
      %c0_39 = arith.constant 0 : index
      %c0_40 = arith.constant 0 : index
      %49 = vector.load %arg14[%c0_39, %c0_40] : memref<128x128xbf16, #tpu.memory_space<vmem>>, vector<128x128xbf16>
      %cst_41 = arith.constant dense<0.000000e+00> : vector<2x128xf32>
      %50 = tpu.matmul %48, %49, %cst_41 {dimension_numbers = #tpu.dot_dimension_numbers<[1], [0], [0], [1], [0, 0, 1, 1], [], []>} : vector<2x128xbf16>, vector<128x128xbf16>, vector<2x128xf32> -> vector<2x128xf32>
      %51 = arith.addf %47, %50 : vector<2x128xf32>
      %52 = arith.truncf %37 : vector<2x1024xf32> to vector<2x1024xbf16>
      %c0_42 = arith.constant 0 : index
      %c0_43 = arith.constant 0 : index
      %53 = vector.load %arg15[%c0_42, %c0_43] : memref<1024x128xbf16, #tpu.memory_space<vmem>>, vector<1024x128xbf16>
      %cst_44 = arith.constant dense<0.000000e+00> : vector<2x128xf32>
      %54 = tpu.matmul %52, %53, %cst_44 {dimension_numbers = #tpu.dot_dimension_numbers<[1], [0], [0], [1], [0, 0, 1, 1], [], []>} : vector<2x1024xbf16>, vector<1024x128xbf16>, vector<2x128xf32> -> vector<2x128xf32>
      %55 = arith.addf %51, %54 : vector<2x128xf32>
      %c0_45 = arith.constant 0 : index
      %c0_46 = arith.constant 0 : index
      %56 = vector.load %arg16[%c0_45, %c0_46] : memref<1x128xf32, #tpu.memory_space<vmem>>, vector<1x128xf32>
      %57 = vector.broadcast %56 : vector<1x128xf32> to vector<2x128xf32>
      %58 = arith.addf %55, %57 : vector<2x128xf32>
      %cst_47 = arith.constant 0.000000e+00 : f32
      %59 = vector.broadcast %cst_47 : f32 to vector<2x128xf32>
      %60 = arith.maximumf %58, %59 : vector<2x128xf32>
      %61 = arith.truncf %60 : vector<2x128xf32> to vector<2x128xbf16>
      %c0_48 = arith.constant 0 : index
      %c0_49 = arith.constant 0 : index
      %62 = vector.load %arg17[%c0_48, %c0_49] : memref<128x128xbf16, #tpu.memory_space<vmem>>, vector<128x128xbf16>
      %cst_50 = arith.constant dense<0.000000e+00> : vector<2x128xf32>
      %63 = tpu.matmul %61, %62, %cst_50 {dimension_numbers = #tpu.dot_dimension_numbers<[1], [0], [0], [1], [0, 0, 1, 1], [], []>} : vector<2x128xbf16>, vector<128x128xbf16>, vector<2x128xf32> -> vector<2x128xf32>
      %c0_51 = arith.constant 0 : index
      %c0_52 = arith.constant 0 : index
      %64 = vector.load %arg18[%c0_51, %c0_52] : memref<1x128xf32, #tpu.memory_space<vmem>>, vector<1x128xf32>
      %65 = vector.broadcast %64 : vector<1x128xf32> to vector<2x128xf32>
      %66 = arith.addf %63, %65 : vector<2x128xf32>
      %cst_53 = arith.constant 0.000000e+00 : f32
      %67 = vector.broadcast %cst_53 : f32 to vector<2x128xf32>
      %68 = arith.maximumf %66, %67 : vector<2x128xf32>
      %c0_54 = arith.constant 0 : index
      %c0_55 = arith.constant 0 : index
      %69 = vector.load %arg19[%c0_54, %c0_55] : memref<2x128xf32, #tpu.memory_space<vmem>>, vector<2x128xf32>
      tpu.vector_store %arg19[%c0_54, %c0_55], %68 {strides = array<i32>} : memref<2x128xf32, #tpu.memory_space<vmem>>, vector<2x128xf32>,
    } else {
    }
    return
  }
  func.func @transform_0(%arg0: i32) -> (i32, i32) {
    %c0_i32 = arith.constant 0 : i32
    %c0_i32_0 = arith.constant 0 : i32
    return %c0_i32, %arg0 : i32, i32
  }
  func.func @transform_1(%arg0: i32) -> (i32, i32) {
    %c0_i32 = arith.constant 0 : i32
    %c0_i32_0 = arith.constant 0 : i32
    return %arg0, %c0_i32 : i32, i32
  }
  func.func @transform_2(%arg0: i32) -> (i32, i32) {
    %c0_i32 = arith.constant 0 : i32
    %c0_i32_0 = arith.constant 0 : i32
    %c0_i32_1 = arith.constant 0 : i32
    return %c0_i32, %c0_i32_0 : i32, i32
  }
  func.func @transform_3(%arg0: i32) -> (i32, i32) {
    %c0_i32 = arith.constant 0 : i32
    %c0_i32_0 = arith.constant 0 : i32
    %c0_i32_1 = arith.constant 0 : i32
    return %c0_i32, %c0_i32_0 : i32, i32
  }
  func.func @transform_4(%arg0: i32) -> (i32, i32) {
    %c0_i32 = arith.constant 0 : i32
    %c0_i32_0 = arith.constant 0 : i32
    %c0_i32_1 = arith.constant 0 : i32
    return %c0_i32, %c0_i32_0 : i32, i32
  }
  func.func @transform_5(%arg0: i32) -> (i32, i32) {
    %c0_i32 = arith.constant 0 : i32
    %c0_i32_0 = arith.constant 0 : i32
    %c0_i32_1 = arith.constant 0 : i32
    return %c0_i32, %c0_i32_0 : i32, i32
  }
  func.func @transform_6(%arg0: i32) -> (i32, i32) {
    %c0_i32 = arith.constant 0 : i32
    %c0_i32_0 = arith.constant 0 : i32
    %c0_i32_1 = arith.constant 0 : i32
    return %c0_i32, %c0_i32_0 : i32, i32
  }
  func.func @transform_7(%arg0: i32) -> (i32, i32) {
    %c0_i32 = arith.constant 0 : i32
    %c0_i32_0 = arith.constant 0 : i32
    %c0_i32_1 = arith.constant 0 : i32
    return %c0_i32, %c0_i32_0 : i32, i32
  }
  func.func @transform_8(%arg0: i32) -> (i32, i32) {
    %c0_i32 = arith.constant 0 : i32
    %c0_i32_0 = arith.constant 0 : i32
    %c0_i32_1 = arith.constant 0 : i32
    return %c0_i32, %c0_i32_0 : i32, i32
  }
  func.func @transform_9(%arg0: i32) -> (i32, i32) {
    %c0_i32 = arith.constant 0 : i32
    %c0_i32_0 = arith.constant 0 : i32
    %c0_i32_1 = arith.constant 0 : i32
    return %c0_i32, %c0_i32_0 : i32, i32
  }
  func.func @transform_10(%arg0: i32) -> (i32, i32) {
    %c0_i32 = arith.constant 0 : i32
    %c0_i32_0 = arith.constant 0 : i32
    %c0_i32_1 = arith.constant 0 : i32
    return %c0_i32, %c0_i32_0 : i32, i32
  }
  func.func @transform_11(%arg0: i32) -> (i32, i32) {
    %c0_i32 = arith.constant 0 : i32
    %c0_i32_0 = arith.constant 0 : i32
    %c0_i32_1 = arith.constant 0 : i32
    return %c0_i32, %c0_i32_0 : i32, i32
  }
  func.func @transform_12(%arg0: i32) -> (i32, i32) {
    %c0_i32 = arith.constant 0 : i32
    %c0_i32_0 = arith.constant 0 : i32
    %c0_i32_1 = arith.constant 0 : i32
    return %c0_i32, %c0_i32_0 : i32, i32
  }
  func.func @transform_13(%arg0: i32) -> (i32, i32) {
    %c0_i32 = arith.constant 0 : i32
    %c0_i32_0 = arith.constant 0 : i32
    %c0_i32_1 = arith.constant 0 : i32
    return %c0_i32, %c0_i32_0 : i32, i32
  }
  func.func @transform_14(%arg0: i32) -> (i32, i32) {
    %c0_i32 = arith.constant 0 : i32
    %c0_i32_0 = arith.constant 0 : i32
    %c0_i32_1 = arith.constant 0 : i32
    return %c0_i32, %c0_i32_0 : i32, i32
  }
  func.func @transform_15(%arg0: i32) -> (i32, i32) {
    %c0_i32 = arith.constant 0 : i32
    %c0_i32_0 = arith.constant 0 : i32
    %c0_i32_1 = arith.constant 0 : i32
    return %c0_i32, %c0_i32_0 : i32, i32
  }
  func.func @transform_16(%arg0: i32) -> (i32, i32) {
    %c0_i32 = arith.constant 0 : i32
    %c0_i32_0 = arith.constant 0 : i32
    %c0_i32_1 = arith.constant 0 : i32
    return %c0_i32, %c0_i32_0 : i32, i32
  }
  func.func @transform_17(%arg0: i32) -> (i32, i32) {
    %c0_i32 = arith.constant 0 : i32
    %c0_i32_0 = arith.constant 0 : i32
    %c0_i32_1 = arith.constant 0 : i32
    return %c0_i32, %c0_i32_0 : i32, i32
  }
  func.func @transform_18(%arg0: i32) -> (i32, i32) {
    %c0_i32 = arith.constant 0 : i32
    %c0_i32_0 = arith.constant 0 : i32
    %c0_i32_1 = arith.constant 0 : i32
    return %c0_i32, %c0_i32_0 : i32, i32
  }
}

</mosaic_0001>

<llo_original>
// kernel: nn_model_nlp_forward.1
$region0: #{nn_model_nlp_forward.1}
  #allocation0 [shape = 'u32[]', space=smem, size = 0x4, offset = 0x4, fixed_abs, tag = 'smem constant byte address 0x4 - core index']
  #allocation1 [shape = 'u32[144,128]{1,0:T(1,128)}', space=vmem, size = 0x12000, scoped, tag = 'internal scratch']
  #allocation2 [shape = 'f32[2,256]{1,0:T(2,128)}', space=vmem, size = 0x800, scoped, tag = 'scratch operand']
  %s0 = inlined_call_operand.vmem [shape: f32[2,24576], index: 0, kind: input, shape index: {}]
  %s1 = inlined_call_operand.hbm [shape: s8[24576,256], index: 1, kind: input, shape index: {}]
  %s2 = inlined_call_operand.hbm [shape: f32[1,256], index: 2, kind: input, shape index: {}]
  %s3 = inlined_call_operand.hbm [shape: f32[1,256], index: 3, kind: input, shape index: {}]
  %s4 = inlined_call_operand.hbm [shape: f32[2,512], index: 4, kind: input, shape index: {}]
  %s5 = inlined_call_operand.vmem [shape: f32[2,128], index: 5, kind: input, shape index: {}]
  %s6 = inlined_call_operand.hbm [shape: bf16[512,1024], index: 6, kind: input, shape index: {}]
  %s7 = inlined_call_operand.hbm [shape: f32[1,1024], index: 7, kind: input, shape index: {}]
  %s8 = inlined_call_operand.hbm [shape: bf16[1024,1024], index: 8, kind: input, shape index: {}]
  %s9 = inlined_call_operand.hbm [shape: f32[1,1024], index: 9, kind: input, shape index: {}]
  %s10 = inlined_call_operand.hbm [shape: bf16[256,128], index: 10, kind: input, shape index: {}]
  %s11 = inlined_call_operand.hbm [shape: f32[1,128], index: 11, kind: input, shape index: {}]
  %s12 = inlined_call_operand.hbm [shape: bf16[128,128], index: 12, kind: input, shape index: {}]
  %s13 = inlined_call_operand.hbm [shape: bf16[128,128], index: 13, kind: input, shape index: {}]
  %s14 = inlined_call_operand.hbm [shape: bf16[1024,128], index: 14, kind: input, shape index: {}]
  %s15 = inlined_call_operand.hbm [shape: f32[1,128], index: 15, kind: input, shape index: {}]
  %s16 = inlined_call_operand.hbm [shape: bf16[128,128], index: 16, kind: input, shape index: {}]
  %s17 = inlined_call_operand.hbm [shape: f32[1,128], index: 17, kind: input, shape index: {}]
  %s18 = inlined_call_operand.vmem [shape: f32[2,128], index: 18, kind: output, shape index: {}]
  %s19 = sld [smem:[#allocation0]]
  $region177: #{nn_model_nlp_forward.1} parent=0
    _
  %s21 = ssub.s32 1, %s19
  %s22 = scalar_select 0, %s21, %s19
  $region1: #{nn_model_nlp_forward.1} parent=0
    #allocation3 [shape = 'u8[4194304]{0}', space=vmem, size = 0x400000, scoped, tag = 'input window, operand 1']
    #allocation4 [shape = 's32[2]{0}', space=sflag, size = 0x8, scoped, tag = 'scoped memory for nn_model_nlp_forward.1']
    #allocation5 [shape = 'u8[1024]{0}', space=vmem, size = 0x400, scoped, tag = 'input window, operand 2, single buffered']
    #allocation6 [shape = 's32[1]{0}', space=sflag, size = 0x4, scoped, tag = 'scoped memory for nn_model_nlp_forward.1']
    #allocation7 [shape = 'u8[1024]{0}', space=vmem, size = 0x400, scoped, tag = 'input window, operand 3, single buffered']
    #allocation8 [shape = 'u8[4096]{0}', space=vmem, size = 0x1000, scoped, tag = 'input window, operand 4, single buffered']
    #allocation9 [shape = 's32[1]{0}', space=sflag, size = 0x4, scoped, tag = 'scoped memory for nn_model_nlp_forward.1']
    #allocation10 [shape = 'u8[1048576]{0}', space=vmem, size = 0x100000, scoped, tag = 'input window, operand 6, single buffered']
    #allocation11 [shape = 'u8[4096]{0}', space=vmem, size = 0x1000, scoped, tag = 'input window, operand 7, single buffered']
    #allocation12 [shape = 's32[1]{0}', space=sflag, size = 0x4, scoped, tag = 'scoped memory for nn_model_nlp_forward.1']
    #allocation13 [shape = 'u8[2097152]{0}', space=vmem, size = 0x200000, scoped, tag = 'input window, operand 8, single buffered']
    #allocation14 [shape = 'u8[4096]{0}', space=vmem, size = 0x1000, scoped, tag = 'input window, operand 9, single buffered']
    #allocation15 [shape = 's32[1]{0}', space=sflag, size = 0x4, scoped, tag = 'scoped memory for nn_model_nlp_forward.1']
    #allocation16 [shape = 'u8[65536]{0}', space=vmem, size = 0x10000, scoped, tag = 'input window, operand 10, single buffered']
    #allocation17 [shape = 'u8[512]{0}', space=vmem, size = 0x400, scoped, tag = 'input window, operand 11, single buffered']
    #allocation18 [shape = 's32[1]{0}', space=sflag, size = 0x4, scoped, tag = 'scoped memory for nn_model_nlp_forward.1']
    #allocation19 [shape = 'u8[32768]{0}', space=vmem, size = 0x8000, scoped, tag = 'input window, operand 12, single buffered']
    #allocation20 [shape = 'u8[32768]{0}', space=vmem, size = 0x8000, scoped, tag = 'input window, operand 13, single buffered']
    #allocation21 [shape = 's32[1]{0}', space=sflag, size = 0x4, scoped, tag = 'scoped memory for nn_model_nlp_forward.1']
    #allocation22 [shape = 'u8[262144]{0}', space=vmem, size = 0x40000, scoped, tag = 'input window, operand 14, single buffered']
    #allocation23 [shape = 'u8[512]{0}', space=vmem, size = 0x400, scoped, tag = 'input window, operand 15, single buffered']
    #allocation24 [shape = 's32[1]{0}', space=sflag, size = 0x4, scoped, tag = 'scoped memory for nn_model_nlp_forward.1']
    #allocation25 [shape = 'u8[32768]{0}', space=vmem, size = 0x8000, scoped, tag = 'input window, operand 16, single buffered']
    #allocation26 [shape = 'u8[512]{0}', space=vmem, size = 0x400, scoped, tag = 'input window, operand 17, single buffered']
    #allocation27 [shape = 's32[1]{0}', space=sflag, size = 0x4, scoped, tag = 'scoped memory for nn_model_nlp_forward.1']
    %23 = vsyncpa [#allocation4], 0
    %s24 = scalar_lea.sflag [#allocation4], 1
    %25 = vsyncpa %s24, 0
    %26 = vsyncpa [#allocation6], 0
    %27 = vsyncpa [#allocation9], 0
    %28 = vsyncpa [#allocation12], 0
    %29 = vsyncpa [#allocation15], 0
    %30 = vsyncpa [#allocation18], 0
    %31 = vsyncpa [#allocation21], 0
    %32 = vsyncpa [#allocation24], 0
    %33 = vsyncpa [#allocation27], 0
    loop: start=0, step=1, limit=5
    $region2: #{nn_model_nlp_forward.1} parent=1 // loop_pre_header
      _
    $region3: #{nn_model_nlp_forward.1} parent=1 // loop_header
      %s35 = sphi 0, %s39
      %p36 = scmp.ge.s32.totalorder %s35, 5
      %s45 = sphi 0, %s47
      %s48 = sphi 0, %s45
      %s49 = sphi 0, %s48
      %s65 = sphi 0, %s49
      %s71 = sphi 0, %s73
      %s74 = sphi 0, %s71
      %s75 = sphi 0, %s74
      %s91 = sphi 0, %s75
      %s95 = sphi 0, %s95
      %s97 = sphi 0, %s95
      %s98 = sphi 0, %s97
      %s112 = sphi 0, %s98
      %s116 = sphi 0, %s116
      %s118 = sphi 0, %s116
      %s119 = sphi 0, %s118
      %s133 = sphi 0, %s119
      %s137 = sphi 0, %s137
      %s139 = sphi 0, %s137
      %s140 = sphi 0, %s139
      %s154 = sphi 0, %s140
      %s158 = sphi 0, %s158
      %s160 = sphi 0, %s158
      %s161 = sphi 0, %s160
      %s175 = sphi 0, %s161
      %s179 = sphi 0, %s179
      %s181 = sphi 0, %s179
      %s182 = sphi 0, %s181
      %s196 = sphi 0, %s182
      %s200 = sphi 0, %s200
      %s202 = sphi 0, %s200
      %s203 = sphi 0, %s202
      %s217 = sphi 0, %s203
      %s221 = sphi 0, %s221
      %s223 = sphi 0, %s221
      %s224 = sphi 0, %s223
      %s238 = sphi 0, %s224
      %s242 = sphi 0, %s242
      %s244 = sphi 0, %s242
      %s245 = sphi 0, %s244
      %s259 = sphi 0, %s245
      %s263 = sphi 0, %s263
      %s265 = sphi 0, %s263
      %s266 = sphi 0, %s265
      %s280 = sphi 0, %s266
      %s284 = sphi 0, %s284
      %s286 = sphi 0, %s284
      %s287 = sphi 0, %s286
      %s301 = sphi 0, %s287
      %s305 = sphi 0, %s305
      %s307 = sphi 0, %s305
      %s308 = sphi 0, %s307
      %s322 = sphi 0, %s308
      %s326 = sphi 0, %s326
      %s328 = sphi 0, %s326
      %s329 = sphi 0, %s328
      %s343 = sphi 0, %s329
      %s347 = sphi 0, %s347
      %s349 = sphi 0, %s347
      %s350 = sphi 0, %s349
      %s364 = sphi 0, %s350
      %s368 = sphi 0, %s368
      %s370 = sphi 0, %s368
      %s371 = sphi 0, %s370
      %s385 = sphi 0, %s371
      %s389 = sphi 0, %s389
      %s391 = sphi 0, %s389
      %s392 = sphi 0, %s391
      %s406 = sphi 0, %s392
      %s410 = sphi 0, %s410
      %s412 = sphi 0, %s410
      %s413 = sphi 0, %s412
      %s427 = sphi 0, %s413
      %s431 = sphi 0, %s431
      %s433 = sphi 0, %s431
      %s434 = sphi 0, %s433
      %s448 = sphi 0, %s434
    $region4: #{nn_model_nlp_forward.1} parent=1 // loop_header_branch
      %38 = sbr.rel (%p36) target = $region8
    $region5: #{nn_model_nlp_forward.1} parent=1 // loop_body
      %s40 = ssub.s32 %s35, 1
      %s41 = ssub.s32 %s35, 2
      %s42 = sadd.s32 %s35, 1
      %s43 = ssub.s32 %s35, %s42
      %p44 = scmp.eq.s32.totalorder %s43, 0
      %s46 = sadd.s32 %s45, 1
      %s47 = scalar_select %p44, %s45, %s46
      %p50 = pneg %p44
      %p51 = scmp.eq.s32.totalorder %s35, 2
      %p52 = por %p50, %p51
      %p53 = scmp.ne.s32.totalorder %s45, %s48
      %p54 = scmp.eq.s32.totalorder %s35, 0
      %p55 = por %p53, %p54
      %p56 = scmp.ne.s32.totalorder %s45, %s48
      %p57 = scmp.eq.s32.totalorder %s40, 2
      %p58 = por %p56, %p57
      %p59 = scmp.ne.s32.totalorder %s48, %s49
      %p60 = scmp.eq.s32.totalorder %s40, 0
      %p61 = por %p59, %p60
      %p62 = scmp.ne.s32.totalorder %s48, %s49
      %p63 = scmp.eq.s32.totalorder %s41, 2
      %p64 = por %p62, %p63
      %p66 = scmp.ne.s32.totalorder %s49, %s65
      %p67 = scmp.eq.s32.totalorder %s41, 0
      %p68 = por %p66, %p67
      %s69 = ssub.s32 %s35, %s42
      %p70 = scmp.eq.s32.totalorder %s69, 0
      %s72 = sadd.s32 %s71, 1
      %s73 = scalar_select %p70, %s71, %s72
      %p76 = pneg %p70
      %p77 = scmp.eq.s32.totalorder %s35, 2
      %p78 = por %p76, %p77
      %p79 = scmp.ne.s32.totalorder %s71, %s74
      %p80 = scmp.eq.s32.totalorder %s35, 0
      %p81 = por %p79, %p80
      %p82 = scmp.ne.s32.totalorder %s71, %s74
      %p83 = scmp.eq.s32.totalorder %s40, 2
      %p84 = por %p82, %p83
      %p85 = scmp.ne.s32.totalorder %s74, %s75
      %p86 = scmp.eq.s32.totalorder %s40, 0
      %p87 = por %p85, %p86
      %p88 = scmp.ne.s32.totalorder %s74, %s75
      %p89 = scmp.eq.s32.totalorder %s41, 2
      %p90 = por %p88, %p89
      %p92 = scmp.ne.s32.totalorder %s75, %s91
      %p93 = scmp.eq.s32.totalorder %s41, 0
      %p94 = por %p92, %p93
      %s96 = sadd.s32 %s95, 1
      %p99 = scmp.eq.s32.totalorder %s35, 2
      %p100 = scmp.ne.s32.totalorder %s95, %s97
      %p101 = scmp.eq.s32.totalorder %s35, 0
      %p102 = por %p100, %p101
      %p103 = scmp.ne.s32.totalorder %s95, %s97
      %p104 = scmp.eq.s32.totalorder %s40, 2
      %p105 = por %p103, %p104
      %p106 = scmp.ne.s32.totalorder %s97, %s98
      %p107 = scmp.eq.s32.totalorder %s40, 0
      %p108 = por %p106, %p107
      %p109 = scmp.ne.s32.totalorder %s97, %s98
      %p110 = scmp.eq.s32.totalorder %s41, 2
      %p111 = por %p109, %p110
      %p113 = scmp.ne.s32.totalorder %s98, %s112
      %p114 = scmp.eq.s32.totalorder %s41, 0
      %p115 = por %p113, %p114
      %s117 = sadd.s32 %s116, 1
      %p120 = scmp.eq.s32.totalorder %s35, 2
      %p121 = scmp.ne.s32.totalorder %s116, %s118
      %p122 = scmp.eq.s32.totalorder %s35, 0
      %p123 = por %p121, %p122
      %p124 = scmp.ne.s32.totalorder %s116, %s118
      %p125 = scmp.eq.s32.totalorder %s40, 2
      %p126 = por %p124, %p125
      %p127 = scmp.ne.s32.totalorder %s118, %s119
      %p128 = scmp.eq.s32.totalorder %s40, 0
      %p129 = por %p127, %p128
      %p130 = scmp.ne.s32.totalorder %s118, %s119
      %p131 = scmp.eq.s32.totalorder %s41, 2
      %p132 = por %p130, %p131
      %p134 = scmp.ne.s32.totalorder %s119, %s133
      %p135 = scmp.eq.s32.totalorder %s41, 0
      %p136 = por %p134, %p135
      %s138 = sadd.s32 %s137, 1
      %p141 = scmp.eq.s32.totalorder %s35, 2
      %p142 = scmp.ne.s32.totalorder %s137, %s139
      %p143 = scmp.eq.s32.totalorder %s35, 0
      %p144 = por %p142, %p143
      %p145 = scmp.ne.s32.totalorder %s137, %s139
      %p146 = scmp.eq.s32.totalorder %s40, 2
      %p147 = por %p145, %p146
      %p148 = scmp.ne.s32.totalorder %s139, %s140
      %p149 = scmp.eq.s32.totalorder %s40, 0
      %p150 = por %p148, %p149
      %p151 = scmp.ne.s32.totalorder %s139, %s140
      %p152 = scmp.eq.s32.totalorder %s41, 2
      %p153 = por %p151, %p152
      %p155 = scmp.ne.s32.totalorder %s140, %s154
      %p156 = scmp.eq.s32.totalorder %s41, 0
      %p157 = por %p155, %p156
      %s159 = sadd.s32 %s158, 1
      %p162 = scmp.eq.s32.totalorder %s35, 2
      %p163 = scmp.ne.s32.totalorder %s158, %s160
      %p164 = scmp.eq.s32.totalorder %s35, 0
      %p165 = por %p163, %p164
      %p166 = scmp.ne.s32.totalorder %s158, %s160
      %p167 = scmp.eq.s32.totalorder %s40, 2
      %p168 = por %p166, %p167
      %p169 = scmp.ne.s32.totalorder %s160, %s161
      %p170 = scmp.eq.s32.totalorder %s40, 0
      %p171 = por %p169, %p170
      %p172 = scmp.ne.s32.totalorder %s160, %s161
      %p173 = scmp.eq.s32.totalorder %s41, 2
      %p174 = por %p172, %p173
      %p176 = scmp.ne.s32.totalorder %s161, %s175
      %p177 = scmp.eq.s32.totalorder %s41, 0
      %p178 = por %p176, %p177
      %s180 = sadd.s32 %s179, 1
      %p183 = scmp.eq.s32.totalorder %s35, 2
      %p184 = scmp.ne.s32.totalorder %s179, %s181
      %p185 = scmp.eq.s32.totalorder %s35, 0
      %p186 = por %p184, %p185
      %p187 = scmp.ne.s32.totalorder %s179, %s181
      %p188 = scmp.eq.s32.totalorder %s40, 2
      %p189 = por %p187, %p188
      %p190 = scmp.ne.s32.totalorder %s181, %s182
      %p191 = scmp.eq.s32.totalorder %s40, 0
      %p192 = por %p190, %p191
      %p193 = scmp.ne.s32.totalorder %s181, %s182
      %p194 = scmp.eq.s32.totalorder %s41, 2
      %p195 = por %p193, %p194
      %p197 = scmp.ne.s32.totalorder %s182, %s196
      %p198 = scmp.eq.s32.totalorder %s41, 0
      %p199 = por %p197, %p198
      %s201 = sadd.s32 %s200, 1
      %p204 = scmp.eq.s32.totalorder %s35, 2
      %p205 = scmp.ne.s32.totalorder %s200, %s202
      %p206 = scmp.eq.s32.totalorder %s35, 0
      %p207 = por %p205, %p206
      %p208 = scmp.ne.s32.totalorder %s200, %s202
      %p209 = scmp.eq.s32.totalorder %s40, 2
      %p210 = por %p208, %p209
      %p211 = scmp.ne.s32.totalorder %s202, %s203
      %p212 = scmp.eq.s32.totalorder %s40, 0
      %p213 = por %p211, %p212
      %p214 = scmp.ne.s32.totalorder %s202, %s203
      %p215 = scmp.eq.s32.totalorder %s41, 2
      %p216 = por %p214, %p215
      %p218 = scmp.ne.s32.totalorder %s203, %s217
      %p219 = scmp.eq.s32.totalorder %s41, 0
      %p220 = por %p218, %p219
      %s222 = sadd.s32 %s221, 1
      %p225 = scmp.eq.s32.totalorder %s35, 2
      %p226 = scmp.ne.s32.totalorder %s221, %s223
      %p227 = scmp.eq.s32.totalorder %s35, 0
      %p228 = por %p226, %p227
      %p229 = scmp.ne.s32.totalorder %s221, %s223
      %p230 = scmp.eq.s32.totalorder %s40, 2
      %p231 = por %p229, %p230
      %p232 = scmp.ne.s32.totalorder %s223, %s224
      %p233 = scmp.eq.s32.totalorder %s40, 0
      %p234 = por %p232, %p233
      %p235 = scmp.ne.s32.totalorder %s223, %s224
      %p236 = scmp.eq.s32.totalorder %s41, 2
      %p237 = por %p235, %p236
      %p239 = scmp.ne.s32.totalorder %s224, %s238
      %p240 = scmp.eq.s32.totalorder %s41, 0
      %p241 = por %p239, %p240
      %s243 = sadd.s32 %s242, 1
      %p246 = scmp.eq.s32.totalorder %s35, 2
      %p247 = scmp.ne.s32.totalorder %s242, %s244
      %p248 = scmp.eq.s32.totalorder %s35, 0
      %p249 = por %p247, %p248
      %p250 = scmp.ne.s32.totalorder %s242, %s244
      %p251 = scmp.eq.s32.totalorder %s40, 2
      %p252 = por %p250, %p251
      %p253 = scmp.ne.s32.totalorder %s244, %s245
      %p254 = scmp.eq.s32.totalorder %s40, 0
      %p255 = por %p253, %p254
      %p256 = scmp.ne.s32.totalorder %s244, %s245
      %p257 = scmp.eq.s32.totalorder %s41, 2
      %p258 = por %p256, %p257
      %p260 = scmp.ne.s32.totalorder %s245, %s259
      %p261 = scmp.eq.s32.totalorder %s41, 0
      %p262 = por %p260, %p261
      %s264 = sadd.s32 %s263, 1
      %p267 = scmp.eq.s32.totalorder %s35, 2
      %p268 = scmp.ne.s32.totalorder %s263, %s265
      %p269 = scmp.eq.s32.totalorder %s35, 0
      %p270 = por %p268, %p269
      %p271 = scmp.ne.s32.totalorder %s263, %s265
      %p272 = scmp.eq.s32.totalorder %s40, 2
      %p273 = por %p271, %p272
      %p274 = scmp.ne.s32.totalorder %s265, %s266
      %p275 = scmp.eq.s32.totalorder %s40, 0
      %p276 = por %p274, %p275
      %p277 = scmp.ne.s32.totalorder %s265, %s266
      %p278 = scmp.eq.s32.totalorder %s41, 2
      %p279 = por %p277, %p278
      %p281 = scmp.ne.s32.totalorder %s266, %s280
      %p282 = scmp.eq.s32.totalorder %s41, 0
      %p283 = por %p281, %p282
      %s285 = sadd.s32 %s284, 1
      %p288 = scmp.eq.s32.totalorder %s35, 2
      %p289 = scmp.ne.s32.totalorder %s284, %s286
      %p290 = scmp.eq.s32.totalorder %s35, 0
      %p291 = por %p289, %p290
      %p292 = scmp.ne.s32.totalorder %s284, %s286
      %p293 = scmp.eq.s32.totalorder %s40, 2
      %p294 = por %p292, %p293
      %p295 = scmp.ne.s32.totalorder %s286, %s287
      %p296 = scmp.eq.s32.totalorder %s40, 0
      %p297 = por %p295, %p296
      %p298 = scmp.ne.s32.totalorder %s286, %s287
      %p299 = scmp.eq.s32.totalorder %s41, 2
      %p300 = por %p298, %p299
      %p302 = scmp.ne.s32.totalorder %s287, %s301
      %p303 = scmp.eq.s32.totalorder %s41, 0
      %p304 = por %p302, %p303
      %s306 = sadd.s32 %s305, 1
      %p309 = scmp.eq.s32.totalorder %s35, 2
      %p310 = scmp.ne.s32.totalorder %s305, %s307
      %p311 = scmp.eq.s32.totalorder %s35, 0
      %p312 = por %p310, %p311
      %p313 = scmp.ne.s32.totalorder %s305, %s307
      %p314 = scmp.eq.s32.totalorder %s40, 2
      %p315 = por %p313, %p314
      %p316 = scmp.ne.s32.totalorder %s307, %s308
      %p317 = scmp.eq.s32.totalorder %s40, 0
      %p318 = por %p316, %p317
      %p319 = scmp.ne.s32.totalorder %s307, %s308
      %p320 = scmp.eq.s32.totalorder %s41, 2
      %p321 = por %p319, %p320
      %p323 = scmp.ne.s32.totalorder %s308, %s322
      %p324 = scmp.eq.s32.totalorder %s41, 0
      %p325 = por %p323, %p324
      %s327 = sadd.s32 %s326, 1
      %p330 = scmp.eq.s32.totalorder %s35, 2
      %p331 = scmp.ne.s32.totalorder %s326, %s328
      %p332 = scmp.eq.s32.totalorder %s35, 0
      %p333 = por %p331, %p332
      %p334 = scmp.ne.s32.totalorder %s326, %s328
      %p335 = scmp.eq.s32.totalorder %s40, 2
      %p336 = por %p334, %p335
      %p337 = scmp.ne.s32.totalorder %s328, %s329
      %p338 = scmp.eq.s32.totalorder %s40, 0
      %p339 = por %p337, %p338
      %p340 = scmp.ne.s32.totalorder %s328, %s329
      %p341 = scmp.eq.s32.totalorder %s41, 2
      %p342 = por %p340, %p341
      %p344 = scmp.ne.s32.totalorder %s329, %s343
      %p345 = scmp.eq.s32.totalorder %s41, 0
      %p346 = por %p344, %p345
      %s348 = sadd.s32 %s347, 1
      %p351 = scmp.eq.s32.totalorder %s35, 2
      %p352 = scmp.ne.s32.totalorder %s347, %s349
      %p353 = scmp.eq.s32.totalorder %s35, 0
      %p354 = por %p352, %p353
      %p355 = scmp.ne.s32.totalorder %s347, %s349
      %p356 = scmp.eq.s32.totalorder %s40, 2
      %p357 = por %p355, %p356
      %p358 = scmp.ne.s32.totalorder %s349, %s350
      %p359 = scmp.eq.s32.totalorder %s40, 0
      %p360 = por %p358, %p359
      %p361 = scmp.ne.s32.totalorder %s349, %s350
      %p362 = scmp.eq.s32.totalorder %s41, 2
      %p363 = por %p361, %p362
      %p365 = scmp.ne.s32.totalorder %s350, %s364
      %p366 = scmp.eq.s32.totalorder %s41, 0
      %p367 = por %p365, %p366
      %s369 = sadd.s32 %s368, 1
      %p372 = scmp.eq.s32.totalorder %s35, 2
      %p373 = scmp.ne.s32.totalorder %s368, %s370
      %p374 = scmp.eq.s32.totalorder %s35, 0
      %p375 = por %p373, %p374
      %p376 = scmp.ne.s32.totalorder %s368, %s370
      %p377 = scmp.eq.s32.totalorder %s40, 2
      %p378 = por %p376, %p377
      %p379 = scmp.ne.s32.totalorder %s370, %s371
      %p380 = scmp.eq.s32.totalorder %s40, 0
      %p381 = por %p379, %p380
      %p382 = scmp.ne.s32.totalorder %s370, %s371
      %p383 = scmp.eq.s32.totalorder %s41, 2
      %p384 = por %p382, %p383
      %p386 = scmp.ne.s32.totalorder %s371, %s385
      %p387 = scmp.eq.s32.totalorder %s41, 0
      %p388 = por %p386, %p387
      %s390 = sadd.s32 %s389, 1
      %p393 = scmp.eq.s32.totalorder %s35, 2
      %p394 = scmp.ne.s32.totalorder %s389, %s391
      %p395 = scmp.eq.s32.totalorder %s35, 0
      %p396 = por %p394, %p395
      %p397 = scmp.ne.s32.totalorder %s389, %s391
      %p398 = scmp.eq.s32.totalorder %s40, 2
      %p399 = por %p397, %p398
      %p400 = scmp.ne.s32.totalorder %s391, %s392
      %p401 = scmp.eq.s32.totalorder %s40, 0
      %p402 = por %p400, %p401
      %p403 = scmp.ne.s32.totalorder %s391, %s392
      %p404 = scmp.eq.s32.totalorder %s41, 2
      %p405 = por %p403, %p404
      %p407 = scmp.ne.s32.totalorder %s392, %s406
      %p408 = scmp.eq.s32.totalorder %s41, 0
      %p409 = por %p407, %p408
      %s411 = sadd.s32 %s410, 1
      %p414 = scmp.eq.s32.totalorder %s35, 2
      %p415 = scmp.ne.s32.totalorder %s410, %s412
      %p416 = scmp.eq.s32.totalorder %s35, 0
      %p417 = por %p415, %p416
      %p418 = scmp.ne.s32.totalorder %s410, %s412
      %p419 = scmp.eq.s32.totalorder %s40, 2
      %p420 = por %p418, %p419
      %p421 = scmp.ne.s32.totalorder %s412, %s413
      %p422 = scmp.eq.s32.totalorder %s40, 0
      %p423 = por %p421, %p422
      %p424 = scmp.ne.s32.totalorder %s412, %s413
      %p425 = scmp.eq.s32.totalorder %s41, 2
      %p426 = por %p424, %p425
      %p428 = scmp.ne.s32.totalorder %s413, %s427
      %p429 = scmp.eq.s32.totalorder %s41, 0
      %p430 = por %p428, %p429
      %s432 = sadd.s32 %s431, 1
      %p435 = scmp.eq.s32.totalorder %s35, 2
      %p436 = scmp.ne.s32.totalorder %s431, %s433
      %p437 = scmp.eq.s32.totalorder %s35, 0
      %p438 = por %p436, %p437
      %p439 = scmp.ne.s32.totalorder %s431, %s433
      %p440 = scmp.eq.s32.totalorder %s40, 2
      %p441 = por %p439, %p440
      %p442 = scmp.ne.s32.totalorder %s433, %s434
      %p443 = scmp.eq.s32.totalorder %s40, 0
      %p444 = por %p442, %p443
      %p445 = scmp.ne.s32.totalorder %s433, %s434
      %p446 = scmp.eq.s32.totalorder %s41, 2
      %p447 = por %p445, %p446
      %p449 = scmp.ne.s32.totalorder %s434, %s448
      %p450 = scmp.eq.s32.totalorder %s41, 0
      %p451 = por %p449, %p450
      %p452 = scmp.le.s32.totalorder 1, %s35
      %p453 = scmp.lt.s32.totalorder %s35, 4
      %p454 = pnand %p452, %p453
      %p455 = pneg %p454
      // Predicated region
      $region9: #{nn_model_nlp_forward.1} parent=5 // pred_check
        _
      $region10: #{nn_model_nlp_forward.1} parent=5 // pred_check_branch
        %457 = sbr.rel (%p454) target = $region12
      $region11: #{nn_model_nlp_forward.1} parent=5 // pred_region
        %s458 = ssub.s32 %s35, 1
        // Predicated region
        $region13: #{nn_model_nlp_forward.1} parent=11 // pred_check
          %p459 = pneg %p108
        $region14: #{nn_model_nlp_forward.1} parent=11 // pred_check_branch
          %461 = sbr.rel (%p459) target = $region16
        $region15: #{nn_model_nlp_forward.1} parent=11 // pred_region
          %s463 = ssub.s32 32, 32
          %464 = vsyncadd [#allocation6], %s463
          %s466 = sshll.u32 [#allocation5], 4
          %s467 = int_to_ptr.vmem [resolvable:$true] %s466
          %469 = dma.hbm_to_vmem [thread:$0]  %s2, 32, %s467, [#allocation6]
        $region16: #{nn_model_nlp_forward.1} parent=11 // pred_fallthru
          _
        // Predicated region
        $region17: #{nn_model_nlp_forward.1} parent=11 // pred_check
          %p470 = pneg %p129
        $region18: #{nn_model_nlp_forward.1} parent=11 // pred_check_branch
          %472 = sbr.rel (%p470) target = $region20
        $region19: #{nn_model_nlp_forward.1} parent=11 // pred_region
          %s474 = ssub.s32 32, 32
          %475 = vsyncadd [#allocation6], %s474
          %s477 = sshll.u32 [#allocation7], 4
          %s478 = int_to_ptr.vmem [resolvable:$true] %s477
          %480 = dma.hbm_to_vmem [thread:$0]  %s3, 32, %s478, [#allocation6]
        $region20: #{nn_model_nlp_forward.1} parent=11 // pred_fallthru
          _
        // Predicated region
        $region21: #{nn_model_nlp_forward.1} parent=11 // pred_check
          %p481 = pneg %p150
        $region22: #{nn_model_nlp_forward.1} parent=11 // pred_check_branch
          %483 = sbr.rel (%p481) target = $region24
        $region23: #{nn_model_nlp_forward.1} parent=11 // pred_region
          %s485 = ssub.s32 128, 128
          %486 = vsyncadd [#allocation9], %s485
          %s488 = sshll.u32 [#allocation8], 4
          %s489 = int_to_ptr.vmem [resolvable:$true] %s488
          %491 = dma.hbm_to_vmem [thread:$0]  %s4, 128, %s489, [#allocation9]
        $region24: #{nn_model_nlp_forward.1} parent=11 // pred_fallthru
          _
        // Predicated region
        $region25: #{nn_model_nlp_forward.1} parent=11 // pred_check
          %p492 = pneg %p171
        $region26: #{nn_model_nlp_forward.1} parent=11 // pred_check_branch
          %494 = sbr.rel (%p492) target = $region28
        $region27: #{nn_model_nlp_forward.1} parent=11 // pred_region
          _
        $region28: #{nn_model_nlp_forward.1} parent=11 // pred_fallthru
          _
        // Predicated region
        $region29: #{nn_model_nlp_forward.1} parent=11 // pred_check
          %p495 = pneg %p192
        $region30: #{nn_model_nlp_forward.1} parent=11 // pred_check_branch
          %497 = sbr.rel (%p495) target = $region32
        $region31: #{nn_model_nlp_forward.1} parent=11 // pred_region
          %s499 = ssub.s32 32768, 32768
          %500 = vsyncadd [#allocation9], %s499
          %s501 = sshll.u32 [#allocation10], 4
          %s502 = int_to_ptr.vmem [resolvable:$true] %s501
          %507 = dma.hbm_to_vmem [thread:$0]  %s6, 32768, %s502, [#allocation9], 512, 512, 32
        $region32: #{nn_model_nlp_forward.1} parent=11 // pred_fallthru
          _
        // Predicated region
        $region33: #{nn_model_nlp_forward.1} parent=11 // pred_check
          %p508 = pneg %p213
        $region34: #{nn_model_nlp_forward.1} parent=11 // pred_check_branch
          %510 = sbr.rel (%p508) target = $region36
        $region35: #{nn_model_nlp_forward.1} parent=11 // pred_region
          %s512 = ssub.s32 128, 128
          %513 = vsyncadd [#allocation12], %s512
          %s515 = sshll.u32 [#allocation11], 4
          %s516 = int_to_ptr.vmem [resolvable:$true] %s515
          %518 = dma.hbm_to_vmem [thread:$0]  %s7, 128, %s516, [#allocation12]
        $region36: #{nn_model_nlp_forward.1} parent=11 // pred_fallthru
          _
        // Predicated region
        $region37: #{nn_model_nlp_forward.1} parent=11 // pred_check
          %p519 = pneg %p234
        $region38: #{nn_model_nlp_forward.1} parent=11 // pred_check_branch
          %521 = sbr.rel (%p519) target = $region40
        $region39: #{nn_model_nlp_forward.1} parent=11 // pred_region
          %s523 = ssub.s32 65536, 65536
          %524 = vsyncadd [#allocation12], %s523
          %s525 = sshll.u32 [#allocation13], 4
          %s526 = int_to_ptr.vmem [resolvable:$true] %s525
          %531 = dma.hbm_to_vmem [thread:$0]  %s8, 65536, %s526, [#allocation12], 512, 512, 32
        $region40: #{nn_model_nlp_forward.1} parent=11 // pred_fallthru
          _
        // Predicated region
        $region41: #{nn_model_nlp_forward.1} parent=11 // pred_check
          %p532 = pneg %p255
        $region42: #{nn_model_nlp_forward.1} parent=11 // pred_check_branch
          %534 = sbr.rel (%p532) target = $region44
        $region43: #{nn_model_nlp_forward.1} parent=11 // pred_region
          %s536 = ssub.s32 128, 128
          %537 = vsyncadd [#allocation15], %s536
          %s539 = sshll.u32 [#allocation14], 4
          %s540 = int_to_ptr.vmem [resolvable:$true] %s539
          %542 = dma.hbm_to_vmem [thread:$0]  %s9, 128, %s540, [#allocation15]
        $region44: #{nn_model_nlp_forward.1} parent=11 // pred_fallthru
          _
        // Predicated region
        $region45: #{nn_model_nlp_forward.1} parent=11 // pred_check
          %p543 = pneg %p276
        $region46: #{nn_model_nlp_forward.1} parent=11 // pred_check_branch
          %545 = sbr.rel (%p543) target = $region48
        $region47: #{nn_model_nlp_forward.1} parent=11 // pred_region
          %s547 = ssub.s32 2048, 2048
          %548 = vsyncadd [#allocation15], %s547
          %s549 = sshll.u32 [#allocation16], 4
          %s550 = int_to_ptr.vmem [resolvable:$true] %s549
          %555 = dma.hbm_to_vmem [thread:$0]  %s10, 2048, %s550, [#allocation15], 64, 64, 4
        $region48: #{nn_model_nlp_forward.1} parent=11 // pred_fallthru
          _
        // Predicated region
        $region49: #{nn_model_nlp_forward.1} parent=11 // pred_check
          %p556 = pneg %p297
        $region50: #{nn_model_nlp_forward.1} parent=11 // pred_check_branch
          %558 = sbr.rel (%p556) target = $region52
        $region51: #{nn_model_nlp_forward.1} parent=11 // pred_region
          %s560 = ssub.s32 16, 16
          %561 = vsyncadd [#allocation18], %s560
          %s563 = sshll.u32 [#allocation17], 4
          %s564 = int_to_ptr.vmem [resolvable:$true] %s563
          %566 = dma.hbm_to_vmem [thread:$0]  %s11, 16, %s564, [#allocation18]
        $region52: #{nn_model_nlp_forward.1} parent=11 // pred_fallthru
          _
        // Predicated region
        $region53: #{nn_model_nlp_forward.1} parent=11 // pred_check
          %p567 = pneg %p318
        $region54: #{nn_model_nlp_forward.1} parent=11 // pred_check_branch
          %569 = sbr.rel (%p567) target = $region56
        $region55: #{nn_model_nlp_forward.1} parent=11 // pred_region
          %s571 = ssub.s32 1024, 1024
          %572 = vsyncadd [#allocation18], %s571
          %s573 = sshll.u32 [#allocation19], 4
          %s574 = int_to_ptr.vmem [resolvable:$true] %s573
          %579 = dma.hbm_to_vmem [thread:$0]  %s12, 1024, %s574, [#allocation18], 64, 64, 4
        $region56: #{nn_model_nlp_forward.1} parent=11 // pred_fallthru
          _
        // Predicated region
        $region57: #{nn_model_nlp_forward.1} parent=11 // pred_check
          %p580 = pneg %p339
        $region58: #{nn_model_nlp_forward.1} parent=11 // pred_check_branch
          %582 = sbr.rel (%p580) target = $region60
        $region59: #{nn_model_nlp_forward.1} parent=11 // pred_region
          %s584 = ssub.s32 1024, 1024
          %585 = vsyncadd [#allocation21], %s584
          %s586 = sshll.u32 [#allocation20], 4
          %s587 = int_to_ptr.vmem [resolvable:$true] %s586
          %592 = dma.hbm_to_vmem [thread:$0]  %s13, 1024, %s587, [#allocation21], 64, 64, 4
        $region60: #{nn_model_nlp_forward.1} parent=11 // pred_fallthru
          _
        // Predicated region
        $region61: #{nn_model_nlp_forward.1} parent=11 // pred_check
          %p593 = pneg %p360
        $region62: #{nn_model_nlp_forward.1} parent=11 // pred_check_branch
          %595 = sbr.rel (%p593) target = $region64
        $region63: #{nn_model_nlp_forward.1} parent=11 // pred_region
          %s597 = ssub.s32 8192, 8192
          %598 = vsyncadd [#allocation21], %s597
          %s599 = sshll.u32 [#allocation22], 4
          %s600 = int_to_ptr.vmem [resolvable:$true] %s599
          %605 = dma.hbm_to_vmem [thread:$0]  %s14, 8192, %s600, [#allocation21], 64, 64, 4
        $region64: #{nn_model_nlp_forward.1} parent=11 // pred_fallthru
          _
        // Predicated region
        $region65: #{nn_model_nlp_forward.1} parent=11 // pred_check
          %p606 = pneg %p381
        $region66: #{nn_model_nlp_forward.1} parent=11 // pred_check_branch
          %608 = sbr.rel (%p606) target = $region68
        $region67: #{nn_model_nlp_forward.1} parent=11 // pred_region
          %s610 = ssub.s32 16, 16
          %611 = vsyncadd [#allocation24], %s610
          %s613 = sshll.u32 [#allocation23], 4
          %s614 = int_to_ptr.vmem [resolvable:$true] %s613
          %616 = dma.hbm_to_vmem [thread:$0]  %s15, 16, %s614, [#allocation24]
        $region68: #{nn_model_nlp_forward.1} parent=11 // pred_fallthru
          _
        // Predicated region
        $region69: #{nn_model_nlp_forward.1} parent=11 // pred_check
          %p617 = pneg %p402
        $region70: #{nn_model_nlp_forward.1} parent=11 // pred_check_branch
          %619 = sbr.rel (%p617) target = $region72
        $region71: #{nn_model_nlp_forward.1} parent=11 // pred_region
          %s621 = ssub.s32 1024, 1024
          %622 = vsyncadd [#allocation24], %s621
          %s623 = sshll.u32 [#allocation25], 4
          %s624 = int_to_ptr.vmem [resolvable:$true] %s623
          %629 = dma.hbm_to_vmem [thread:$0]  %s16, 1024, %s624, [#allocation24], 64, 64, 4
        $region72: #{nn_model_nlp_forward.1} parent=11 // pred_fallthru
          _
        // Predicated region
        $region73: #{nn_model_nlp_forward.1} parent=11 // pred_check
          %p630 = pneg %p423
        $region74: #{nn_model_nlp_forward.1} parent=11 // pred_check_branch
          %632 = sbr.rel (%p630) target = $region76
        $region75: #{nn_model_nlp_forward.1} parent=11 // pred_region
          %s634 = ssub.s32 16, 16
          %635 = vsyncadd [#allocation27], %s634
          %s637 = sshll.u32 [#allocation26], 4
          %s638 = int_to_ptr.vmem [resolvable:$true] %s637
          %640 = dma.hbm_to_vmem [thread:$0]  %s17, 16, %s638, [#allocation27]
        $region76: #{nn_model_nlp_forward.1} parent=11 // pred_fallthru
          _
      $region12: #{nn_model_nlp_forward.1} parent=5 // pred_fallthru
        _
      %p641 = scmp.lt.s32.totalorder %s35, 3
      // Predicated region
      $region77: #{nn_model_nlp_forward.1} parent=5 // pred_check
        %p642 = pneg %p641
      $region78: #{nn_model_nlp_forward.1} parent=5 // pred_check_branch
        %644 = sbr.rel (%p642) target = $region80
      $region79: #{nn_model_nlp_forward.1} parent=5 // pred_region
        // Predicated region
        $region81: #{nn_model_nlp_forward.1} parent=79 // pred_check
          %p645 = pneg %p55
        $region82: #{nn_model_nlp_forward.1} parent=79 // pred_check_branch
          %647 = sbr.rel (%p645) target = $region84
        $region83: #{nn_model_nlp_forward.1} parent=79 // pred_region
          %s648 = smul.u32 64, %s35
          %p649 = scmp.lt.s32.totalorder %s648, 191
          %s650 = scalar_select %p649, %s648, 191
          %s651 = smul.addr %s650, 2
          %s652 = scalar_lea.vmem %s0, %s651
          %s653 = smul.u32 64, %s35
        $region84: #{nn_model_nlp_forward.1} parent=79 // pred_fallthru
          _
        // Predicated region
        $region85: #{nn_model_nlp_forward.1} parent=79 // pred_check
          %p654 = pneg %p81
        $region86: #{nn_model_nlp_forward.1} parent=79 // pred_check_branch
          %656 = sbr.rel (%p654) target = $region88
        $region87: #{nn_model_nlp_forward.1} parent=79 // pred_region
          %s657 = sand.u32 %s71, 1
          %s658 = scalar_lea.sflag [#allocation4], %s657
          %s659 = sand.u32 %s71, 1
          %s660 = smul.addr %s659, 4096
          %s661 = scalar_lea.vmem [#allocation3], %s660
          %s662 = smul.u32 256, %s35
          %s664 = ssub.s32 65536, 65536
          %665 = vsyncadd %s658, %s664
          %s666 = smul.addr %s662, 2
          %s667 = smul.addr %s666, 128
          %s668 = scalar_lea.hbm %s1, %s667
          %s669 = sshll.u32 %s661, 4
          %s670 = int_to_ptr.vmem [resolvable:$true] %s669
          %675 = dma.hbm_to_vmem [thread:$0]  %s668, 65536, %s670, %s658, 256, 256, 16
        $region88: #{nn_model_nlp_forward.1} parent=79 // pred_fallthru
          _
      $region80: #{nn_model_nlp_forward.1} parent=5 // pred_fallthru
        _
      %p676 = scmp.le.s32.totalorder 1, %s35
      %p677 = scmp.lt.s32.totalorder %s35, 4
      %p678 = pnand %p676, %p677
      %p679 = pneg %p678
      // Predicated region
      $region89: #{nn_model_nlp_forward.1} parent=5 // pred_check
        _
      $region90: #{nn_model_nlp_forward.1} parent=5 // pred_check_branch
        %681 = sbr.rel (%p678) target = $region92
      $region91: #{nn_model_nlp_forward.1} parent=5 // pred_region
        %s682 = ssub.s32 %s35, 1
        %s683 = sand.u32 %s74, 1
        %s684 = scalar_lea.sflag [#allocation4], %s683
        %s685 = sand.u32 %s74, 1
        %s686 = smul.addr %s685, 4096
        %s687 = scalar_lea.vmem [#allocation3], %s686
        // Predicated region
        $region93: #{nn_model_nlp_forward.1} parent=91 // pred_check
          %p688 = pneg %p87
        $region94: #{nn_model_nlp_forward.1} parent=91 // pred_check_branch
          %690 = sbr.rel (%p688) target = $region96
        $region95: #{nn_model_nlp_forward.1} parent=91 // pred_region
          %691 = dma.done %s684, 65536
        $region96: #{nn_model_nlp_forward.1} parent=91 // pred_fallthru
          _
        // Predicated region
        $region97: #{nn_model_nlp_forward.1} parent=91 // pred_check
          %p692 = pneg %p108
        $region98: #{nn_model_nlp_forward.1} parent=91 // pred_check_branch
          %694 = sbr.rel (%p692) target = $region100
        $region99: #{nn_model_nlp_forward.1} parent=91 // pred_region
          %695 = dma.done [#allocation6], 32
        $region100: #{nn_model_nlp_forward.1} parent=91 // pred_fallthru
          _
        // Predicated region
        $region101: #{nn_model_nlp_forward.1} parent=91 // pred_check
          %p696 = pneg %p129
        $region102: #{nn_model_nlp_forward.1} parent=91 // pred_check_branch
          %698 = sbr.rel (%p696) target = $region104
        $region103: #{nn_model_nlp_forward.1} parent=91 // pred_region
          %699 = dma.done [#allocation6], 32
        $region104: #{nn_model_nlp_forward.1} parent=91 // pred_fallthru
          _
        // Predicated region
        $region105: #{nn_model_nlp_forward.1} parent=91 // pred_check
          %p700 = pneg %p150
        $region106: #{nn_model_nlp_forward.1} parent=91 // pred_check_branch
          %702 = sbr.rel (%p700) target = $region108
        $region107: #{nn_model_nlp_forward.1} parent=91 // pred_region
          %703 = dma.done [#allocation9], 128
        $region108: #{nn_model_nlp_forward.1} parent=91 // pred_fallthru
          _
        // Predicated region
        $region109: #{nn_model_nlp_forward.1} parent=91 // pred_check
          %p704 = pneg %p192
        $region110: #{nn_model_nlp_forward.1} parent=91 // pred_check_branch
          %706 = sbr.rel (%p704) target = $region112
        $region111: #{nn_model_nlp_forward.1} parent=91 // pred_region
          %707 = dma.done [#allocation9], 32768
        $region112: #{nn_model_nlp_forward.1} parent=91 // pred_fallthru
          _
        // Predicated region
        $region113: #{nn_model_nlp_forward.1} parent=91 // pred_check
          %p708 = pneg %p213
        $region114: #{nn_model_nlp_forward.1} parent=91 // pred_check_branch
          %710 = sbr.rel (%p708) target = $region116
        $region115: #{nn_model_nlp_forward.1} parent=91 // pred_region
          %711 = dma.done [#allocation12], 128
        $region116: #{nn_model_nlp_forward.1} parent=91 // pred_fallthru
          _
        // Predicated region
        $region117: #{nn_model_nlp_forward.1} parent=91 // pred_check
          %p712 = pneg %p234
        $region118: #{nn_model_nlp_forward.1} parent=91 // pred_check_branch
          %714 = sbr.rel (%p712) target = $region120
        $region119: #{nn_model_nlp_forward.1} parent=91 // pred_region
          %715 = dma.done [#allocation12], 65536
        $region120: #{nn_model_nlp_forward.1} parent=91 // pred_fallthru
          _
        // Predicated region
        $region121: #{nn_model_nlp_forward.1} parent=91 // pred_check
          %p716 = pneg %p255
        $region122: #{nn_model_nlp_forward.1} parent=91 // pred_check_branch
          %718 = sbr.rel (%p716) target = $region124
        $region123: #{nn_model_nlp_forward.1} parent=91 // pred_region
          %719 = dma.done [#allocation15], 128
        $region124: #{nn_model_nlp_forward.1} parent=91 // pred_fallthru
          _
        // Predicated region
        $region125: #{nn_model_nlp_forward.1} parent=91 // pred_check
          %p720 = pneg %p276
        $region126: #{nn_model_nlp_forward.1} parent=91 // pred_check_branch
          %722 = sbr.rel (%p720) target = $region128
        $region127: #{nn_model_nlp_forward.1} parent=91 // pred_region
          %723 = dma.done [#allocation15], 2048
        $region128: #{nn_model_nlp_forward.1} parent=91 // pred_fallthru
          _
        // Predicated region
        $region129: #{nn_model_nlp_forward.1} parent=91 // pred_check
          %p724 = pneg %p297
        $region130: #{nn_model_nlp_forward.1} parent=91 // pred_check_branch
          %726 = sbr.rel (%p724) target = $region132
        $region131: #{nn_model_nlp_forward.1} parent=91 // pred_region
          %727 = dma.done [#allocation18], 16
        $region132: #{nn_model_nlp_forward.1} parent=91 // pred_fallthru
          _
        // Predicated region
        $region133: #{nn_model_nlp_forward.1} parent=91 // pred_check
          %p728 = pneg %p318
        $region134: #{nn_model_nlp_forward.1} parent=91 // pred_check_branch
          %730 = sbr.rel (%p728) target = $region136
        $region135: #{nn_model_nlp_forward.1} parent=91 // pred_region
          %731 = dma.done [#allocation18], 1024
        $region136: #{nn_model_nlp_forward.1} parent=91 // pred_fallthru
          _
        // Predicated region
        $region137: #{nn_model_nlp_forward.1} parent=91 // pred_check
          %p732 = pneg %p339
        $region138: #{nn_model_nlp_forward.1} parent=91 // pred_check_branch
          %734 = sbr.rel (%p732) target = $region140
        $region139: #{nn_model_nlp_forward.1} parent=91 // pred_region
          %735 = dma.done [#allocation21], 1024
        $region140: #{nn_model_nlp_forward.1} parent=91 // pred_fallthru
          _
        // Predicated region
        $region141: #{nn_model_nlp_forward.1} parent=91 // pred_check
          %p736 = pneg %p360
        $region142: #{nn_model_nlp_forward.1} parent=91 // pred_check_branch
          %738 = sbr.rel (%p736) target = $region144
        $region143: #{nn_model_nlp_forward.1} parent=91 // pred_region
          %739 = dma.done [#allocation21], 8192
        $region144: #{nn_model_nlp_forward.1} parent=91 // pred_fallthru
          _
        // Predicated region
        $region145: #{nn_model_nlp_forward.1} parent=91 // pred_check
          %p740 = pneg %p381
        $region146: #{nn_model_nlp_forward.1} parent=91 // pred_check_branch
          %742 = sbr.rel (%p740) target = $region148
        $region147: #{nn_model_nlp_forward.1} parent=91 // pred_region
          %743 = dma.done [#allocation24], 16
        $region148: #{nn_model_nlp_forward.1} parent=91 // pred_fallthru
          _
        // Predicated region
        $region149: #{nn_model_nlp_forward.1} parent=91 // pred_check
          %p744 = pneg %p402
        $region150: #{nn_model_nlp_forward.1} parent=91 // pred_check_branch
          %746 = sbr.rel (%p744) target = $region152
        $region151: #{nn_model_nlp_forward.1} parent=91 // pred_region
          %747 = dma.done [#allocation24], 1024
        $region152: #{nn_model_nlp_forward.1} parent=91 // pred_fallthru
          _
        // Predicated region
        $region153: #{nn_model_nlp_forward.1} parent=91 // pred_check
          %p748 = pneg %p423
        $region154: #{nn_model_nlp_forward.1} parent=91 // pred_check_branch
          %750 = sbr.rel (%p748) target = $region156
        $region155: #{nn_model_nlp_forward.1} parent=91 // pred_region
          %751 = dma.done [#allocation27], 16
        $region156: #{nn_model_nlp_forward.1} parent=91 // pred_fallthru
          _
        %s752 = smul.u32 64, %s40
        %p753 = scmp.lt.s32.totalorder %s752, 191
        %s754 = scalar_select %p753, %s752, 191
        %s755 = smul.addr %s754, 2
        %s756 = scalar_lea.vmem %s0, %s755
        %p757 = pneg %p61
        %p758 = pneg %p58
        %s759 = sand.u32 %s74, 1
        %s760 = scalar_lea.sflag [#allocation4], %s759
        %s761 = sand.u32 %s74, 1
        %s762 = smul.addr %s761, 4096
        %s763 = scalar_lea.vmem [#allocation3], %s762
        %p764 = pneg %p87
        %p765 = pneg %p84
        %p766 = pneg %p108
        %p767 = pneg %p105
        %p768 = pneg %p129
        %p769 = pneg %p126
        %p770 = pneg %p150
        %p771 = pneg %p147
        %p772 = pneg %p171
        %p773 = pneg %p168
        %p774 = pneg %p192
        %p775 = pneg %p189
        %p776 = pneg %p213
        %p777 = pneg %p210
        %p778 = pneg %p234
        %p779 = pneg %p231
        %p780 = pneg %p255
        %p781 = pneg %p252
        %p782 = pneg %p276
        %p783 = pneg %p273
        %p784 = pneg %p297
        %p785 = pneg %p294
        %p786 = pneg %p318
        %p787 = pneg %p315
        %p788 = pneg %p339
        %p789 = pneg %p336
        %p790 = pneg %p360
        %p791 = pneg %p357
        %p792 = pneg %p381
        %p793 = pneg %p378
        %p794 = pneg %p402
        %p795 = pneg %p399
        %p796 = pneg %p423
        %p797 = pneg %p420
        %p798 = pneg %p444
        %p799 = pneg %p441
        %s800 = smul.u32 64, %s40
        %p801 = scmp.lt.s32.totalorder %s800, 191
        %s802 = scalar_select %p801, %s800, 191
        %s803 = smul.addr %s802, 2
        %s804 = scalar_lea.vmem %s0, %s803
        %s805 = smul.u32 64, %s40
        %s806 = smul.u32 256, %s40
        %p808 = scmp.eq.s32.totalorder %s40, 0
        // Predicated region
        $region157: #{nn_model_nlp_forward.1} parent=91 // pred_check
          %p809 = pneg %p808
        $region158: #{nn_model_nlp_forward.1} parent=91 // pred_check_branch
          %811 = sbr.rel (%p809) target = $region160
        $region159: #{nn_model_nlp_forward.1} parent=91 // pred_region
          %812 = vst [vmem:[#allocation2] sm:$0xf] 0.0
        $region160: #{nn_model_nlp_forward.1} parent=91 // pred_fallthru
          _
        %v813 = vld [vmem:[#allocation2] sm:$0xf]
        %v814 = vld [vmem:[%s804] sm:$0xff]
        %v815 = vld [vmem:[%s804 + $0x8] sm:$0xff]
        %v816 = vld [vmem:[%s804 + $0x10] sm:$0xff]
        %v817 = vld [vmem:[%s804 + $0x18] sm:$0xff]
        %v818 = vld [vmem:[%s804 + $0x20] sm:$0xff]
        %v819 = vld [vmem:[%s804 + $0x28] sm:$0xff]
        %v820 = vld [vmem:[%s804 + $0x30] sm:$0xff]
        %v821 = vld [vmem:[%s804 + $0x38] sm:$0xff]
        %v822 = vld [vmem:[%s804 + $0x40] sm:$0xff]
        %v823 = vld [vmem:[%s804 + $0x48] sm:$0xff]
        %v824 = vld [vmem:[%s804 + $0x50] sm:$0xff]
        %v825 = vld [vmem:[%s804 + $0x58] sm:$0xff]
        %v826 = vld [vmem:[%s804 + $0x60] sm:$0xff]
        %v827 = vld [vmem:[%s804 + $0x68] sm:$0xff]
        %v828 = vld [vmem:[%s804 + $0x70] sm:$0xff]
        %v829 = vld [vmem:[%s804 + $0x78] sm:$0xff]
        %v846 = vcombine.high %v814, %v814
        %v848 = vunpack.c.l.s4 1983009808
        %v849 = vunpack.c.0.s8 %v848
        %v850 = vlaneseq
        %v851 = vshrl.u32 %v850, 7
        %v852 = vsub.s32 %v849, %v851
        %v853 = vrot.slane %v814, %v852
        %v855 = vunpack.c.l.s4 1983009808
        %v856 = vunpack.c.0.s8 %v855
        %v857 = vlaneseq
        %v858 = vshrl.u32 %v857, 7
        %v859 = vsub.s32 %v856, %v858
        %v860 = vrot.slane %v846, %v859
        %v861 = vcombine.high %v853, %v853
        %v862 = vcombine.high %v860, %v860
        %v863 = vcombine.high %v815, %v815
        %v865 = vunpack.c.l.s4 1983009808
        %v866 = vunpack.c.0.s8 %v865
        %v867 = vlaneseq
        %v868 = vshrl.u32 %v867, 7
        %v869 = vsub.s32 %v866, %v868
        %v870 = vrot.slane %v815, %v869
        %v872 = vunpack.c.l.s4 1983009808
        %v873 = vunpack.c.0.s8 %v872
        %v874 = vlaneseq
        %v875 = vshrl.u32 %v874, 7
        %v876 = vsub.s32 %v873, %v875
        %v877 = vrot.slane %v863, %v876
        %v878 = vcombine.high %v870, %v870
        %v879 = vcombine.high %v877, %v877
        %v880 = vcombine.high %v816, %v816
        %v882 = vunpack.c.l.s4 1983009808
        %v883 = vunpack.c.0.s8 %v882
        %v884 = vlaneseq
        %v885 = vshrl.u32 %v884, 7
        %v886 = vsub.s32 %v883, %v885
        %v887 = vrot.slane %v816, %v886
        %v889 = vunpack.c.l.s4 1983009808
        %v890 = vunpack.c.0.s8 %v889
        %v891 = vlaneseq
        %v892 = vshrl.u32 %v891, 7
        %v893 = vsub.s32 %v890, %v892
        %v894 = vrot.slane %v880, %v893
        %v895 = vcombine.high %v887, %v887
        %v896 = vcombine.high %v894, %v894
        %v897 = vcombine.high %v817, %v817
        %v899 = vunpack.c.l.s4 1983009808
        %v900 = vunpack.c.0.s8 %v899
        %v901 = vlaneseq
        %v902 = vshrl.u32 %v901, 7
        %v903 = vsub.s32 %v900, %v902
        %v904 = vrot.slane %v817, %v903
        %v906 = vunpack.c.l.s4 1983009808
        %v907 = vunpack.c.0.s8 %v906
        %v908 = vlaneseq
        %v909 = vshrl.u32 %v908, 7
        %v910 = vsub.s32 %v907, %v909
        %v911 = vrot.slane %v897, %v910
        %v912 = vcombine.high %v904, %v904
        %v913 = vcombine.high %v911, %v911
        %v914 = vcombine.high %v818, %v818
        %v916 = vunpack.c.l.s4 1983009808
        %v917 = vunpack.c.0.s8 %v916
        %v918 = vlaneseq
        %v919 = vshrl.u32 %v918, 7
        %v920 = vsub.s32 %v917, %v919
        %v921 = vrot.slane %v818, %v920
        %v923 = vunpack.c.l.s4 1983009808
        %v924 = vunpack.c.0.s8 %v923
        %v925 = vlaneseq
        %v926 = vshrl.u32 %v925, 7
        %v927 = vsub.s32 %v924, %v926
        %v928 = vrot.slane %v914, %v927
        %v929 = vcombine.high %v921, %v921
        %v930 = vcombine.high %v928, %v928
        %v931 = vcombine.high %v819, %v819
        %v933 = vunpack.c.l.s4 1983009808
        %v934 = vunpack.c.0.s8 %v933
        %v935 = vlaneseq
        %v936 = vshrl.u32 %v935, 7
        %v937 = vsub.s32 %v934, %v936
        %v938 = vrot.slane %v819, %v937
        %v940 = vunpack.c.l.s4 1983009808
        %v941 = vunpack.c.0.s8 %v940
        %v942 = vlaneseq
        %v943 = vshrl.u32 %v942, 7
        %v944 = vsub.s32 %v941, %v943
        %v945 = vrot.slane %v931, %v944
        %v946 = vcombine.high %v938, %v938
        %v947 = vcombine.high %v945, %v945
        %v948 = vcombine.high %v820, %v820
        %v950 = vunpack.c.l.s4 1983009808
        %v951 = vunpack.c.0.s8 %v950
        %v952 = vlaneseq
        %v953 = vshrl.u32 %v952, 7
        %v954 = vsub.s32 %v951, %v953
        %v955 = vrot.slane %v820, %v954
        %v957 = vunpack.c.l.s4 1983009808
        %v958 = vunpack.c.0.s8 %v957
        %v959 = vlaneseq
        %v960 = vshrl.u32 %v959, 7
        %v961 = vsub.s32 %v958, %v960
        %v962 = vrot.slane %v948, %v961
        %v963 = vcombine.high %v955, %v955
        %v964 = vcombine.high %v962, %v962
        %v965 = vcombine.high %v821, %v821
        %v967 = vunpack.c.l.s4 1983009808
        %v968 = vunpack.c.0.s8 %v967
        %v969 = vlaneseq
        %v970 = vshrl.u32 %v969, 7
        %v971 = vsub.s32 %v968, %v970
        %v972 = vrot.slane %v821, %v971
        %v974 = vunpack.c.l.s4 1983009808
        %v975 = vunpack.c.0.s8 %v974
        %v976 = vlaneseq
        %v977 = vshrl.u32 %v976, 7
        %v978 = vsub.s32 %v975, %v977
        %v979 = vrot.slane %v965, %v978
        %v980 = vcombine.high %v972, %v972
        %v981 = vcombine.high %v979, %v979
        %v982 = vcombine.high %v822, %v822
        %v984 = vunpack.c.l.s4 1983009808
        %v985 = vunpack.c.0.s8 %v984
        %v986 = vlaneseq
        %v987 = vshrl.u32 %v986, 7
        %v988 = vsub.s32 %v985, %v987
        %v989 = vrot.slane %v822, %v988
        %v991 = vunpack.c.l.s4 1983009808
        %v992 = vunpack.c.0.s8 %v991
        %v993 = vlaneseq
        %v994 = vshrl.u32 %v993, 7
        %v995 = vsub.s32 %v992, %v994
        %v996 = vrot.slane %v982, %v995
        %v997 = vcombine.high %v989, %v989
        %v998 = vcombine.high %v996, %v996
        %v999 = vcombine.high %v823, %v823
        %v1001 = vunpack.c.l.s4 1983009808
        %v1002 = vunpack.c.0.s8 %v1001
        %v1003 = vlaneseq
        %v1004 = vshrl.u32 %v1003, 7
        %v1005 = vsub.s32 %v1002, %v1004
        %v1006 = vrot.slane %v823, %v1005
        %v1008 = vunpack.c.l.s4 1983009808
        %v1009 = vunpack.c.0.s8 %v1008
        %v1010 = vlaneseq
        %v1011 = vshrl.u32 %v1010, 7
        %v1012 = vsub.s32 %v1009, %v1011
        %v1013 = vrot.slane %v999, %v1012
        %v1014 = vcombine.high %v1006, %v1006
        %v1015 = vcombine.high %v1013, %v1013
        %v1016 = vcombine.high %v824, %v824
        %v1018 = vunpack.c.l.s4 1983009808
        %v1019 = vunpack.c.0.s8 %v1018
        %v1020 = vlaneseq
        %v1021 = vshrl.u32 %v1020, 7
        %v1022 = vsub.s32 %v1019, %v1021
        %v1023 = vrot.slane %v824, %v1022
        %v1025 = vunpack.c.l.s4 1983009808
        %v1026 = vunpack.c.0.s8 %v1025
        %v1027 = vlaneseq
        %v1028 = vshrl.u32 %v1027, 7
        %v1029 = vsub.s32 %v1026, %v1028
        %v1030 = vrot.slane %v1016, %v1029
        %v1031 = vcombine.high %v1023, %v1023
        %v1032 = vcombine.high %v1030, %v1030
        %v1033 = vcombine.high %v825, %v825
        %v1035 = vunpack.c.l.s4 1983009808
        %v1036 = vunpack.c.0.s8 %v1035
        %v1037 = vlaneseq
        %v1038 = vshrl.u32 %v1037, 7
        %v1039 = vsub.s32 %v1036, %v1038
        %v1040 = vrot.slane %v825, %v1039
        %v1042 = vunpack.c.l.s4 1983009808
        %v1043 = vunpack.c.0.s8 %v1042
        %v1044 = vlaneseq
        %v1045 = vshrl.u32 %v1044, 7
        %v1046 = vsub.s32 %v1043, %v1045
        %v1047 = vrot.slane %v1033, %v1046
        %v1048 = vcombine.high %v1040, %v1040
        %v1049 = vcombine.high %v1047, %v1047
        %v1050 = vcombine.high %v826, %v826
        %v1052 = vunpack.c.l.s4 1983009808
        %v1053 = vunpack.c.0.s8 %v1052
        %v1054 = vlaneseq
        %v1055 = vshrl.u32 %v1054, 7
        %v1056 = vsub.s32 %v1053, %v1055
        %v1057 = vrot.slane %v826, %v1056
        %v1059 = vunpack.c.l.s4 1983009808
        %v1060 = vunpack.c.0.s8 %v1059
        %v1061 = vlaneseq
        %v1062 = vshrl.u32 %v1061, 7
        %v1063 = vsub.s32 %v1060, %v1062
        %v1064 = vrot.slane %v1050, %v1063
        %v1065 = vcombine.high %v1057, %v1057
        %v1066 = vcombine.high %v1064, %v1064
        %v1067 = vcombine.high %v827, %v827
        %v1069 = vunpack.c.l.s4 1983009808
        %v1070 = vunpack.c.0.s8 %v1069
        %v1071 = vlaneseq
        %v1072 = vshrl.u32 %v1071, 7
        %v1073 = vsub.s32 %v1070, %v1072
        %v1074 = vrot.slane %v827, %v1073
        %v1076 = vunpack.c.l.s4 1983009808
        %v1077 = vunpack.c.0.s8 %v1076
        %v1078 = vlaneseq
        %v1079 = vshrl.u32 %v1078, 7
        %v1080 = vsub.s32 %v1077, %v1079
        %v1081 = vrot.slane %v1067, %v1080
        %v1082 = vcombine.high %v1074, %v1074
        %v1083 = vcombine.high %v1081, %v1081
        %v1084 = vcombine.high %v828, %v828
        %v1086 = vunpack.c.l.s4 1983009808
        %v1087 = vunpack.c.0.s8 %v1086
        %v1088 = vlaneseq
        %v1089 = vshrl.u32 %v1088, 7
        %v1090 = vsub.s32 %v1087, %v1089
        %v1091 = vrot.slane %v828, %v1090
        %v1093 = vunpack.c.l.s4 1983009808
        %v1094 = vunpack.c.0.s8 %v1093
        %v1095 = vlaneseq
        %v1096 = vshrl.u32 %v1095, 7
        %v1097 = vsub.s32 %v1094, %v1096
        %v1098 = vrot.slane %v1084, %v1097
        %v1099 = vcombine.high %v1091, %v1091
        %v1100 = vcombine.high %v1098, %v1098
        %v1101 = vcombine.high %v829, %v829
        %v1103 = vunpack.c.l.s4 1983009808
        %v1104 = vunpack.c.0.s8 %v1103
        %v1105 = vlaneseq
        %v1106 = vshrl.u32 %v1105, 7
        %v1107 = vsub.s32 %v1104, %v1106
        %v1108 = vrot.slane %v829, %v1107
        %v1110 = vunpack.c.l.s4 1983009808
        %v1111 = vunpack.c.0.s8 %v1110
        %v1112 = vlaneseq
        %v1113 = vshrl.u32 %v1112, 7
        %v1114 = vsub.s32 %v1111, %v1113
        %v1115 = vrot.slane %v1101, %v1114
        %v1116 = vcombine.high %v1108, %v1108
        %v1117 = vcombine.high %v1115, %v1115
        %v1182 = vpack.c.bf16 %v853, %v853
        %v1183 = vpack.c.bf16 %v861, %v861
        %v1184 = vpack.c.bf16 %v860, %v860
        %v1185 = vpack.c.bf16 %v862, %v862
        %v1186 = vpack.c.bf16 %v870, %v870
        %v1187 = vpack.c.bf16 %v878, %v878
        %v1188 = vpack.c.bf16 %v877, %v877
        %v1189 = vpack.c.bf16 %v879, %v879
        %v1190 = vpack.c.bf16 %v887, %v887
        %v1191 = vpack.c.bf16 %v895, %v895
        %v1192 = vpack.c.bf16 %v894, %v894
        %v1193 = vpack.c.bf16 %v896, %v896
        %v1194 = vpack.c.bf16 %v904, %v904
        %v1195 = vpack.c.bf16 %v912, %v912
        %v1196 = vpack.c.bf16 %v911, %v911
        %v1197 = vpack.c.bf16 %v913, %v913
        %v1198 = vpack.c.bf16 %v921, %v921
        %v1199 = vpack.c.bf16 %v929, %v929
        %v1200 = vpack.c.bf16 %v928, %v928
        %v1201 = vpack.c.bf16 %v930, %v930
        %v1202 = vpack.c.bf16 %v938, %v938
        %v1203 = vpack.c.bf16 %v946, %v946
        %v1204 = vpack.c.bf16 %v945, %v945
        %v1205 = vpack.c.bf16 %v947, %v947
        %v1206 = vpack.c.bf16 %v955, %v955
        %v1207 = vpack.c.bf16 %v963, %v963
        %v1208 = vpack.c.bf16 %v962, %v962
        %v1209 = vpack.c.bf16 %v964, %v964
        %v1210 = vpack.c.bf16 %v972, %v972
        %v1211 = vpack.c.bf16 %v980, %v980
        %v1212 = vpack.c.bf16 %v979, %v979
        %v1213 = vpack.c.bf16 %v981, %v981
        %v1214 = vpack.c.bf16 %v989, %v989
        %v1215 = vpack.c.bf16 %v997, %v997
        %v1216 = vpack.c.bf16 %v996, %v996
        %v1217 = vpack.c.bf16 %v998, %v998
        %v1218 = vpack.c.bf16 %v1006, %v1006
        %v1219 = vpack.c.bf16 %v1014, %v1014
        %v1220 = vpack.c.bf16 %v1013, %v1013
        %v1221 = vpack.c.bf16 %v1015, %v1015
        %v1222 = vpack.c.bf16 %v1023, %v1023
        %v1223 = vpack.c.bf16 %v1031, %v1031
        %v1224 = vpack.c.bf16 %v1030, %v1030
        %v1225 = vpack.c.bf16 %v1032, %v1032
        %v1226 = vpack.c.bf16 %v1040, %v1040
        %v1227 = vpack.c.bf16 %v1048, %v1048
        %v1228 = vpack.c.bf16 %v1047, %v1047
        %v1229 = vpack.c.bf16 %v1049, %v1049
        %v1230 = vpack.c.bf16 %v1057, %v1057
        %v1231 = vpack.c.bf16 %v1065, %v1065
        %v1232 = vpack.c.bf16 %v1064, %v1064
        %v1233 = vpack.c.bf16 %v1066, %v1066
        %v1234 = vpack.c.bf16 %v1074, %v1074
        %v1235 = vpack.c.bf16 %v1082, %v1082
        %v1236 = vpack.c.bf16 %v1081, %v1081
        %v1237 = vpack.c.bf16 %v1083, %v1083
        %v1238 = vpack.c.bf16 %v1091, %v1091
        %v1239 = vpack.c.bf16 %v1099, %v1099
        %v1240 = vpack.c.bf16 %v1098, %v1098
        %v1241 = vpack.c.bf16 %v1100, %v1100
        %v1242 = vpack.c.bf16 %v1108, %v1108
        %v1243 = vpack.c.bf16 %v1116, %v1116
        %v1244 = vpack.c.bf16 %v1115, %v1115
        %v1245 = vpack.c.bf16 %v1117, %v1117
        %v1246 = vld [vmem:[%s687] sm:$0xff]
        %v1247 = vld [vmem:[%s687 + $0x8] sm:$0xff]
        %v1248 = vld [vmem:[%s687 + $0x10] sm:$0xff]
        %v1249 = vld [vmem:[%s687 + $0x18] sm:$0xff]
        %v1250 = vld [vmem:[%s687 + $0x20] sm:$0xff]
        %v1251 = vld [vmem:[%s687 + $0x28] sm:$0xff]
        %v1252 = vld [vmem:[%s687 + $0x30] sm:$0xff]
        %v1253 = vld [vmem:[%s687 + $0x38] sm:$0xff]
        %v1254 = vld [vmem:[%s687 + $0x40] sm:$0xff]
        %v1255 = vld [vmem:[%s687 + $0x48] sm:$0xff]
        %v1256 = vld [vmem:[%s687 + $0x50] sm:$0xff]
        %v1257 = vld [vmem:[%s687 + $0x58] sm:$0xff]
        %v1258 = vld [vmem:[%s687 + $0x60] sm:$0xff]
        %v1259 = vld [vmem:[%s687 + $0x68] sm:$0xff]
        %v1260 = vld [vmem:[%s687 + $0x70] sm:$0xff]
        %v1261 = vld [vmem:[%s687 + $0x78] sm:$0xff]
        %v1262 = vld [vmem:[%s687 + $0x80] sm:$0xff]
        %v1263 = vld [vmem:[%s687 + $0x88] sm:$0xff]
        %v1264 = vld [vmem:[%s687 + $0x90] sm:$0xff]
        %v1265 = vld [vmem:[%s687 + $0x98] sm:$0xff]
        %v1266 = vld [vmem:[%s687 + $0xa0] sm:$0xff]
        %v1267 = vld [vmem:[%s687 + $0xa8] sm:$0xff]
        %v1268 = vld [vmem:[%s687 + $0xb0] sm:$0xff]
        %v1269 = vld [vmem:[%s687 + $0xb8] sm:$0xff]
        %v1270 = vld [vmem:[%s687 + $0xc0] sm:$0xff]
        %v1271 = vld [vmem:[%s687 + $0xc8] sm:$0xff]
        %v1272 = vld [vmem:[%s687 + $0xd0] sm:$0xff]
        %v1273 = vld [vmem:[%s687 + $0xd8] sm:$0xff]
        %v1274 = vld [vmem:[%s687 + $0xe0] sm:$0xff]
        %v1275 = vld [vmem:[%s687 + $0xe8] sm:$0xff]
        %v1276 = vld [vmem:[%s687 + $0xf0] sm:$0xff]
        %v1277 = vld [vmem:[%s687 + $0xf8] sm:$0xff]
        %v1278 = vld [vmem:[%s687 + $0x100] sm:$0xff]
        %v1279 = vld [vmem:[%s687 + $0x108] sm:$0xff]
        %v1280 = vld [vmem:[%s687 + $0x110] sm:$0xff]
        %v1281 = vld [vmem:[%s687 + $0x118] sm:$0xff]
        %v1282 = vld [vmem:[%s687 + $0x120] sm:$0xff]
        %v1283 = vld [vmem:[%s687 + $0x128] sm:$0xff]
        %v1284 = vld [vmem:[%s687 + $0x130] sm:$0xff]
        %v1285 = vld [vmem:[%s687 + $0x138] sm:$0xff]
        %v1286 = vld [vmem:[%s687 + $0x140] sm:$0xff]
        %v1287 = vld [vmem:[%s687 + $0x148] sm:$0xff]
        %v1288 = vld [vmem:[%s687 + $0x150] sm:$0xff]
        %v1289 = vld [vmem:[%s687 + $0x158] sm:$0xff]
        %v1290 = vld [vmem:[%s687 + $0x160] sm:$0xff]
        %v1291 = vld [vmem:[%s687 + $0x168] sm:$0xff]
        %v1292 = vld [vmem:[%s687 + $0x170] sm:$0xff]
        %v1293 = vld [vmem:[%s687 + $0x178] sm:$0xff]
        %v1294 = vld [vmem:[%s687 + $0x180] sm:$0xff]
        %v1295 = vld [vmem:[%s687 + $0x188] sm:$0xff]
        %v1296 = vld [vmem:[%s687 + $0x190] sm:$0xff]
        %v1297 = vld [vmem:[%s687 + $0x198] sm:$0xff]
        %v1298 = vld [vmem:[%s687 + $0x1a0] sm:$0xff]
        %v1299 = vld [vmem:[%s687 + $0x1a8] sm:$0xff]
        %v1300 = vld [vmem:[%s687 + $0x1b0] sm:$0xff]
        %v1301 = vld [vmem:[%s687 + $0x1b8] sm:$0xff]
        %v1302 = vld [vmem:[%s687 + $0x1c0] sm:$0xff]
        %v1303 = vld [vmem:[%s687 + $0x1c8] sm:$0xff]
        %v1304 = vld [vmem:[%s687 + $0x1d0] sm:$0xff]
        %v1305 = vld [vmem:[%s687 + $0x1d8] sm:$0xff]
        %v1306 = vld [vmem:[%s687 + $0x1e0] sm:$0xff]
        %v1307 = vld [vmem:[%s687 + $0x1e8] sm:$0xff]
        %v1308 = vld [vmem:[%s687 + $0x1f0] sm:$0xff]
        %v1309 = vld [vmem:[%s687 + $0x1f8] sm:$0xff]
        %v1310 = vld [vmem:[%s687 + $0x200] sm:$0xff]
        %v1311 = vld [vmem:[%s687 + $0x208] sm:$0xff]
        %v1312 = vld [vmem:[%s687 + $0x210] sm:$0xff]
        %v1313 = vld [vmem:[%s687 + $0x218] sm:$0xff]
        %v1314 = vld [vmem:[%s687 + $0x220] sm:$0xff]
        %v1315 = vld [vmem:[%s687 + $0x228] sm:$0xff]
        %v1316 = vld [vmem:[%s687 + $0x230] sm:$0xff]
        %v1317 = vld [vmem:[%s687 + $0x238] sm:$0xff]
        %v1318 = vld [vmem:[%s687 + $0x240] sm:$0xff]
        %v1319 = vld [vmem:[%s687 + $0x248] sm:$0xff]
        %v1320 = vld [vmem:[%s687 + $0x250] sm:$0xff]
        %v1321 = vld [vmem:[%s687 + $0x258] sm:$0xff]
        %v1322 = vld [vmem:[%s687 + $0x260] sm:$0xff]
        %v1323 = vld [vmem:[%s687 + $0x268] sm:$0xff]
        %v1324 = vld [vmem:[%s687 + $0x270] sm:$0xff]
        %v1325 = vld [vmem:[%s687 + $0x278] sm:$0xff]
        %v1326 = vld [vmem:[%s687 + $0x280] sm:$0xff]
        %v1327 = vld [vmem:[%s687 + $0x288] sm:$0xff]
        %v1328 = vld [vmem:[%s687 + $0x290] sm:$0xff]
        %v1329 = vld [vmem:[%s687 + $0x298] sm:$0xff]
        %v1330 = vld [vmem:[%s687 + $0x2a0] sm:$0xff]
        %v1331 = vld [vmem:[%s687 + $0x2a8] sm:$0xff]
        %v1332 = vld [vmem:[%s687 + $0x2b0] sm:$0xff]
        %v1333 = vld [vmem:[%s687 + $0x2b8] sm:$0xff]
        %v1334 = vld [vmem:[%s687 + $0x2c0] sm:$0xff]
        %v1335 = vld [vmem:[%s687 + $0x2c8] sm:$0xff]
        %v1336 = vld [vmem:[%s687 + $0x2d0] sm:$0xff]
        %v1337 = vld [vmem:[%s687 + $0x2d8] sm:$0xff]
        %v1338 = vld [vmem:[%s687 + $0x2e0] sm:$0xff]
        %v1339 = vld [vmem:[%s687 + $0x2e8] sm:$0xff]
        %v1340 = vld [vmem:[%s687 + $0x2f0] sm:$0xff]
        %v1341 = vld [vmem:[%s687 + $0x2f8] sm:$0xff]
        %v1342 = vld [vmem:[%s687 + $0x300] sm:$0xff]
        %v1343 = vld [vmem:[%s687 + $0x308] sm:$0xff]
        %v1344 = vld [vmem:[%s687 + $0x310] sm:$0xff]
        %v1345 = vld [vmem:[%s687 + $0x318] sm:$0xff]
        %v1346 = vld [vmem:[%s687 + $0x320] sm:$0xff]
        %v1347 = vld [vmem:[%s687 + $0x328] sm:$0xff]
        %v1348 = vld [vmem:[%s687 + $0x330] sm:$0xff]
        %v1349 = vld [vmem:[%s687 + $0x338] sm:$0xff]
        %v1350 = vld [vmem:[%s687 + $0x340] sm:$0xff]
        %v1351 = vld [vmem:[%s687 + $0x348] sm:$0xff]
        %v1352 = vld [vmem:[%s687 + $0x350] sm:$0xff]
        %v1353 = vld [vmem:[%s687 + $0x358] sm:$0xff]
        %v1354 = vld [vmem:[%s687 + $0x360] sm:$0xff]
        %v1355 = vld [vmem:[%s687 + $0x368] sm:$0xff]
        %v1356 = vld [vmem:[%s687 + $0x370] sm:$0xff]
        %v1357 = vld [vmem:[%s687 + $0x378] sm:$0xff]
        %v1358 = vld [vmem:[%s687 + $0x380] sm:$0xff]
        %v1359 = vld [vmem:[%s687 + $0x388] sm:$0xff]
        %v1360 = vld [vmem:[%s687 + $0x390] sm:$0xff]
        %v1361 = vld [vmem:[%s687 + $0x398] sm:$0xff]
        %v1362 = vld [vmem:[%s687 + $0x3a0] sm:$0xff]
        %v1363 = vld [vmem:[%s687 + $0x3a8] sm:$0xff]
        %v1364 = vld [vmem:[%s687 + $0x3b0] sm:$0xff]
        %v1365 = vld [vmem:[%s687 + $0x3b8] sm:$0xff]
        %v1366 = vld [vmem:[%s687 + $0x3c0] sm:$0xff]
        %v1367 = vld [vmem:[%s687 + $0x3c8] sm:$0xff]
        %v1368 = vld [vmem:[%s687 + $0x3d0] sm:$0xff]
        %v1369 = vld [vmem:[%s687 + $0x3d8] sm:$0xff]
        %v1370 = vld [vmem:[%s687 + $0x3e0] sm:$0xff]
        %v1371 = vld [vmem:[%s687 + $0x3e8] sm:$0xff]
        %v1372 = vld [vmem:[%s687 + $0x3f0] sm:$0xff]
        %v1373 = vld [vmem:[%s687 + $0x3f8] sm:$0xff]
        %v1374 = vld [vmem:[%s687 + $0x400] sm:$0xff]
        %v1375 = vld [vmem:[%s687 + $0x408] sm:$0xff]
        %v1376 = vld [vmem:[%s687 + $0x410] sm:$0xff]
        %v1377 = vld [vmem:[%s687 + $0x418] sm:$0xff]
        %v1378 = vld [vmem:[%s687 + $0x420] sm:$0xff]
        %v1379 = vld [vmem:[%s687 + $0x428] sm:$0xff]
        %v1380 = vld [vmem:[%s687 + $0x430] sm:$0xff]
        %v1381 = vld [vmem:[%s687 + $0x438] sm:$0xff]
        %v1382 = vld [vmem:[%s687 + $0x440] sm:$0xff]
        %v1383 = vld [vmem:[%s687 + $0x448] sm:$0xff]
        %v1384 = vld [vmem:[%s687 + $0x450] sm:$0xff]
        %v1385 = vld [vmem:[%s687 + $0x458] sm:$0xff]
        %v1386 = vld [vmem:[%s687 + $0x460] sm:$0xff]
        %v1387 = vld [vmem:[%s687 + $0x468] sm:$0xff]
        %v1388 = vld [vmem:[%s687 + $0x470] sm:$0xff]
        %v1389 = vld [vmem:[%s687 + $0x478] sm:$0xff]
        %v1390 = vld [vmem:[%s687 + $0x480] sm:$0xff]
        %v1391 = vld [vmem:[%s687 + $0x488] sm:$0xff]
        %v1392 = vld [vmem:[%s687 + $0x490] sm:$0xff]
        %v1393 = vld [vmem:[%s687 + $0x498] sm:$0xff]
        %v1394 = vld [vmem:[%s687 + $0x4a0] sm:$0xff]
        %v1395 = vld [vmem:[%s687 + $0x4a8] sm:$0xff]
        %v1396 = vld [vmem:[%s687 + $0x4b0] sm:$0xff]
        %v1397 = vld [vmem:[%s687 + $0x4b8] sm:$0xff]
        %v1398 = vld [vmem:[%s687 + $0x4c0] sm:$0xff]
        %v1399 = vld [vmem:[%s687 + $0x4c8] sm:$0xff]
        %v1400 = vld [vmem:[%s687 + $0x4d0] sm:$0xff]
        %v1401 = vld [vmem:[%s687 + $0x4d8] sm:$0xff]
        %v1402 = vld [vmem:[%s687 + $0x4e0] sm:$0xff]
        %v1403 = vld [vmem:[%s687 + $0x4e8] sm:$0xff]
        %v1404 = vld [vmem:[%s687 + $0x4f0] sm:$0xff]
        %v1405 = vld [vmem:[%s687 + $0x4f8] sm:$0xff]
        %v1406 = vld [vmem:[%s687 + $0x500] sm:$0xff]
        %v1407 = vld [vmem:[%s687 + $0x508] sm:$0xff]
        %v1408 = vld [vmem:[%s687 + $0x510] sm:$0xff]
        %v1409 = vld [vmem:[%s687 + $0x518] sm:$0xff]
        %v1410 = vld [vmem:[%s687 + $0x520] sm:$0xff]
        %v1411 = vld [vmem:[%s687 + $0x528] sm:$0xff]
        %v1412 = vld [vmem:[%s687 + $0x530] sm:$0xff]
        %v1413 = vld [vmem:[%s687 + $0x538] sm:$0xff]
        %v1414 = vld [vmem:[%s687 + $0x540] sm:$0xff]
        %v1415 = vld [vmem:[%s687 + $0x548] sm:$0xff]
        %v1416 = vld [vmem:[%s687 + $0x550] sm:$0xff]
        %v1417 = vld [vmem:[%s687 + $0x558] sm:$0xff]
        %v1418 = vld [vmem:[%s687 + $0x560] sm:$0xff]
        %v1419 = vld [vmem:[%s687 + $0x568] sm:$0xff]
        %v1420 = vld [vmem:[%s687 + $0x570] sm:$0xff]
        %v1421 = vld [vmem:[%s687 + $0x578] sm:$0xff]
        %v1422 = vld [vmem:[%s687 + $0x580] sm:$0xff]
        %v1423 = vld [vmem:[%s687 + $0x588] sm:$0xff]
        %v1424 = vld [vmem:[%s687 + $0x590] sm:$0xff]
        %v1425 = vld [vmem:[%s687 + $0x598] sm:$0xff]
        %v1426 = vld [vmem:[%s687 + $0x5a0] sm:$0xff]
        %v1427 = vld [vmem:[%s687 + $0x5a8] sm:$0xff]
        %v1428 = vld [vmem:[%s687 + $0x5b0] sm:$0xff]
        %v1429 = vld [vmem:[%s687 + $0x5b8] sm:$0xff]
        %v1430 = vld [vmem:[%s687 + $0x5c0] sm:$0xff]
        %v1431 = vld [vmem:[%s687 + $0x5c8] sm:$0xff]
        %v1432 = vld [vmem:[%s687 + $0x5d0] sm:$0xff]
        %v1433 = vld [vmem:[%s687 + $0x5d8] sm:$0xff]
        %v1434 = vld [vmem:[%s687 + $0x5e0] sm:$0xff]
        %v1435 = vld [vmem:[%s687 + $0x5e8] sm:$0xff]
        %v1436 = vld [vmem:[%s687 + $0x5f0] sm:$0xff]
        %v1437 = vld [vmem:[%s687 + $0x5f8] sm:$0xff]
        %v1438 = vld [vmem:[%s687 + $0x600] sm:$0xff]
        %v1439 = vld [vmem:[%s687 + $0x608] sm:$0xff]
        %v1440 = vld [vmem:[%s687 + $0x610] sm:$0xff]
        %v1441 = vld [vmem:[%s687 + $0x618] sm:$0xff]
        %v1442 = vld [vmem:[%s687 + $0x620] sm:$0xff]
        %v1443 = vld [vmem:[%s687 + $0x628] sm:$0xff]
        %v1444 = vld [vmem:[%s687 + $0x630] sm:$0xff]
        %v1445 = vld [vmem:[%s687 + $0x638] sm:$0xff]
        %v1446 = vld [vmem:[%s687 + $0x640] sm:$0xff]
        %v1447 = vld [vmem:[%s687 + $0x648] sm:$0xff]
        %v1448 = vld [vmem:[%s687 + $0x650] sm:$0xff]
        %v1449 = vld [vmem:[%s687 + $0x658] sm:$0xff]
        %v1450 = vld [vmem:[%s687 + $0x660] sm:$0xff]
        %v1451 = vld [vmem:[%s687 + $0x668] sm:$0xff]
        %v1452 = vld [vmem:[%s687 + $0x670] sm:$0xff]
        %v1453 = vld [vmem:[%s687 + $0x678] sm:$0xff]
        %v1454 = vld [vmem:[%s687 + $0x680] sm:$0xff]
        %v1455 = vld [vmem:[%s687 + $0x688] sm:$0xff]
        %v1456 = vld [vmem:[%s687 + $0x690] sm:$0xff]
        %v1457 = vld [vmem:[%s687 + $0x698] sm:$0xff]
        %v1458 = vld [vmem:[%s687 + $0x6a0] sm:$0xff]
        %v1459 = vld [vmem:[%s687 + $0x6a8] sm:$0xff]
        %v1460 = vld [vmem:[%s687 + $0x6b0] sm:$0xff]
        %v1461 = vld [vmem:[%s687 + $0x6b8] sm:$0xff]
        %v1462 = vld [vmem:[%s687 + $0x6c0] sm:$0xff]
        %v1463 = vld [vmem:[%s687 + $0x6c8] sm:$0xff]
        %v1464 = vld [vmem:[%s687 + $0x6d0] sm:$0xff]
        %v1465 = vld [vmem:[%s687 + $0x6d8] sm:$0xff]
        %v1466 = vld [vmem:[%s687 + $0x6e0] sm:$0xff]
        %v1467 = vld [vmem:[%s687 + $0x6e8] sm:$0xff]
        %v1468 = vld [vmem:[%s687 + $0x6f0] sm:$0xff]
        %v1469 = vld [vmem:[%s687 + $0x6f8] sm:$0xff]
        %v1470 = vld [vmem:[%s687 + $0x700] sm:$0xff]
        %v1471 = vld [vmem:[%s687 + $0x708] sm:$0xff]
        %v1472 = vld [vmem:[%s687 + $0x710] sm:$0xff]
        %v1473 = vld [vmem:[%s687 + $0x718] sm:$0xff]
        %v1474 = vld [vmem:[%s687 + $0x720] sm:$0xff]
        %v1475 = vld [vmem:[%s687 + $0x728] sm:$0xff]
        %v1476 = vld [vmem:[%s687 + $0x730] sm:$0xff]
        %v1477 = vld [vmem:[%s687 + $0x738] sm:$0xff]
        %v1478 = vld [vmem:[%s687 + $0x740] sm:$0xff]
        %v1479 = vld [vmem:[%s687 + $0x748] sm:$0xff]
        %v1480 = vld [vmem:[%s687 + $0x750] sm:$0xff]
        %v1481 = vld [vmem:[%s687 + $0x758] sm:$0xff]
        %v1482 = vld [vmem:[%s687 + $0x760] sm:$0xff]
        %v1483 = vld [vmem:[%s687 + $0x768] sm:$0xff]
        %v1484 = vld [vmem:[%s687 + $0x770] sm:$0xff]
        %v1485 = vld [vmem:[%s687 + $0x778] sm:$0xff]
        %v1486 = vld [vmem:[%s687 + $0x780] sm:$0xff]
        %v1487 = vld [vmem:[%s687 + $0x788] sm:$0xff]
        %v1488 = vld [vmem:[%s687 + $0x790] sm:$0xff]
        %v1489 = vld [vmem:[%s687 + $0x798] sm:$0xff]
        %v1490 = vld [vmem:[%s687 + $0x7a0] sm:$0xff]
        %v1491 = vld [vmem:[%s687 + $0x7a8] sm:$0xff]
        %v1492 = vld [vmem:[%s687 + $0x7b0] sm:$0xff]
        %v1493 = vld [vmem:[%s687 + $0x7b8] sm:$0xff]
        %v1494 = vld [vmem:[%s687 + $0x7c0] sm:$0xff]
        %v1495 = vld [vmem:[%s687 + $0x7c8] sm:$0xff]
        %v1496 = vld [vmem:[%s687 + $0x7d0] sm:$0xff]
        %v1497 = vld [vmem:[%s687 + $0x7d8] sm:$0xff]
        %v1498 = vld [vmem:[%s687 + $0x7e0] sm:$0xff]
        %v1499 = vld [vmem:[%s687 + $0x7e8] sm:$0xff]
        %v1500 = vld [vmem:[%s687 + $0x7f0] sm:$0xff]
        %v1501 = vld [vmem:[%s687 + $0x7f8] sm:$0xff]
        %v1502 = vld [vmem:[%s687 + $0x800] sm:$0xff]
        %v1503 = vld [vmem:[%s687 + $0x808] sm:$0xff]
        %v1504 = vld [vmem:[%s687 + $0x810] sm:$0xff]
        %v1505 = vld [vmem:[%s687 + $0x818] sm:$0xff]
        %v1506 = vld [vmem:[%s687 + $0x820] sm:$0xff]
        %v1507 = vld [vmem:[%s687 + $0x828] sm:$0xff]
        %v1508 = vld [vmem:[%s687 + $0x830] sm:$0xff]
        %v1509 = vld [vmem:[%s687 + $0x838] sm:$0xff]
        %v1510 = vld [vmem:[%s687 + $0x840] sm:$0xff]
        %v1511 = vld [vmem:[%s687 + $0x848] sm:$0xff]
        %v1512 = vld [vmem:[%s687 + $0x850] sm:$0xff]
        %v1513 = vld [vmem:[%s687 + $0x858] sm:$0xff]
        %v1514 = vld [vmem:[%s687 + $0x860] sm:$0xff]
        %v1515 = vld [vmem:[%s687 + $0x868] sm:$0xff]
        %v1516 = vld [vmem:[%s687 + $0x870] sm:$0xff]
        %v1517 = vld [vmem:[%s687 + $0x878] sm:$0xff]
        %v1518 = vld [vmem:[%s687 + $0x880] sm:$0xff]
        %v1519 = vld [vmem:[%s687 + $0x888] sm:$0xff]
        %v1520 = vld [vmem:[%s687 + $0x890] sm:$0xff]
        %v1521 = vld [vmem:[%s687 + $0x898] sm:$0xff]
        %v1522 = vld [vmem:[%s687 + $0x8a0] sm:$0xff]
        %v1523 = vld [vmem:[%s687 + $0x8a8] sm:$0xff]
        %v1524 = vld [vmem:[%s687 + $0x8b0] sm:$0xff]
        %v1525 = vld [vmem:[%s687 + $0x8b8] sm:$0xff]
        %v1526 = vld [vmem:[%s687 + $0x8c0] sm:$0xff]
        %v1527 = vld [vmem:[%s687 + $0x8c8] sm:$0xff]
        %v1528 = vld [vmem:[%s687 + $0x8d0] sm:$0xff]
        %v1529 = vld [vmem:[%s687 + $0x8d8] sm:$0xff]
        %v1530 = vld [vmem:[%s687 + $0x8e0] sm:$0xff]
        %v1531 = vld [vmem:[%s687 + $0x8e8] sm:$0xff]
        %v1532 = vld [vmem:[%s687 + $0x8f0] sm:$0xff]
        %v1533 = vld [vmem:[%s687 + $0x8f8] sm:$0xff]
        %v1534 = vld [vmem:[%s687 + $0x900] sm:$0xff]
        %v1535 = vld [vmem:[%s687 + $0x908] sm:$0xff]
        %v1536 = vld [vmem:[%s687 + $0x910] sm:$0xff]
        %v1537 = vld [vmem:[%s687 + $0x918] sm:$0xff]
        %v1538 = vld [vmem:[%s687 + $0x920] sm:$0xff]
        %v1539 = vld [vmem:[%s687 + $0x928] sm:$0xff]
        %v1540 = vld [vmem:[%s687 + $0x930] sm:$0xff]
        %v1541 = vld [vmem:[%s687 + $0x938] sm:$0xff]
        %v1542 = vld [vmem:[%s687 + $0x940] sm:$0xff]
        %v1543 = vld [vmem:[%s687 + $0x948] sm:$0xff]
        %v1544 = vld [vmem:[%s687 + $0x950] sm:$0xff]
        %v1545 = vld [vmem:[%s687 + $0x958] sm:$0xff]
        %v1546 = vld [vmem:[%s687 + $0x960] sm:$0xff]
        %v1547 = vld [vmem:[%s687 + $0x968] sm:$0xff]
        %v1548 = vld [vmem:[%s687 + $0x970] sm:$0xff]
        %v1549 = vld [vmem:[%s687 + $0x978] sm:$0xff]
        %v1550 = vld [vmem:[%s687 + $0x980] sm:$0xff]
        %v1551 = vld [vmem:[%s687 + $0x988] sm:$0xff]
        %v1552 = vld [vmem:[%s687 + $0x990] sm:$0xff]
        %v1553 = vld [vmem:[%s687 + $0x998] sm:$0xff]
        %v1554 = vld [vmem:[%s687 + $0x9a0] sm:$0xff]
        %v1555 = vld [vmem:[%s687 + $0x9a8] sm:$0xff]
        %v1556 = vld [vmem:[%s687 + $0x9b0] sm:$0xff]
        %v1557 = vld [vmem:[%s687 + $0x9b8] sm:$0xff]
        %v1558 = vld [vmem:[%s687 + $0x9c0] sm:$0xff]
        %v1559 = vld [vmem:[%s687 + $0x9c8] sm:$0xff]
        %v1560 = vld [vmem:[%s687 + $0x9d0] sm:$0xff]
        %v1561 = vld [vmem:[%s687 + $0x9d8] sm:$0xff]
        %v1562 = vld [vmem:[%s687 + $0x9e0] sm:$0xff]
        %v1563 = vld [vmem:[%s687 + $0x9e8] sm:$0xff]
        %v1564 = vld [vmem:[%s687 + $0x9f0] sm:$0xff]
        %v1565 = vld [vmem:[%s687 + $0x9f8] sm:$0xff]
        %v1566 = vld [vmem:[%s687 + $0xa00] sm:$0xff]
        %v1567 = vld [vmem:[%s687 + $0xa08] sm:$0xff]
        %v1568 = vld [vmem:[%s687 + $0xa10] sm:$0xff]
        %v1569 = vld [vmem:[%s687 + $0xa18] sm:$0xff]
        %v1570 = vld [vmem:[%s687 + $0xa20] sm:$0xff]
        %v1571 = vld [vmem:[%s687 + $0xa28] sm:$0xff]
        %v1572 = vld [vmem:[%s687 + $0xa30] sm:$0xff]
        %v1573 = vld [vmem:[%s687 + $0xa38] sm:$0xff]
        %v1574 = vld [vmem:[%s687 + $0xa40] sm:$0xff]
        %v1575 = vld [vmem:[%s687 + $0xa48] sm:$0xff]
        %v1576 = vld [vmem:[%s687 + $0xa50] sm:$0xff]
        %v1577 = vld [vmem:[%s687 + $0xa58] sm:$0xff]
        %v1578 = vld [vmem:[%s687 + $0xa60] sm:$0xff]
        %v1579 = vld [vmem:[%s687 + $0xa68] sm:$0xff]
        %v1580 = vld [vmem:[%s687 + $0xa70] sm:$0xff]
        %v1581 = vld [vmem:[%s687 + $0xa78] sm:$0xff]
        %v1582 = vld [vmem:[%s687 + $0xa80] sm:$0xff]
        %v1583 = vld [vmem:[%s687 + $0xa88] sm:$0xff]
        %v1584 = vld [vmem:[%s687 + $0xa90] sm:$0xff]
        %v1585 = vld [vmem:[%s687 + $0xa98] sm:$0xff]
        %v1586 = vld [vmem:[%s687 + $0xaa0] sm:$0xff]
        %v1587 = vld [vmem:[%s687 + $0xaa8] sm:$0xff]
        %v1588 = vld [vmem:[%s687 + $0xab0] sm:$0xff]
        %v1589 = vld [vmem:[%s687 + $0xab8] sm:$0xff]
        %v1590 = vld [vmem:[%s687 + $0xac0] sm:$0xff]
        %v1591 = vld [vmem:[%s687 + $0xac8] sm:$0xff]
        %v1592 = vld [vmem:[%s687 + $0xad0] sm:$0xff]
        %v1593 = vld [vmem:[%s687 + $0xad8] sm:$0xff]
        %v1594 = vld [vmem:[%s687 + $0xae0] sm:$0xff]
        %v1595 = vld [vmem:[%s687 + $0xae8] sm:$0xff]
        %v1596 = vld [vmem:[%s687 + $0xaf0] sm:$0xff]
        %v1597 = vld [vmem:[%s687 + $0xaf8] sm:$0xff]
        %v1598 = vld [vmem:[%s687 + $0xb00] sm:$0xff]
        %v1599 = vld [vmem:[%s687 + $0xb08] sm:$0xff]
        %v1600 = vld [vmem:[%s687 + $0xb10] sm:$0xff]
        %v1601 = vld [vmem:[%s687 + $0xb18] sm:$0xff]
        %v1602 = vld [vmem:[%s687 + $0xb20] sm:$0xff]
        %v1603 = vld [vmem:[%s687 + $0xb28] sm:$0xff]
        %v1604 = vld [vmem:[%s687 + $0xb30] sm:$0xff]
        %v1605 = vld [vmem:[%s687 + $0xb38] sm:$0xff]
        %v1606 = vld [vmem:[%s687 + $0xb40] sm:$0xff]
        %v1607 = vld [vmem:[%s687 + $0xb48] sm:$0xff]
        %v1608 = vld [vmem:[%s687 + $0xb50] sm:$0xff]
        %v1609 = vld [vmem:[%s687 + $0xb58] sm:$0xff]
        %v1610 = vld [vmem:[%s687 + $0xb60] sm:$0xff]
        %v1611 = vld [vmem:[%s687 + $0xb68] sm:$0xff]
        %v1612 = vld [vmem:[%s687 + $0xb70] sm:$0xff]
        %v1613 = vld [vmem:[%s687 + $0xb78] sm:$0xff]
        %v1614 = vld [vmem:[%s687 + $0xb80] sm:$0xff]
        %v1615 = vld [vmem:[%s687 + $0xb88] sm:$0xff]
        %v1616 = vld [vmem:[%s687 + $0xb90] sm:$0xff]
        %v1617 = vld [vmem:[%s687 + $0xb98] sm:$0xff]
        %v1618 = vld [vmem:[%s687 + $0xba0] sm:$0xff]
        %v1619 = vld [vmem:[%s687 + $0xba8] sm:$0xff]
        %v1620 = vld [vmem:[%s687 + $0xbb0] sm:$0xff]
        %v1621 = vld [vmem:[%s687 + $0xbb8] sm:$0xff]
        %v1622 = vld [vmem:[%s687 + $0xbc0] sm:$0xff]
        %v1623 = vld [vmem:[%s687 + $0xbc8] sm:$0xff]
        %v1624 = vld [vmem:[%s687 + $0xbd0] sm:$0xff]
        %v1625 = vld [vmem:[%s687 + $0xbd8] sm:$0xff]
        %v1626 = vld [vmem:[%s687 + $0xbe0] sm:$0xff]
        %v1627 = vld [vmem:[%s687 + $0xbe8] sm:$0xff]
        %v1628 = vld [vmem:[%s687 + $0xbf0] sm:$0xff]
        %v1629 = vld [vmem:[%s687 + $0xbf8] sm:$0xff]
        %v1630 = vld [vmem:[%s687 + $0xc00] sm:$0xff]
        %v1631 = vld [vmem:[%s687 + $0xc08] sm:$0xff]
        %v1632 = vld [vmem:[%s687 + $0xc10] sm:$0xff]
        %v1633 = vld [vmem:[%s687 + $0xc18] sm:$0xff]
        %v1634 = vld [vmem:[%s687 + $0xc20] sm:$0xff]
        %v1635 = vld [vmem:[%s687 + $0xc28] sm:$0xff]
        %v1636 = vld [vmem:[%s687 + $0xc30] sm:$0xff]
        %v1637 = vld [vmem:[%s687 + $0xc38] sm:$0xff]
        %v1638 = vld [vmem:[%s687 + $0xc40] sm:$0xff]
        %v1639 = vld [vmem:[%s687 + $0xc48] sm:$0xff]
        %v1640 = vld [vmem:[%s687 + $0xc50] sm:$0xff]
        %v1641 = vld [vmem:[%s687 + $0xc58] sm:$0xff]
        %v1642 = vld [vmem:[%s687 + $0xc60] sm:$0xff]
        %v1643 = vld [vmem:[%s687 + $0xc68] sm:$0xff]
        %v1644 = vld [vmem:[%s687 + $0xc70] sm:$0xff]
        %v1645 = vld [vmem:[%s687 + $0xc78] sm:$0xff]
        %v1646 = vld [vmem:[%s687 + $0xc80] sm:$0xff]
        %v1647 = vld [vmem:[%s687 + $0xc88] sm:$0xff]
        %v1648 = vld [vmem:[%s687 + $0xc90] sm:$0xff]
        %v1649 = vld [vmem:[%s687 + $0xc98] sm:$0xff]
        %v1650 = vld [vmem:[%s687 + $0xca0] sm:$0xff]
        %v1651 = vld [vmem:[%s687 + $0xca8] sm:$0xff]
        %v1652 = vld [vmem:[%s687 + $0xcb0] sm:$0xff]
        %v1653 = vld [vmem:[%s687 + $0xcb8] sm:$0xff]
        %v1654 = vld [vmem:[%s687 + $0xcc0] sm:$0xff]
        %v1655 = vld [vmem:[%s687 + $0xcc8] sm:$0xff]
        %v1656 = vld [vmem:[%s687 + $0xcd0] sm:$0xff]
        %v1657 = vld [vmem:[%s687 + $0xcd8] sm:$0xff]
        %v1658 = vld [vmem:[%s687 + $0xce0] sm:$0xff]
        %v1659 = vld [vmem:[%s687 + $0xce8] sm:$0xff]
        %v1660 = vld [vmem:[%s687 + $0xcf0] sm:$0xff]
        %v1661 = vld [vmem:[%s687 + $0xcf8] sm:$0xff]
        %v1662 = vld [vmem:[%s687 + $0xd00] sm:$0xff]
        %v1663 = vld [vmem:[%s687 + $0xd08] sm:$0xff]
        %v1664 = vld [vmem:[%s687 + $0xd10] sm:$0xff]
        %v1665 = vld [vmem:[%s687 + $0xd18] sm:$0xff]
        %v1666 = vld [vmem:[%s687 + $0xd20] sm:$0xff]
        %v1667 = vld [vmem:[%s687 + $0xd28] sm:$0xff]
        %v1668 = vld [vmem:[%s687 + $0xd30] sm:$0xff]
        %v1669 = vld [vmem:[%s687 + $0xd38] sm:$0xff]
        %v1670 = vld [vmem:[%s687 + $0xd40] sm:$0xff]
        %v1671 = vld [vmem:[%s687 + $0xd48] sm:$0xff]
        %v1672 = vld [vmem:[%s687 + $0xd50] sm:$0xff]
        %v1673 = vld [vmem:[%s687 + $0xd58] sm:$0xff]
        %v1674 = vld [vmem:[%s687 + $0xd60] sm:$0xff]
        %v1675 = vld [vmem:[%s687 + $0xd68] sm:$0xff]
        %v1676 = vld [vmem:[%s687 + $0xd70] sm:$0xff]
        %v1677 = vld [vmem:[%s687 + $0xd78] sm:$0xff]
        %v1678 = vld [vmem:[%s687 + $0xd80] sm:$0xff]
        %v1679 = vld [vmem:[%s687 + $0xd88] sm:$0xff]
        %v1680 = vld [vmem:[%s687 + $0xd90] sm:$0xff]
        %v1681 = vld [vmem:[%s687 + $0xd98] sm:$0xff]
        %v1682 = vld [vmem:[%s687 + $0xda0] sm:$0xff]
        %v1683 = vld [vmem:[%s687 + $0xda8] sm:$0xff]
        %v1684 = vld [vmem:[%s687 + $0xdb0] sm:$0xff]
        %v1685 = vld [vmem:[%s687 + $0xdb8] sm:$0xff]
        %v1686 = vld [vmem:[%s687 + $0xdc0] sm:$0xff]
        %v1687 = vld [vmem:[%s687 + $0xdc8] sm:$0xff]
        %v1688 = vld [vmem:[%s687 + $0xdd0] sm:$0xff]
        %v1689 = vld [vmem:[%s687 + $0xdd8] sm:$0xff]
        %v1690 = vld [vmem:[%s687 + $0xde0] sm:$0xff]
        %v1691 = vld [vmem:[%s687 + $0xde8] sm:$0xff]
        %v1692 = vld [vmem:[%s687 + $0xdf0] sm:$0xff]
        %v1693 = vld [vmem:[%s687 + $0xdf8] sm:$0xff]
        %v1694 = vld [vmem:[%s687 + $0xe00] sm:$0xff]
        %v1695 = vld [vmem:[%s687 + $0xe08] sm:$0xff]
        %v1696 = vld [vmem:[%s687 + $0xe10] sm:$0xff]
        %v1697 = vld [vmem:[%s687 + $0xe18] sm:$0xff]
        %v1698 = vld [vmem:[%s687 + $0xe20] sm:$0xff]
        %v1699 = vld [vmem:[%s687 + $0xe28] sm:$0xff]
        %v1700 = vld [vmem:[%s687 + $0xe30] sm:$0xff]
        %v1701 = vld [vmem:[%s687 + $0xe38] sm:$0xff]
        %v1702 = vld [vmem:[%s687 + $0xe40] sm:$0xff]
        %v1703 = vld [vmem:[%s687 + $0xe48] sm:$0xff]
        %v1704 = vld [vmem:[%s687 + $0xe50] sm:$0xff]
        %v1705 = vld [vmem:[%s687 + $0xe58] sm:$0xff]
        %v1706 = vld [vmem:[%s687 + $0xe60] sm:$0xff]
        %v1707 = vld [vmem:[%s687 + $0xe68] sm:$0xff]
        %v1708 = vld [vmem:[%s687 + $0xe70] sm:$0xff]
        %v1709 = vld [vmem:[%s687 + $0xe78] sm:$0xff]
        %v1710 = vld [vmem:[%s687 + $0xe80] sm:$0xff]
        %v1711 = vld [vmem:[%s687 + $0xe88] sm:$0xff]
        %v1712 = vld [vmem:[%s687 + $0xe90] sm:$0xff]
        %v1713 = vld [vmem:[%s687 + $0xe98] sm:$0xff]
        %v1714 = vld [vmem:[%s687 + $0xea0] sm:$0xff]
        %v1715 = vld [vmem:[%s687 + $0xea8] sm:$0xff]
        %v1716 = vld [vmem:[%s687 + $0xeb0] sm:$0xff]
        %v1717 = vld [vmem:[%s687 + $0xeb8] sm:$0xff]
        %v1718 = vld [vmem:[%s687 + $0xec0] sm:$0xff]
        %v1719 = vld [vmem:[%s687 + $0xec8] sm:$0xff]
        %v1720 = vld [vmem:[%s687 + $0xed0] sm:$0xff]
        %v1721 = vld [vmem:[%s687 + $0xed8] sm:$0xff]
        %v1722 = vld [vmem:[%s687 + $0xee0] sm:$0xff]
        %v1723 = vld [vmem:[%s687 + $0xee8] sm:$0xff]
        %v1724 = vld [vmem:[%s687 + $0xef0] sm:$0xff]
        %v1725 = vld [vmem:[%s687 + $0xef8] sm:$0xff]
        %v1726 = vld [vmem:[%s687 + $0xf00] sm:$0xff]
        %v1727 = vld [vmem:[%s687 + $0xf08] sm:$0xff]
        %v1728 = vld [vmem:[%s687 + $0xf10] sm:$0xff]
        %v1729 = vld [vmem:[%s687 + $0xf18] sm:$0xff]
        %v1730 = vld [vmem:[%s687 + $0xf20] sm:$0xff]
        %v1731 = vld [vmem:[%s687 + $0xf28] sm:$0xff]
        %v1732 = vld [vmem:[%s687 + $0xf30] sm:$0xff]
        %v1733 = vld [vmem:[%s687 + $0xf38] sm:$0xff]
        %v1734 = vld [vmem:[%s687 + $0xf40] sm:$0xff]
        %v1735 = vld [vmem:[%s687 + $0xf48] sm:$0xff]
        %v1736 = vld [vmem:[%s687 + $0xf50] sm:$0xff]
        %v1737 = vld [vmem:[%s687 + $0xf58] sm:$0xff]
        %v1738 = vld [vmem:[%s687 + $0xf60] sm:$0xff]
        %v1739 = vld [vmem:[%s687 + $0xf68] sm:$0xff]
        %v1740 = vld [vmem:[%s687 + $0xf70] sm:$0xff]
        %v1741 = vld [vmem:[%s687 + $0xf78] sm:$0xff]
        %v1742 = vld [vmem:[%s687 + $0xf80] sm:$0xff]
        %v1743 = vld [vmem:[%s687 + $0xf88] sm:$0xff]
        %v1744 = vld [vmem:[%s687 + $0xf90] sm:$0xff]
        %v1745 = vld [vmem:[%s687 + $0xf98] sm:$0xff]
        %v1746 = vld [vmem:[%s687 + $0xfa0] sm:$0xff]
        %v1747 = vld [vmem:[%s687 + $0xfa8] sm:$0xff]
        %v1748 = vld [vmem:[%s687 + $0xfb0] sm:$0xff]
        %v1749 = vld [vmem:[%s687 + $0xfb8] sm:$0xff]
        %v1750 = vld [vmem:[%s687 + $0xfc0] sm:$0xff]
        %v1751 = vld [vmem:[%s687 + $0xfc8] sm:$0xff]
        %v1752 = vld [vmem:[%s687 + $0xfd0] sm:$0xff]
        %v1753 = vld [vmem:[%s687 + $0xfd8] sm:$0xff]
        %v1754 = vld [vmem:[%s687 + $0xfe0] sm:$0xff]
        %v1755 = vld [vmem:[%s687 + $0xfe8] sm:$0xff]
        %v1756 = vld [vmem:[%s687 + $0xff0] sm:$0xff]
        %v1757 = vld [vmem:[%s687 + $0xff8] sm:$0xff]
        %v1758 = vunpack.c.l.s8.bf16 %v1246
        %v1759 = vunpack.c.l.s8.bf16 %v1247
        %v1760 = vunpack.c.h.s8.bf16 %v1246
        %v1761 = vunpack.c.h.s8.bf16 %v1247
        %v1762 = vunpack.c.l.s8.bf16 %v1248
        %v1763 = vunpack.c.l.s8.bf16 %v1249
        %v1764 = vunpack.c.h.s8.bf16 %v1248
        %v1765 = vunpack.c.h.s8.bf16 %v1249
        %v1766 = vunpack.c.l.s8.bf16 %v1250
        %v1767 = vunpack.c.l.s8.bf16 %v1251
        %v1768 = vunpack.c.h.s8.bf16 %v1250
        %v1769 = vunpack.c.h.s8.bf16 %v1251
        %v1770 = vunpack.c.l.s8.bf16 %v1252
        %v1771 = vunpack.c.l.s8.bf16 %v1253
        %v1772 = vunpack.c.h.s8.bf16 %v1252
        %v1773 = vunpack.c.h.s8.bf16 %v1253
        %v1774 = vunpack.c.l.s8.bf16 %v1254
        %v1775 = vunpack.c.l.s8.bf16 %v1255
        %v1776 = vunpack.c.h.s8.bf16 %v1254
        %v1777 = vunpack.c.h.s8.bf16 %v1255
        %v1778 = vunpack.c.l.s8.bf16 %v1256
        %v1779 = vunpack.c.l.s8.bf16 %v1257
        %v1780 = vunpack.c.h.s8.bf16 %v1256
        %v1781 = vunpack.c.h.s8.bf16 %v1257
        %v1782 = vunpack.c.l.s8.bf16 %v1258
        %v1783 = vunpack.c.l.s8.bf16 %v1259
        %v1784 = vunpack.c.h.s8.bf16 %v1258
        %v1785 = vunpack.c.h.s8.bf16 %v1259
        %v1786 = vunpack.c.l.s8.bf16 %v1260
        %v1787 = vunpack.c.l.s8.bf16 %v1261
        %v1788 = vunpack.c.h.s8.bf16 %v1260
        %v1789 = vunpack.c.h.s8.bf16 %v1261
        %v1790 = vunpack.c.l.s8.bf16 %v1262
        %v1791 = vunpack.c.l.s8.bf16 %v1263
        %v1792 = vunpack.c.h.s8.bf16 %v1262
        %v1793 = vunpack.c.h.s8.bf16 %v1263
        %v1794 = vunpack.c.l.s8.bf16 %v1264
        %v1795 = vunpack.c.l.s8.bf16 %v1265
        %v1796 = vunpack.c.h.s8.bf16 %v1264
        %v1797 = vunpack.c.h.s8.bf16 %v1265
        %v1798 = vunpack.c.l.s8.bf16 %v1266
        %v1799 = vunpack.c.l.s8.bf16 %v1267
        %v1800 = vunpack.c.h.s8.bf16 %v1266
        %v1801 = vunpack.c.h.s8.bf16 %v1267
        %v1802 = vunpack.c.l.s8.bf16 %v1268
        %v1803 = vunpack.c.l.s8.bf16 %v1269
        %v1804 = vunpack.c.h.s8.bf16 %v1268
        %v1805 = vunpack.c.h.s8.bf16 %v1269
        %v1806 = vunpack.c.l.s8.bf16 %v1270
        %v1807 = vunpack.c.l.s8.bf16 %v1271
        %v1808 = vunpack.c.h.s8.bf16 %v1270
        %v1809 = vunpack.c.h.s8.bf16 %v1271
        %v1810 = vunpack.c.l.s8.bf16 %v1272
        %v1811 = vunpack.c.l.s8.bf16 %v1273
        %v1812 = vunpack.c.h.s8.bf16 %v1272
        %v1813 = vunpack.c.h.s8.bf16 %v1273
        %v1814 = vunpack.c.l.s8.bf16 %v1274
        %v1815 = vunpack.c.l.s8.bf16 %v1275
        %v1816 = vunpack.c.h.s8.bf16 %v1274
        %v1817 = vunpack.c.h.s8.bf16 %v1275
        %v1818 = vunpack.c.l.s8.bf16 %v1276
        %v1819 = vunpack.c.l.s8.bf16 %v1277
        %v1820 = vunpack.c.h.s8.bf16 %v1276
        %v1821 = vunpack.c.h.s8.bf16 %v1277
        %v1822 = vunpack.c.l.s8.bf16 %v1278
        %v1823 = vunpack.c.l.s8.bf16 %v1279
        %v1824 = vunpack.c.h.s8.bf16 %v1278
        %v1825 = vunpack.c.h.s8.bf16 %v1279
        %v1826 = vunpack.c.l.s8.bf16 %v1280
        %v1827 = vunpack.c.l.s8.bf16 %v1281
        %v1828 = vunpack.c.h.s8.bf16 %v1280
        %v1829 = vunpack.c.h.s8.bf16 %v1281
        %v1830 = vunpack.c.l.s8.bf16 %v1282
        %v1831 = vunpack.c.l.s8.bf16 %v1283
        %v1832 = vunpack.c.h.s8.bf16 %v1282
        %v1833 = vunpack.c.h.s8.bf16 %v1283
        %v1834 = vunpack.c.l.s8.bf16 %v1284
        %v1835 = vunpack.c.l.s8.bf16 %v1285
        %v1836 = vunpack.c.h.s8.bf16 %v1284
        %v1837 = vunpack.c.h.s8.bf16 %v1285
        %v1838 = vunpack.c.l.s8.bf16 %v1286
        %v1839 = vunpack.c.l.s8.bf16 %v1287
        %v1840 = vunpack.c.h.s8.bf16 %v1286
        %v1841 = vunpack.c.h.s8.bf16 %v1287
        %v1842 = vunpack.c.l.s8.bf16 %v1288
        %v1843 = vunpack.c.l.s8.bf16 %v1289
        %v1844 = vunpack.c.h.s8.bf16 %v1288
        %v1845 = vunpack.c.h.s8.bf16 %v1289
        %v1846 = vunpack.c.l.s8.bf16 %v1290
        %v1847 = vunpack.c.l.s8.bf16 %v1291
        %v1848 = vunpack.c.h.s8.bf16 %v1290
        %v1849 = vunpack.c.h.s8.bf16 %v1291
        %v1850 = vunpack.c.l.s8.bf16 %v1292
        %v1851 = vunpack.c.l.s8.bf16 %v1293
        %v1852 = vunpack.c.h.s8.bf16 %v1292
        %v1853 = vunpack.c.h.s8.bf16 %v1293
        %v1854 = vunpack.c.l.s8.bf16 %v1294
        %v1855 = vunpack.c.l.s8.bf16 %v1295
        %v1856 = vunpack.c.h.s8.bf16 %v1294
        %v1857 = vunpack.c.h.s8.bf16 %v1295
        %v1858 = vunpack.c.l.s8.bf16 %v1296
        %v1859 = vunpack.c.l.s8.bf16 %v1297
        %v1860 = vunpack.c.h.s8.bf16 %v1296
        %v1861 = vunpack.c.h.s8.bf16 %v1297
        %v1862 = vunpack.c.l.s8.bf16 %v1298
        %v1863 = vunpack.c.l.s8.bf16 %v1299
        %v1864 = vunpack.c.h.s8.bf16 %v1298
        %v1865 = vunpack.c.h.s8.bf16 %v1299
        %v1866 = vunpack.c.l.s8.bf16 %v1300
        %v1867 = vunpack.c.l.s8.bf16 %v1301
        %v1868 = vunpack.c.h.s8.bf16 %v1300
        %v1869 = vunpack.c.h.s8.bf16 %v1301
        %v1870 = vunpack.c.l.s8.bf16 %v1302
        %v1871 = vunpack.c.l.s8.bf16 %v1303
        %v1872 = vunpack.c.h.s8.bf16 %v1302
        %v1873 = vunpack.c.h.s8.bf16 %v1303
        %v1874 = vunpack.c.l.s8.bf16 %v1304
        %v1875 = vunpack.c.l.s8.bf16 %v1305
        %v1876 = vunpack.c.h.s8.bf16 %v1304
        %v1877 = vunpack.c.h.s8.bf16 %v1305
        %v1878 = vunpack.c.l.s8.bf16 %v1306
        %v1879 = vunpack.c.l.s8.bf16 %v1307
        %v1880 = vunpack.c.h.s8.bf16 %v1306
        %v1881 = vunpack.c.h.s8.bf16 %v1307
        %v1882 = vunpack.c.l.s8.bf16 %v1308
        %v1883 = vunpack.c.l.s8.bf16 %v1309
        %v1884 = vunpack.c.h.s8.bf16 %v1308
        %v1885 = vunpack.c.h.s8.bf16 %v1309
        %v1886 = vunpack.c.l.s8.bf16 %v1310
        %v1887 = vunpack.c.l.s8.bf16 %v1311
        %v1888 = vunpack.c.h.s8.bf16 %v1310
        %v1889 = vunpack.c.h.s8.bf16 %v1311
        %v1890 = vunpack.c.l.s8.bf16 %v1312
        %v1891 = vunpack.c.l.s8.bf16 %v1313
        %v1892 = vunpack.c.h.s8.bf16 %v1312
        %v1893 = vunpack.c.h.s8.bf16 %v1313
        %v1894 = vunpack.c.l.s8.bf16 %v1314
        %v1895 = vunpack.c.l.s8.bf16 %v1315
        %v1896 = vunpack.c.h.s8.bf16 %v1314
        %v1897 = vunpack.c.h.s8.bf16 %v1315
        %v1898 = vunpack.c.l.s8.bf16 %v1316
        %v1899 = vunpack.c.l.s8.bf16 %v1317
        %v1900 = vunpack.c.h.s8.bf16 %v1316
        %v1901 = vunpack.c.h.s8.bf16 %v1317
        %v1902 = vunpack.c.l.s8.bf16 %v1318
        %v1903 = vunpack.c.l.s8.bf16 %v1319
        %v1904 = vunpack.c.h.s8.bf16 %v1318
        %v1905 = vunpack.c.h.s8.bf16 %v1319
        %v1906 = vunpack.c.l.s8.bf16 %v1320
        %v1907 = vunpack.c.l.s8.bf16 %v1321
        %v1908 = vunpack.c.h.s8.bf16 %v1320
        %v1909 = vunpack.c.h.s8.bf16 %v1321
        %v1910 = vunpack.c.l.s8.bf16 %v1322
        %v1911 = vunpack.c.l.s8.bf16 %v1323
        %v1912 = vunpack.c.h.s8.bf16 %v1322
        %v1913 = vunpack.c.h.s8.bf16 %v1323
        %v1914 = vunpack.c.l.s8.bf16 %v1324
        %v1915 = vunpack.c.l.s8.bf16 %v1325
        %v1916 = vunpack.c.h.s8.bf16 %v1324
        %v1917 = vunpack.c.h.s8.bf16 %v1325
        %v1918 = vunpack.c.l.s8.bf16 %v1326
        %v1919 = vunpack.c.l.s8.bf16 %v1327
        %v1920 = vunpack.c.h.s8.bf16 %v1326
        %v1921 = vunpack.c.h.s8.bf16 %v1327
        %v1922 = vunpack.c.l.s8.bf16 %v1328
        %v1923 = vunpack.c.l.s8.bf16 %v1329
        %v1924 = vunpack.c.h.s8.bf16 %v1328
        %v1925 = vunpack.c.h.s8.bf16 %v1329
        %v1926 = vunpack.c.l.s8.bf16 %v1330
        %v1927 = vunpack.c.l.s8.bf16 %v1331
        %v1928 = vunpack.c.h.s8.bf16 %v1330
        %v1929 = vunpack.c.h.s8.bf16 %v1331
        %v1930 = vunpack.c.l.s8.bf16 %v1332
        %v1931 = vunpack.c.l.s8.bf16 %v1333
        %v1932 = vunpack.c.h.s8.bf16 %v1332
        %v1933 = vunpack.c.h.s8.bf16 %v1333
        %v1934 = vunpack.c.l.s8.bf16 %v1334
        %v1935 = vunpack.c.l.s8.bf16 %v1335
        %v1936 = vunpack.c.h.s8.bf16 %v1334
        %v1937 = vunpack.c.h.s8.bf16 %v1335
        %v1938 = vunpack.c.l.s8.bf16 %v1336
        %v1939 = vunpack.c.l.s8.bf16 %v1337
        %v1940 = vunpack.c.h.s8.bf16 %v1336
        %v1941 = vunpack.c.h.s8.bf16 %v1337
        %v1942 = vunpack.c.l.s8.bf16 %v1338
        %v1943 = vunpack.c.l.s8.bf16 %v1339
        %v1944 = vunpack.c.h.s8.bf16 %v1338
        %v1945 = vunpack.c.h.s8.bf16 %v1339
        %v1946 = vunpack.c.l.s8.bf16 %v1340
        %v1947 = vunpack.c.l.s8.bf16 %v1341
        %v1948 = vunpack.c.h.s8.bf16 %v1340
        %v1949 = vunpack.c.h.s8.bf16 %v1341
        %v1950 = vunpack.c.l.s8.bf16 %v1342
        %v1951 = vunpack.c.l.s8.bf16 %v1343
        %v1952 = vunpack.c.h.s8.bf16 %v1342
        %v1953 = vunpack.c.h.s8.bf16 %v1343
        %v1954 = vunpack.c.l.s8.bf16 %v1344
        %v1955 = vunpack.c.l.s8.bf16 %v1345
        %v1956 = vunpack.c.h.s8.bf16 %v1344
        %v1957 = vunpack.c.h.s8.bf16 %v1345
        %v1958 = vunpack.c.l.s8.bf16 %v1346
        %v1959 = vunpack.c.l.s8.bf16 %v1347
        %v1960 = vunpack.c.h.s8.bf16 %v1346
        %v1961 = vunpack.c.h.s8.bf16 %v1347
        %v1962 = vunpack.c.l.s8.bf16 %v1348
        %v1963 = vunpack.c.l.s8.bf16 %v1349
        %v1964 = vunpack.c.h.s8.bf16 %v1348
        %v1965 = vunpack.c.h.s8.bf16 %v1349
        %v1966 = vunpack.c.l.s8.bf16 %v1350
        %v1967 = vunpack.c.l.s8.bf16 %v1351
        %v1968 = vunpack.c.h.s8.bf16 %v1350
        %v1969 = vunpack.c.h.s8.bf16 %v1351
        %v1970 = vunpack.c.l.s8.bf16 %v1352
        %v1971 = vunpack.c.l.s8.bf16 %v1353
        %v1972 = vunpack.c.h.s8.bf16 %v1352
        %v1973 = vunpack.c.h.s8.bf16 %v1353
        %v1974 = vunpack.c.l.s8.bf16 %v1354
        %v1975 = vunpack.c.l.s8.bf16 %v1355
        %v1976 = vunpack.c.h.s8.bf16 %v1354
        %v1977 = vunpack.c.h.s8.bf16 %v1355
        %v1978 = vunpack.c.l.s8.bf16 %v1356
        %v1979 = vunpack.c.l.s8.bf16 %v1357
        %v1980 = vunpack.c.h.s8.bf16 %v1356
        %v1981 = vunpack.c.h.s8.bf16 %v1357
        %v1982 = vunpack.c.l.s8.bf16 %v1358
        %v1983 = vunpack.c.l.s8.bf16 %v1359
        %v1984 = vunpack.c.h.s8.bf16 %v1358
        %v1985 = vunpack.c.h.s8.bf16 %v1359
        %v1986 = vunpack.c.l.s8.bf16 %v1360
        %v1987 = vunpack.c.l.s8.bf16 %v1361
        %v1988 = vunpack.c.h.s8.bf16 %v1360
        %v1989 = vunpack.c.h.s8.bf16 %v1361
        %v1990 = vunpack.c.l.s8.bf16 %v1362
        %v1991 = vunpack.c.l.s8.bf16 %v1363
        %v1992 = vunpack.c.h.s8.bf16 %v1362
        %v1993 = vunpack.c.h.s8.bf16 %v1363
        %v1994 = vunpack.c.l.s8.bf16 %v1364
        %v1995 = vunpack.c.l.s8.bf16 %v1365
        %v1996 = vunpack.c.h.s8.bf16 %v1364
        %v1997 = vunpack.c.h.s8.bf16 %v1365
        %v1998 = vunpack.c.l.s8.bf16 %v1366
        %v1999 = vunpack.c.l.s8.bf16 %v1367
        %v2000 = vunpack.c.h.s8.bf16 %v1366
        %v2001 = vunpack.c.h.s8.bf16 %v1367
        %v2002 = vunpack.c.l.s8.bf16 %v1368
        %v2003 = vunpack.c.l.s8.bf16 %v1369
        %v2004 = vunpack.c.h.s8.bf16 %v1368
        %v2005 = vunpack.c.h.s8.bf16 %v1369
        %v2006 = vunpack.c.l.s8.bf16 %v1370
        %v2007 = vunpack.c.l.s8.bf16 %v1371
        %v2008 = vunpack.c.h.s8.bf16 %v1370
        %v2009 = vunpack.c.h.s8.bf16 %v1371
        %v2010 = vunpack.c.l.s8.bf16 %v1372
        %v2011 = vunpack.c.l.s8.bf16 %v1373
        %v2012 = vunpack.c.h.s8.bf16 %v1372
        %v2013 = vunpack.c.h.s8.bf16 %v1373
        %v2014 = vunpack.c.l.s8.bf16 %v1374
        %v2015 = vunpack.c.l.s8.bf16 %v1375
        %v2016 = vunpack.c.h.s8.bf16 %v1374
        %v2017 = vunpack.c.h.s8.bf16 %v1375
        %v2018 = vunpack.c.l.s8.bf16 %v1376
        %v2019 = vunpack.c.l.s8.bf16 %v1377
        %v2020 = vunpack.c.h.s8.bf16 %v1376
        %v2021 = vunpack.c.h.s8.bf16 %v1377
        %v2022 = vunpack.c.l.s8.bf16 %v1378
        %v2023 = vunpack.c.l.s8.bf16 %v1379
        %v2024 = vunpack.c.h.s8.bf16 %v1378
        %v2025 = vunpack.c.h.s8.bf16 %v1379
        %v2026 = vunpack.c.l.s8.bf16 %v1380
        %v2027 = vunpack.c.l.s8.bf16 %v1381
        %v2028 = vunpack.c.h.s8.bf16 %v1380
        %v2029 = vunpack.c.h.s8.bf16 %v1381
        %v2030 = vunpack.c.l.s8.bf16 %v1382
        %v2031 = vunpack.c.l.s8.bf16 %v1383
        %v2032 = vunpack.c.h.s8.bf16 %v1382
        %v2033 = vunpack.c.h.s8.bf16 %v1383
        %v2034 = vunpack.c.l.s8.bf16 %v1384
        %v2035 = vunpack.c.l.s8.bf16 %v1385
        %v2036 = vunpack.c.h.s8.bf16 %v1384
        %v2037 = vunpack.c.h.s8.bf16 %v1385
        %v2038 = vunpack.c.l.s8.bf16 %v1386
        %v2039 = vunpack.c.l.s8.bf16 %v1387
        %v2040 = vunpack.c.h.s8.bf16 %v1386
        %v2041 = vunpack.c.h.s8.bf16 %v1387
        %v2042 = vunpack.c.l.s8.bf16 %v1388
        %v2043 = vunpack.c.l.s8.bf16 %v1389
        %v2044 = vunpack.c.h.s8.bf16 %v1388
        %v2045 = vunpack.c.h.s8.bf16 %v1389
        %v2046 = vunpack.c.l.s8.bf16 %v1390
        %v2047 = vunpack.c.l.s8.bf16 %v1391
        %v2048 = vunpack.c.h.s8.bf16 %v1390
        %v2049 = vunpack.c.h.s8.bf16 %v1391
        %v2050 = vunpack.c.l.s8.bf16 %v1392
        %v2051 = vunpack.c.l.s8.bf16 %v1393
        %v2052 = vunpack.c.h.s8.bf16 %v1392
        %v2053 = vunpack.c.h.s8.bf16 %v1393
        %v2054 = vunpack.c.l.s8.bf16 %v1394
        %v2055 = vunpack.c.l.s8.bf16 %v1395
        %v2056 = vunpack.c.h.s8.bf16 %v1394
        %v2057 = vunpack.c.h.s8.bf16 %v1395
        %v2058 = vunpack.c.l.s8.bf16 %v1396
        %v2059 = vunpack.c.l.s8.bf16 %v1397
        %v2060 = vunpack.c.h.s8.bf16 %v1396
        %v2061 = vunpack.c.h.s8.bf16 %v1397
        %v2062 = vunpack.c.l.s8.bf16 %v1398
        %v2063 = vunpack.c.l.s8.bf16 %v1399
        %v2064 = vunpack.c.h.s8.bf16 %v1398
        %v2065 = vunpack.c.h.s8.bf16 %v1399
        %v2066 = vunpack.c.l.s8.bf16 %v1400
        %v2067 = vunpack.c.l.s8.bf16 %v1401
        %v2068 = vunpack.c.h.s8.bf16 %v1400
        %v2069 = vunpack.c.h.s8.bf16 %v1401
        %v2070 = vunpack.c.l.s8.bf16 %v1402
        %v2071 = vunpack.c.l.s8.bf16 %v1403
        %v2072 = vunpack.c.h.s8.bf16 %v1402
        %v2073 = vunpack.c.h.s8.bf16 %v1403
        %v2074 = vunpack.c.l.s8.bf16 %v1404
        %v2075 = vunpack.c.l.s8.bf16 %v1405
        %v2076 = vunpack.c.h.s8.bf16 %v1404
        %v2077 = vunpack.c.h.s8.bf16 %v1405
        %v2078 = vunpack.c.l.s8.bf16 %v1406
        %v2079 = vunpack.c.l.s8.bf16 %v1407
        %v2080 = vunpack.c.h.s8.bf16 %v1406
        %v2081 = vunpack.c.h.s8.bf16 %v1407
        %v2082 = vunpack.c.l.s8.bf16 %v1408
        %v2083 = vunpack.c.l.s8.bf16 %v1409
        %v2084 = vunpack.c.h.s8.bf16 %v1408
        %v2085 = vunpack.c.h.s8.bf16 %v1409
        %v2086 = vunpack.c.l.s8.bf16 %v1410
        %v2087 = vunpack.c.l.s8.bf16 %v1411
        %v2088 = vunpack.c.h.s8.bf16 %v1410
        %v2089 = vunpack.c.h.s8.bf16 %v1411
        %v2090 = vunpack.c.l.s8.bf16 %v1412
        %v2091 = vunpack.c.l.s8.bf16 %v1413
        %v2092 = vunpack.c.h.s8.bf16 %v1412
        %v2093 = vunpack.c.h.s8.bf16 %v1413
        %v2094 = vunpack.c.l.s8.bf16 %v1414
        %v2095 = vunpack.c.l.s8.bf16 %v1415
        %v2096 = vunpack.c.h.s8.bf16 %v1414
        %v2097 = vunpack.c.h.s8.bf16 %v1415
        %v2098 = vunpack.c.l.s8.bf16 %v1416
        %v2099 = vunpack.c.l.s8.bf16 %v1417
        %v2100 = vunpack.c.h.s8.bf16 %v1416
        %v2101 = vunpack.c.h.s8.bf16 %v1417
        %v2102 = vunpack.c.l.s8.bf16 %v1418
        %v2103 = vunpack.c.l.s8.bf16 %v1419
        %v2104 = vunpack.c.h.s8.bf16 %v1418
        %v2105 = vunpack.c.h.s8.bf16 %v1419
        %v2106 = vunpack.c.l.s8.bf16 %v1420
        %v2107 = vunpack.c.l.s8.bf16 %v1421
        %v2108 = vunpack.c.h.s8.bf16 %v1420
        %v2109 = vunpack.c.h.s8.bf16 %v1421
        %v2110 = vunpack.c.l.s8.bf16 %v1422
        %v2111 = vunpack.c.l.s8.bf16 %v1423
        %v2112 = vunpack.c.h.s8.bf16 %v1422
        %v2113 = vunpack.c.h.s8.bf16 %v1423
        %v2114 = vunpack.c.l.s8.bf16 %v1424
        %v2115 = vunpack.c.l.s8.bf16 %v1425
        %v2116 = vunpack.c.h.s8.bf16 %v1424
        %v2117 = vunpack.c.h.s8.bf16 %v1425
        %v2118 = vunpack.c.l.s8.bf16 %v1426
        %v2119 = vunpack.c.l.s8.bf16 %v1427
        %v2120 = vunpack.c.h.s8.bf16 %v1426
        %v2121 = vunpack.c.h.s8.bf16 %v1427
        %v2122 = vunpack.c.l.s8.bf16 %v1428
        %v2123 = vunpack.c.l.s8.bf16 %v1429
        %v2124 = vunpack.c.h.s8.bf16 %v1428
        %v2125 = vunpack.c.h.s8.bf16 %v1429
        %v2126 = vunpack.c.l.s8.bf16 %v1430
        %v2127 = vunpack.c.l.s8.bf16 %v1431
        %v2128 = vunpack.c.h.s8.bf16 %v1430
        %v2129 = vunpack.c.h.s8.bf16 %v1431
        %v2130 = vunpack.c.l.s8.bf16 %v1432
        %v2131 = vunpack.c.l.s8.bf16 %v1433
        %v2132 = vunpack.c.h.s8.bf16 %v1432
        %v2133 = vunpack.c.h.s8.bf16 %v1433
        %v2134 = vunpack.c.l.s8.bf16 %v1434
        %v2135 = vunpack.c.l.s8.bf16 %v1435
        %v2136 = vunpack.c.h.s8.bf16 %v1434
        %v2137 = vunpack.c.h.s8.bf16 %v1435
        %v2138 = vunpack.c.l.s8.bf16 %v1436
        %v2139 = vunpack.c.l.s8.bf16 %v1437
        %v2140 = vunpack.c.h.s8.bf16 %v1436
        %v2141 = vunpack.c.h.s8.bf16 %v1437
        %v2142 = vunpack.c.l.s8.bf16 %v1438
        %v2143 = vunpack.c.l.s8.bf16 %v1439
        %v2144 = vunpack.c.h.s8.bf16 %v1438
        %v2145 = vunpack.c.h.s8.bf16 %v1439
        %v2146 = vunpack.c.l.s8.bf16 %v1440
        %v2147 = vunpack.c.l.s8.bf16 %v1441
        %v2148 = vunpack.c.h.s8.bf16 %v1440
        %v2149 = vunpack.c.h.s8.bf16 %v1441
        %v2150 = vunpack.c.l.s8.bf16 %v1442
        %v2151 = vunpack.c.l.s8.bf16 %v1443
        %v2152 = vunpack.c.h.s8.bf16 %v1442
        %v2153 = vunpack.c.h.s8.bf16 %v1443
        %v2154 = vunpack.c.l.s8.bf16 %v1444
        %v2155 = vunpack.c.l.s8.bf16 %v1445
        %v2156 = vunpack.c.h.s8.bf16 %v1444
        %v2157 = vunpack.c.h.s8.bf16 %v1445
        %v2158 = vunpack.c.l.s8.bf16 %v1446
        %v2159 = vunpack.c.l.s8.bf16 %v1447
        %v2160 = vunpack.c.h.s8.bf16 %v1446
        %v2161 = vunpack.c.h.s8.bf16 %v1447
        %v2162 = vunpack.c.l.s8.bf16 %v1448
        %v2163 = vunpack.c.l.s8.bf16 %v1449
        %v2164 = vunpack.c.h.s8.bf16 %v1448
        %v2165 = vunpack.c.h.s8.bf16 %v1449
        %v2166 = vunpack.c.l.s8.bf16 %v1450
        %v2167 = vunpack.c.l.s8.bf16 %v1451
        %v2168 = vunpack.c.h.s8.bf16 %v1450
        %v2169 = vunpack.c.h.s8.bf16 %v1451
        %v2170 = vunpack.c.l.s8.bf16 %v1452
        %v2171 = vunpack.c.l.s8.bf16 %v1453
        %v2172 = vunpack.c.h.s8.bf16 %v1452
        %v2173 = vunpack.c.h.s8.bf16 %v1453
        %v2174 = vunpack.c.l.s8.bf16 %v1454
        %v2175 = vunpack.c.l.s8.bf16 %v1455
        %v2176 = vunpack.c.h.s8.bf16 %v1454
        %v2177 = vunpack.c.h.s8.bf16 %v1455
        %v2178 = vunpack.c.l.s8.bf16 %v1456
        %v2179 = vunpack.c.l.s8.bf16 %v1457
        %v2180 = vunpack.c.h.s8.bf16 %v1456
        %v2181 = vunpack.c.h.s8.bf16 %v1457
        %v2182 = vunpack.c.l.s8.bf16 %v1458
        %v2183 = vunpack.c.l.s8.bf16 %v1459
        %v2184 = vunpack.c.h.s8.bf16 %v1458
        %v2185 = vunpack.c.h.s8.bf16 %v1459
        %v2186 = vunpack.c.l.s8.bf16 %v1460
        %v2187 = vunpack.c.l.s8.bf16 %v1461
        %v2188 = vunpack.c.h.s8.bf16 %v1460
        %v2189 = vunpack.c.h.s8.bf16 %v1461
        %v2190 = vunpack.c.l.s8.bf16 %v1462
        %v2191 = vunpack.c.l.s8.bf16 %v1463
        %v2192 = vunpack.c.h.s8.bf16 %v1462
        %v2193 = vunpack.c.h.s8.bf16 %v1463
        %v2194 = vunpack.c.l.s8.bf16 %v1464
        %v2195 = vunpack.c.l.s8.bf16 %v1465
        %v2196 = vunpack.c.h.s8.bf16 %v1464
        %v2197 = vunpack.c.h.s8.bf16 %v1465
        %v2198 = vunpack.c.l.s8.bf16 %v1466
        %v2199 = vunpack.c.l.s8.bf16 %v1467
        %v2200 = vunpack.c.h.s8.bf16 %v1466
        %v2201 = vunpack.c.h.s8.bf16 %v1467
        %v2202 = vunpack.c.l.s8.bf16 %v1468
        %v2203 = vunpack.c.l.s8.bf16 %v1469
        %v2204 = vunpack.c.h.s8.bf16 %v1468
        %v2205 = vunpack.c.h.s8.bf16 %v1469
        %v2206 = vunpack.c.l.s8.bf16 %v1470
        %v2207 = vunpack.c.l.s8.bf16 %v1471
        %v2208 = vunpack.c.h.s8.bf16 %v1470
        %v2209 = vunpack.c.h.s8.bf16 %v1471
        %v2210 = vunpack.c.l.s8.bf16 %v1472
        %v2211 = vunpack.c.l.s8.bf16 %v1473
        %v2212 = vunpack.c.h.s8.bf16 %v1472
        %v2213 = vunpack.c.h.s8.bf16 %v1473
        %v2214 = vunpack.c.l.s8.bf16 %v1474
        %v2215 = vunpack.c.l.s8.bf16 %v1475
        %v2216 = vunpack.c.h.s8.bf16 %v1474
        %v2217 = vunpack.c.h.s8.bf16 %v1475
        %v2218 = vunpack.c.l.s8.bf16 %v1476
        %v2219 = vunpack.c.l.s8.bf16 %v1477
        %v2220 = vunpack.c.h.s8.bf16 %v1476
        %v2221 = vunpack.c.h.s8.bf16 %v1477
        %v2222 = vunpack.c.l.s8.bf16 %v1478
        %v2223 = vunpack.c.l.s8.bf16 %v1479
        %v2224 = vunpack.c.h.s8.bf16 %v1478
        %v2225 = vunpack.c.h.s8.bf16 %v1479
        %v2226 = vunpack.c.l.s8.bf16 %v1480
        %v2227 = vunpack.c.l.s8.bf16 %v1481
        %v2228 = vunpack.c.h.s8.bf16 %v1480
        %v2229 = vunpack.c.h.s8.bf16 %v1481
        %v2230 = vunpack.c.l.s8.bf16 %v1482
        %v2231 = vunpack.c.l.s8.bf16 %v1483
        %v2232 = vunpack.c.h.s8.bf16 %v1482
        %v2233 = vunpack.c.h.s8.bf16 %v1483
        %v2234 = vunpack.c.l.s8.bf16 %v1484
        %v2235 = vunpack.c.l.s8.bf16 %v1485
        %v2236 = vunpack.c.h.s8.bf16 %v1484
        %v2237 = vunpack.c.h.s8.bf16 %v1485
        %v2238 = vunpack.c.l.s8.bf16 %v1486
        %v2239 = vunpack.c.l.s8.bf16 %v1487
        %v2240 = vunpack.c.h.s8.bf16 %v1486
        %v2241 = vunpack.c.h.s8.bf16 %v1487
        %v2242 = vunpack.c.l.s8.bf16 %v1488
        %v2243 = vunpack.c.l.s8.bf16 %v1489
        %v2244 = vunpack.c.h.s8.bf16 %v1488
        %v2245 = vunpack.c.h.s8.bf16 %v1489
        %v2246 = vunpack.c.l.s8.bf16 %v1490
        %v2247 = vunpack.c.l.s8.bf16 %v1491
        %v2248 = vunpack.c.h.s8.bf16 %v1490
        %v2249 = vunpack.c.h.s8.bf16 %v1491
        %v2250 = vunpack.c.l.s8.bf16 %v1492
        %v2251 = vunpack.c.l.s8.bf16 %v1493
        %v2252 = vunpack.c.h.s8.bf16 %v1492
        %v2253 = vunpack.c.h.s8.bf16 %v1493
        %v2254 = vunpack.c.l.s8.bf16 %v1494
        %v2255 = vunpack.c.l.s8.bf16 %v1495
        %v2256 = vunpack.c.h.s8.bf16 %v1494
        %v2257 = vunpack.c.h.s8.bf16 %v1495
        %v2258 = vunpack.c.l.s8.bf16 %v1496
        %v2259 = vunpack.c.l.s8.bf16 %v1497
        %v2260 = vunpack.c.h.s8.bf16 %v1496
        %v2261 = vunpack.c.h.s8.bf16 %v1497
        %v2262 = vunpack.c.l.s8.bf16 %v1498
        %v2263 = vunpack.c.l.s8.bf16 %v1499
        %v2264 = vunpack.c.h.s8.bf16 %v1498
        %v2265 = vunpack.c.h.s8.bf16 %v1499
        %v2266 = vunpack.c.l.s8.bf16 %v1500
        %v2267 = vunpack.c.l.s8.bf16 %v1501
        %v2268 = vunpack.c.h.s8.bf16 %v1500
        %v2269 = vunpack.c.h.s8.bf16 %v1501
        %v2270 = vunpack.c.l.s8.bf16 %v1502
        %v2271 = vunpack.c.l.s8.bf16 %v1503
        %v2272 = vunpack.c.h.s8.bf16 %v1502
        %v2273 = vunpack.c.h.s8.bf16 %v1503
        %v2274 = vunpack.c.l.s8.bf16 %v1504
        %v2275 = vunpack.c.l.s8.bf16 %v1505
        %v2276 = vunpack.c.h.s8.bf16 %v1504
        %v2277 = vunpack.c.h.s8.bf16 %v1505
        %v2278 = vunpack.c.l.s8.bf16 %v1506
        %v2279 = vunpack.c.l.s8.bf16 %v1507
        %v2280 = vunpack.c.h.s8.bf16 %v1506
        %v2281 = vunpack.c.h.s8.bf16 %v1507
        %v2282 = vunpack.c.l.s8.bf16 %v1508
        %v2283 = vunpack.c.l.s8.bf16 %v1509
        %v2284 = vunpack.c.h.s8.bf16 %v1508
        %v2285 = vunpack.c.h.s8.bf16 %v1509
        %v2286 = vunpack.c.l.s8.bf16 %v1510
        %v2287 = vunpack.c.l.s8.bf16 %v1511
        %v2288 = vunpack.c.h.s8.bf16 %v1510
        %v2289 = vunpack.c.h.s8.bf16 %v1511
        %v2290 = vunpack.c.l.s8.bf16 %v1512
        %v2291 = vunpack.c.l.s8.bf16 %v1513
        %v2292 = vunpack.c.h.s8.bf16 %v1512
        %v2293 = vunpack.c.h.s8.bf16 %v1513
        %v2294 = vunpack.c.l.s8.bf16 %v1514
        %v2295 = vunpack.c.l.s8.bf16 %v1515
        %v2296 = vunpack.c.h.s8.bf16 %v1514
        %v2297 = vunpack.c.h.s8.bf16 %v1515
        %v2298 = vunpack.c.l.s8.bf16 %v1516
        %v2299 = vunpack.c.l.s8.bf16 %v1517
        %v2300 = vunpack.c.h.s8.bf16 %v1516
        %v2301 = vunpack.c.h.s8.bf16 %v1517
        %v2302 = vunpack.c.l.s8.bf16 %v1518
        %v2303 = vunpack.c.l.s8.bf16 %v1519
        %v2304 = vunpack.c.h.s8.bf16 %v1518
        %v2305 = vunpack.c.h.s8.bf16 %v1519
        %v2306 = vunpack.c.l.s8.bf16 %v1520
        %v2307 = vunpack.c.l.s8.bf16 %v1521
        %v2308 = vunpack.c.h.s8.bf16 %v1520
        %v2309 = vunpack.c.h.s8.bf16 %v1521
        %v2310 = vunpack.c.l.s8.bf16 %v1522
        %v2311 = vunpack.c.l.s8.bf16 %v1523
        %v2312 = vunpack.c.h.s8.bf16 %v1522
        %v2313 = vunpack.c.h.s8.bf16 %v1523
        %v2314 = vunpack.c.l.s8.bf16 %v1524
        %v2315 = vunpack.c.l.s8.bf16 %v1525
        %v2316 = vunpack.c.h.s8.bf16 %v1524
        %v2317 = vunpack.c.h.s8.bf16 %v1525
        %v2318 = vunpack.c.l.s8.bf16 %v1526
        %v2319 = vunpack.c.l.s8.bf16 %v1527
        %v2320 = vunpack.c.h.s8.bf16 %v1526
        %v2321 = vunpack.c.h.s8.bf16 %v1527
        %v2322 = vunpack.c.l.s8.bf16 %v1528
        %v2323 = vunpack.c.l.s8.bf16 %v1529
        %v2324 = vunpack.c.h.s8.bf16 %v1528
        %v2325 = vunpack.c.h.s8.bf16 %v1529
        %v2326 = vunpack.c.l.s8.bf16 %v1530
        %v2327 = vunpack.c.l.s8.bf16 %v1531
        %v2328 = vunpack.c.h.s8.bf16 %v1530
        %v2329 = vunpack.c.h.s8.bf16 %v1531
        %v2330 = vunpack.c.l.s8.bf16 %v1532
        %v2331 = vunpack.c.l.s8.bf16 %v1533
        %v2332 = vunpack.c.h.s8.bf16 %v1532
        %v2333 = vunpack.c.h.s8.bf16 %v1533
        %v2334 = vunpack.c.l.s8.bf16 %v1534
        %v2335 = vunpack.c.l.s8.bf16 %v1535
        %v2336 = vunpack.c.h.s8.bf16 %v1534
        %v2337 = vunpack.c.h.s8.bf16 %v1535
        %v2338 = vunpack.c.l.s8.bf16 %v1536
        %v2339 = vunpack.c.l.s8.bf16 %v1537
        %v2340 = vunpack.c.h.s8.bf16 %v1536
        %v2341 = vunpack.c.h.s8.bf16 %v1537
        %v2342 = vunpack.c.l.s8.bf16 %v1538
        %v2343 = vunpack.c.l.s8.bf16 %v1539
        %v2344 = vunpack.c.h.s8.bf16 %v1538
        %v2345 = vunpack.c.h.s8.bf16 %v1539
        %v2346 = vunpack.c.l.s8.bf16 %v1540
        %v2347 = vunpack.c.l.s8.bf16 %v1541
        %v2348 = vunpack.c.h.s8.bf16 %v1540
        %v2349 = vunpack.c.h.s8.bf16 %v1541
        %v2350 = vunpack.c.l.s8.bf16 %v1542
        %v2351 = vunpack.c.l.s8.bf16 %v1543
        %v2352 = vunpack.c.h.s8.bf16 %v1542
        %v2353 = vunpack.c.h.s8.bf16 %v1543
        %v2354 = vunpack.c.l.s8.bf16 %v1544
        %v2355 = vunpack.c.l.s8.bf16 %v1545
        %v2356 = vunpack.c.h.s8.bf16 %v1544
        %v2357 = vunpack.c.h.s8.bf16 %v1545
        %v2358 = vunpack.c.l.s8.bf16 %v1546
        %v2359 = vunpack.c.l.s8.bf16 %v1547
        %v2360 = vunpack.c.h.s8.bf16 %v1546
        %v2361 = vunpack.c.h.s8.bf16 %v1547
        %v2362 = vunpack.c.l.s8.bf16 %v1548
        %v2363 = vunpack.c.l.s8.bf16 %v1549
        %v2364 = vunpack.c.h.s8.bf16 %v1548
        %v2365 = vunpack.c.h.s8.bf16 %v1549
        %v2366 = vunpack.c.l.s8.bf16 %v1550
        %v2367 = vunpack.c.l.s8.bf16 %v1551
        %v2368 = vunpack.c.h.s8.bf16 %v1550
        %v2369 = vunpack.c.h.s8.bf16 %v1551
        %v2370 = vunpack.c.l.s8.bf16 %v1552
        %v2371 = vunpack.c.l.s8.bf16 %v1553
        %v2372 = vunpack.c.h.s8.bf16 %v1552
        %v2373 = vunpack.c.h.s8.bf16 %v1553
        %v2374 = vunpack.c.l.s8.bf16 %v1554
        %v2375 = vunpack.c.l.s8.bf16 %v1555
        %v2376 = vunpack.c.h.s8.bf16 %v1554
        %v2377 = vunpack.c.h.s8.bf16 %v1555
        %v2378 = vunpack.c.l.s8.bf16 %v1556
        %v2379 = vunpack.c.l.s8.bf16 %v1557
        %v2380 = vunpack.c.h.s8.bf16 %v1556
        %v2381 = vunpack.c.h.s8.bf16 %v1557
        %v2382 = vunpack.c.l.s8.bf16 %v1558
        %v2383 = vunpack.c.l.s8.bf16 %v1559
        %v2384 = vunpack.c.h.s8.bf16 %v1558
        %v2385 = vunpack.c.h.s8.bf16 %v1559
        %v2386 = vunpack.c.l.s8.bf16 %v1560
        %v2387 = vunpack.c.l.s8.bf16 %v1561
        %v2388 = vunpack.c.h.s8.bf16 %v1560
        %v2389 = vunpack.c.h.s8.bf16 %v1561
        %v2390 = vunpack.c.l.s8.bf16 %v1562
        %v2391 = vunpack.c.l.s8.bf16 %v1563
        %v2392 = vunpack.c.h.s8.bf16 %v1562
        %v2393 = vunpack.c.h.s8.bf16 %v1563
        %v2394 = vunpack.c.l.s8.bf16 %v1564
        %v2395 = vunpack.c.l.s8.bf16 %v1565
        %v2396 = vunpack.c.h.s8.bf16 %v1564
        %v2397 = vunpack.c.h.s8.bf16 %v1565
        %v2398 = vunpack.c.l.s8.bf16 %v1566
        %v2399 = vunpack.c.l.s8.bf16 %v1567
        %v2400 = vunpack.c.h.s8.bf16 %v1566
        %v2401 = vunpack.c.h.s8.bf16 %v1567
        %v2402 = vunpack.c.l.s8.bf16 %v1568
        %v2403 = vunpack.c.l.s8.bf16 %v1569
        %v2404 = vunpack.c.h.s8.bf16 %v1568
        %v2405 = vunpack.c.h.s8.bf16 %v1569
        %v2406 = vunpack.c.l.s8.bf16 %v1570
        %v2407 = vunpack.c.l.s8.bf16 %v1571
        %v2408 = vunpack.c.h.s8.bf16 %v1570
        %v2409 = vunpack.c.h.s8.bf16 %v1571
        %v2410 = vunpack.c.l.s8.bf16 %v1572
        %v2411 = vunpack.c.l.s8.bf16 %v1573
        %v2412 = vunpack.c.h.s8.bf16 %v1572
        %v2413 = vunpack.c.h.s8.bf16 %v1573
        %v2414 = vunpack.c.l.s8.bf16 %v1574
        %v2415 = vunpack.c.l.s8.bf16 %v1575
        %v2416 = vunpack.c.h.s8.bf16 %v1574
        %v2417 = vunpack.c.h.s8.bf16 %v1575
        %v2418 = vunpack.c.l.s8.bf16 %v1576
        %v2419 = vunpack.c.l.s8.bf16 %v1577
        %v2420 = vunpack.c.h.s8.bf16 %v1576
        %v2421 = vunpack.c.h.s8.bf16 %v1577
        %v2422 = vunpack.c.l.s8.bf16 %v1578
        %v2423 = vunpack.c.l.s8.bf16 %v1579
        %v2424 = vunpack.c.h.s8.bf16 %v1578
        %v2425 = vunpack.c.h.s8.bf16 %v1579
        %v2426 = vunpack.c.l.s8.bf16 %v1580
        %v2427 = vunpack.c.l.s8.bf16 %v1581
        %v2428 = vunpack.c.h.s8.bf16 %v1580
        %v2429 = vunpack.c.h.s8.bf16 %v1581
        %v2430 = vunpack.c.l.s8.bf16 %v1582
        %v2431 = vunpack.c.l.s8.bf16 %v1583
        %v2432 = vunpack.c.h.s8.bf16 %v1582
        %v2433 = vunpack.c.h.s8.bf16 %v1583
        %v2434 = vunpack.c.l.s8.bf16 %v1584
        %v2435 = vunpack.c.l.s8.bf16 %v1585
        %v2436 = vunpack.c.h.s8.bf16 %v1584
        %v2437 = vunpack.c.h.s8.bf16 %v1585
        %v2438 = vunpack.c.l.s8.bf16 %v1586
        %v2439 = vunpack.c.l.s8.bf16 %v1587
        %v2440 = vunpack.c.h.s8.bf16 %v1586
        %v2441 = vunpack.c.h.s8.bf16 %v1587
        %v2442 = vunpack.c.l.s8.bf16 %v1588
        %v2443 = vunpack.c.l.s8.bf16 %v1589
        %v2444 = vunpack.c.h.s8.bf16 %v1588
        %v2445 = vunpack.c.h.s8.bf16 %v1589
        %v2446 = vunpack.c.l.s8.bf16 %v1590
        %v2447 = vunpack.c.l.s8.bf16 %v1591
        %v2448 = vunpack.c.h.s8.bf16 %v1590
        %v2449 = vunpack.c.h.s8.bf16 %v1591
        %v2450 = vunpack.c.l.s8.bf16 %v1592
        %v2451 = vunpack.c.l.s8.bf16 %v1593
        %v2452 = vunpack.c.h.s8.bf16 %v1592
        %v2453 = vunpack.c.h.s8.bf16 %v1593
        %v2454 = vunpack.c.l.s8.bf16 %v1594
        %v2455 = vunpack.c.l.s8.bf16 %v1595
        %v2456 = vunpack.c.h.s8.bf16 %v1594
        %v2457 = vunpack.c.h.s8.bf16 %v1595
        %v2458 = vunpack.c.l.s8.bf16 %v1596
        %v2459 = vunpack.c.l.s8.bf16 %v1597
        %v2460 = vunpack.c.h.s8.bf16 %v1596
        %v2461 = vunpack.c.h.s8.bf16 %v1597
        %v2462 = vunpack.c.l.s8.bf16 %v1598
        %v2463 = vunpack.c.l.s8.bf16 %v1599
        %v2464 = vunpack.c.h.s8.bf16 %v1598
        %v2465 = vunpack.c.h.s8.bf16 %v1599
        %v2466 = vunpack.c.l.s8.bf16 %v1600
        %v2467 = vunpack.c.l.s8.bf16 %v1601
        %v2468 = vunpack.c.h.s8.bf16 %v1600
        %v2469 = vunpack.c.h.s8.bf16 %v1601
        %v2470 = vunpack.c.l.s8.bf16 %v1602
        %v2471 = vunpack.c.l.s8.bf16 %v1603
        %v2472 = vunpack.c.h.s8.bf16 %v1602
        %v2473 = vunpack.c.h.s8.bf16 %v1603
        %v2474 = vunpack.c.l.s8.bf16 %v1604
        %v2475 = vunpack.c.l.s8.bf16 %v1605
        %v2476 = vunpack.c.h.s8.bf16 %v1604
        %v2477 = vunpack.c.h.s8.bf16 %v1605
        %v2478 = vunpack.c.l.s8.bf16 %v1606
        %v2479 = vunpack.c.l.s8.bf16 %v1607
        %v2480 = vunpack.c.h.s8.bf16 %v1606
        %v2481 = vunpack.c.h.s8.bf16 %v1607
        %v2482 = vunpack.c.l.s8.bf16 %v1608
        %v2483 = vunpack.c.l.s8.bf16 %v1609
        %v2484 = vunpack.c.h.s8.bf16 %v1608
        %v2485 = vunpack.c.h.s8.bf16 %v1609
        %v2486 = vunpack.c.l.s8.bf16 %v1610
        %v2487 = vunpack.c.l.s8.bf16 %v1611
        %v2488 = vunpack.c.h.s8.bf16 %v1610
        %v2489 = vunpack.c.h.s8.bf16 %v1611
        %v2490 = vunpack.c.l.s8.bf16 %v1612
        %v2491 = vunpack.c.l.s8.bf16 %v1613
        %v2492 = vunpack.c.h.s8.bf16 %v1612
        %v2493 = vunpack.c.h.s8.bf16 %v1613
        %v2494 = vunpack.c.l.s8.bf16 %v1614
        %v2495 = vunpack.c.l.s8.bf16 %v1615
        %v2496 = vunpack.c.h.s8.bf16 %v1614
        %v2497 = vunpack.c.h.s8.bf16 %v1615
        %v2498 = vunpack.c.l.s8.bf16 %v1616
        %v2499 = vunpack.c.l.s8.bf16 %v1617
        %v2500 = vunpack.c.h.s8.bf16 %v1616
        %v2501 = vunpack.c.h.s8.bf16 %v1617
        %v2502 = vunpack.c.l.s8.bf16 %v1618
        %v2503 = vunpack.c.l.s8.bf16 %v1619
        %v2504 = vunpack.c.h.s8.bf16 %v1618
        %v2505 = vunpack.c.h.s8.bf16 %v1619
        %v2506 = vunpack.c.l.s8.bf16 %v1620
        %v2507 = vunpack.c.l.s8.bf16 %v1621
        %v2508 = vunpack.c.h.s8.bf16 %v1620
        %v2509 = vunpack.c.h.s8.bf16 %v1621
        %v2510 = vunpack.c.l.s8.bf16 %v1622
        %v2511 = vunpack.c.l.s8.bf16 %v1623
        %v2512 = vunpack.c.h.s8.bf16 %v1622
        %v2513 = vunpack.c.h.s8.bf16 %v1623
        %v2514 = vunpack.c.l.s8.bf16 %v1624
        %v2515 = vunpack.c.l.s8.bf16 %v1625
        %v2516 = vunpack.c.h.s8.bf16 %v1624
        %v2517 = vunpack.c.h.s8.bf16 %v1625
        %v2518 = vunpack.c.l.s8.bf16 %v1626
        %v2519 = vunpack.c.l.s8.bf16 %v1627
        %v2520 = vunpack.c.h.s8.bf16 %v1626
        %v2521 = vunpack.c.h.s8.bf16 %v1627
        %v2522 = vunpack.c.l.s8.bf16 %v1628
        %v2523 = vunpack.c.l.s8.bf16 %v1629
        %v2524 = vunpack.c.h.s8.bf16 %v1628
        %v2525 = vunpack.c.h.s8.bf16 %v1629
        %v2526 = vunpack.c.l.s8.bf16 %v1630
        %v2527 = vunpack.c.l.s8.bf16 %v1631
        %v2528 = vunpack.c.h.s8.bf16 %v1630
        %v2529 = vunpack.c.h.s8.bf16 %v1631
        %v2530 = vunpack.c.l.s8.bf16 %v1632
        %v2531 = vunpack.c.l.s8.bf16 %v1633
        %v2532 = vunpack.c.h.s8.bf16 %v1632
        %v2533 = vunpack.c.h.s8.bf16 %v1633
        %v2534 = vunpack.c.l.s8.bf16 %v1634
        %v2535 = vunpack.c.l.s8.bf16 %v1635
        %v2536 = vunpack.c.h.s8.bf16 %v1634
        %v2537 = vunpack.c.h.s8.bf16 %v1635
        %v2538 = vunpack.c.l.s8.bf16 %v1636
        %v2539 = vunpack.c.l.s8.bf16 %v1637
        %v2540 = vunpack.c.h.s8.bf16 %v1636
        %v2541 = vunpack.c.h.s8.bf16 %v1637
        %v2542 = vunpack.c.l.s8.bf16 %v1638
        %v2543 = vunpack.c.l.s8.bf16 %v1639
        %v2544 = vunpack.c.h.s8.bf16 %v1638
        %v2545 = vunpack.c.h.s8.bf16 %v1639
        %v2546 = vunpack.c.l.s8.bf16 %v1640
        %v2547 = vunpack.c.l.s8.bf16 %v1641
        %v2548 = vunpack.c.h.s8.bf16 %v1640
        %v2549 = vunpack.c.h.s8.bf16 %v1641
        %v2550 = vunpack.c.l.s8.bf16 %v1642
        %v2551 = vunpack.c.l.s8.bf16 %v1643
        %v2552 = vunpack.c.h.s8.bf16 %v1642
        %v2553 = vunpack.c.h.s8.bf16 %v1643
        %v2554 = vunpack.c.l.s8.bf16 %v1644
        %v2555 = vunpack.c.l.s8.bf16 %v1645
        %v2556 = vunpack.c.h.s8.bf16 %v1644
        %v2557 = vunpack.c.h.s8.bf16 %v1645
        %v2558 = vunpack.c.l.s8.bf16 %v1646
        %v2559 = vunpack.c.l.s8.bf16 %v1647
        %v2560 = vunpack.c.h.s8.bf16 %v1646
        %v2561 = vunpack.c.h.s8.bf16 %v1647
        %v2562 = vunpack.c.l.s8.bf16 %v1648
        %v2563 = vunpack.c.l.s8.bf16 %v1649
        %v2564 = vunpack.c.h.s8.bf16 %v1648
        %v2565 = vunpack.c.h.s8.bf16 %v1649
        %v2566 = vunpack.c.l.s8.bf16 %v1650
        %v2567 = vunpack.c.l.s8.bf16 %v1651
        %v2568 = vunpack.c.h.s8.bf16 %v1650
        %v2569 = vunpack.c.h.s8.bf16 %v1651
        %v2570 = vunpack.c.l.s8.bf16 %v1652
        %v2571 = vunpack.c.l.s8.bf16 %v1653
        %v2572 = vunpack.c.h.s8.bf16 %v1652
        %v2573 = vunpack.c.h.s8.bf16 %v1653
        %v2574 = vunpack.c.l.s8.bf16 %v1654
        %v2575 = vunpack.c.l.s8.bf16 %v1655
        %v2576 = vunpack.c.h.s8.bf16 %v1654
        %v2577 = vunpack.c.h.s8.bf16 %v1655
        %v2578 = vunpack.c.l.s8.bf16 %v1656
        %v2579 = vunpack.c.l.s8.bf16 %v1657
        %v2580 = vunpack.c.h.s8.bf16 %v1656
        %v2581 = vunpack.c.h.s8.bf16 %v1657
        %v2582 = vunpack.c.l.s8.bf16 %v1658
        %v2583 = vunpack.c.l.s8.bf16 %v1659
        %v2584 = vunpack.c.h.s8.bf16 %v1658
        %v2585 = vunpack.c.h.s8.bf16 %v1659
        %v2586 = vunpack.c.l.s8.bf16 %v1660
        %v2587 = vunpack.c.l.s8.bf16 %v1661
        %v2588 = vunpack.c.h.s8.bf16 %v1660
        %v2589 = vunpack.c.h.s8.bf16 %v1661
        %v2590 = vunpack.c.l.s8.bf16 %v1662
        %v2591 = vunpack.c.l.s8.bf16 %v1663
        %v2592 = vunpack.c.h.s8.bf16 %v1662
        %v2593 = vunpack.c.h.s8.bf16 %v1663
        %v2594 = vunpack.c.l.s8.bf16 %v1664
        %v2595 = vunpack.c.l.s8.bf16 %v1665
        %v2596 = vunpack.c.h.s8.bf16 %v1664
        %v2597 = vunpack.c.h.s8.bf16 %v1665
        %v2598 = vunpack.c.l.s8.bf16 %v1666
        %v2599 = vunpack.c.l.s8.bf16 %v1667
        %v2600 = vunpack.c.h.s8.bf16 %v1666
        %v2601 = vunpack.c.h.s8.bf16 %v1667
        %v2602 = vunpack.c.l.s8.bf16 %v1668
        %v2603 = vunpack.c.l.s8.bf16 %v1669
        %v2604 = vunpack.c.h.s8.bf16 %v1668
        %v2605 = vunpack.c.h.s8.bf16 %v1669
        %v2606 = vunpack.c.l.s8.bf16 %v1670
        %v2607 = vunpack.c.l.s8.bf16 %v1671
        %v2608 = vunpack.c.h.s8.bf16 %v1670
        %v2609 = vunpack.c.h.s8.bf16 %v1671
        %v2610 = vunpack.c.l.s8.bf16 %v1672
        %v2611 = vunpack.c.l.s8.bf16 %v1673
        %v2612 = vunpack.c.h.s8.bf16 %v1672
        %v2613 = vunpack.c.h.s8.bf16 %v1673
        %v2614 = vunpack.c.l.s8.bf16 %v1674
        %v2615 = vunpack.c.l.s8.bf16 %v1675
        %v2616 = vunpack.c.h.s8.bf16 %v1674
        %v2617 = vunpack.c.h.s8.bf16 %v1675
        %v2618 = vunpack.c.l.s8.bf16 %v1676
        %v2619 = vunpack.c.l.s8.bf16 %v1677
        %v2620 = vunpack.c.h.s8.bf16 %v1676
        %v2621 = vunpack.c.h.s8.bf16 %v1677
        %v2622 = vunpack.c.l.s8.bf16 %v1678
        %v2623 = vunpack.c.l.s8.bf16 %v1679
        %v2624 = vunpack.c.h.s8.bf16 %v1678
        %v2625 = vunpack.c.h.s8.bf16 %v1679
        %v2626 = vunpack.c.l.s8.bf16 %v1680
        %v2627 = vunpack.c.l.s8.bf16 %v1681
        %v2628 = vunpack.c.h.s8.bf16 %v1680
        %v2629 = vunpack.c.h.s8.bf16 %v1681
        %v2630 = vunpack.c.l.s8.bf16 %v1682
        %v2631 = vunpack.c.l.s8.bf16 %v1683
        %v2632 = vunpack.c.h.s8.bf16 %v1682
        %v2633 = vunpack.c.h.s8.bf16 %v1683
        %v2634 = vunpack.c.l.s8.bf16 %v1684
        %v2635 = vunpack.c.l.s8.bf16 %v1685
        %v2636 = vunpack.c.h.s8.bf16 %v1684
        %v2637 = vunpack.c.h.s8.bf16 %v1685
        %v2638 = vunpack.c.l.s8.bf16 %v1686
        %v2639 = vunpack.c.l.s8.bf16 %v1687
        %v2640 = vunpack.c.h.s8.bf16 %v1686
        %v2641 = vunpack.c.h.s8.bf16 %v1687
        %v2642 = vunpack.c.l.s8.bf16 %v1688
        %v2643 = vunpack.c.l.s8.bf16 %v1689
        %v2644 = vunpack.c.h.s8.bf16 %v1688
        %v2645 = vunpack.c.h.s8.bf16 %v1689
        %v2646 = vunpack.c.l.s8.bf16 %v1690
        %v2647 = vunpack.c.l.s8.bf16 %v1691
        %v2648 = vunpack.c.h.s8.bf16 %v1690
        %v2649 = vunpack.c.h.s8.bf16 %v1691
        %v2650 = vunpack.c.l.s8.bf16 %v1692
        %v2651 = vunpack.c.l.s8.bf16 %v1693
        %v2652 = vunpack.c.h.s8.bf16 %v1692
        %v2653 = vunpack.c.h.s8.bf16 %v1693
        %v2654 = vunpack.c.l.s8.bf16 %v1694
        %v2655 = vunpack.c.l.s8.bf16 %v1695
        %v2656 = vunpack.c.h.s8.bf16 %v1694
        %v2657 = vunpack.c.h.s8.bf16 %v1695
        %v2658 = vunpack.c.l.s8.bf16 %v1696
        %v2659 = vunpack.c.l.s8.bf16 %v1697
        %v2660 = vunpack.c.h.s8.bf16 %v1696
        %v2661 = vunpack.c.h.s8.bf16 %v1697
        %v2662 = vunpack.c.l.s8.bf16 %v1698
        %v2663 = vunpack.c.l.s8.bf16 %v1699
        %v2664 = vunpack.c.h.s8.bf16 %v1698
        %v2665 = vunpack.c.h.s8.bf16 %v1699
        %v2666 = vunpack.c.l.s8.bf16 %v1700
        %v2667 = vunpack.c.l.s8.bf16 %v1701
        %v2668 = vunpack.c.h.s8.bf16 %v1700
        %v2669 = vunpack.c.h.s8.bf16 %v1701
        %v2670 = vunpack.c.l.s8.bf16 %v1702
        %v2671 = vunpack.c.l.s8.bf16 %v1703
        %v2672 = vunpack.c.h.s8.bf16 %v1702
        %v2673 = vunpack.c.h.s8.bf16 %v1703
        %v2674 = vunpack.c.l.s8.bf16 %v1704
        %v2675 = vunpack.c.l.s8.bf16 %v1705
        %v2676 = vunpack.c.h.s8.bf16 %v1704
        %v2677 = vunpack.c.h.s8.bf16 %v1705
        %v2678 = vunpack.c.l.s8.bf16 %v1706
        %v2679 = vunpack.c.l.s8.bf16 %v1707
        %v2680 = vunpack.c.h.s8.bf16 %v1706
        %v2681 = vunpack.c.h.s8.bf16 %v1707
        %v2682 = vunpack.c.l.s8.bf16 %v1708
        %v2683 = vunpack.c.l.s8.bf16 %v1709
        %v2684 = vunpack.c.h.s8.bf16 %v1708
        %v2685 = vunpack.c.h.s8.bf16 %v1709
        %v2686 = vunpack.c.l.s8.bf16 %v1710
        %v2687 = vunpack.c.l.s8.bf16 %v1711
        %v2688 = vunpack.c.h.s8.bf16 %v1710
        %v2689 = vunpack.c.h.s8.bf16 %v1711
        %v2690 = vunpack.c.l.s8.bf16 %v1712
        %v2691 = vunpack.c.l.s8.bf16 %v1713
        %v2692 = vunpack.c.h.s8.bf16 %v1712
        %v2693 = vunpack.c.h.s8.bf16 %v1713
        %v2694 = vunpack.c.l.s8.bf16 %v1714
        %v2695 = vunpack.c.l.s8.bf16 %v1715
        %v2696 = vunpack.c.h.s8.bf16 %v1714
        %v2697 = vunpack.c.h.s8.bf16 %v1715
        %v2698 = vunpack.c.l.s8.bf16 %v1716
        %v2699 = vunpack.c.l.s8.bf16 %v1717
        %v2700 = vunpack.c.h.s8.bf16 %v1716
        %v2701 = vunpack.c.h.s8.bf16 %v1717
        %v2702 = vunpack.c.l.s8.bf16 %v1718
        %v2703 = vunpack.c.l.s8.bf16 %v1719
        %v2704 = vunpack.c.h.s8.bf16 %v1718
        %v2705 = vunpack.c.h.s8.bf16 %v1719
        %v2706 = vunpack.c.l.s8.bf16 %v1720
        %v2707 = vunpack.c.l.s8.bf16 %v1721
        %v2708 = vunpack.c.h.s8.bf16 %v1720
        %v2709 = vunpack.c.h.s8.bf16 %v1721
        %v2710 = vunpack.c.l.s8.bf16 %v1722
        %v2711 = vunpack.c.l.s8.bf16 %v1723
        %v2712 = vunpack.c.h.s8.bf16 %v1722
        %v2713 = vunpack.c.h.s8.bf16 %v1723
        %v2714 = vunpack.c.l.s8.bf16 %v1724
        %v2715 = vunpack.c.l.s8.bf16 %v1725
        %v2716 = vunpack.c.h.s8.bf16 %v1724
        %v2717 = vunpack.c.h.s8.bf16 %v1725
        %v2718 = vunpack.c.l.s8.bf16 %v1726
        %v2719 = vunpack.c.l.s8.bf16 %v1727
        %v2720 = vunpack.c.h.s8.bf16 %v1726
        %v2721 = vunpack.c.h.s8.bf16 %v1727
        %v2722 = vunpack.c.l.s8.bf16 %v1728
        %v2723 = vunpack.c.l.s8.bf16 %v1729
        %v2724 = vunpack.c.h.s8.bf16 %v1728
        %v2725 = vunpack.c.h.s8.bf16 %v1729
        %v2726 = vunpack.c.l.s8.bf16 %v1730
        %v2727 = vunpack.c.l.s8.bf16 %v1731
        %v2728 = vunpack.c.h.s8.bf16 %v1730
        %v2729 = vunpack.c.h.s8.bf16 %v1731
        %v2730 = vunpack.c.l.s8.bf16 %v1732
        %v2731 = vunpack.c.l.s8.bf16 %v1733
        %v2732 = vunpack.c.h.s8.bf16 %v1732
        %v2733 = vunpack.c.h.s8.bf16 %v1733
        %v2734 = vunpack.c.l.s8.bf16 %v1734
        %v2735 = vunpack.c.l.s8.bf16 %v1735
        %v2736 = vunpack.c.h.s8.bf16 %v1734
        %v2737 = vunpack.c.h.s8.bf16 %v1735
        %v2738 = vunpack.c.l.s8.bf16 %v1736
        %v2739 = vunpack.c.l.s8.bf16 %v1737
        %v2740 = vunpack.c.h.s8.bf16 %v1736
        %v2741 = vunpack.c.h.s8.bf16 %v1737
        %v2742 = vunpack.c.l.s8.bf16 %v1738
        %v2743 = vunpack.c.l.s8.bf16 %v1739
        %v2744 = vunpack.c.h.s8.bf16 %v1738
        %v2745 = vunpack.c.h.s8.bf16 %v1739
        %v2746 = vunpack.c.l.s8.bf16 %v1740
        %v2747 = vunpack.c.l.s8.bf16 %v1741
        %v2748 = vunpack.c.h.s8.bf16 %v1740
        %v2749 = vunpack.c.h.s8.bf16 %v1741
        %v2750 = vunpack.c.l.s8.bf16 %v1742
        %v2751 = vunpack.c.l.s8.bf16 %v1743
        %v2752 = vunpack.c.h.s8.bf16 %v1742
        %v2753 = vunpack.c.h.s8.bf16 %v1743
        %v2754 = vunpack.c.l.s8.bf16 %v1744
        %v2755 = vunpack.c.l.s8.bf16 %v1745
        %v2756 = vunpack.c.h.s8.bf16 %v1744
        %v2757 = vunpack.c.h.s8.bf16 %v1745
        %v2758 = vunpack.c.l.s8.bf16 %v1746
        %v2759 = vunpack.c.l.s8.bf16 %v1747
        %v2760 = vunpack.c.h.s8.bf16 %v1746
        %v2761 = vunpack.c.h.s8.bf16 %v1747
        %v2762 = vunpack.c.l.s8.bf16 %v1748
        %v2763 = vunpack.c.l.s8.bf16 %v1749
        %v2764 = vunpack.c.h.s8.bf16 %v1748
        %v2765 = vunpack.c.h.s8.bf16 %v1749
        %v2766 = vunpack.c.l.s8.bf16 %v1750
        %v2767 = vunpack.c.l.s8.bf16 %v1751
        %v2768 = vunpack.c.h.s8.bf16 %v1750
        %v2769 = vunpack.c.h.s8.bf16 %v1751
        %v2770 = vunpack.c.l.s8.bf16 %v1752
        %v2771 = vunpack.c.l.s8.bf16 %v1753
        %v2772 = vunpack.c.h.s8.bf16 %v1752
        %v2773 = vunpack.c.h.s8.bf16 %v1753
        %v2774 = vunpack.c.l.s8.bf16 %v1754
        %v2775 = vunpack.c.l.s8.bf16 %v1755
        %v2776 = vunpack.c.h.s8.bf16 %v1754
        %v2777 = vunpack.c.h.s8.bf16 %v1755
        %v2778 = vunpack.c.l.s8.bf16 %v1756
        %v2779 = vunpack.c.l.s8.bf16 %v1757
        %v2780 = vunpack.c.h.s8.bf16 %v1756
        %v2781 = vunpack.c.h.s8.bf16 %v1757
        %2782 = vmatprep.subr.bf16.mxu0 %v1773
        %2783 = vmatpush1.bf16.msra.mxu0 %v1772
        %2784 = vmatprep.subr.bf16.mxu0 %v1771
        %2785 = vmatpush1.bf16.msra.mxu0 %v1770
        %2786 = vmatprep.subr.bf16.mxu0 %v1769
        %2787 = vmatpush1.bf16.msra.mxu0 %v1768
        %2788 = vmatprep.subr.bf16.mxu0 %v1767
        %2789 = vmatpush1.bf16.msra.mxu0 %v1766
        %2790 = vmatprep.subr.bf16.mxu0 %v1765
        %2791 = vmatpush1.bf16.msra.mxu0 %v1764
        %2792 = vmatprep.subr.bf16.mxu0 %v1763
        %2793 = vmatpush1.bf16.msra.mxu0 %v1762
        %2794 = vmatprep.subr.bf16.mxu0 %v1761
        %2795 = vmatpush1.bf16.msra.mxu0 %v1760
        %2796 = vmatprep.subr.bf16.mxu0 %v1759
        %2797 = vmatpush1.bf16.msra.mxu0 %v1758
        %2798 = vmatprep.subr.bf16.mxu0 %v1789
        %2799 = vmatpush2.bf16.msra.mxu0 %v1788
        %2800 = vmatprep.subr.bf16.mxu0 %v1787
        %2801 = vmatpush2.bf16.msra.mxu0 %v1786
        %2802 = vmatprep.subr.bf16.mxu0 %v1785
        %2803 = vmatpush2.bf16.msra.mxu0 %v1784
        %2804 = vmatprep.subr.bf16.mxu0 %v1783
        %2805 = vmatpush2.bf16.msra.mxu0 %v1782
        %2806 = vmatprep.subr.bf16.mxu0 %v1781
        %2807 = vmatpush2.bf16.msra.mxu0 %v1780
        %2808 = vmatprep.subr.bf16.mxu0 %v1779
        %2809 = vmatpush2.bf16.msra.mxu0 %v1778
        %2810 = vmatprep.subr.bf16.mxu0 %v1777
        %2811 = vmatpush2.bf16.msra.mxu0 %v1776
        %2812 = vmatprep.subr.bf16.mxu0 %v1775
        %2813 = vmatpush2.bf16.msra.mxu0 %v1774
        %2814 = vmatprep.mubr.bf16.mxu0 %v1183
        %2815 = vmatmul.mubr.bf16.gmra.mxu0 %v1182
        %v2816 = vpop.f32.mrf.mxu0
        %v2817 = vadd.f32 0.0, %v2816
        %v2818 = vpop.f32.mrf.mxu0
        %v2819 = vadd.f32 0.0, %v2818
        %v2820 = vpop.f32.mrf.mxu0
        %v2821 = vpop.f32.mrf.mxu0
        %2822 = vdwg.mxu0
        %2823 = vmatprep.subr.bf16.mxu0 %v1805
        %2824 = vmatpush1.bf16.msra.mxu0 %v1804
        %2825 = vmatprep.subr.bf16.mxu0 %v1803
        %2826 = vmatpush1.bf16.msra.mxu0 %v1802
        %2827 = vmatprep.subr.bf16.mxu0 %v1801
        %2828 = vmatpush1.bf16.msra.mxu0 %v1800
        %2829 = vmatprep.subr.bf16.mxu0 %v1799
        %2830 = vmatpush1.bf16.msra.mxu0 %v1798
        %2831 = vmatprep.subr.bf16.mxu0 %v1797
        %2832 = vmatpush1.bf16.msra.mxu0 %v1796
        %2833 = vmatprep.subr.bf16.mxu0 %v1795
        %2834 = vmatpush1.bf16.msra.mxu0 %v1794
        %2835 = vmatprep.subr.bf16.mxu0 %v1793
        %2836 = vmatpush1.bf16.msra.mxu0 %v1792
        %2837 = vmatprep.subr.bf16.mxu0 %v1791
        %2838 = vmatpush1.bf16.msra.mxu0 %v1790
        %2839 = vmatprep.subr.bf16.mxu0 %v1821
        %2840 = vmatpush2.bf16.msra.mxu0 %v1820
        %2841 = vmatprep.subr.bf16.mxu0 %v1819
        %2842 = vmatpush2.bf16.msra.mxu0 %v1818
        %2843 = vmatprep.subr.bf16.mxu0 %v1817
        %2844 = vmatpush2.bf16.msra.mxu0 %v1816
        %2845 = vmatprep.subr.bf16.mxu0 %v1815
        %2846 = vmatpush2.bf16.msra.mxu0 %v1814
        %2847 = vmatprep.subr.bf16.mxu0 %v1813
        %2848 = vmatpush2.bf16.msra.mxu0 %v1812
        %2849 = vmatprep.subr.bf16.mxu0 %v1811
        %2850 = vmatpush2.bf16.msra.mxu0 %v1810
        %2851 = vmatprep.subr.bf16.mxu0 %v1809
        %2852 = vmatpush2.bf16.msra.mxu0 %v1808
        %2853 = vmatprep.subr.bf16.mxu0 %v1807
        %2854 = vmatpush2.bf16.msra.mxu0 %v1806
        %2855 = vmatprep.mubr.bf16.mxu0 %v1185
        %2856 = vmatmul.mubr.bf16.gmra.mxu0 %v1184
        %v2857 = vpop.f32.mrf.mxu0
        %v2858 = vadd.f32 %v2817, %v2857
        %v2859 = vpop.f32.mrf.mxu0
        %v2860 = vadd.f32 %v2819, %v2859
        %v2861 = vpop.f32.mrf.mxu0
        %v2862 = vpop.f32.mrf.mxu0
        %2863 = vdwg.mxu0
        %2864 = vmatprep.subr.bf16.mxu0 %v1837
        %2865 = vmatpush1.bf16.msra.mxu0 %v1836
        %2866 = vmatprep.subr.bf16.mxu0 %v1835
        %2867 = vmatpush1.bf16.msra.mxu0 %v1834
        %2868 = vmatprep.subr.bf16.mxu0 %v1833
        %2869 = vmatpush1.bf16.msra.mxu0 %v1832
        %2870 = vmatprep.subr.bf16.mxu0 %v1831
        %2871 = vmatpush1.bf16.msra.mxu0 %v1830
        %2872 = vmatprep.subr.bf16.mxu0 %v1829
        %2873 = vmatpush1.bf16.msra.mxu0 %v1828
        %2874 = vmatprep.subr.bf16.mxu0 %v1827
        %2875 = vmatpush1.bf16.msra.mxu0 %v1826
        %2876 = vmatprep.subr.bf16.mxu0 %v1825
        %2877 = vmatpush1.bf16.msra.mxu0 %v1824
        %2878 = vmatprep.subr.bf16.mxu0 %v1823
        %2879 = vmatpush1.bf16.msra.mxu0 %v1822
        %2880 = vmatprep.subr.bf16.mxu0 %v1853
        %2881 = vmatpush2.bf16.msra.mxu0 %v1852
        %2882 = vmatprep.subr.bf16.mxu0 %v1851
        %2883 = vmatpush2.bf16.msra.mxu0 %v1850
        %2884 = vmatprep.subr.bf16.mxu0 %v1849
        %2885 = vmatpush2.bf16.msra.mxu0 %v1848
        %2886 = vmatprep.subr.bf16.mxu0 %v1847
        %2887 = vmatpush2.bf16.msra.mxu0 %v1846
        %2888 = vmatprep.subr.bf16.mxu0 %v1845
        %2889 = vmatpush2.bf16.msra.mxu0 %v1844
        %2890 = vmatprep.subr.bf16.mxu0 %v1843
        %2891 = vmatpush2.bf16.msra.mxu0 %v1842
        %2892 = vmatprep.subr.bf16.mxu0 %v1841
        %2893 = vmatpush2.bf16.msra.mxu0 %v1840
        %2894 = vmatprep.subr.bf16.mxu0 %v1839
        %2895 = vmatpush2.bf16.msra.mxu0 %v1838
        %2896 = vmatprep.mubr.bf16.mxu0 %v1187
        %2897 = vmatmul.mubr.bf16.gmra.mxu0 %v1186
        %v2898 = vpop.f32.mrf.mxu0
        %v2899 = vadd.f32 %v2858, %v2898
        %v2900 = vpop.f32.mrf.mxu0
        %v2901 = vadd.f32 %v2860, %v2900
        %v2902 = vpop.f32.mrf.mxu0
        %v2903 = vpop.f32.mrf.mxu0
        %2904 = vdwg.mxu0
        %2905 = vmatprep.subr.bf16.mxu0 %v1869
        %2906 = vmatpush1.bf16.msra.mxu0 %v1868
        %2907 = vmatprep.subr.bf16.mxu0 %v1867
        %2908 = vmatpush1.bf16.msra.mxu0 %v1866
        %2909 = vmatprep.subr.bf16.mxu0 %v1865
        %2910 = vmatpush1.bf16.msra.mxu0 %v1864
        %2911 = vmatprep.subr.bf16.mxu0 %v1863
        %2912 = vmatpush1.bf16.msra.mxu0 %v1862
        %2913 = vmatprep.subr.bf16.mxu0 %v1861
        %2914 = vmatpush1.bf16.msra.mxu0 %v1860
        %2915 = vmatprep.subr.bf16.mxu0 %v1859
        %2916 = vmatpush1.bf16.msra.mxu0 %v1858
        %2917 = vmatprep.subr.bf16.mxu0 %v1857
        %2918 = vmatpush1.bf16.msra.mxu0 %v1856
        %2919 = vmatprep.subr.bf16.mxu0 %v1855
        %2920 = vmatpush1.bf16.msra.mxu0 %v1854
        %2921 = vmatprep.subr.bf16.mxu0 %v1885
        %2922 = vmatpush2.bf16.msra.mxu0 %v1884
        %2923 = vmatprep.subr.bf16.mxu0 %v1883
        %2924 = vmatpush2.bf16.msra.mxu0 %v1882
        %2925 = vmatprep.subr.bf16.mxu0 %v1881
        %2926 = vmatpush2.bf16.msra.mxu0 %v1880
        %2927 = vmatprep.subr.bf16.mxu0 %v1879
        %2928 = vmatpush2.bf16.msra.mxu0 %v1878
        %2929 = vmatprep.subr.bf16.mxu0 %v1877
        %2930 = vmatpush2.bf16.msra.mxu0 %v1876
        %2931 = vmatprep.subr.bf16.mxu0 %v1875
        %2932 = vmatpush2.bf16.msra.mxu0 %v1874
        %2933 = vmatprep.subr.bf16.mxu0 %v1873
        %2934 = vmatpush2.bf16.msra.mxu0 %v1872
        %2935 = vmatprep.subr.bf16.mxu0 %v1871
        %2936 = vmatpush2.bf16.msra.mxu0 %v1870
        %2937 = vmatprep.mubr.bf16.mxu0 %v1189
        %2938 = vmatmul.mubr.bf16.gmra.mxu0 %v1188
        %v2939 = vpop.f32.mrf.mxu0
        %v2940 = vadd.f32 %v2899, %v2939
        %v2941 = vpop.f32.mrf.mxu0
        %v2942 = vadd.f32 %v2901, %v2941
        %v2943 = vpop.f32.mrf.mxu0
        %v2944 = vpop.f32.mrf.mxu0
        %2945 = vdwg.mxu0
        %2946 = vmatprep.subr.bf16.mxu0 %v1901
        %2947 = vmatpush1.bf16.msra.mxu0 %v1900
        %2948 = vmatprep.subr.bf16.mxu0 %v1899
        %2949 = vmatpush1.bf16.msra.mxu0 %v1898
        %2950 = vmatprep.subr.bf16.mxu0 %v1897
        %2951 = vmatpush1.bf16.msra.mxu0 %v1896
        %2952 = vmatprep.subr.bf16.mxu0 %v1895
        %2953 = vmatpush1.bf16.msra.mxu0 %v1894
        %2954 = vmatprep.subr.bf16.mxu0 %v1893
        %2955 = vmatpush1.bf16.msra.mxu0 %v1892
        %2956 = vmatprep.subr.bf16.mxu0 %v1891
        %2957 = vmatpush1.bf16.msra.mxu0 %v1890
        %2958 = vmatprep.subr.bf16.mxu0 %v1889
        %2959 = vmatpush1.bf16.msra.mxu0 %v1888
        %2960 = vmatprep.subr.bf16.mxu0 %v1887
        %2961 = vmatpush1.bf16.msra.mxu0 %v1886
        %2962 = vmatprep.subr.bf16.mxu0 %v1917
        %2963 = vmatpush2.bf16.msra.mxu0 %v1916
        %2964 = vmatprep.subr.bf16.mxu0 %v1915
        %2965 = vmatpush2.bf16.msra.mxu0 %v1914
        %2966 = vmatprep.subr.bf16.mxu0 %v1913
        %2967 = vmatpush2.bf16.msra.mxu0 %v1912
        %2968 = vmatprep.subr.bf16.mxu0 %v1911
        %2969 = vmatpush2.bf16.msra.mxu0 %v1910
        %2970 = vmatprep.subr.bf16.mxu0 %v1909
        %2971 = vmatpush2.bf16.msra.mxu0 %v1908
        %2972 = vmatprep.subr.bf16.mxu0 %v1907
        %2973 = vmatpush2.bf16.msra.mxu0 %v1906
        %2974 = vmatprep.subr.bf16.mxu0 %v1905
        %2975 = vmatpush2.bf16.msra.mxu0 %v1904
        %2976 = vmatprep.subr.bf16.mxu0 %v1903
        %2977 = vmatpush2.bf16.msra.mxu0 %v1902
        %2978 = vmatprep.mubr.bf16.mxu0 %v1191
        %2979 = vmatmul.mubr.bf16.gmra.mxu0 %v1190
        %v2980 = vpop.f32.mrf.mxu0
        %v2981 = vadd.f32 %v2940, %v2980
        %v2982 = vpop.f32.mrf.mxu0
        %v2983 = vadd.f32 %v2942, %v2982
        %v2984 = vpop.f32.mrf.mxu0
        %v2985 = vpop.f32.mrf.mxu0
        %2986 = vdwg.mxu0
        %2987 = vmatprep.subr.bf16.mxu0 %v1933
        %2988 = vmatpush1.bf16.msra.mxu0 %v1932
        %2989 = vmatprep.subr.bf16.mxu0 %v1931
        %2990 = vmatpush1.bf16.msra.mxu0 %v1930
        %2991 = vmatprep.subr.bf16.mxu0 %v1929
        %2992 = vmatpush1.bf16.msra.mxu0 %v1928
        %2993 = vmatprep.subr.bf16.mxu0 %v1927
        %2994 = vmatpush1.bf16.msra.mxu0 %v1926
        %2995 = vmatprep.subr.bf16.mxu0 %v1925
        %2996 = vmatpush1.bf16.msra.mxu0 %v1924
        %2997 = vmatprep.subr.bf16.mxu0 %v1923
        %2998 = vmatpush1.bf16.msra.mxu0 %v1922
        %2999 = vmatprep.subr.bf16.mxu0 %v1921
        %3000 = vmatpush1.bf16.msra.mxu0 %v1920
        %3001 = vmatprep.subr.bf16.mxu0 %v1919
        %3002 = vmatpush1.bf16.msra.mxu0 %v1918
        %3003 = vmatprep.subr.bf16.mxu0 %v1949
        %3004 = vmatpush2.bf16.msra.mxu0 %v1948
        %3005 = vmatprep.subr.bf16.mxu0 %v1947
        %3006 = vmatpush2.bf16.msra.mxu0 %v1946
        %3007 = vmatprep.subr.bf16.mxu0 %v1945
        %3008 = vmatpush2.bf16.msra.mxu0 %v1944
        %3009 = vmatprep.subr.bf16.mxu0 %v1943
        %3010 = vmatpush2.bf16.msra.mxu0 %v1942
        %3011 = vmatprep.subr.bf16.mxu0 %v1941
        %3012 = vmatpush2.bf16.msra.mxu0 %v1940
        %3013 = vmatprep.subr.bf16.mxu0 %v1939
        %3014 = vmatpush2.bf16.msra.mxu0 %v1938
        %3015 = vmatprep.subr.bf16.mxu0 %v1937
        %3016 = vmatpush2.bf16.msra.mxu0 %v1936
        %3017 = vmatprep.subr.bf16.mxu0 %v1935
        %3018 = vmatpush2.bf16.msra.mxu0 %v1934
        %3019 = vmatprep.mubr.bf16.mxu0 %v1193
        %3020 = vmatmul.mubr.bf16.gmra.mxu0 %v1192
        %v3021 = vpop.f32.mrf.mxu0
        %v3022 = vadd.f32 %v2981, %v3021
        %v3023 = vpop.f32.mrf.mxu0
        %v3024 = vadd.f32 %v2983, %v3023
        %v3025 = vpop.f32.mrf.mxu0
        %v3026 = vpop.f32.mrf.mxu0
        %3027 = vdwg.mxu0
        %3028 = vmatprep.subr.bf16.mxu0 %v1965
        %3029 = vmatpush1.bf16.msra.mxu0 %v1964
        %3030 = vmatprep.subr.bf16.mxu0 %v1963
        %3031 = vmatpush1.bf16.msra.mxu0 %v1962
        %3032 = vmatprep.subr.bf16.mxu0 %v1961
        %3033 = vmatpush1.bf16.msra.mxu0 %v1960
        %3034 = vmatprep.subr.bf16.mxu0 %v1959
        %3035 = vmatpush1.bf16.msra.mxu0 %v1958
        %3036 = vmatprep.subr.bf16.mxu0 %v1957
        %3037 = vmatpush1.bf16.msra.mxu0 %v1956
        %3038 = vmatprep.subr.bf16.mxu0 %v1955
        %3039 = vmatpush1.bf16.msra.mxu0 %v1954
        %3040 = vmatprep.subr.bf16.mxu0 %v1953
        %3041 = vmatpush1.bf16.msra.mxu0 %v1952
        %3042 = vmatprep.subr.bf16.mxu0 %v1951
        %3043 = vmatpush1.bf16.msra.mxu0 %v1950
        %3044 = vmatprep.subr.bf16.mxu0 %v1981
        %3045 = vmatpush2.bf16.msra.mxu0 %v1980
        %3046 = vmatprep.subr.bf16.mxu0 %v1979
        %3047 = vmatpush2.bf16.msra.mxu0 %v1978
        %3048 = vmatprep.subr.bf16.mxu0 %v1977
        %3049 = vmatpush2.bf16.msra.mxu0 %v1976
        %3050 = vmatprep.subr.bf16.mxu0 %v1975
        %3051 = vmatpush2.bf16.msra.mxu0 %v1974
        %3052 = vmatprep.subr.bf16.mxu0 %v1973
        %3053 = vmatpush2.bf16.msra.mxu0 %v1972
        %3054 = vmatprep.subr.bf16.mxu0 %v1971
        %3055 = vmatpush2.bf16.msra.mxu0 %v1970
        %3056 = vmatprep.subr.bf16.mxu0 %v1969
        %3057 = vmatpush2.bf16.msra.mxu0 %v1968
        %3058 = vmatprep.subr.bf16.mxu0 %v1967
        %3059 = vmatpush2.bf16.msra.mxu0 %v1966
        %3060 = vmatprep.mubr.bf16.mxu0 %v1195
        %3061 = vmatmul.mubr.bf16.gmra.mxu0 %v1194
        %v3062 = vpop.f32.mrf.mxu0
        %v3063 = vadd.f32 %v3022, %v3062
        %v3064 = vpop.f32.mrf.mxu0
        %v3065 = vadd.f32 %v3024, %v3064
        %v3066 = vpop.f32.mrf.mxu0
        %v3067 = vpop.f32.mrf.mxu0
        %3068 = vdwg.mxu0
        %3069 = vmatprep.subr.bf16.mxu0 %v1997
        %3070 = vmatpush1.bf16.msra.mxu0 %v1996
        %3071 = vmatprep.subr.bf16.mxu0 %v1995
        %3072 = vmatpush1.bf16.msra.mxu0 %v1994
        %3073 = vmatprep.subr.bf16.mxu0 %v1993
        %3074 = vmatpush1.bf16.msra.mxu0 %v1992
        %3075 = vmatprep.subr.bf16.mxu0 %v1991
        %3076 = vmatpush1.bf16.msra.mxu0 %v1990
        %3077 = vmatprep.subr.bf16.mxu0 %v1989
        %3078 = vmatpush1.bf16.msra.mxu0 %v1988
        %3079 = vmatprep.subr.bf16.mxu0 %v1987
        %3080 = vmatpush1.bf16.msra.mxu0 %v1986
        %3081 = vmatprep.subr.bf16.mxu0 %v1985
        %3082 = vmatpush1.bf16.msra.mxu0 %v1984
        %3083 = vmatprep.subr.bf16.mxu0 %v1983
        %3084 = vmatpush1.bf16.msra.mxu0 %v1982
        %3085 = vmatprep.subr.bf16.mxu0 %v2013
        %3086 = vmatpush2.bf16.msra.mxu0 %v2012
        %3087 = vmatprep.subr.bf16.mxu0 %v2011
        %3088 = vmatpush2.bf16.msra.mxu0 %v2010
        %3089 = vmatprep.subr.bf16.mxu0 %v2009
        %3090 = vmatpush2.bf16.msra.mxu0 %v2008
        %3091 = vmatprep.subr.bf16.mxu0 %v2007
        %3092 = vmatpush2.bf16.msra.mxu0 %v2006
        %3093 = vmatprep.subr.bf16.mxu0 %v2005
        %3094 = vmatpush2.bf16.msra.mxu0 %v2004
        %3095 = vmatprep.subr.bf16.mxu0 %v2003
        %3096 = vmatpush2.bf16.msra.mxu0 %v2002
        %3097 = vmatprep.subr.bf16.mxu0 %v2001
        %3098 = vmatpush2.bf16.msra.mxu0 %v2000
        %3099 = vmatprep.subr.bf16.mxu0 %v1999
        %3100 = vmatpush2.bf16.msra.mxu0 %v1998
        %3101 = vmatprep.mubr.bf16.mxu0 %v1197
        %3102 = vmatmul.mubr.bf16.gmra.mxu0 %v1196
        %v3103 = vpop.f32.mrf.mxu0
        %v3104 = vadd.f32 %v3063, %v3103
        %v3105 = vpop.f32.mrf.mxu0
        %v3106 = vadd.f32 %v3065, %v3105
        %v3107 = vpop.f32.mrf.mxu0
        %v3108 = vpop.f32.mrf.mxu0
        %3109 = vdwg.mxu0
        %3110 = vmatprep.subr.bf16.mxu0 %v2029
        %3111 = vmatpush1.bf16.msra.mxu0 %v2028
        %3112 = vmatprep.subr.bf16.mxu0 %v2027
        %3113 = vmatpush1.bf16.msra.mxu0 %v2026
        %3114 = vmatprep.subr.bf16.mxu0 %v2025
        %3115 = vmatpush1.bf16.msra.mxu0 %v2024
        %3116 = vmatprep.subr.bf16.mxu0 %v2023
        %3117 = vmatpush1.bf16.msra.mxu0 %v2022
        %3118 = vmatprep.subr.bf16.mxu0 %v2021
        %3119 = vmatpush1.bf16.msra.mxu0 %v2020
        %3120 = vmatprep.subr.bf16.mxu0 %v2019
        %3121 = vmatpush1.bf16.msra.mxu0 %v2018
        %3122 = vmatprep.subr.bf16.mxu0 %v2017
        %3123 = vmatpush1.bf16.msra.mxu0 %v2016
        %3124 = vmatprep.subr.bf16.mxu0 %v2015
        %3125 = vmatpush1.bf16.msra.mxu0 %v2014
        %3126 = vmatprep.subr.bf16.mxu0 %v2045
        %3127 = vmatpush2.bf16.msra.mxu0 %v2044
        %3128 = vmatprep.subr.bf16.mxu0 %v2043
        %3129 = vmatpush2.bf16.msra.mxu0 %v2042
        %3130 = vmatprep.subr.bf16.mxu0 %v2041
        %3131 = vmatpush2.bf16.msra.mxu0 %v2040
        %3132 = vmatprep.subr.bf16.mxu0 %v2039
        %3133 = vmatpush2.bf16.msra.mxu0 %v2038
        %3134 = vmatprep.subr.bf16.mxu0 %v2037
        %3135 = vmatpush2.bf16.msra.mxu0 %v2036
        %3136 = vmatprep.subr.bf16.mxu0 %v2035
        %3137 = vmatpush2.bf16.msra.mxu0 %v2034
        %3138 = vmatprep.subr.bf16.mxu0 %v2033
        %3139 = vmatpush2.bf16.msra.mxu0 %v2032
        %3140 = vmatprep.subr.bf16.mxu0 %v2031
        %3141 = vmatpush2.bf16.msra.mxu0 %v2030
        %3142 = vmatprep.mubr.bf16.mxu0 %v1199
        %3143 = vmatmul.mubr.bf16.gmra.mxu0 %v1198
        %v3144 = vpop.f32.mrf.mxu0
        %v3145 = vadd.f32 %v3104, %v3144
        %v3146 = vpop.f32.mrf.mxu0
        %v3147 = vadd.f32 %v3106, %v3146
        %v3148 = vpop.f32.mrf.mxu0
        %v3149 = vpop.f32.mrf.mxu0
        %3150 = vdwg.mxu0
        %3151 = vmatprep.subr.bf16.mxu0 %v2061
        %3152 = vmatpush1.bf16.msra.mxu0 %v2060
        %3153 = vmatprep.subr.bf16.mxu0 %v2059
        %3154 = vmatpush1.bf16.msra.mxu0 %v2058
        %3155 = vmatprep.subr.bf16.mxu0 %v2057
        %3156 = vmatpush1.bf16.msra.mxu0 %v2056
        %3157 = vmatprep.subr.bf16.mxu0 %v2055
        %3158 = vmatpush1.bf16.msra.mxu0 %v2054
        %3159 = vmatprep.subr.bf16.mxu0 %v2053
        %3160 = vmatpush1.bf16.msra.mxu0 %v2052
        %3161 = vmatprep.subr.bf16.mxu0 %v2051
        %3162 = vmatpush1.bf16.msra.mxu0 %v2050
        %3163 = vmatprep.subr.bf16.mxu0 %v2049
        %3164 = vmatpush1.bf16.msra.mxu0 %v2048
        %3165 = vmatprep.subr.bf16.mxu0 %v2047
        %3166 = vmatpush1.bf16.msra.mxu0 %v2046
        %3167 = vmatprep.subr.bf16.mxu0 %v2077
        %3168 = vmatpush2.bf16.msra.mxu0 %v2076
        %3169 = vmatprep.subr.bf16.mxu0 %v2075
        %3170 = vmatpush2.bf16.msra.mxu0 %v2074
        %3171 = vmatprep.subr.bf16.mxu0 %v2073
        %3172 = vmatpush2.bf16.msra.mxu0 %v2072
        %3173 = vmatprep.subr.bf16.mxu0 %v2071
        %3174 = vmatpush2.bf16.msra.mxu0 %v2070
        %3175 = vmatprep.subr.bf16.mxu0 %v2069
        %3176 = vmatpush2.bf16.msra.mxu0 %v2068
        %3177 = vmatprep.subr.bf16.mxu0 %v2067
        %3178 = vmatpush2.bf16.msra.mxu0 %v2066
        %3179 = vmatprep.subr.bf16.mxu0 %v2065
        %3180 = vmatpush2.bf16.msra.mxu0 %v2064
        %3181 = vmatprep.subr.bf16.mxu0 %v2063
        %3182 = vmatpush2.bf16.msra.mxu0 %v2062
        %3183 = vmatprep.mubr.bf16.mxu0 %v1201
        %3184 = vmatmul.mubr.bf16.gmra.mxu0 %v1200
        %v3185 = vpop.f32.mrf.mxu0
        %v3186 = vadd.f32 %v3145, %v3185
        %v3187 = vpop.f32.mrf.mxu0
        %v3188 = vadd.f32 %v3147, %v3187
        %v3189 = vpop.f32.mrf.mxu0
        %v3190 = vpop.f32.mrf.mxu0
        %3191 = vdwg.mxu0
        %3192 = vmatprep.subr.bf16.mxu0 %v2093
        %3193 = vmatpush1.bf16.msra.mxu0 %v2092
        %3194 = vmatprep.subr.bf16.mxu0 %v2091
        %3195 = vmatpush1.bf16.msra.mxu0 %v2090
        %3196 = vmatprep.subr.bf16.mxu0 %v2089
        %3197 = vmatpush1.bf16.msra.mxu0 %v2088
        %3198 = vmatprep.subr.bf16.mxu0 %v2087
        %3199 = vmatpush1.bf16.msra.mxu0 %v2086
        %3200 = vmatprep.subr.bf16.mxu0 %v2085
        %3201 = vmatpush1.bf16.msra.mxu0 %v2084
        %3202 = vmatprep.subr.bf16.mxu0 %v2083
        %3203 = vmatpush1.bf16.msra.mxu0 %v2082
        %3204 = vmatprep.subr.bf16.mxu0 %v2081
        %3205 = vmatpush1.bf16.msra.mxu0 %v2080
        %3206 = vmatprep.subr.bf16.mxu0 %v2079
        %3207 = vmatpush1.bf16.msra.mxu0 %v2078
        %3208 = vmatprep.subr.bf16.mxu0 %v2109
        %3209 = vmatpush2.bf16.msra.mxu0 %v2108
        %3210 = vmatprep.subr.bf16.mxu0 %v2107
        %3211 = vmatpush2.bf16.msra.mxu0 %v2106
        %3212 = vmatprep.subr.bf16.mxu0 %v2105
        %3213 = vmatpush2.bf16.msra.mxu0 %v2104
        %3214 = vmatprep.subr.bf16.mxu0 %v2103
        %3215 = vmatpush2.bf16.msra.mxu0 %v2102
        %3216 = vmatprep.subr.bf16.mxu0 %v2101
        %3217 = vmatpush2.bf16.msra.mxu0 %v2100
        %3218 = vmatprep.subr.bf16.mxu0 %v2099
        %3219 = vmatpush2.bf16.msra.mxu0 %v2098
        %3220 = vmatprep.subr.bf16.mxu0 %v2097
        %3221 = vmatpush2.bf16.msra.mxu0 %v2096
        %3222 = vmatprep.subr.bf16.mxu0 %v2095
        %3223 = vmatpush2.bf16.msra.mxu0 %v2094
        %3224 = vmatprep.mubr.bf16.mxu0 %v1203
        %3225 = vmatmul.mubr.bf16.gmra.mxu0 %v1202
        %v3226 = vpop.f32.mrf.mxu0
        %v3227 = vadd.f32 %v3186, %v3226
        %v3228 = vpop.f32.mrf.mxu0
        %v3229 = vadd.f32 %v3188, %v3228
        %v3230 = vpop.f32.mrf.mxu0
        %v3231 = vpop.f32.mrf.mxu0
        %3232 = vdwg.mxu0
        %3233 = vmatprep.subr.bf16.mxu0 %v2125
        %3234 = vmatpush1.bf16.msra.mxu0 %v2124
        %3235 = vmatprep.subr.bf16.mxu0 %v2123
        %3236 = vmatpush1.bf16.msra.mxu0 %v2122
        %3237 = vmatprep.subr.bf16.mxu0 %v2121
        %3238 = vmatpush1.bf16.msra.mxu0 %v2120
        %3239 = vmatprep.subr.bf16.mxu0 %v2119
        %3240 = vmatpush1.bf16.msra.mxu0 %v2118
        %3241 = vmatprep.subr.bf16.mxu0 %v2117
        %3242 = vmatpush1.bf16.msra.mxu0 %v2116
        %3243 = vmatprep.subr.bf16.mxu0 %v2115
        %3244 = vmatpush1.bf16.msra.mxu0 %v2114
        %3245 = vmatprep.subr.bf16.mxu0 %v2113
        %3246 = vmatpush1.bf16.msra.mxu0 %v2112
        %3247 = vmatprep.subr.bf16.mxu0 %v2111
        %3248 = vmatpush1.bf16.msra.mxu0 %v2110
        %3249 = vmatprep.subr.bf16.mxu0 %v2141
        %3250 = vmatpush2.bf16.msra.mxu0 %v2140
        %3251 = vmatprep.subr.bf16.mxu0 %v2139
        %3252 = vmatpush2.bf16.msra.mxu0 %v2138
        %3253 = vmatprep.subr.bf16.mxu0 %v2137
        %3254 = vmatpush2.bf16.msra.mxu0 %v2136
        %3255 = vmatprep.subr.bf16.mxu0 %v2135
        %3256 = vmatpush2.bf16.msra.mxu0 %v2134
        %3257 = vmatprep.subr.bf16.mxu0 %v2133
        %3258 = vmatpush2.bf16.msra.mxu0 %v2132
        %3259 = vmatprep.subr.bf16.mxu0 %v2131
        %3260 = vmatpush2.bf16.msra.mxu0 %v2130
        %3261 = vmatprep.subr.bf16.mxu0 %v2129
        %3262 = vmatpush2.bf16.msra.mxu0 %v2128
        %3263 = vmatprep.subr.bf16.mxu0 %v2127
        %3264 = vmatpush2.bf16.msra.mxu0 %v2126
        %3265 = vmatprep.mubr.bf16.mxu0 %v1205
        %3266 = vmatmul.mubr.bf16.gmra.mxu0 %v1204
        %v3267 = vpop.f32.mrf.mxu0
        %v3268 = vadd.f32 %v3227, %v3267
        %v3269 = vpop.f32.mrf.mxu0
        %v3270 = vadd.f32 %v3229, %v3269
        %v3271 = vpop.f32.mrf.mxu0
        %v3272 = vpop.f32.mrf.mxu0
        %3273 = vdwg.mxu0
        %3274 = vmatprep.subr.bf16.mxu0 %v2157
        %3275 = vmatpush1.bf16.msra.mxu0 %v2156
        %3276 = vmatprep.subr.bf16.mxu0 %v2155
        %3277 = vmatpush1.bf16.msra.mxu0 %v2154
        %3278 = vmatprep.subr.bf16.mxu0 %v2153
        %3279 = vmatpush1.bf16.msra.mxu0 %v2152
        %3280 = vmatprep.subr.bf16.mxu0 %v2151
        %3281 = vmatpush1.bf16.msra.mxu0 %v2150
        %3282 = vmatprep.subr.bf16.mxu0 %v2149
        %3283 = vmatpush1.bf16.msra.mxu0 %v2148
        %3284 = vmatprep.subr.bf16.mxu0 %v2147
        %3285 = vmatpush1.bf16.msra.mxu0 %v2146
        %3286 = vmatprep.subr.bf16.mxu0 %v2145
        %3287 = vmatpush1.bf16.msra.mxu0 %v2144
        %3288 = vmatprep.subr.bf16.mxu0 %v2143
        %3289 = vmatpush1.bf16.msra.mxu0 %v2142
        %3290 = vmatprep.subr.bf16.mxu0 %v2173
        %3291 = vmatpush2.bf16.msra.mxu0 %v2172
        %3292 = vmatprep.subr.bf16.mxu0 %v2171
        %3293 = vmatpush2.bf16.msra.mxu0 %v2170
        %3294 = vmatprep.subr.bf16.mxu0 %v2169
        %3295 = vmatpush2.bf16.msra.mxu0 %v2168
        %3296 = vmatprep.subr.bf16.mxu0 %v2167
        %3297 = vmatpush2.bf16.msra.mxu0 %v2166
        %3298 = vmatprep.subr.bf16.mxu0 %v2165
        %3299 = vmatpush2.bf16.msra.mxu0 %v2164
        %3300 = vmatprep.subr.bf16.mxu0 %v2163
        %3301 = vmatpush2.bf16.msra.mxu0 %v2162
        %3302 = vmatprep.subr.bf16.mxu0 %v2161
        %3303 = vmatpush2.bf16.msra.mxu0 %v2160
        %3304 = vmatprep.subr.bf16.mxu0 %v2159
        %3305 = vmatpush2.bf16.msra.mxu0 %v2158
        %3306 = vmatprep.mubr.bf16.mxu0 %v1207
        %3307 = vmatmul.mubr.bf16.gmra.mxu0 %v1206
        %v3308 = vpop.f32.mrf.mxu0
        %v3309 = vadd.f32 %v3268, %v3308
        %v3310 = vpop.f32.mrf.mxu0
        %v3311 = vadd.f32 %v3270, %v3310
        %v3312 = vpop.f32.mrf.mxu0
        %v3313 = vpop.f32.mrf.mxu0
        %3314 = vdwg.mxu0
        %3315 = vmatprep.subr.bf16.mxu0 %v2189
        %3316 = vmatpush1.bf16.msra.mxu0 %v2188
        %3317 = vmatprep.subr.bf16.mxu0 %v2187
        %3318 = vmatpush1.bf16.msra.mxu0 %v2186
        %3319 = vmatprep.subr.bf16.mxu0 %v2185
        %3320 = vmatpush1.bf16.msra.mxu0 %v2184
        %3321 = vmatprep.subr.bf16.mxu0 %v2183
        %3322 = vmatpush1.bf16.msra.mxu0 %v2182
        %3323 = vmatprep.subr.bf16.mxu0 %v2181
        %3324 = vmatpush1.bf16.msra.mxu0 %v2180
        %3325 = vmatprep.subr.bf16.mxu0 %v2179
        %3326 = vmatpush1.bf16.msra.mxu0 %v2178
        %3327 = vmatprep.subr.bf16.mxu0 %v2177
        %3328 = vmatpush1.bf16.msra.mxu0 %v2176
        %3329 = vmatprep.subr.bf16.mxu0 %v2175
        %3330 = vmatpush1.bf16.msra.mxu0 %v2174
        %3331 = vmatprep.subr.bf16.mxu0 %v2205
        %3332 = vmatpush2.bf16.msra.mxu0 %v2204
        %3333 = vmatprep.subr.bf16.mxu0 %v2203
        %3334 = vmatpush2.bf16.msra.mxu0 %v2202
        %3335 = vmatprep.subr.bf16.mxu0 %v2201
        %3336 = vmatpush2.bf16.msra.mxu0 %v2200
        %3337 = vmatprep.subr.bf16.mxu0 %v2199
        %3338 = vmatpush2.bf16.msra.mxu0 %v2198
        %3339 = vmatprep.subr.bf16.mxu0 %v2197
        %3340 = vmatpush2.bf16.msra.mxu0 %v2196
        %3341 = vmatprep.subr.bf16.mxu0 %v2195
        %3342 = vmatpush2.bf16.msra.mxu0 %v2194
        %3343 = vmatprep.subr.bf16.mxu0 %v2193
        %3344 = vmatpush2.bf16.msra.mxu0 %v2192
        %3345 = vmatprep.subr.bf16.mxu0 %v2191
        %3346 = vmatpush2.bf16.msra.mxu0 %v2190
        %3347 = vmatprep.mubr.bf16.mxu0 %v1209
        %3348 = vmatmul.mubr.bf16.gmra.mxu0 %v1208
        %v3349 = vpop.f32.mrf.mxu0
        %v3350 = vadd.f32 %v3309, %v3349
        %v3351 = vpop.f32.mrf.mxu0
        %v3352 = vadd.f32 %v3311, %v3351
        %v3353 = vpop.f32.mrf.mxu0
        %v3354 = vpop.f32.mrf.mxu0
        %3355 = vdwg.mxu0
        %3356 = vmatprep.subr.bf16.mxu0 %v2221
        %3357 = vmatpush1.bf16.msra.mxu0 %v2220
        %3358 = vmatprep.subr.bf16.mxu0 %v2219
        %3359 = vmatpush1.bf16.msra.mxu0 %v2218
        %3360 = vmatprep.subr.bf16.mxu0 %v2217
        %3361 = vmatpush1.bf16.msra.mxu0 %v2216
        %3362 = vmatprep.subr.bf16.mxu0 %v2215
        %3363 = vmatpush1.bf16.msra.mxu0 %v2214
        %3364 = vmatprep.subr.bf16.mxu0 %v2213
        %3365 = vmatpush1.bf16.msra.mxu0 %v2212
        %3366 = vmatprep.subr.bf16.mxu0 %v2211
        %3367 = vmatpush1.bf16.msra.mxu0 %v2210
        %3368 = vmatprep.subr.bf16.mxu0 %v2209
        %3369 = vmatpush1.bf16.msra.mxu0 %v2208
        %3370 = vmatprep.subr.bf16.mxu0 %v2207
        %3371 = vmatpush1.bf16.msra.mxu0 %v2206
        %3372 = vmatprep.subr.bf16.mxu0 %v2237
        %3373 = vmatpush2.bf16.msra.mxu0 %v2236
        %3374 = vmatprep.subr.bf16.mxu0 %v2235
        %3375 = vmatpush2.bf16.msra.mxu0 %v2234
        %3376 = vmatprep.subr.bf16.mxu0 %v2233
        %3377 = vmatpush2.bf16.msra.mxu0 %v2232
        %3378 = vmatprep.subr.bf16.mxu0 %v2231
        %3379 = vmatpush2.bf16.msra.mxu0 %v2230
        %3380 = vmatprep.subr.bf16.mxu0 %v2229
        %3381 = vmatpush2.bf16.msra.mxu0 %v2228
        %3382 = vmatprep.subr.bf16.mxu0 %v2227
        %3383 = vmatpush2.bf16.msra.mxu0 %v2226
        %3384 = vmatprep.subr.bf16.mxu0 %v2225
        %3385 = vmatpush2.bf16.msra.mxu0 %v2224
        %3386 = vmatprep.subr.bf16.mxu0 %v2223
        %3387 = vmatpush2.bf16.msra.mxu0 %v2222
        %3388 = vmatprep.mubr.bf16.mxu0 %v1211
        %3389 = vmatmul.mubr.bf16.gmra.mxu0 %v1210
        %v3390 = vpop.f32.mrf.mxu0
        %v3391 = vadd.f32 %v3350, %v3390
        %v3392 = vpop.f32.mrf.mxu0
        %v3393 = vadd.f32 %v3352, %v3392
        %v3394 = vpop.f32.mrf.mxu0
        %v3395 = vpop.f32.mrf.mxu0
        %3396 = vdwg.mxu0
        %3397 = vmatprep.subr.bf16.mxu0 %v2253
        %3398 = vmatpush1.bf16.msra.mxu0 %v2252
        %3399 = vmatprep.subr.bf16.mxu0 %v2251
        %3400 = vmatpush1.bf16.msra.mxu0 %v2250
        %3401 = vmatprep.subr.bf16.mxu0 %v2249
        %3402 = vmatpush1.bf16.msra.mxu0 %v2248
        %3403 = vmatprep.subr.bf16.mxu0 %v2247
        %3404 = vmatpush1.bf16.msra.mxu0 %v2246
        %3405 = vmatprep.subr.bf16.mxu0 %v2245
        %3406 = vmatpush1.bf16.msra.mxu0 %v2244
        %3407 = vmatprep.subr.bf16.mxu0 %v2243
        %3408 = vmatpush1.bf16.msra.mxu0 %v2242
        %3409 = vmatprep.subr.bf16.mxu0 %v2241
        %3410 = vmatpush1.bf16.msra.mxu0 %v2240
        %3411 = vmatprep.subr.bf16.mxu0 %v2239
        %3412 = vmatpush1.bf16.msra.mxu0 %v2238
        %3413 = vmatprep.subr.bf16.mxu0 %v2269
        %3414 = vmatpush2.bf16.msra.mxu0 %v2268
        %3415 = vmatprep.subr.bf16.mxu0 %v2267
        %3416 = vmatpush2.bf16.msra.mxu0 %v2266
        %3417 = vmatprep.subr.bf16.mxu0 %v2265
        %3418 = vmatpush2.bf16.msra.mxu0 %v2264
        %3419 = vmatprep.subr.bf16.mxu0 %v2263
        %3420 = vmatpush2.bf16.msra.mxu0 %v2262
        %3421 = vmatprep.subr.bf16.mxu0 %v2261
        %3422 = vmatpush2.bf16.msra.mxu0 %v2260
        %3423 = vmatprep.subr.bf16.mxu0 %v2259
        %3424 = vmatpush2.bf16.msra.mxu0 %v2258
        %3425 = vmatprep.subr.bf16.mxu0 %v2257
        %3426 = vmatpush2.bf16.msra.mxu0 %v2256
        %3427 = vmatprep.subr.bf16.mxu0 %v2255
        %3428 = vmatpush2.bf16.msra.mxu0 %v2254
        %3429 = vmatprep.mubr.bf16.mxu0 %v1213
        %3430 = vmatmul.mubr.bf16.gmra.mxu0 %v1212
        %v3431 = vpop.f32.mrf.mxu0
        %v3432 = vadd.f32 %v3391, %v3431
        %v3433 = vpop.f32.mrf.mxu0
        %v3434 = vadd.f32 %v3393, %v3433
        %v3435 = vpop.f32.mrf.mxu0
        %v3436 = vpop.f32.mrf.mxu0
        %3437 = vdwg.mxu0
        %3438 = vmatprep.subr.bf16.mxu0 %v2285
        %3439 = vmatpush1.bf16.msra.mxu0 %v2284
        %3440 = vmatprep.subr.bf16.mxu0 %v2283
        %3441 = vmatpush1.bf16.msra.mxu0 %v2282
        %3442 = vmatprep.subr.bf16.mxu0 %v2281
        %3443 = vmatpush1.bf16.msra.mxu0 %v2280
        %3444 = vmatprep.subr.bf16.mxu0 %v2279
        %3445 = vmatpush1.bf16.msra.mxu0 %v2278
        %3446 = vmatprep.subr.bf16.mxu0 %v2277
        %3447 = vmatpush1.bf16.msra.mxu0 %v2276
        %3448 = vmatprep.subr.bf16.mxu0 %v2275
        %3449 = vmatpush1.bf16.msra.mxu0 %v2274
        %3450 = vmatprep.subr.bf16.mxu0 %v2273
        %3451 = vmatpush1.bf16.msra.mxu0 %v2272
        %3452 = vmatprep.subr.bf16.mxu0 %v2271
        %3453 = vmatpush1.bf16.msra.mxu0 %v2270
        %3454 = vmatprep.subr.bf16.mxu0 %v2301
        %3455 = vmatpush2.bf16.msra.mxu0 %v2300
        %3456 = vmatprep.subr.bf16.mxu0 %v2299
        %3457 = vmatpush2.bf16.msra.mxu0 %v2298
        %3458 = vmatprep.subr.bf16.mxu0 %v2297
        %3459 = vmatpush2.bf16.msra.mxu0 %v2296
        %3460 = vmatprep.subr.bf16.mxu0 %v2295
        %3461 = vmatpush2.bf16.msra.mxu0 %v2294
        %3462 = vmatprep.subr.bf16.mxu0 %v2293
        %3463 = vmatpush2.bf16.msra.mxu0 %v2292
        %3464 = vmatprep.subr.bf16.mxu0 %v2291
        %3465 = vmatpush2.bf16.msra.mxu0 %v2290
        %3466 = vmatprep.subr.bf16.mxu0 %v2289
        %3467 = vmatpush2.bf16.msra.mxu0 %v2288
        %3468 = vmatprep.subr.bf16.mxu0 %v2287
        %3469 = vmatpush2.bf16.msra.mxu0 %v2286
        %3470 = vmatprep.mubr.bf16.mxu0 %v1215
        %3471 = vmatmul.mubr.bf16.gmra.mxu0 %v1214
        %v3472 = vpop.f32.mrf.mxu0
        %v3473 = vadd.f32 %v3432, %v3472
        %v3474 = vpop.f32.mrf.mxu0
        %v3475 = vadd.f32 %v3434, %v3474
        %v3476 = vpop.f32.mrf.mxu0
        %v3477 = vpop.f32.mrf.mxu0
        %3478 = vdwg.mxu0
        %3479 = vmatprep.subr.bf16.mxu0 %v2317
        %3480 = vmatpush1.bf16.msra.mxu0 %v2316
        %3481 = vmatprep.subr.bf16.mxu0 %v2315
        %3482 = vmatpush1.bf16.msra.mxu0 %v2314
        %3483 = vmatprep.subr.bf16.mxu0 %v2313
        %3484 = vmatpush1.bf16.msra.mxu0 %v2312
        %3485 = vmatprep.subr.bf16.mxu0 %v2311
        %3486 = vmatpush1.bf16.msra.mxu0 %v2310
        %3487 = vmatprep.subr.bf16.mxu0 %v2309
        %3488 = vmatpush1.bf16.msra.mxu0 %v2308
        %3489 = vmatprep.subr.bf16.mxu0 %v2307
        %3490 = vmatpush1.bf16.msra.mxu0 %v2306
        %3491 = vmatprep.subr.bf16.mxu0 %v2305
        %3492 = vmatpush1.bf16.msra.mxu0 %v2304
        %3493 = vmatprep.subr.bf16.mxu0 %v2303
        %3494 = vmatpush1.bf16.msra.mxu0 %v2302
        %3495 = vmatprep.subr.bf16.mxu0 %v2333
        %3496 = vmatpush2.bf16.msra.mxu0 %v2332
        %3497 = vmatprep.subr.bf16.mxu0 %v2331
        %3498 = vmatpush2.bf16.msra.mxu0 %v2330
        %3499 = vmatprep.subr.bf16.mxu0 %v2329
        %3500 = vmatpush2.bf16.msra.mxu0 %v2328
        %3501 = vmatprep.subr.bf16.mxu0 %v2327
        %3502 = vmatpush2.bf16.msra.mxu0 %v2326
        %3503 = vmatprep.subr.bf16.mxu0 %v2325
        %3504 = vmatpush2.bf16.msra.mxu0 %v2324
        %3505 = vmatprep.subr.bf16.mxu0 %v2323
        %3506 = vmatpush2.bf16.msra.mxu0 %v2322
        %3507 = vmatprep.subr.bf16.mxu0 %v2321
        %3508 = vmatpush2.bf16.msra.mxu0 %v2320
        %3509 = vmatprep.subr.bf16.mxu0 %v2319
        %3510 = vmatpush2.bf16.msra.mxu0 %v2318
        %3511 = vmatprep.mubr.bf16.mxu0 %v1217
        %3512 = vmatmul.mubr.bf16.gmra.mxu0 %v1216
        %v3513 = vpop.f32.mrf.mxu0
        %v3514 = vadd.f32 %v3473, %v3513
        %v3515 = vpop.f32.mrf.mxu0
        %v3516 = vadd.f32 %v3475, %v3515
        %v3517 = vpop.f32.mrf.mxu0
        %v3518 = vpop.f32.mrf.mxu0
        %3519 = vdwg.mxu0
        %3520 = vmatprep.subr.bf16.mxu0 %v2349
        %3521 = vmatpush1.bf16.msra.mxu0 %v2348
        %3522 = vmatprep.subr.bf16.mxu0 %v2347
        %3523 = vmatpush1.bf16.msra.mxu0 %v2346
        %3524 = vmatprep.subr.bf16.mxu0 %v2345
        %3525 = vmatpush1.bf16.msra.mxu0 %v2344
        %3526 = vmatprep.subr.bf16.mxu0 %v2343
        %3527 = vmatpush1.bf16.msra.mxu0 %v2342
        %3528 = vmatprep.subr.bf16.mxu0 %v2341
        %3529 = vmatpush1.bf16.msra.mxu0 %v2340
        %3530 = vmatprep.subr.bf16.mxu0 %v2339
        %3531 = vmatpush1.bf16.msra.mxu0 %v2338
        %3532 = vmatprep.subr.bf16.mxu0 %v2337
        %3533 = vmatpush1.bf16.msra.mxu0 %v2336
        %3534 = vmatprep.subr.bf16.mxu0 %v2335
        %3535 = vmatpush1.bf16.msra.mxu0 %v2334
        %3536 = vmatprep.subr.bf16.mxu0 %v2365
        %3537 = vmatpush2.bf16.msra.mxu0 %v2364
        %3538 = vmatprep.subr.bf16.mxu0 %v2363
        %3539 = vmatpush2.bf16.msra.mxu0 %v2362
        %3540 = vmatprep.subr.bf16.mxu0 %v2361
        %3541 = vmatpush2.bf16.msra.mxu0 %v2360
        %3542 = vmatprep.subr.bf16.mxu0 %v2359
        %3543 = vmatpush2.bf16.msra.mxu0 %v2358
        %3544 = vmatprep.subr.bf16.mxu0 %v2357
        %3545 = vmatpush2.bf16.msra.mxu0 %v2356
        %3546 = vmatprep.subr.bf16.mxu0 %v2355
        %3547 = vmatpush2.bf16.msra.mxu0 %v2354
        %3548 = vmatprep.subr.bf16.mxu0 %v2353
        %3549 = vmatpush2.bf16.msra.mxu0 %v2352
        %3550 = vmatprep.subr.bf16.mxu0 %v2351
        %3551 = vmatpush2.bf16.msra.mxu0 %v2350
        %3552 = vmatprep.mubr.bf16.mxu0 %v1219
        %3553 = vmatmul.mubr.bf16.gmra.mxu0 %v1218
        %v3554 = vpop.f32.mrf.mxu0
        %v3555 = vadd.f32 %v3514, %v3554
        %v3556 = vpop.f32.mrf.mxu0
        %v3557 = vadd.f32 %v3516, %v3556
        %v3558 = vpop.f32.mrf.mxu0
        %v3559 = vpop.f32.mrf.mxu0
        %3560 = vdwg.mxu0
        %3561 = vmatprep.subr.bf16.mxu0 %v2381
        %3562 = vmatpush1.bf16.msra.mxu0 %v2380
        %3563 = vmatprep.subr.bf16.mxu0 %v2379
        %3564 = vmatpush1.bf16.msra.mxu0 %v2378
        %3565 = vmatprep.subr.bf16.mxu0 %v2377
        %3566 = vmatpush1.bf16.msra.mxu0 %v2376
        %3567 = vmatprep.subr.bf16.mxu0 %v2375
        %3568 = vmatpush1.bf16.msra.mxu0 %v2374
        %3569 = vmatprep.subr.bf16.mxu0 %v2373
        %3570 = vmatpush1.bf16.msra.mxu0 %v2372
        %3571 = vmatprep.subr.bf16.mxu0 %v2371
        %3572 = vmatpush1.bf16.msra.mxu0 %v2370
        %3573 = vmatprep.subr.bf16.mxu0 %v2369
        %3574 = vmatpush1.bf16.msra.mxu0 %v2368
        %3575 = vmatprep.subr.bf16.mxu0 %v2367
        %3576 = vmatpush1.bf16.msra.mxu0 %v2366
        %3577 = vmatprep.subr.bf16.mxu0 %v2397
        %3578 = vmatpush2.bf16.msra.mxu0 %v2396
        %3579 = vmatprep.subr.bf16.mxu0 %v2395
        %3580 = vmatpush2.bf16.msra.mxu0 %v2394
        %3581 = vmatprep.subr.bf16.mxu0 %v2393
        %3582 = vmatpush2.bf16.msra.mxu0 %v2392
        %3583 = vmatprep.subr.bf16.mxu0 %v2391
        %3584 = vmatpush2.bf16.msra.mxu0 %v2390
        %3585 = vmatprep.subr.bf16.mxu0 %v2389
        %3586 = vmatpush2.bf16.msra.mxu0 %v2388
        %3587 = vmatprep.subr.bf16.mxu0 %v2387
        %3588 = vmatpush2.bf16.msra.mxu0 %v2386
        %3589 = vmatprep.subr.bf16.mxu0 %v2385
        %3590 = vmatpush2.bf16.msra.mxu0 %v2384
        %3591 = vmatprep.subr.bf16.mxu0 %v2383
        %3592 = vmatpush2.bf16.msra.mxu0 %v2382
        %3593 = vmatprep.mubr.bf16.mxu0 %v1221
        %3594 = vmatmul.mubr.bf16.gmra.mxu0 %v1220
        %v3595 = vpop.f32.mrf.mxu0
        %v3596 = vadd.f32 %v3555, %v3595
        %v3597 = vpop.f32.mrf.mxu0
        %v3598 = vadd.f32 %v3557, %v3597
        %v3599 = vpop.f32.mrf.mxu0
        %v3600 = vpop.f32.mrf.mxu0
        %3601 = vdwg.mxu0
        %3602 = vmatprep.subr.bf16.mxu0 %v2413
        %3603 = vmatpush1.bf16.msra.mxu0 %v2412
        %3604 = vmatprep.subr.bf16.mxu0 %v2411
        %3605 = vmatpush1.bf16.msra.mxu0 %v2410
        %3606 = vmatprep.subr.bf16.mxu0 %v2409
        %3607 = vmatpush1.bf16.msra.mxu0 %v2408
        %3608 = vmatprep.subr.bf16.mxu0 %v2407
        %3609 = vmatpush1.bf16.msra.mxu0 %v2406
        %3610 = vmatprep.subr.bf16.mxu0 %v2405
        %3611 = vmatpush1.bf16.msra.mxu0 %v2404
        %3612 = vmatprep.subr.bf16.mxu0 %v2403
        %3613 = vmatpush1.bf16.msra.mxu0 %v2402
        %3614 = vmatprep.subr.bf16.mxu0 %v2401
        %3615 = vmatpush1.bf16.msra.mxu0 %v2400
        %3616 = vmatprep.subr.bf16.mxu0 %v2399
        %3617 = vmatpush1.bf16.msra.mxu0 %v2398
        %3618 = vmatprep.subr.bf16.mxu0 %v2429
        %3619 = vmatpush2.bf16.msra.mxu0 %v2428
        %3620 = vmatprep.subr.bf16.mxu0 %v2427
        %3621 = vmatpush2.bf16.msra.mxu0 %v2426
        %3622 = vmatprep.subr.bf16.mxu0 %v2425
        %3623 = vmatpush2.bf16.msra.mxu0 %v2424
        %3624 = vmatprep.subr.bf16.mxu0 %v2423
        %3625 = vmatpush2.bf16.msra.mxu0 %v2422
        %3626 = vmatprep.subr.bf16.mxu0 %v2421
        %3627 = vmatpush2.bf16.msra.mxu0 %v2420
        %3628 = vmatprep.subr.bf16.mxu0 %v2419
        %3629 = vmatpush2.bf16.msra.mxu0 %v2418
        %3630 = vmatprep.subr.bf16.mxu0 %v2417
        %3631 = vmatpush2.bf16.msra.mxu0 %v2416
        %3632 = vmatprep.subr.bf16.mxu0 %v2415
        %3633 = vmatpush2.bf16.msra.mxu0 %v2414
        %3634 = vmatprep.mubr.bf16.mxu0 %v1223
        %3635 = vmatmul.mubr.bf16.gmra.mxu0 %v1222
        %v3636 = vpop.f32.mrf.mxu0
        %v3637 = vadd.f32 %v3596, %v3636
        %v3638 = vpop.f32.mrf.mxu0
        %v3639 = vadd.f32 %v3598, %v3638
        %v3640 = vpop.f32.mrf.mxu0
        %v3641 = vpop.f32.mrf.mxu0
        %3642 = vdwg.mxu0
        %3643 = vmatprep.subr.bf16.mxu0 %v2445
        %3644 = vmatpush1.bf16.msra.mxu0 %v2444
        %3645 = vmatprep.subr.bf16.mxu0 %v2443
        %3646 = vmatpush1.bf16.msra.mxu0 %v2442
        %3647 = vmatprep.subr.bf16.mxu0 %v2441
        %3648 = vmatpush1.bf16.msra.mxu0 %v2440
        %3649 = vmatprep.subr.bf16.mxu0 %v2439
        %3650 = vmatpush1.bf16.msra.mxu0 %v2438
        %3651 = vmatprep.subr.bf16.mxu0 %v2437
        %3652 = vmatpush1.bf16.msra.mxu0 %v2436
        %3653 = vmatprep.subr.bf16.mxu0 %v2435
        %3654 = vmatpush1.bf16.msra.mxu0 %v2434
        %3655 = vmatprep.subr.bf16.mxu0 %v2433
        %3656 = vmatpush1.bf16.msra.mxu0 %v2432
        %3657 = vmatprep.subr.bf16.mxu0 %v2431
        %3658 = vmatpush1.bf16.msra.mxu0 %v2430
        %3659 = vmatprep.subr.bf16.mxu0 %v2461
        %3660 = vmatpush2.bf16.msra.mxu0 %v2460
        %3661 = vmatprep.subr.bf16.mxu0 %v2459
        %3662 = vmatpush2.bf16.msra.mxu0 %v2458
        %3663 = vmatprep.subr.bf16.mxu0 %v2457
        %3664 = vmatpush2.bf16.msra.mxu0 %v2456
        %3665 = vmatprep.subr.bf16.mxu0 %v2455
        %3666 = vmatpush2.bf16.msra.mxu0 %v2454
        %3667 = vmatprep.subr.bf16.mxu0 %v2453
        %3668 = vmatpush2.bf16.msra.mxu0 %v2452
        %3669 = vmatprep.subr.bf16.mxu0 %v2451
        %3670 = vmatpush2.bf16.msra.mxu0 %v2450
        %3671 = vmatprep.subr.bf16.mxu0 %v2449
        %3672 = vmatpush2.bf16.msra.mxu0 %v2448
        %3673 = vmatprep.subr.bf16.mxu0 %v2447
        %3674 = vmatpush2.bf16.msra.mxu0 %v2446
        %3675 = vmatprep.mubr.bf16.mxu0 %v1225
        %3676 = vmatmul.mubr.bf16.gmra.mxu0 %v1224
        %v3677 = vpop.f32.mrf.mxu0
        %v3678 = vadd.f32 %v3637, %v3677
        %v3679 = vpop.f32.mrf.mxu0
        %v3680 = vadd.f32 %v3639, %v3679
        %v3681 = vpop.f32.mrf.mxu0
        %v3682 = vpop.f32.mrf.mxu0
        %3683 = vdwg.mxu0
        %3684 = vmatprep.subr.bf16.mxu0 %v2477
        %3685 = vmatpush1.bf16.msra.mxu0 %v2476
        %3686 = vmatprep.subr.bf16.mxu0 %v2475
        %3687 = vmatpush1.bf16.msra.mxu0 %v2474
        %3688 = vmatprep.subr.bf16.mxu0 %v2473
        %3689 = vmatpush1.bf16.msra.mxu0 %v2472
        %3690 = vmatprep.subr.bf16.mxu0 %v2471
        %3691 = vmatpush1.bf16.msra.mxu0 %v2470
        %3692 = vmatprep.subr.bf16.mxu0 %v2469
        %3693 = vmatpush1.bf16.msra.mxu0 %v2468
        %3694 = vmatprep.subr.bf16.mxu0 %v2467
        %3695 = vmatpush1.bf16.msra.mxu0 %v2466
        %3696 = vmatprep.subr.bf16.mxu0 %v2465
        %3697 = vmatpush1.bf16.msra.mxu0 %v2464
        %3698 = vmatprep.subr.bf16.mxu0 %v2463
        %3699 = vmatpush1.bf16.msra.mxu0 %v2462
        %3700 = vmatprep.subr.bf16.mxu0 %v2493
        %3701 = vmatpush2.bf16.msra.mxu0 %v2492
        %3702 = vmatprep.subr.bf16.mxu0 %v2491
        %3703 = vmatpush2.bf16.msra.mxu0 %v2490
        %3704 = vmatprep.subr.bf16.mxu0 %v2489
        %3705 = vmatpush2.bf16.msra.mxu0 %v2488
        %3706 = vmatprep.subr.bf16.mxu0 %v2487
        %3707 = vmatpush2.bf16.msra.mxu0 %v2486
        %3708 = vmatprep.subr.bf16.mxu0 %v2485
        %3709 = vmatpush2.bf16.msra.mxu0 %v2484
        %3710 = vmatprep.subr.bf16.mxu0 %v2483
        %3711 = vmatpush2.bf16.msra.mxu0 %v2482
        %3712 = vmatprep.subr.bf16.mxu0 %v2481
        %3713 = vmatpush2.bf16.msra.mxu0 %v2480
        %3714 = vmatprep.subr.bf16.mxu0 %v2479
        %3715 = vmatpush2.bf16.msra.mxu0 %v2478
        %3716 = vmatprep.mubr.bf16.mxu0 %v1227
        %3717 = vmatmul.mubr.bf16.gmra.mxu0 %v1226
        %v3718 = vpop.f32.mrf.mxu0
        %v3719 = vadd.f32 %v3678, %v3718
        %v3720 = vpop.f32.mrf.mxu0
        %v3721 = vadd.f32 %v3680, %v3720
        %v3722 = vpop.f32.mrf.mxu0
        %v3723 = vpop.f32.mrf.mxu0
        %3724 = vdwg.mxu0
        %3725 = vmatprep.subr.bf16.mxu0 %v2509
        %3726 = vmatpush1.bf16.msra.mxu0 %v2508
        %3727 = vmatprep.subr.bf16.mxu0 %v2507
        %3728 = vmatpush1.bf16.msra.mxu0 %v2506
        %3729 = vmatprep.subr.bf16.mxu0 %v2505
        %3730 = vmatpush1.bf16.msra.mxu0 %v2504
        %3731 = vmatprep.subr.bf16.mxu0 %v2503
        %3732 = vmatpush1.bf16.msra.mxu0 %v2502
        %3733 = vmatprep.subr.bf16.mxu0 %v2501
        %3734 = vmatpush1.bf16.msra.mxu0 %v2500
        %3735 = vmatprep.subr.bf16.mxu0 %v2499
        %3736 = vmatpush1.bf16.msra.mxu0 %v2498
        %3737 = vmatprep.subr.bf16.mxu0 %v2497
        %3738 = vmatpush1.bf16.msra.mxu0 %v2496
        %3739 = vmatprep.subr.bf16.mxu0 %v2495
        %3740 = vmatpush1.bf16.msra.mxu0 %v2494
        %3741 = vmatprep.subr.bf16.mxu0 %v2525
        %3742 = vmatpush2.bf16.msra.mxu0 %v2524
        %3743 = vmatprep.subr.bf16.mxu0 %v2523
        %3744 = vmatpush2.bf16.msra.mxu0 %v2522
        %3745 = vmatprep.subr.bf16.mxu0 %v2521
        %3746 = vmatpush2.bf16.msra.mxu0 %v2520
        %3747 = vmatprep.subr.bf16.mxu0 %v2519
        %3748 = vmatpush2.bf16.msra.mxu0 %v2518
        %3749 = vmatprep.subr.bf16.mxu0 %v2517
        %3750 = vmatpush2.bf16.msra.mxu0 %v2516
        %3751 = vmatprep.subr.bf16.mxu0 %v2515
        %3752 = vmatpush2.bf16.msra.mxu0 %v2514
        %3753 = vmatprep.subr.bf16.mxu0 %v2513
        %3754 = vmatpush2.bf16.msra.mxu0 %v2512
        %3755 = vmatprep.subr.bf16.mxu0 %v2511
        %3756 = vmatpush2.bf16.msra.mxu0 %v2510
        %3757 = vmatprep.mubr.bf16.mxu0 %v1229
        %3758 = vmatmul.mubr.bf16.gmra.mxu0 %v1228
        %v3759 = vpop.f32.mrf.mxu0
        %v3760 = vadd.f32 %v3719, %v3759
        %v3761 = vpop.f32.mrf.mxu0
        %v3762 = vadd.f32 %v3721, %v3761
        %v3763 = vpop.f32.mrf.mxu0
        %v3764 = vpop.f32.mrf.mxu0
        %3765 = vdwg.mxu0
        %3766 = vmatprep.subr.bf16.mxu0 %v2541
        %3767 = vmatpush1.bf16.msra.mxu0 %v2540
        %3768 = vmatprep.subr.bf16.mxu0 %v2539
        %3769 = vmatpush1.bf16.msra.mxu0 %v2538
        %3770 = vmatprep.subr.bf16.mxu0 %v2537
        %3771 = vmatpush1.bf16.msra.mxu0 %v2536
        %3772 = vmatprep.subr.bf16.mxu0 %v2535
        %3773 = vmatpush1.bf16.msra.mxu0 %v2534
        %3774 = vmatprep.subr.bf16.mxu0 %v2533
        %3775 = vmatpush1.bf16.msra.mxu0 %v2532
        %3776 = vmatprep.subr.bf16.mxu0 %v2531
        %3777 = vmatpush1.bf16.msra.mxu0 %v2530
        %3778 = vmatprep.subr.bf16.mxu0 %v2529
        %3779 = vmatpush1.bf16.msra.mxu0 %v2528
        %3780 = vmatprep.subr.bf16.mxu0 %v2527
        %3781 = vmatpush1.bf16.msra.mxu0 %v2526
        %3782 = vmatprep.subr.bf16.mxu0 %v2557
        %3783 = vmatpush2.bf16.msra.mxu0 %v2556
        %3784 = vmatprep.subr.bf16.mxu0 %v2555
        %3785 = vmatpush2.bf16.msra.mxu0 %v2554
        %3786 = vmatprep.subr.bf16.mxu0 %v2553
        %3787 = vmatpush2.bf16.msra.mxu0 %v2552
        %3788 = vmatprep.subr.bf16.mxu0 %v2551
        %3789 = vmatpush2.bf16.msra.mxu0 %v2550
        %3790 = vmatprep.subr.bf16.mxu0 %v2549
        %3791 = vmatpush2.bf16.msra.mxu0 %v2548
        %3792 = vmatprep.subr.bf16.mxu0 %v2547
        %3793 = vmatpush2.bf16.msra.mxu0 %v2546
        %3794 = vmatprep.subr.bf16.mxu0 %v2545
        %3795 = vmatpush2.bf16.msra.mxu0 %v2544
        %3796 = vmatprep.subr.bf16.mxu0 %v2543
        %3797 = vmatpush2.bf16.msra.mxu0 %v2542
        %3798 = vmatprep.mubr.bf16.mxu0 %v1231
        %3799 = vmatmul.mubr.bf16.gmra.mxu0 %v1230
        %v3800 = vpop.f32.mrf.mxu0
        %v3801 = vadd.f32 %v3760, %v3800
        %v3802 = vpop.f32.mrf.mxu0
        %v3803 = vadd.f32 %v3762, %v3802
        %v3804 = vpop.f32.mrf.mxu0
        %v3805 = vpop.f32.mrf.mxu0
        %3806 = vdwg.mxu0
        %3807 = vmatprep.subr.bf16.mxu0 %v2573
        %3808 = vmatpush1.bf16.msra.mxu0 %v2572
        %3809 = vmatprep.subr.bf16.mxu0 %v2571
        %3810 = vmatpush1.bf16.msra.mxu0 %v2570
        %3811 = vmatprep.subr.bf16.mxu0 %v2569
        %3812 = vmatpush1.bf16.msra.mxu0 %v2568
        %3813 = vmatprep.subr.bf16.mxu0 %v2567
        %3814 = vmatpush1.bf16.msra.mxu0 %v2566
        %3815 = vmatprep.subr.bf16.mxu0 %v2565
        %3816 = vmatpush1.bf16.msra.mxu0 %v2564
        %3817 = vmatprep.subr.bf16.mxu0 %v2563
        %3818 = vmatpush1.bf16.msra.mxu0 %v2562
        %3819 = vmatprep.subr.bf16.mxu0 %v2561
        %3820 = vmatpush1.bf16.msra.mxu0 %v2560
        %3821 = vmatprep.subr.bf16.mxu0 %v2559
        %3822 = vmatpush1.bf16.msra.mxu0 %v2558
        %3823 = vmatprep.subr.bf16.mxu0 %v2589
        %3824 = vmatpush2.bf16.msra.mxu0 %v2588
        %3825 = vmatprep.subr.bf16.mxu0 %v2587
        %3826 = vmatpush2.bf16.msra.mxu0 %v2586
        %3827 = vmatprep.subr.bf16.mxu0 %v2585
        %3828 = vmatpush2.bf16.msra.mxu0 %v2584
        %3829 = vmatprep.subr.bf16.mxu0 %v2583
        %3830 = vmatpush2.bf16.msra.mxu0 %v2582
        %3831 = vmatprep.subr.bf16.mxu0 %v2581
        %3832 = vmatpush2.bf16.msra.mxu0 %v2580
        %3833 = vmatprep.subr.bf16.mxu0 %v2579
        %3834 = vmatpush2.bf16.msra.mxu0 %v2578
        %3835 = vmatprep.subr.bf16.mxu0 %v2577
        %3836 = vmatpush2.bf16.msra.mxu0 %v2576
        %3837 = vmatprep.subr.bf16.mxu0 %v2575
        %3838 = vmatpush2.bf16.msra.mxu0 %v2574
        %3839 = vmatprep.mubr.bf16.mxu0 %v1233
        %3840 = vmatmul.mubr.bf16.gmra.mxu0 %v1232
        %v3841 = vpop.f32.mrf.mxu0
        %v3842 = vadd.f32 %v3801, %v3841
        %v3843 = vpop.f32.mrf.mxu0
        %v3844 = vadd.f32 %v3803, %v3843
        %v3845 = vpop.f32.mrf.mxu0
        %v3846 = vpop.f32.mrf.mxu0
        %3847 = vdwg.mxu0
        %3848 = vmatprep.subr.bf16.mxu0 %v2605
        %3849 = vmatpush1.bf16.msra.mxu0 %v2604
        %3850 = vmatprep.subr.bf16.mxu0 %v2603
        %3851 = vmatpush1.bf16.msra.mxu0 %v2602
        %3852 = vmatprep.subr.bf16.mxu0 %v2601
        %3853 = vmatpush1.bf16.msra.mxu0 %v2600
        %3854 = vmatprep.subr.bf16.mxu0 %v2599
        %3855 = vmatpush1.bf16.msra.mxu0 %v2598
        %3856 = vmatprep.subr.bf16.mxu0 %v2597
        %3857 = vmatpush1.bf16.msra.mxu0 %v2596
        %3858 = vmatprep.subr.bf16.mxu0 %v2595
        %3859 = vmatpush1.bf16.msra.mxu0 %v2594
        %3860 = vmatprep.subr.bf16.mxu0 %v2593
        %3861 = vmatpush1.bf16.msra.mxu0 %v2592
        %3862 = vmatprep.subr.bf16.mxu0 %v2591
        %3863 = vmatpush1.bf16.msra.mxu0 %v2590
        %3864 = vmatprep.subr.bf16.mxu0 %v2621
        %3865 = vmatpush2.bf16.msra.mxu0 %v2620
        %3866 = vmatprep.subr.bf16.mxu0 %v2619
        %3867 = vmatpush2.bf16.msra.mxu0 %v2618
        %3868 = vmatprep.subr.bf16.mxu0 %v2617
        %3869 = vmatpush2.bf16.msra.mxu0 %v2616
        %3870 = vmatprep.subr.bf16.mxu0 %v2615
        %3871 = vmatpush2.bf16.msra.mxu0 %v2614
        %3872 = vmatprep.subr.bf16.mxu0 %v2613
        %3873 = vmatpush2.bf16.msra.mxu0 %v2612
        %3874 = vmatprep.subr.bf16.mxu0 %v2611
        %3875 = vmatpush2.bf16.msra.mxu0 %v2610
        %3876 = vmatprep.subr.bf16.mxu0 %v2609
        %3877 = vmatpush2.bf16.msra.mxu0 %v2608
        %3878 = vmatprep.subr.bf16.mxu0 %v2607
        %3879 = vmatpush2.bf16.msra.mxu0 %v2606
        %3880 = vmatprep.mubr.bf16.mxu0 %v1235
        %3881 = vmatmul.mubr.bf16.gmra.mxu0 %v1234
        %v3882 = vpop.f32.mrf.mxu0
        %v3883 = vadd.f32 %v3842, %v3882
        %v3884 = vpop.f32.mrf.mxu0
        %v3885 = vadd.f32 %v3844, %v3884
        %v3886 = vpop.f32.mrf.mxu0
        %v3887 = vpop.f32.mrf.mxu0
        %3888 = vdwg.mxu0
        %3889 = vmatprep.subr.bf16.mxu0 %v2637
        %3890 = vmatpush1.bf16.msra.mxu0 %v2636
        %3891 = vmatprep.subr.bf16.mxu0 %v2635
        %3892 = vmatpush1.bf16.msra.mxu0 %v2634
        %3893 = vmatprep.subr.bf16.mxu0 %v2633
        %3894 = vmatpush1.bf16.msra.mxu0 %v2632
        %3895 = vmatprep.subr.bf16.mxu0 %v2631
        %3896 = vmatpush1.bf16.msra.mxu0 %v2630
        %3897 = vmatprep.subr.bf16.mxu0 %v2629
        %3898 = vmatpush1.bf16.msra.mxu0 %v2628
        %3899 = vmatprep.subr.bf16.mxu0 %v2627
        %3900 = vmatpush1.bf16.msra.mxu0 %v2626
        %3901 = vmatprep.subr.bf16.mxu0 %v2625
        %3902 = vmatpush1.bf16.msra.mxu0 %v2624
        %3903 = vmatprep.subr.bf16.mxu0 %v2623
        %3904 = vmatpush1.bf16.msra.mxu0 %v2622
        %3905 = vmatprep.subr.bf16.mxu0 %v2653
        %3906 = vmatpush2.bf16.msra.mxu0 %v2652
        %3907 = vmatprep.subr.bf16.mxu0 %v2651
        %3908 = vmatpush2.bf16.msra.mxu0 %v2650
        %3909 = vmatprep.subr.bf16.mxu0 %v2649
        %3910 = vmatpush2.bf16.msra.mxu0 %v2648
        %3911 = vmatprep.subr.bf16.mxu0 %v2647
        %3912 = vmatpush2.bf16.msra.mxu0 %v2646
        %3913 = vmatprep.subr.bf16.mxu0 %v2645
        %3914 = vmatpush2.bf16.msra.mxu0 %v2644
        %3915 = vmatprep.subr.bf16.mxu0 %v2643
        %3916 = vmatpush2.bf16.msra.mxu0 %v2642
        %3917 = vmatprep.subr.bf16.mxu0 %v2641
        %3918 = vmatpush2.bf16.msra.mxu0 %v2640
        %3919 = vmatprep.subr.bf16.mxu0 %v2639
        %3920 = vmatpush2.bf16.msra.mxu0 %v2638
        %3921 = vmatprep.mubr.bf16.mxu0 %v1237
        %3922 = vmatmul.mubr.bf16.gmra.mxu0 %v1236
        %v3923 = vpop.f32.mrf.mxu0
        %v3924 = vadd.f32 %v3883, %v3923
        %v3925 = vpop.f32.mrf.mxu0
        %v3926 = vadd.f32 %v3885, %v3925
        %v3927 = vpop.f32.mrf.mxu0
        %v3928 = vpop.f32.mrf.mxu0
        %3929 = vdwg.mxu0
        %3930 = vmatprep.subr.bf16.mxu0 %v2669
        %3931 = vmatpush1.bf16.msra.mxu0 %v2668
        %3932 = vmatprep.subr.bf16.mxu0 %v2667
        %3933 = vmatpush1.bf16.msra.mxu0 %v2666
        %3934 = vmatprep.subr.bf16.mxu0 %v2665
        %3935 = vmatpush1.bf16.msra.mxu0 %v2664
        %3936 = vmatprep.subr.bf16.mxu0 %v2663
        %3937 = vmatpush1.bf16.msra.mxu0 %v2662
        %3938 = vmatprep.subr.bf16.mxu0 %v2661
        %3939 = vmatpush1.bf16.msra.mxu0 %v2660
        %3940 = vmatprep.subr.bf16.mxu0 %v2659
        %3941 = vmatpush1.bf16.msra.mxu0 %v2658
        %3942 = vmatprep.subr.bf16.mxu0 %v2657
        %3943 = vmatpush1.bf16.msra.mxu0 %v2656
        %3944 = vmatprep.subr.bf16.mxu0 %v2655
        %3945 = vmatpush1.bf16.msra.mxu0 %v2654
        %3946 = vmatprep.subr.bf16.mxu0 %v2685
        %3947 = vmatpush2.bf16.msra.mxu0 %v2684
        %3948 = vmatprep.subr.bf16.mxu0 %v2683
        %3949 = vmatpush2.bf16.msra.mxu0 %v2682
        %3950 = vmatprep.subr.bf16.mxu0 %v2681
        %3951 = vmatpush2.bf16.msra.mxu0 %v2680
        %3952 = vmatprep.subr.bf16.mxu0 %v2679
        %3953 = vmatpush2.bf16.msra.mxu0 %v2678
        %3954 = vmatprep.subr.bf16.mxu0 %v2677
        %3955 = vmatpush2.bf16.msra.mxu0 %v2676
        %3956 = vmatprep.subr.bf16.mxu0 %v2675
        %3957 = vmatpush2.bf16.msra.mxu0 %v2674
        %3958 = vmatprep.subr.bf16.mxu0 %v2673
        %3959 = vmatpush2.bf16.msra.mxu0 %v2672
        %3960 = vmatprep.subr.bf16.mxu0 %v2671
        %3961 = vmatpush2.bf16.msra.mxu0 %v2670
        %3962 = vmatprep.mubr.bf16.mxu0 %v1239
        %3963 = vmatmul.mubr.bf16.gmra.mxu0 %v1238
        %v3964 = vpop.f32.mrf.mxu0
        %v3965 = vadd.f32 %v3924, %v3964
        %v3966 = vpop.f32.mrf.mxu0
        %v3967 = vadd.f32 %v3926, %v3966
        %v3968 = vpop.f32.mrf.mxu0
        %v3969 = vpop.f32.mrf.mxu0
        %3970 = vdwg.mxu0
        %3971 = vmatprep.subr.bf16.mxu0 %v2701
        %3972 = vmatpush1.bf16.msra.mxu0 %v2700
        %3973 = vmatprep.subr.bf16.mxu0 %v2699
        %3974 = vmatpush1.bf16.msra.mxu0 %v2698
        %3975 = vmatprep.subr.bf16.mxu0 %v2697
        %3976 = vmatpush1.bf16.msra.mxu0 %v2696
        %3977 = vmatprep.subr.bf16.mxu0 %v2695
        %3978 = vmatpush1.bf16.msra.mxu0 %v2694
        %3979 = vmatprep.subr.bf16.mxu0 %v2693
        %3980 = vmatpush1.bf16.msra.mxu0 %v2692
        %3981 = vmatprep.subr.bf16.mxu0 %v2691
        %3982 = vmatpush1.bf16.msra.mxu0 %v2690
        %3983 = vmatprep.subr.bf16.mxu0 %v2689
        %3984 = vmatpush1.bf16.msra.mxu0 %v2688
        %3985 = vmatprep.subr.bf16.mxu0 %v2687
        %3986 = vmatpush1.bf16.msra.mxu0 %v2686
        %3987 = vmatprep.subr.bf16.mxu0 %v2717
        %3988 = vmatpush2.bf16.msra.mxu0 %v2716
        %3989 = vmatprep.subr.bf16.mxu0 %v2715
        %3990 = vmatpush2.bf16.msra.mxu0 %v2714
        %3991 = vmatprep.subr.bf16.mxu0 %v2713
        %3992 = vmatpush2.bf16.msra.mxu0 %v2712
        %3993 = vmatprep.subr.bf16.mxu0 %v2711
        %3994 = vmatpush2.bf16.msra.mxu0 %v2710
        %3995 = vmatprep.subr.bf16.mxu0 %v2709
        %3996 = vmatpush2.bf16.msra.mxu0 %v2708
        %3997 = vmatprep.subr.bf16.mxu0 %v2707
        %3998 = vmatpush2.bf16.msra.mxu0 %v2706
        %3999 = vmatprep.subr.bf16.mxu0 %v2705
        %4000 = vmatpush2.bf16.msra.mxu0 %v2704
        %4001 = vmatprep.subr.bf16.mxu0 %v2703
        %4002 = vmatpush2.bf16.msra.mxu0 %v2702
        %4003 = vmatprep.mubr.bf16.mxu0 %v1241
        %4004 = vmatmul.mubr.bf16.gmra.mxu0 %v1240
        %v4005 = vpop.f32.mrf.mxu0
        %v4006 = vadd.f32 %v3965, %v4005
        %v4007 = vpop.f32.mrf.mxu0
        %v4008 = vadd.f32 %v3967, %v4007
        %v4009 = vpop.f32.mrf.mxu0
        %v4010 = vpop.f32.mrf.mxu0
        %4011 = vdwg.mxu0
        %4012 = vmatprep.subr.bf16.mxu0 %v2733
        %4013 = vmatpush1.bf16.msra.mxu0 %v2732
        %4014 = vmatprep.subr.bf16.mxu0 %v2731
        %4015 = vmatpush1.bf16.msra.mxu0 %v2730
        %4016 = vmatprep.subr.bf16.mxu0 %v2729
        %4017 = vmatpush1.bf16.msra.mxu0 %v2728
        %4018 = vmatprep.subr.bf16.mxu0 %v2727
        %4019 = vmatpush1.bf16.msra.mxu0 %v2726
        %4020 = vmatprep.subr.bf16.mxu0 %v2725
        %4021 = vmatpush1.bf16.msra.mxu0 %v2724
        %4022 = vmatprep.subr.bf16.mxu0 %v2723
        %4023 = vmatpush1.bf16.msra.mxu0 %v2722
        %4024 = vmatprep.subr.bf16.mxu0 %v2721
        %4025 = vmatpush1.bf16.msra.mxu0 %v2720
        %4026 = vmatprep.subr.bf16.mxu0 %v2719
        %4027 = vmatpush1.bf16.msra.mxu0 %v2718
        %4028 = vmatprep.subr.bf16.mxu0 %v2749
        %4029 = vmatpush2.bf16.msra.mxu0 %v2748
        %4030 = vmatprep.subr.bf16.mxu0 %v2747
        %4031 = vmatpush2.bf16.msra.mxu0 %v2746
        %4032 = vmatprep.subr.bf16.mxu0 %v2745
        %4033 = vmatpush2.bf16.msra.mxu0 %v2744
        %4034 = vmatprep.subr.bf16.mxu0 %v2743
        %4035 = vmatpush2.bf16.msra.mxu0 %v2742
        %4036 = vmatprep.subr.bf16.mxu0 %v2741
        %4037 = vmatpush2.bf16.msra.mxu0 %v2740
        %4038 = vmatprep.subr.bf16.mxu0 %v2739
        %4039 = vmatpush2.bf16.msra.mxu0 %v2738
        %4040 = vmatprep.subr.bf16.mxu0 %v2737
        %4041 = vmatpush2.bf16.msra.mxu0 %v2736
        %4042 = vmatprep.subr.bf16.mxu0 %v2735
        %4043 = vmatpush2.bf16.msra.mxu0 %v2734
        %4044 = vmatprep.mubr.bf16.mxu0 %v1243
        %4045 = vmatmul.mubr.bf16.gmra.mxu0 %v1242
        %v4046 = vpop.f32.mrf.mxu0
        %v4047 = vadd.f32 %v4006, %v4046
        %v4048 = vpop.f32.mrf.mxu0
        %v4049 = vadd.f32 %v4008, %v4048
        %v4050 = vpop.f32.mrf.mxu0
        %v4051 = vpop.f32.mrf.mxu0
        %4052 = vdwg.mxu0
        %4053 = vmatprep.subr.bf16.mxu0 %v2765
        %4054 = vmatpush1.bf16.msra.mxu0 %v2764
        %4055 = vmatprep.subr.bf16.mxu0 %v2763
        %4056 = vmatpush1.bf16.msra.mxu0 %v2762
        %4057 = vmatprep.subr.bf16.mxu0 %v2761
        %4058 = vmatpush1.bf16.msra.mxu0 %v2760
        %4059 = vmatprep.subr.bf16.mxu0 %v2759
        %4060 = vmatpush1.bf16.msra.mxu0 %v2758
        %4061 = vmatprep.subr.bf16.mxu0 %v2757
        %4062 = vmatpush1.bf16.msra.mxu0 %v2756
        %4063 = vmatprep.subr.bf16.mxu0 %v2755
        %4064 = vmatpush1.bf16.msra.mxu0 %v2754
        %4065 = vmatprep.subr.bf16.mxu0 %v2753
        %4066 = vmatpush1.bf16.msra.mxu0 %v2752
        %4067 = vmatprep.subr.bf16.mxu0 %v2751
        %4068 = vmatpush1.bf16.msra.mxu0 %v2750
        %4069 = vmatprep.subr.bf16.mxu0 %v2781
        %4070 = vmatpush2.bf16.msra.mxu0 %v2780
        %4071 = vmatprep.subr.bf16.mxu0 %v2779
        %4072 = vmatpush2.bf16.msra.mxu0 %v2778
        %4073 = vmatprep.subr.bf16.mxu0 %v2777
        %4074 = vmatpush2.bf16.msra.mxu0 %v2776
        %4075 = vmatprep.subr.bf16.mxu0 %v2775
        %4076 = vmatpush2.bf16.msra.mxu0 %v2774
        %4077 = vmatprep.subr.bf16.mxu0 %v2773
        %4078 = vmatpush2.bf16.msra.mxu0 %v2772
        %4079 = vmatprep.subr.bf16.mxu0 %v2771
        %4080 = vmatpush2.bf16.msra.mxu0 %v2770
        %4081 = vmatprep.subr.bf16.mxu0 %v2769
        %4082 = vmatpush2.bf16.msra.mxu0 %v2768
        %4083 = vmatprep.subr.bf16.mxu0 %v2767
        %4084 = vmatpush2.bf16.msra.mxu0 %v2766
        %4085 = vmatprep.mubr.bf16.mxu0 %v1245
        %4086 = vmatmul.mubr.bf16.gmra.mxu0 %v1244
        %v4087 = vpop.f32.mrf.mxu0
        %v4088 = vadd.f32 %v4047, %v4087
        %v4089 = vpop.f32.mrf.mxu0
        %v4090 = vadd.f32 %v4049, %v4089
        %v4091 = vpop.f32.mrf.mxu0
        %v4092 = vpop.f32.mrf.mxu0
        %4093 = vdwg.mxu0
        %v4096 = vcombine.low %v4088, %v4090
        %v4098 = vunpack.c.l.s4 1983009808
        %v4099 = vunpack.c.0.s8 %v4098
        %v4100 = vlaneseq
        %v4101 = vshrl.u32 %v4100, 7
        %v4102 = vsub.s32 %v4099, %v4101
        %v4103 = vrot.slane %v4096, %v4102
        %v4105 = vadd.f32 %v813, %v4103
        %4106 = vst [vmem:[#allocation2] sm:$0xf] %v4105
        %p4107 = scmp.eq.s32.totalorder %s40, 2
        // Predicated region
        $region161: #{nn_model_nlp_forward.1} parent=91 // pred_check
          %p4108 = pneg %p4107
        $region162: #{nn_model_nlp_forward.1} parent=91 // pred_check_branch
          %4110 = sbr.rel (%p4108) target = $region164
        $region163: #{nn_model_nlp_forward.1} parent=91 // pred_region
          %v4111 = vld [vmem:[#allocation2] sm:$0xf]
          %v4112 = vld [vmem:[#allocation5] sm:$0x3]
          %v4114 = vlaneseq
          %v4115 = vshrl.u32 %v4114, 7
          %v4116 = vsub.s32 0, %v4115
          %v4117 = vrot.slane %v4112, %v4116
          %v4118 = vlaneseq
          %v4119 = vshrl.u32 %v4118, 7
          %v4120 = vsub.s32 1, %v4119
          %v4121 = vrot.slane %v4112, %v4120
          %v4122 = vcombine.low %v4117, %v4121
          %v4124 = vunpack.c.l.s4 1983009808
          %v4125 = vunpack.c.0.s8 %v4124
          %v4126 = vlaneseq
          %v4127 = vshrl.u32 %v4126, 7
          %v4128 = vsub.s32 %v4125, %v4127
          %v4129 = vrot.slane %v4122, %v4128
          %v4131 = vmul.f32 %v4111, %v4129
          %v4132 = vld [vmem:[#allocation7] sm:$0x3]
          %v4134 = vlaneseq
          %v4135 = vshrl.u32 %v4134, 7
          %v4136 = vsub.s32 0, %v4135
          %v4137 = vrot.slane %v4132, %v4136
          %v4138 = vlaneseq
          %v4139 = vshrl.u32 %v4138, 7
          %v4140 = vsub.s32 1, %v4139
          %v4141 = vrot.slane %v4132, %v4140
          %v4142 = vcombine.low %v4137, %v4141
          %v4144 = vunpack.c.l.s4 1983009808
          %v4145 = vunpack.c.0.s8 %v4144
          %v4146 = vlaneseq
          %v4147 = vshrl.u32 %v4146, 7
          %v4148 = vsub.s32 %v4145, %v4147
          %v4149 = vrot.slane %v4142, %v4148
          %v4151 = vadd.f32 %v4131, %v4149
          %v4152 = vmax.f32 %v4151, 0.0
          %v4153 = vld [vmem:[#allocation8] sm:$0xff]
          %v4155 = vcombine.high %v4153, %v4153
          %v4157 = vunpack.c.l.s4 1983009808
          %v4158 = vunpack.c.0.s8 %v4157
          %v4159 = vlaneseq
          %v4160 = vshrl.u32 %v4159, 7
          %v4161 = vsub.s32 %v4158, %v4160
          %v4162 = vrot.slane %v4153, %v4161
          %v4164 = vunpack.c.l.s4 1983009808
          %v4165 = vunpack.c.0.s8 %v4164
          %v4166 = vlaneseq
          %v4167 = vshrl.u32 %v4166, 7
          %v4168 = vsub.s32 %v4165, %v4167
          %v4169 = vrot.slane %v4155, %v4168
          %v4170 = vcombine.high %v4162, %v4162
          %v4171 = vcombine.high %v4169, %v4169
          %v4176 = vpack.c.bf16 %v4162, %v4162
          %v4177 = vpack.c.bf16 %v4170, %v4170
          %v4178 = vpack.c.bf16 %v4169, %v4169
          %v4179 = vpack.c.bf16 %v4171, %v4171
          %v4180 = vld [vmem:[#allocation10] sm:$0xff]
          %v4181 = vld [vmem:[#allocation10 + $0x8] sm:$0xff]
          %v4182 = vld [vmem:[#allocation10 + $0x10] sm:$0xff]
          %v4183 = vld [vmem:[#allocation10 + $0x18] sm:$0xff]
          %v4184 = vld [vmem:[#allocation10 + $0x20] sm:$0xff]
          %v4185 = vld [vmem:[#allocation10 + $0x28] sm:$0xff]
          %v4186 = vld [vmem:[#allocation10 + $0x30] sm:$0xff]
          %v4187 = vld [vmem:[#allocation10 + $0x38] sm:$0xff]
          %v4188 = vld [vmem:[#allocation10 + $0x40] sm:$0xff]
          %v4189 = vld [vmem:[#allocation10 + $0x48] sm:$0xff]
          %v4190 = vld [vmem:[#allocation10 + $0x50] sm:$0xff]
          %v4191 = vld [vmem:[#allocation10 + $0x58] sm:$0xff]
          %v4192 = vld [vmem:[#allocation10 + $0x60] sm:$0xff]
          %v4193 = vld [vmem:[#allocation10 + $0x68] sm:$0xff]
          %v4194 = vld [vmem:[#allocation10 + $0x70] sm:$0xff]
          %v4195 = vld [vmem:[#allocation10 + $0x78] sm:$0xff]
          %v4196 = vld [vmem:[#allocation10 + $0x80] sm:$0xff]
          %v4197 = vld [vmem:[#allocation10 + $0x88] sm:$0xff]
          %v4198 = vld [vmem:[#allocation10 + $0x90] sm:$0xff]
          %v4199 = vld [vmem:[#allocation10 + $0x98] sm:$0xff]
          %v4200 = vld [vmem:[#allocation10 + $0xa0] sm:$0xff]
          %v4201 = vld [vmem:[#allocation10 + $0xa8] sm:$0xff]
          %v4202 = vld [vmem:[#allocation10 + $0xb0] sm:$0xff]
          %v4203 = vld [vmem:[#allocation10 + $0xb8] sm:$0xff]
          %v4204 = vld [vmem:[#allocation10 + $0xc0] sm:$0xff]
          %v4205 = vld [vmem:[#allocation10 + $0xc8] sm:$0xff]
          %v4206 = vld [vmem:[#allocation10 + $0xd0] sm:$0xff]
          %v4207 = vld [vmem:[#allocation10 + $0xd8] sm:$0xff]
          %v4208 = vld [vmem:[#allocation10 + $0xe0] sm:$0xff]
          %v4209 = vld [vmem:[#allocation10 + $0xe8] sm:$0xff]
          %v4210 = vld [vmem:[#allocation10 + $0xf0] sm:$0xff]
          %v4211 = vld [vmem:[#allocation10 + $0xf8] sm:$0xff]
          %v4212 = vld [vmem:[#allocation10 + $0x100] sm:$0xff]
          %v4213 = vld [vmem:[#allocation10 + $0x108] sm:$0xff]
          %v4214 = vld [vmem:[#allocation10 + $0x110] sm:$0xff]
          %v4215 = vld [vmem:[#allocation10 + $0x118] sm:$0xff]
          %v4216 = vld [vmem:[#allocation10 + $0x120] sm:$0xff]
          %v4217 = vld [vmem:[#allocation10 + $0x128] sm:$0xff]
          %v4218 = vld [vmem:[#allocation10 + $0x130] sm:$0xff]
          %v4219 = vld [vmem:[#allocation10 + $0x138] sm:$0xff]
          %v4220 = vld [vmem:[#allocation10 + $0x140] sm:$0xff]
          %v4221 = vld [vmem:[#allocation10 + $0x148] sm:$0xff]
          %v4222 = vld [vmem:[#allocation10 + $0x150] sm:$0xff]
          %v4223 = vld [vmem:[#allocation10 + $0x158] sm:$0xff]
          %v4224 = vld [vmem:[#allocation10 + $0x160] sm:$0xff]
          %v4225 = vld [vmem:[#allocation10 + $0x168] sm:$0xff]
          %v4226 = vld [vmem:[#allocation10 + $0x170] sm:$0xff]
          %v4227 = vld [vmem:[#allocation10 + $0x178] sm:$0xff]
          %v4228 = vld [vmem:[#allocation10 + $0x180] sm:$0xff]
          %v4229 = vld [vmem:[#allocation10 + $0x188] sm:$0xff]
          %v4230 = vld [vmem:[#allocation10 + $0x190] sm:$0xff]
          %v4231 = vld [vmem:[#allocation10 + $0x198] sm:$0xff]
          %v4232 = vld [vmem:[#allocation10 + $0x1a0] sm:$0xff]
          %v4233 = vld [vmem:[#allocation10 + $0x1a8] sm:$0xff]
          %v4234 = vld [vmem:[#allocation10 + $0x1b0] sm:$0xff]
          %v4235 = vld [vmem:[#allocation10 + $0x1b8] sm:$0xff]
          %v4236 = vld [vmem:[#allocation10 + $0x1c0] sm:$0xff]
          %v4237 = vld [vmem:[#allocation10 + $0x1c8] sm:$0xff]
          %v4238 = vld [vmem:[#allocation10 + $0x1d0] sm:$0xff]
          %v4239 = vld [vmem:[#allocation10 + $0x1d8] sm:$0xff]
          %v4240 = vld [vmem:[#allocation10 + $0x1e0] sm:$0xff]
          %v4241 = vld [vmem:[#allocation10 + $0x1e8] sm:$0xff]
          %v4242 = vld [vmem:[#allocation10 + $0x1f0] sm:$0xff]
          %v4243 = vld [vmem:[#allocation10 + $0x1f8] sm:$0xff]
          %v4244 = vld [vmem:[#allocation10 + $0x200] sm:$0xff]
          %v4245 = vld [vmem:[#allocation10 + $0x208] sm:$0xff]
          %v4246 = vld [vmem:[#allocation10 + $0x210] sm:$0xff]
          %v4247 = vld [vmem:[#allocation10 + $0x218] sm:$0xff]
          %v4248 = vld [vmem:[#allocation10 + $0x220] sm:$0xff]
          %v4249 = vld [vmem:[#allocation10 + $0x228] sm:$0xff]
          %v4250 = vld [vmem:[#allocation10 + $0x230] sm:$0xff]
          %v4251 = vld [vmem:[#allocation10 + $0x238] sm:$0xff]
          %v4252 = vld [vmem:[#allocation10 + $0x240] sm:$0xff]
          %v4253 = vld [vmem:[#allocation10 + $0x248] sm:$0xff]
          %v4254 = vld [vmem:[#allocation10 + $0x250] sm:$0xff]
          %v4255 = vld [vmem:[#allocation10 + $0x258] sm:$0xff]
          %v4256 = vld [vmem:[#allocation10 + $0x260] sm:$0xff]
          %v4257 = vld [vmem:[#allocation10 + $0x268] sm:$0xff]
          %v4258 = vld [vmem:[#allocation10 + $0x270] sm:$0xff]
          %v4259 = vld [vmem:[#allocation10 + $0x278] sm:$0xff]
          %v4260 = vld [vmem:[#allocation10 + $0x280] sm:$0xff]
          %v4261 = vld [vmem:[#allocation10 + $0x288] sm:$0xff]
          %v4262 = vld [vmem:[#allocation10 + $0x290] sm:$0xff]
          %v4263 = vld [vmem:[#allocation10 + $0x298] sm:$0xff]
          %v4264 = vld [vmem:[#allocation10 + $0x2a0] sm:$0xff]
          %v4265 = vld [vmem:[#allocation10 + $0x2a8] sm:$0xff]
          %v4266 = vld [vmem:[#allocation10 + $0x2b0] sm:$0xff]
          %v4267 = vld [vmem:[#allocation10 + $0x2b8] sm:$0xff]
          %v4268 = vld [vmem:[#allocation10 + $0x2c0] sm:$0xff]
          %v4269 = vld [vmem:[#allocation10 + $0x2c8] sm:$0xff]
          %v4270 = vld [vmem:[#allocation10 + $0x2d0] sm:$0xff]
          %v4271 = vld [vmem:[#allocation10 + $0x2d8] sm:$0xff]
          %v4272 = vld [vmem:[#allocation10 + $0x2e0] sm:$0xff]
          %v4273 = vld [vmem:[#allocation10 + $0x2e8] sm:$0xff]
          %v4274 = vld [vmem:[#allocation10 + $0x2f0] sm:$0xff]
          %v4275 = vld [vmem:[#allocation10 + $0x2f8] sm:$0xff]
          %v4276 = vld [vmem:[#allocation10 + $0x300] sm:$0xff]
          %v4277 = vld [vmem:[#allocation10 + $0x308] sm:$0xff]
          %v4278 = vld [vmem:[#allocation10 + $0x310] sm:$0xff]
          %v4279 = vld [vmem:[#allocation10 + $0x318] sm:$0xff]
          %v4280 = vld [vmem:[#allocation10 + $0x320] sm:$0xff]
          %v4281 = vld [vmem:[#allocation10 + $0x328] sm:$0xff]
          %v4282 = vld [vmem:[#allocation10 + $0x330] sm:$0xff]
          %v4283 = vld [vmem:[#allocation10 + $0x338] sm:$0xff]
          %v4284 = vld [vmem:[#allocation10 + $0x340] sm:$0xff]
          %v4285 = vld [vmem:[#allocation10 + $0x348] sm:$0xff]
          %v4286 = vld [vmem:[#allocation10 + $0x350] sm:$0xff]
          %v4287 = vld [vmem:[#allocation10 + $0x358] sm:$0xff]
          %v4288 = vld [vmem:[#allocation10 + $0x360] sm:$0xff]
          %v4289 = vld [vmem:[#allocation10 + $0x368] sm:$0xff]
          %v4290 = vld [vmem:[#allocation10 + $0x370] sm:$0xff]
          %v4291 = vld [vmem:[#allocation10 + $0x378] sm:$0xff]
          %v4292 = vld [vmem:[#allocation10 + $0x380] sm:$0xff]
          %v4293 = vld [vmem:[#allocation10 + $0x388] sm:$0xff]
          %v4294 = vld [vmem:[#allocation10 + $0x390] sm:$0xff]
          %v4295 = vld [vmem:[#allocation10 + $0x398] sm:$0xff]
          %v4296 = vld [vmem:[#allocation10 + $0x3a0] sm:$0xff]
          %v4297 = vld [vmem:[#allocation10 + $0x3a8] sm:$0xff]
          %v4298 = vld [vmem:[#allocation10 + $0x3b0] sm:$0xff]
          %v4299 = vld [vmem:[#allocation10 + $0x3b8] sm:$0xff]
          %v4300 = vld [vmem:[#allocation10 + $0x3c0] sm:$0xff]
          %v4301 = vld [vmem:[#allocation10 + $0x3c8] sm:$0xff]
          %v4302 = vld [vmem:[#allocation10 + $0x3d0] sm:$0xff]
          %v4303 = vld [vmem:[#allocation10 + $0x3d8] sm:$0xff]
          %v4304 = vld [vmem:[#allocation10 + $0x3e0] sm:$0xff]
          %v4305 = vld [vmem:[#allocation10 + $0x3e8] sm:$0xff]
          %v4306 = vld [vmem:[#allocation10 + $0x3f0] sm:$0xff]
          %v4307 = vld [vmem:[#allocation10 + $0x3f8] sm:$0xff]
          %v4308 = vld [vmem:[#allocation10 + $0x400] sm:$0xff]
          %v4309 = vld [vmem:[#allocation10 + $0x408] sm:$0xff]
          %v4310 = vld [vmem:[#allocation10 + $0x410] sm:$0xff]
          %v4311 = vld [vmem:[#allocation10 + $0x418] sm:$0xff]
          %v4312 = vld [vmem:[#allocation10 + $0x420] sm:$0xff]
          %v4313 = vld [vmem:[#allocation10 + $0x428] sm:$0xff]
          %v4314 = vld [vmem:[#allocation10 + $0x430] sm:$0xff]
          %v4315 = vld [vmem:[#allocation10 + $0x438] sm:$0xff]
          %v4316 = vld [vmem:[#allocation10 + $0x440] sm:$0xff]
          %v4317 = vld [vmem:[#allocation10 + $0x448] sm:$0xff]
          %v4318 = vld [vmem:[#allocation10 + $0x450] sm:$0xff]
          %v4319 = vld [vmem:[#allocation10 + $0x458] sm:$0xff]
          %v4320 = vld [vmem:[#allocation10 + $0x460] sm:$0xff]
          %v4321 = vld [vmem:[#allocation10 + $0x468] sm:$0xff]
          %v4322 = vld [vmem:[#allocation10 + $0x470] sm:$0xff]
          %v4323 = vld [vmem:[#allocation10 + $0x478] sm:$0xff]
          %v4324 = vld [vmem:[#allocation10 + $0x480] sm:$0xff]
          %v4325 = vld [vmem:[#allocation10 + $0x488] sm:$0xff]
          %v4326 = vld [vmem:[#allocation10 + $0x490] sm:$0xff]
          %v4327 = vld [vmem:[#allocation10 + $0x498] sm:$0xff]
          %v4328 = vld [vmem:[#allocation10 + $0x4a0] sm:$0xff]
          %v4329 = vld [vmem:[#allocation10 + $0x4a8] sm:$0xff]
          %v4330 = vld [vmem:[#allocation10 + $0x4b0] sm:$0xff]
          %v4331 = vld [vmem:[#allocation10 + $0x4b8] sm:$0xff]
          %v4332 = vld [vmem:[#allocation10 + $0x4c0] sm:$0xff]
          %v4333 = vld [vmem:[#allocation10 + $0x4c8] sm:$0xff]
          %v4334 = vld [vmem:[#allocation10 + $0x4d0] sm:$0xff]
          %v4335 = vld [vmem:[#allocation10 + $0x4d8] sm:$0xff]
          %v4336 = vld [vmem:[#allocation10 + $0x4e0] sm:$0xff]
          %v4337 = vld [vmem:[#allocation10 + $0x4e8] sm:$0xff]
          %v4338 = vld [vmem:[#allocation10 + $0x4f0] sm:$0xff]
          %v4339 = vld [vmem:[#allocation10 + $0x4f8] sm:$0xff]
          %v4340 = vld [vmem:[#allocation10 + $0x500] sm:$0xff]
          %v4341 = vld [vmem:[#allocation10 + $0x508] sm:$0xff]
          %v4342 = vld [vmem:[#allocation10 + $0x510] sm:$0xff]
          %v4343 = vld [vmem:[#allocation10 + $0x518] sm:$0xff]
          %v4344 = vld [vmem:[#allocation10 + $0x520] sm:$0xff]
          %v4345 = vld [vmem:[#allocation10 + $0x528] sm:$0xff]
          %v4346 = vld [vmem:[#allocation10 + $0x530] sm:$0xff]
          %v4347 = vld [vmem:[#allocation10 + $0x538] sm:$0xff]
          %v4348 = vld [vmem:[#allocation10 + $0x540] sm:$0xff]
          %v4349 = vld [vmem:[#allocation10 + $0x548] sm:$0xff]
          %v4350 = vld [vmem:[#allocation10 + $0x550] sm:$0xff]
          %v4351 = vld [vmem:[#allocation10 + $0x558] sm:$0xff]
          %v4352 = vld [vmem:[#allocation10 + $0x560] sm:$0xff]
          %v4353 = vld [vmem:[#allocation10 + $0x568] sm:$0xff]
          %v4354 = vld [vmem:[#allocation10 + $0x570] sm:$0xff]
          %v4355 = vld [vmem:[#allocation10 + $0x578] sm:$0xff]
          %v4356 = vld [vmem:[#allocation10 + $0x580] sm:$0xff]
          %v4357 = vld [vmem:[#allocation10 + $0x588] sm:$0xff]
          %v4358 = vld [vmem:[#allocation10 + $0x590] sm:$0xff]
          %v4359 = vld [vmem:[#allocation10 + $0x598] sm:$0xff]
          %v4360 = vld [vmem:[#allocation10 + $0x5a0] sm:$0xff]
          %v4361 = vld [vmem:[#allocation10 + $0x5a8] sm:$0xff]
          %v4362 = vld [vmem:[#allocation10 + $0x5b0] sm:$0xff]
          %v4363 = vld [vmem:[#allocation10 + $0x5b8] sm:$0xff]
          %v4364 = vld [vmem:[#allocation10 + $0x5c0] sm:$0xff]
          %v4365 = vld [vmem:[#allocation10 + $0x5c8] sm:$0xff]
          %v4366 = vld [vmem:[#allocation10 + $0x5d0] sm:$0xff]
          %v4367 = vld [vmem:[#allocation10 + $0x5d8] sm:$0xff]
          %v4368 = vld [vmem:[#allocation10 + $0x5e0] sm:$0xff]
          %v4369 = vld [vmem:[#allocation10 + $0x5e8] sm:$0xff]
          %v4370 = vld [vmem:[#allocation10 + $0x5f0] sm:$0xff]
          %v4371 = vld [vmem:[#allocation10 + $0x5f8] sm:$0xff]
          %v4372 = vld [vmem:[#allocation10 + $0x600] sm:$0xff]
          %v4373 = vld [vmem:[#allocation10 + $0x608] sm:$0xff]
          %v4374 = vld [vmem:[#allocation10 + $0x610] sm:$0xff]
          %v4375 = vld [vmem:[#allocation10 + $0x618] sm:$0xff]
          %v4376 = vld [vmem:[#allocation10 + $0x620] sm:$0xff]
          %v4377 = vld [vmem:[#allocation10 + $0x628] sm:$0xff]
          %v4378 = vld [vmem:[#allocation10 + $0x630] sm:$0xff]
          %v4379 = vld [vmem:[#allocation10 + $0x638] sm:$0xff]
          %v4380 = vld [vmem:[#allocation10 + $0x640] sm:$0xff]
          %v4381 = vld [vmem:[#allocation10 + $0x648] sm:$0xff]
          %v4382 = vld [vmem:[#allocation10 + $0x650] sm:$0xff]
          %v4383 = vld [vmem:[#allocation10 + $0x658] sm:$0xff]
          %v4384 = vld [vmem:[#allocation10 + $0x660] sm:$0xff]
          %v4385 = vld [vmem:[#allocation10 + $0x668] sm:$0xff]
          %v4386 = vld [vmem:[#allocation10 + $0x670] sm:$0xff]
          %v4387 = vld [vmem:[#allocation10 + $0x678] sm:$0xff]
          %v4388 = vld [vmem:[#allocation10 + $0x680] sm:$0xff]
          %v4389 = vld [vmem:[#allocation10 + $0x688] sm:$0xff]
          %v4390 = vld [vmem:[#allocation10 + $0x690] sm:$0xff]
          %v4391 = vld [vmem:[#allocation10 + $0x698] sm:$0xff]
          %v4392 = vld [vmem:[#allocation10 + $0x6a0] sm:$0xff]
          %v4393 = vld [vmem:[#allocation10 + $0x6a8] sm:$0xff]
          %v4394 = vld [vmem:[#allocation10 + $0x6b0] sm:$0xff]
          %v4395 = vld [vmem:[#allocation10 + $0x6b8] sm:$0xff]
          %v4396 = vld [vmem:[#allocation10 + $0x6c0] sm:$0xff]
          %v4397 = vld [vmem:[#allocation10 + $0x6c8] sm:$0xff]
          %v4398 = vld [vmem:[#allocation10 + $0x6d0] sm:$0xff]
          %v4399 = vld [vmem:[#allocation10 + $0x6d8] sm:$0xff]
          %v4400 = vld [vmem:[#allocation10 + $0x6e0] sm:$0xff]
          %v4401 = vld [vmem:[#allocation10 + $0x6e8] sm:$0xff]
          %v4402 = vld [vmem:[#allocation10 + $0x6f0] sm:$0xff]
          %v4403 = vld [vmem:[#allocation10 + $0x6f8] sm:$0xff]
          %v4404 = vld [vmem:[#allocation10 + $0x700] sm:$0xff]
          %v4405 = vld [vmem:[#allocation10 + $0x708] sm:$0xff]
          %v4406 = vld [vmem:[#allocation10 + $0x710] sm:$0xff]
          %v4407 = vld [vmem:[#allocation10 + $0x718] sm:$0xff]
          %v4408 = vld [vmem:[#allocation10 + $0x720] sm:$0xff]
          %v4409 = vld [vmem:[#allocation10 + $0x728] sm:$0xff]
          %v4410 = vld [vmem:[#allocation10 + $0x730] sm:$0xff]
          %v4411 = vld [vmem:[#allocation10 + $0x738] sm:$0xff]
          %v4412 = vld [vmem:[#allocation10 + $0x740] sm:$0xff]
          %v4413 = vld [vmem:[#allocation10 + $0x748] sm:$0xff]
          %v4414 = vld [vmem:[#allocation10 + $0x750] sm:$0xff]
          %v4415 = vld [vmem:[#allocation10 + $0x758] sm:$0xff]
          %v4416 = vld [vmem:[#allocation10 + $0x760] sm:$0xff]
          %v4417 = vld [vmem:[#allocation10 + $0x768] sm:$0xff]
          %v4418 = vld [vmem:[#allocation10 + $0x770] sm:$0xff]
          %v4419 = vld [vmem:[#allocation10 + $0x778] sm:$0xff]
          %v4420 = vld [vmem:[#allocation10 + $0x780] sm:$0xff]
          %v4421 = vld [vmem:[#allocation10 + $0x788] sm:$0xff]
          %v4422 = vld [vmem:[#allocation10 + $0x790] sm:$0xff]
          %v4423 = vld [vmem:[#allocation10 + $0x798] sm:$0xff]
          %v4424 = vld [vmem:[#allocation10 + $0x7a0] sm:$0xff]
          %v4425 = vld [vmem:[#allocation10 + $0x7a8] sm:$0xff]
          %v4426 = vld [vmem:[#allocation10 + $0x7b0] sm:$0xff]
          %v4427 = vld [vmem:[#allocation10 + $0x7b8] sm:$0xff]
          %v4428 = vld [vmem:[#allocation10 + $0x7c0] sm:$0xff]
          %v4429 = vld [vmem:[#allocation10 + $0x7c8] sm:$0xff]
          %v4430 = vld [vmem:[#allocation10 + $0x7d0] sm:$0xff]
          %v4431 = vld [vmem:[#allocation10 + $0x7d8] sm:$0xff]
          %v4432 = vld [vmem:[#allocation10 + $0x7e0] sm:$0xff]
          %v4433 = vld [vmem:[#allocation10 + $0x7e8] sm:$0xff]
          %v4434 = vld [vmem:[#allocation10 + $0x7f0] sm:$0xff]
          %v4435 = vld [vmem:[#allocation10 + $0x7f8] sm:$0xff]
          %v4436 = vld [vmem:[#allocation11] sm:$0xff]
          %v4438 = vlaneseq
          %v4439 = vshrl.u32 %v4438, 7
          %v4440 = vsub.s32 0, %v4439
          %v4441 = vrot.slane %v4436, %v4440
          %v4442 = vlaneseq
          %v4443 = vshrl.u32 %v4442, 7
          %v4444 = vsub.s32 1, %v4443
          %v4445 = vrot.slane %v4436, %v4444
          %v4446 = vlaneseq
          %v4447 = vshrl.u32 %v4446, 7
          %v4448 = vsub.s32 2, %v4447
          %v4449 = vrot.slane %v4436, %v4448
          %v4450 = vlaneseq
          %v4451 = vshrl.u32 %v4450, 7
          %v4452 = vsub.s32 3, %v4451
          %v4453 = vrot.slane %v4436, %v4452
          %v4454 = vlaneseq
          %v4455 = vshrl.u32 %v4454, 7
          %v4456 = vsub.s32 4, %v4455
          %v4457 = vrot.slane %v4436, %v4456
          %v4458 = vlaneseq
          %v4459 = vshrl.u32 %v4458, 7
          %v4460 = vsub.s32 5, %v4459
          %v4461 = vrot.slane %v4436, %v4460
          %v4462 = vlaneseq
          %v4463 = vshrl.u32 %v4462, 7
          %v4464 = vsub.s32 6, %v4463
          %v4465 = vrot.slane %v4436, %v4464
          %v4466 = vlaneseq
          %v4467 = vshrl.u32 %v4466, 7
          %v4468 = vsub.s32 7, %v4467
          %v4469 = vrot.slane %v4436, %v4468
          %v4734 = vunpack.c.l.b16 %v4180
          %v4735 = vunpack.c.h.b16 %v4180
          %v4736 = vunpack.c.l.b16 %v4181
          %v4737 = vunpack.c.h.b16 %v4181
          %v4738 = vunpack.c.l.b16 %v4182
          %v4739 = vunpack.c.h.b16 %v4182
          %v4740 = vunpack.c.l.b16 %v4183
          %v4741 = vunpack.c.h.b16 %v4183
          %v4742 = vunpack.c.l.b16 %v4184
          %v4743 = vunpack.c.h.b16 %v4184
          %v4744 = vunpack.c.l.b16 %v4185
          %v4745 = vunpack.c.h.b16 %v4185
          %v4746 = vunpack.c.l.b16 %v4186
          %v4747 = vunpack.c.h.b16 %v4186
          %v4748 = vunpack.c.l.b16 %v4187
          %v4749 = vunpack.c.h.b16 %v4187
          %v4750 = vunpack.c.l.b16 %v4188
          %v4751 = vunpack.c.h.b16 %v4188
          %v4752 = vunpack.c.l.b16 %v4189
          %v4753 = vunpack.c.h.b16 %v4189
          %v4754 = vunpack.c.l.b16 %v4190
          %v4755 = vunpack.c.h.b16 %v4190
          %v4756 = vunpack.c.l.b16 %v4191
          %v4757 = vunpack.c.h.b16 %v4191
          %v4758 = vunpack.c.l.b16 %v4192
          %v4759 = vunpack.c.h.b16 %v4192
          %v4760 = vunpack.c.l.b16 %v4193
          %v4761 = vunpack.c.h.b16 %v4193
          %v4762 = vunpack.c.l.b16 %v4194
          %v4763 = vunpack.c.h.b16 %v4194
          %v4764 = vunpack.c.l.b16 %v4195
          %v4765 = vunpack.c.h.b16 %v4195
          %v4766 = vunpack.c.l.b16 %v4196
          %v4767 = vunpack.c.h.b16 %v4196
          %v4768 = vunpack.c.l.b16 %v4197
          %v4769 = vunpack.c.h.b16 %v4197
          %v4770 = vunpack.c.l.b16 %v4198
          %v4771 = vunpack.c.h.b16 %v4198
          %v4772 = vunpack.c.l.b16 %v4199
          %v4773 = vunpack.c.h.b16 %v4199
          %v4774 = vunpack.c.l.b16 %v4200
          %v4775 = vunpack.c.h.b16 %v4200
          %v4776 = vunpack.c.l.b16 %v4201
          %v4777 = vunpack.c.h.b16 %v4201
          %v4778 = vunpack.c.l.b16 %v4202
          %v4779 = vunpack.c.h.b16 %v4202
          %v4780 = vunpack.c.l.b16 %v4203
          %v4781 = vunpack.c.h.b16 %v4203
          %v4782 = vunpack.c.l.b16 %v4204
          %v4783 = vunpack.c.h.b16 %v4204
          %v4784 = vunpack.c.l.b16 %v4205
          %v4785 = vunpack.c.h.b16 %v4205
          %v4786 = vunpack.c.l.b16 %v4206
          %v4787 = vunpack.c.h.b16 %v4206
          %v4788 = vunpack.c.l.b16 %v4207
          %v4789 = vunpack.c.h.b16 %v4207
          %v4790 = vunpack.c.l.b16 %v4208
          %v4791 = vunpack.c.h.b16 %v4208
          %v4792 = vunpack.c.l.b16 %v4209
          %v4793 = vunpack.c.h.b16 %v4209
          %v4794 = vunpack.c.l.b16 %v4210
          %v4795 = vunpack.c.h.b16 %v4210
          %v4796 = vunpack.c.l.b16 %v4211
          %v4797 = vunpack.c.h.b16 %v4211
          %v4798 = vunpack.c.l.b16 %v4212
          %v4799 = vunpack.c.h.b16 %v4212
          %v4800 = vunpack.c.l.b16 %v4213
          %v4801 = vunpack.c.h.b16 %v4213
          %v4802 = vunpack.c.l.b16 %v4214
          %v4803 = vunpack.c.h.b16 %v4214
          %v4804 = vunpack.c.l.b16 %v4215
          %v4805 = vunpack.c.h.b16 %v4215
          %v4806 = vunpack.c.l.b16 %v4216
          %v4807 = vunpack.c.h.b16 %v4216
          %v4808 = vunpack.c.l.b16 %v4217
          %v4809 = vunpack.c.h.b16 %v4217
          %v4810 = vunpack.c.l.b16 %v4218
          %v4811 = vunpack.c.h.b16 %v4218
          %v4812 = vunpack.c.l.b16 %v4219
          %v4813 = vunpack.c.h.b16 %v4219
          %v4814 = vunpack.c.l.b16 %v4220
          %v4815 = vunpack.c.h.b16 %v4220
          %v4816 = vunpack.c.l.b16 %v4221
          %v4817 = vunpack.c.h.b16 %v4221
          %v4818 = vunpack.c.l.b16 %v4222
          %v4819 = vunpack.c.h.b16 %v4222
          %v4820 = vunpack.c.l.b16 %v4223
          %v4821 = vunpack.c.h.b16 %v4223
          %v4822 = vunpack.c.l.b16 %v4224
          %v4823 = vunpack.c.h.b16 %v4224
          %v4824 = vunpack.c.l.b16 %v4225
          %v4825 = vunpack.c.h.b16 %v4225
          %v4826 = vunpack.c.l.b16 %v4226
          %v4827 = vunpack.c.h.b16 %v4226
          %v4828 = vunpack.c.l.b16 %v4227
          %v4829 = vunpack.c.h.b16 %v4227
          %v4830 = vunpack.c.l.b16 %v4228
          %v4831 = vunpack.c.h.b16 %v4228
          %v4832 = vunpack.c.l.b16 %v4229
          %v4833 = vunpack.c.h.b16 %v4229
          %v4834 = vunpack.c.l.b16 %v4230
          %v4835 = vunpack.c.h.b16 %v4230
          %v4836 = vunpack.c.l.b16 %v4231
          %v4837 = vunpack.c.h.b16 %v4231
          %v4838 = vunpack.c.l.b16 %v4232
          %v4839 = vunpack.c.h.b16 %v4232
          %v4840 = vunpack.c.l.b16 %v4233
          %v4841 = vunpack.c.h.b16 %v4233
          %v4842 = vunpack.c.l.b16 %v4234
          %v4843 = vunpack.c.h.b16 %v4234
          %v4844 = vunpack.c.l.b16 %v4235
          %v4845 = vunpack.c.h.b16 %v4235
          %v4846 = vunpack.c.l.b16 %v4236
          %v4847 = vunpack.c.h.b16 %v4236
          %v4848 = vunpack.c.l.b16 %v4237
          %v4849 = vunpack.c.h.b16 %v4237
          %v4850 = vunpack.c.l.b16 %v4238
          %v4851 = vunpack.c.h.b16 %v4238
          %v4852 = vunpack.c.l.b16 %v4239
          %v4853 = vunpack.c.h.b16 %v4239
          %v4854 = vunpack.c.l.b16 %v4240
          %v4855 = vunpack.c.h.b16 %v4240
          %v4856 = vunpack.c.l.b16 %v4241
          %v4857 = vunpack.c.h.b16 %v4241
          %v4858 = vunpack.c.l.b16 %v4242
          %v4859 = vunpack.c.h.b16 %v4242
          %v4860 = vunpack.c.l.b16 %v4243
          %v4861 = vunpack.c.h.b16 %v4243
          %v4862 = vunpack.c.l.b16 %v4244
          %v4863 = vunpack.c.h.b16 %v4244
          %v4864 = vunpack.c.l.b16 %v4245
          %v4865 = vunpack.c.h.b16 %v4245
          %v4866 = vunpack.c.l.b16 %v4246
          %v4867 = vunpack.c.h.b16 %v4246
          %v4868 = vunpack.c.l.b16 %v4247
          %v4869 = vunpack.c.h.b16 %v4247
          %v4870 = vunpack.c.l.b16 %v4248
          %v4871 = vunpack.c.h.b16 %v4248
          %v4872 = vunpack.c.l.b16 %v4249
          %v4873 = vunpack.c.h.b16 %v4249
          %v4874 = vunpack.c.l.b16 %v4250
          %v4875 = vunpack.c.h.b16 %v4250
          %v4876 = vunpack.c.l.b16 %v4251
          %v4877 = vunpack.c.h.b16 %v4251
          %v4878 = vunpack.c.l.b16 %v4252
          %v4879 = vunpack.c.h.b16 %v4252
          %v4880 = vunpack.c.l.b16 %v4253
          %v4881 = vunpack.c.h.b16 %v4253
          %v4882 = vunpack.c.l.b16 %v4254
          %v4883 = vunpack.c.h.b16 %v4254
          %v4884 = vunpack.c.l.b16 %v4255
          %v4885 = vunpack.c.h.b16 %v4255
          %v4886 = vunpack.c.l.b16 %v4256
          %v4887 = vunpack.c.h.b16 %v4256
          %v4888 = vunpack.c.l.b16 %v4257
          %v4889 = vunpack.c.h.b16 %v4257
          %v4890 = vunpack.c.l.b16 %v4258
          %v4891 = vunpack.c.h.b16 %v4258
          %v4892 = vunpack.c.l.b16 %v4259
          %v4893 = vunpack.c.h.b16 %v4259
          %v4894 = vunpack.c.l.b16 %v4260
          %v4895 = vunpack.c.h.b16 %v4260
          %v4896 = vunpack.c.l.b16 %v4261
          %v4897 = vunpack.c.h.b16 %v4261
          %v4898 = vunpack.c.l.b16 %v4262
          %v4899 = vunpack.c.h.b16 %v4262
          %v4900 = vunpack.c.l.b16 %v4263
          %v4901 = vunpack.c.h.b16 %v4263
          %v4902 = vunpack.c.l.b16 %v4264
          %v4903 = vunpack.c.h.b16 %v4264
          %v4904 = vunpack.c.l.b16 %v4265
          %v4905 = vunpack.c.h.b16 %v4265
          %v4906 = vunpack.c.l.b16 %v4266
          %v4907 = vunpack.c.h.b16 %v4266
          %v4908 = vunpack.c.l.b16 %v4267
          %v4909 = vunpack.c.h.b16 %v4267
          %v4910 = vunpack.c.l.b16 %v4268
          %v4911 = vunpack.c.h.b16 %v4268
          %v4912 = vunpack.c.l.b16 %v4269
          %v4913 = vunpack.c.h.b16 %v4269
          %v4914 = vunpack.c.l.b16 %v4270
          %v4915 = vunpack.c.h.b16 %v4270
          %v4916 = vunpack.c.l.b16 %v4271
          %v4917 = vunpack.c.h.b16 %v4271
          %v4918 = vunpack.c.l.b16 %v4272
          %v4919 = vunpack.c.h.b16 %v4272
          %v4920 = vunpack.c.l.b16 %v4273
          %v4921 = vunpack.c.h.b16 %v4273
          %v4922 = vunpack.c.l.b16 %v4274
          %v4923 = vunpack.c.h.b16 %v4274
          %v4924 = vunpack.c.l.b16 %v4275
          %v4925 = vunpack.c.h.b16 %v4275
          %v4926 = vunpack.c.l.b16 %v4276
          %v4927 = vunpack.c.h.b16 %v4276
          %v4928 = vunpack.c.l.b16 %v4277
          %v4929 = vunpack.c.h.b16 %v4277
          %v4930 = vunpack.c.l.b16 %v4278
          %v4931 = vunpack.c.h.b16 %v4278
          %v4932 = vunpack.c.l.b16 %v4279
          %v4933 = vunpack.c.h.b16 %v4279
          %v4934 = vunpack.c.l.b16 %v4280
          %v4935 = vunpack.c.h.b16 %v4280
          %v4936 = vunpack.c.l.b16 %v4281
          %v4937 = vunpack.c.h.b16 %v4281
          %v4938 = vunpack.c.l.b16 %v4282
          %v4939 = vunpack.c.h.b16 %v4282
          %v4940 = vunpack.c.l.b16 %v4283
          %v4941 = vunpack.c.h.b16 %v4283
          %v4942 = vunpack.c.l.b16 %v4284
          %v4943 = vunpack.c.h.b16 %v4284
          %v4944 = vunpack.c.l.b16 %v4285
          %v4945 = vunpack.c.h.b16 %v4285
          %v4946 = vunpack.c.l.b16 %v4286
          %v4947 = vunpack.c.h.b16 %v4286
          %v4948 = vunpack.c.l.b16 %v4287
          %v4949 = vunpack.c.h.b16 %v4287
          %v4950 = vunpack.c.l.b16 %v4288
          %v4951 = vunpack.c.h.b16 %v4288
          %v4952 = vunpack.c.l.b16 %v4289
          %v4953 = vunpack.c.h.b16 %v4289
          %v4954 = vunpack.c.l.b16 %v4290
          %v4955 = vunpack.c.h.b16 %v4290
          %v4956 = vunpack.c.l.b16 %v4291
          %v4957 = vunpack.c.h.b16 %v4291
          %v4958 = vunpack.c.l.b16 %v4292
          %v4959 = vunpack.c.h.b16 %v4292
          %v4960 = vunpack.c.l.b16 %v4293
          %v4961 = vunpack.c.h.b16 %v4293
          %v4962 = vunpack.c.l.b16 %v4294
          %v4963 = vunpack.c.h.b16 %v4294
          %v4964 = vunpack.c.l.b16 %v4295
          %v4965 = vunpack.c.h.b16 %v4295
          %v4966 = vunpack.c.l.b16 %v4296
          %v4967 = vunpack.c.h.b16 %v4296
          %v4968 = vunpack.c.l.b16 %v4297
          %v4969 = vunpack.c.h.b16 %v4297
          %v4970 = vunpack.c.l.b16 %v4298
          %v4971 = vunpack.c.h.b16 %v4298
          %v4972 = vunpack.c.l.b16 %v4299
          %v4973 = vunpack.c.h.b16 %v4299
          %v4974 = vunpack.c.l.b16 %v4300
          %v4975 = vunpack.c.h.b16 %v4300
          %v4976 = vunpack.c.l.b16 %v4301
          %v4977 = vunpack.c.h.b16 %v4301
          %v4978 = vunpack.c.l.b16 %v4302
          %v4979 = vunpack.c.h.b16 %v4302
          %v4980 = vunpack.c.l.b16 %v4303
          %v4981 = vunpack.c.h.b16 %v4303
          %v4982 = vunpack.c.l.b16 %v4304
          %v4983 = vunpack.c.h.b16 %v4304
          %v4984 = vunpack.c.l.b16 %v4305
          %v4985 = vunpack.c.h.b16 %v4305
          %v4986 = vunpack.c.l.b16 %v4306
          %v4987 = vunpack.c.h.b16 %v4306
          %v4988 = vunpack.c.l.b16 %v4307
          %v4989 = vunpack.c.h.b16 %v4307
          %v4990 = vunpack.c.l.b16 %v4308
          %v4991 = vunpack.c.h.b16 %v4308
          %v4992 = vunpack.c.l.b16 %v4309
          %v4993 = vunpack.c.h.b16 %v4309
          %v4994 = vunpack.c.l.b16 %v4310
          %v4995 = vunpack.c.h.b16 %v4310
          %v4996 = vunpack.c.l.b16 %v4311
          %v4997 = vunpack.c.h.b16 %v4311
          %v4998 = vunpack.c.l.b16 %v4312
          %v4999 = vunpack.c.h.b16 %v4312
          %v5000 = vunpack.c.l.b16 %v4313
          %v5001 = vunpack.c.h.b16 %v4313
          %v5002 = vunpack.c.l.b16 %v4314
          %v5003 = vunpack.c.h.b16 %v4314
          %v5004 = vunpack.c.l.b16 %v4315
          %v5005 = vunpack.c.h.b16 %v4315
          %v5006 = vunpack.c.l.b16 %v4316
          %v5007 = vunpack.c.h.b16 %v4316
          %v5008 = vunpack.c.l.b16 %v4317
          %v5009 = vunpack.c.h.b16 %v4317
          %v5010 = vunpack.c.l.b16 %v4318
          %v5011 = vunpack.c.h.b16 %v4318
          %v5012 = vunpack.c.l.b16 %v4319
          %v5013 = vunpack.c.h.b16 %v4319
          %v5014 = vunpack.c.l.b16 %v4320
          %v5015 = vunpack.c.h.b16 %v4320
          %v5016 = vunpack.c.l.b16 %v4321
          %v5017 = vunpack.c.h.b16 %v4321
          %v5018 = vunpack.c.l.b16 %v4322
          %v5019 = vunpack.c.h.b16 %v4322
          %v5020 = vunpack.c.l.b16 %v4323
          %v5021 = vunpack.c.h.b16 %v4323
          %v5022 = vunpack.c.l.b16 %v4324
          %v5023 = vunpack.c.h.b16 %v4324
          %v5024 = vunpack.c.l.b16 %v4325
          %v5025 = vunpack.c.h.b16 %v4325
          %v5026 = vunpack.c.l.b16 %v4326
          %v5027 = vunpack.c.h.b16 %v4326
          %v5028 = vunpack.c.l.b16 %v4327
          %v5029 = vunpack.c.h.b16 %v4327
          %v5030 = vunpack.c.l.b16 %v4328
          %v5031 = vunpack.c.h.b16 %v4328
          %v5032 = vunpack.c.l.b16 %v4329
          %v5033 = vunpack.c.h.b16 %v4329
          %v5034 = vunpack.c.l.b16 %v4330
          %v5035 = vunpack.c.h.b16 %v4330
          %v5036 = vunpack.c.l.b16 %v4331
          %v5037 = vunpack.c.h.b16 %v4331
          %v5038 = vunpack.c.l.b16 %v4332
          %v5039 = vunpack.c.h.b16 %v4332
          %v5040 = vunpack.c.l.b16 %v4333
          %v5041 = vunpack.c.h.b16 %v4333
          %v5042 = vunpack.c.l.b16 %v4334
          %v5043 = vunpack.c.h.b16 %v4334
          %v5044 = vunpack.c.l.b16 %v4335
          %v5045 = vunpack.c.h.b16 %v4335
          %v5046 = vunpack.c.l.b16 %v4336
          %v5047 = vunpack.c.h.b16 %v4336
          %v5048 = vunpack.c.l.b16 %v4337
          %v5049 = vunpack.c.h.b16 %v4337
          %v5050 = vunpack.c.l.b16 %v4338
          %v5051 = vunpack.c.h.b16 %v4338
          %v5052 = vunpack.c.l.b16 %v4339
          %v5053 = vunpack.c.h.b16 %v4339
          %v5054 = vunpack.c.l.b16 %v4340
          %v5055 = vunpack.c.h.b16 %v4340
          %v5056 = vunpack.c.l.b16 %v4341
          %v5057 = vunpack.c.h.b16 %v4341
          %v5058 = vunpack.c.l.b16 %v4342
          %v5059 = vunpack.c.h.b16 %v4342
          %v5060 = vunpack.c.l.b16 %v4343
          %v5061 = vunpack.c.h.b16 %v4343
          %v5062 = vunpack.c.l.b16 %v4344
          %v5063 = vunpack.c.h.b16 %v4344
          %v5064 = vunpack.c.l.b16 %v4345
          %v5065 = vunpack.c.h.b16 %v4345
          %v5066 = vunpack.c.l.b16 %v4346
          %v5067 = vunpack.c.h.b16 %v4346
          %v5068 = vunpack.c.l.b16 %v4347
          %v5069 = vunpack.c.h.b16 %v4347
          %v5070 = vunpack.c.l.b16 %v4348
          %v5071 = vunpack.c.h.b16 %v4348
          %v5072 = vunpack.c.l.b16 %v4349
          %v5073 = vunpack.c.h.b16 %v4349
          %v5074 = vunpack.c.l.b16 %v4350
          %v5075 = vunpack.c.h.b16 %v4350
          %v5076 = vunpack.c.l.b16 %v4351
          %v5077 = vunpack.c.h.b16 %v4351
          %v5078 = vunpack.c.l.b16 %v4352
          %v5079 = vunpack.c.h.b16 %v4352
          %v5080 = vunpack.c.l.b16 %v4353
          %v5081 = vunpack.c.h.b16 %v4353
          %v5082 = vunpack.c.l.b16 %v4354
          %v5083 = vunpack.c.h.b16 %v4354
          %v5084 = vunpack.c.l.b16 %v4355
          %v5085 = vunpack.c.h.b16 %v4355
          %v5086 = vunpack.c.l.b16 %v4356
          %v5087 = vunpack.c.h.b16 %v4356
          %v5088 = vunpack.c.l.b16 %v4357
          %v5089 = vunpack.c.h.b16 %v4357
          %v5090 = vunpack.c.l.b16 %v4358
          %v5091 = vunpack.c.h.b16 %v4358
          %v5092 = vunpack.c.l.b16 %v4359
          %v5093 = vunpack.c.h.b16 %v4359
          %v5094 = vunpack.c.l.b16 %v4360
          %v5095 = vunpack.c.h.b16 %v4360
          %v5096 = vunpack.c.l.b16 %v4361
          %v5097 = vunpack.c.h.b16 %v4361
          %v5098 = vunpack.c.l.b16 %v4362
          %v5099 = vunpack.c.h.b16 %v4362
          %v5100 = vunpack.c.l.b16 %v4363
          %v5101 = vunpack.c.h.b16 %v4363
          %v5102 = vunpack.c.l.b16 %v4364
          %v5103 = vunpack.c.h.b16 %v4364
          %v5104 = vunpack.c.l.b16 %v4365
          %v5105 = vunpack.c.h.b16 %v4365
          %v5106 = vunpack.c.l.b16 %v4366
          %v5107 = vunpack.c.h.b16 %v4366
          %v5108 = vunpack.c.l.b16 %v4367
          %v5109 = vunpack.c.h.b16 %v4367
          %v5110 = vunpack.c.l.b16 %v4368
          %v5111 = vunpack.c.h.b16 %v4368
          %v5112 = vunpack.c.l.b16 %v4369
          %v5113 = vunpack.c.h.b16 %v4369
          %v5114 = vunpack.c.l.b16 %v4370
          %v5115 = vunpack.c.h.b16 %v4370
          %v5116 = vunpack.c.l.b16 %v4371
          %v5117 = vunpack.c.h.b16 %v4371
          %v5118 = vunpack.c.l.b16 %v4372
          %v5119 = vunpack.c.h.b16 %v4372
          %v5120 = vunpack.c.l.b16 %v4373
          %v5121 = vunpack.c.h.b16 %v4373
          %v5122 = vunpack.c.l.b16 %v4374
          %v5123 = vunpack.c.h.b16 %v4374
          %v5124 = vunpack.c.l.b16 %v4375
          %v5125 = vunpack.c.h.b16 %v4375
          %v5126 = vunpack.c.l.b16 %v4376
          %v5127 = vunpack.c.h.b16 %v4376
          %v5128 = vunpack.c.l.b16 %v4377
          %v5129 = vunpack.c.h.b16 %v4377
          %v5130 = vunpack.c.l.b16 %v4378
          %v5131 = vunpack.c.h.b16 %v4378
          %v5132 = vunpack.c.l.b16 %v4379
          %v5133 = vunpack.c.h.b16 %v4379
          %v5134 = vunpack.c.l.b16 %v4380
          %v5135 = vunpack.c.h.b16 %v4380
          %v5136 = vunpack.c.l.b16 %v4381
          %v5137 = vunpack.c.h.b16 %v4381
          %v5138 = vunpack.c.l.b16 %v4382
          %v5139 = vunpack.c.h.b16 %v4382
          %v5140 = vunpack.c.l.b16 %v4383
          %v5141 = vunpack.c.h.b16 %v4383
          %v5142 = vunpack.c.l.b16 %v4384
          %v5143 = vunpack.c.h.b16 %v4384
          %v5144 = vunpack.c.l.b16 %v4385
          %v5145 = vunpack.c.h.b16 %v4385
          %v5146 = vunpack.c.l.b16 %v4386
          %v5147 = vunpack.c.h.b16 %v4386
          %v5148 = vunpack.c.l.b16 %v4387
          %v5149 = vunpack.c.h.b16 %v4387
          %v5150 = vunpack.c.l.b16 %v4388
          %v5151 = vunpack.c.h.b16 %v4388
          %v5152 = vunpack.c.l.b16 %v4389
          %v5153 = vunpack.c.h.b16 %v4389
          %v5154 = vunpack.c.l.b16 %v4390
          %v5155 = vunpack.c.h.b16 %v4390
          %v5156 = vunpack.c.l.b16 %v4391
          %v5157 = vunpack.c.h.b16 %v4391
          %v5158 = vunpack.c.l.b16 %v4392
          %v5159 = vunpack.c.h.b16 %v4392
          %v5160 = vunpack.c.l.b16 %v4393
          %v5161 = vunpack.c.h.b16 %v4393
          %v5162 = vunpack.c.l.b16 %v4394
          %v5163 = vunpack.c.h.b16 %v4394
          %v5164 = vunpack.c.l.b16 %v4395
          %v5165 = vunpack.c.h.b16 %v4395
          %v5166 = vunpack.c.l.b16 %v4396
          %v5167 = vunpack.c.h.b16 %v4396
          %v5168 = vunpack.c.l.b16 %v4397
          %v5169 = vunpack.c.h.b16 %v4397
          %v5170 = vunpack.c.l.b16 %v4398
          %v5171 = vunpack.c.h.b16 %v4398
          %v5172 = vunpack.c.l.b16 %v4399
          %v5173 = vunpack.c.h.b16 %v4399
          %v5174 = vunpack.c.l.b16 %v4400
          %v5175 = vunpack.c.h.b16 %v4400
          %v5176 = vunpack.c.l.b16 %v4401
          %v5177 = vunpack.c.h.b16 %v4401
          %v5178 = vunpack.c.l.b16 %v4402
          %v5179 = vunpack.c.h.b16 %v4402
          %v5180 = vunpack.c.l.b16 %v4403
          %v5181 = vunpack.c.h.b16 %v4403
          %v5182 = vunpack.c.l.b16 %v4404
          %v5183 = vunpack.c.h.b16 %v4404
          %v5184 = vunpack.c.l.b16 %v4405
          %v5185 = vunpack.c.h.b16 %v4405
          %v5186 = vunpack.c.l.b16 %v4406
          %v5187 = vunpack.c.h.b16 %v4406
          %v5188 = vunpack.c.l.b16 %v4407
          %v5189 = vunpack.c.h.b16 %v4407
          %v5190 = vunpack.c.l.b16 %v4408
          %v5191 = vunpack.c.h.b16 %v4408
          %v5192 = vunpack.c.l.b16 %v4409
          %v5193 = vunpack.c.h.b16 %v4409
          %v5194 = vunpack.c.l.b16 %v4410
          %v5195 = vunpack.c.h.b16 %v4410
          %v5196 = vunpack.c.l.b16 %v4411
          %v5197 = vunpack.c.h.b16 %v4411
          %v5198 = vunpack.c.l.b16 %v4412
          %v5199 = vunpack.c.h.b16 %v4412
          %v5200 = vunpack.c.l.b16 %v4413
          %v5201 = vunpack.c.h.b16 %v4413
          %v5202 = vunpack.c.l.b16 %v4414
          %v5203 = vunpack.c.h.b16 %v4414
          %v5204 = vunpack.c.l.b16 %v4415
          %v5205 = vunpack.c.h.b16 %v4415
          %v5206 = vunpack.c.l.b16 %v4416
          %v5207 = vunpack.c.h.b16 %v4416
          %v5208 = vunpack.c.l.b16 %v4417
          %v5209 = vunpack.c.h.b16 %v4417
          %v5210 = vunpack.c.l.b16 %v4418
          %v5211 = vunpack.c.h.b16 %v4418
          %v5212 = vunpack.c.l.b16 %v4419
          %v5213 = vunpack.c.h.b16 %v4419
          %v5214 = vunpack.c.l.b16 %v4420
          %v5215 = vunpack.c.h.b16 %v4420
          %v5216 = vunpack.c.l.b16 %v4421
          %v5217 = vunpack.c.h.b16 %v4421
          %v5218 = vunpack.c.l.b16 %v4422
          %v5219 = vunpack.c.h.b16 %v4422
          %v5220 = vunpack.c.l.b16 %v4423
          %v5221 = vunpack.c.h.b16 %v4423
          %v5222 = vunpack.c.l.b16 %v4424
          %v5223 = vunpack.c.h.b16 %v4424
          %v5224 = vunpack.c.l.b16 %v4425
          %v5225 = vunpack.c.h.b16 %v4425
          %v5226 = vunpack.c.l.b16 %v4426
          %v5227 = vunpack.c.h.b16 %v4426
          %v5228 = vunpack.c.l.b16 %v4427
          %v5229 = vunpack.c.h.b16 %v4427
          %v5230 = vunpack.c.l.b16 %v4428
          %v5231 = vunpack.c.h.b16 %v4428
          %v5232 = vunpack.c.l.b16 %v4429
          %v5233 = vunpack.c.h.b16 %v4429
          %v5234 = vunpack.c.l.b16 %v4430
          %v5235 = vunpack.c.h.b16 %v4430
          %v5236 = vunpack.c.l.b16 %v4431
          %v5237 = vunpack.c.h.b16 %v4431
          %v5238 = vunpack.c.l.b16 %v4432
          %v5239 = vunpack.c.h.b16 %v4432
          %v5240 = vunpack.c.l.b16 %v4433
          %v5241 = vunpack.c.h.b16 %v4433
          %v5242 = vunpack.c.l.b16 %v4434
          %v5243 = vunpack.c.h.b16 %v4434
          %v5244 = vunpack.c.l.b16 %v4435
          %v5245 = vunpack.c.h.b16 %v4435
          %v5246 = vpack.c.b16 %v4742, %v4734
          %v5247 = vpack.c.b16 %v4743, %v4735
          %v5248 = vpack.c.b16 %v4744, %v4736
          %v5249 = vpack.c.b16 %v4745, %v4737
          %v5250 = vpack.c.b16 %v4746, %v4738
          %v5251 = vpack.c.b16 %v4747, %v4739
          %v5252 = vpack.c.b16 %v4748, %v4740
          %v5253 = vpack.c.b16 %v4749, %v4741
          %v5254 = vpack.c.b16 %v4758, %v4750
          %v5255 = vpack.c.b16 %v4759, %v4751
          %v5256 = vpack.c.b16 %v4760, %v4752
          %v5257 = vpack.c.b16 %v4761, %v4753
          %v5258 = vpack.c.b16 %v4762, %v4754
          %v5259 = vpack.c.b16 %v4763, %v4755
          %v5260 = vpack.c.b16 %v4764, %v4756
          %v5261 = vpack.c.b16 %v4765, %v4757
          %v5262 = vpack.c.b16 %v4774, %v4766
          %v5263 = vpack.c.b16 %v4775, %v4767
          %v5264 = vpack.c.b16 %v4776, %v4768
          %v5265 = vpack.c.b16 %v4777, %v4769
          %v5266 = vpack.c.b16 %v4778, %v4770
          %v5267 = vpack.c.b16 %v4779, %v4771
          %v5268 = vpack.c.b16 %v4780, %v4772
          %v5269 = vpack.c.b16 %v4781, %v4773
          %v5270 = vpack.c.b16 %v4790, %v4782
          %v5271 = vpack.c.b16 %v4791, %v4783
          %v5272 = vpack.c.b16 %v4792, %v4784
          %v5273 = vpack.c.b16 %v4793, %v4785
          %v5274 = vpack.c.b16 %v4794, %v4786
          %v5275 = vpack.c.b16 %v4795, %v4787
          %v5276 = vpack.c.b16 %v4796, %v4788
          %v5277 = vpack.c.b16 %v4797, %v4789
          %v5278 = vpack.c.b16 %v4806, %v4798
          %v5279 = vpack.c.b16 %v4807, %v4799
          %v5280 = vpack.c.b16 %v4808, %v4800
          %v5281 = vpack.c.b16 %v4809, %v4801
          %v5282 = vpack.c.b16 %v4810, %v4802
          %v5283 = vpack.c.b16 %v4811, %v4803
          %v5284 = vpack.c.b16 %v4812, %v4804
          %v5285 = vpack.c.b16 %v4813, %v4805
          %v5286 = vpack.c.b16 %v4822, %v4814
          %v5287 = vpack.c.b16 %v4823, %v4815
          %v5288 = vpack.c.b16 %v4824, %v4816
          %v5289 = vpack.c.b16 %v4825, %v4817
          %v5290 = vpack.c.b16 %v4826, %v4818
          %v5291 = vpack.c.b16 %v4827, %v4819
          %v5292 = vpack.c.b16 %v4828, %v4820
          %v5293 = vpack.c.b16 %v4829, %v4821
          %v5294 = vpack.c.b16 %v4838, %v4830
          %v5295 = vpack.c.b16 %v4839, %v4831
          %v5296 = vpack.c.b16 %v4840, %v4832
          %v5297 = vpack.c.b16 %v4841, %v4833
          %v5298 = vpack.c.b16 %v4842, %v4834
          %v5299 = vpack.c.b16 %v4843, %v4835
          %v5300 = vpack.c.b16 %v4844, %v4836
          %v5301 = vpack.c.b16 %v4845, %v4837
          %v5302 = vpack.c.b16 %v4854, %v4846
          %v5303 = vpack.c.b16 %v4855, %v4847
          %v5304 = vpack.c.b16 %v4856, %v4848
          %v5305 = vpack.c.b16 %v4857, %v4849
          %v5306 = vpack.c.b16 %v4858, %v4850
          %v5307 = vpack.c.b16 %v4859, %v4851
          %v5308 = vpack.c.b16 %v4860, %v4852
          %v5309 = vpack.c.b16 %v4861, %v4853
          %v5310 = vpack.c.b16 %v4870, %v4862
          %v5311 = vpack.c.b16 %v4871, %v4863
          %v5312 = vpack.c.b16 %v4872, %v4864
          %v5313 = vpack.c.b16 %v4873, %v4865
          %v5314 = vpack.c.b16 %v4874, %v4866
          %v5315 = vpack.c.b16 %v4875, %v4867
          %v5316 = vpack.c.b16 %v4876, %v4868
          %v5317 = vpack.c.b16 %v4877, %v4869
          %v5318 = vpack.c.b16 %v4886, %v4878
          %v5319 = vpack.c.b16 %v4887, %v4879
          %v5320 = vpack.c.b16 %v4888, %v4880
          %v5321 = vpack.c.b16 %v4889, %v4881
          %v5322 = vpack.c.b16 %v4890, %v4882
          %v5323 = vpack.c.b16 %v4891, %v4883
          %v5324 = vpack.c.b16 %v4892, %v4884
          %v5325 = vpack.c.b16 %v4893, %v4885
          %v5326 = vpack.c.b16 %v4902, %v4894
          %v5327 = vpack.c.b16 %v4903, %v4895
          %v5328 = vpack.c.b16 %v4904, %v4896
          %v5329 = vpack.c.b16 %v4905, %v4897
          %v5330 = vpack.c.b16 %v4906, %v4898
          %v5331 = vpack.c.b16 %v4907, %v4899
          %v5332 = vpack.c.b16 %v4908, %v4900
          %v5333 = vpack.c.b16 %v4909, %v4901
          %v5334 = vpack.c.b16 %v4918, %v4910
          %v5335 = vpack.c.b16 %v4919, %v4911
          %v5336 = vpack.c.b16 %v4920, %v4912
          %v5337 = vpack.c.b16 %v4921, %v4913
          %v5338 = vpack.c.b16 %v4922, %v4914
          %v5339 = vpack.c.b16 %v4923, %v4915
          %v5340 = vpack.c.b16 %v4924, %v4916
          %v5341 = vpack.c.b16 %v4925, %v4917
          %v5342 = vpack.c.b16 %v4934, %v4926
          %v5343 = vpack.c.b16 %v4935, %v4927
          %v5344 = vpack.c.b16 %v4936, %v4928
          %v5345 = vpack.c.b16 %v4937, %v4929
          %v5346 = vpack.c.b16 %v4938, %v4930
          %v5347 = vpack.c.b16 %v4939, %v4931
          %v5348 = vpack.c.b16 %v4940, %v4932
          %v5349 = vpack.c.b16 %v4941, %v4933
          %v5350 = vpack.c.b16 %v4950, %v4942
          %v5351 = vpack.c.b16 %v4951, %v4943
          %v5352 = vpack.c.b16 %v4952, %v4944
          %v5353 = vpack.c.b16 %v4953, %v4945
          %v5354 = vpack.c.b16 %v4954, %v4946
          %v5355 = vpack.c.b16 %v4955, %v4947
          %v5356 = vpack.c.b16 %v4956, %v4948
          %v5357 = vpack.c.b16 %v4957, %v4949
          %v5358 = vpack.c.b16 %v4966, %v4958
          %v5359 = vpack.c.b16 %v4967, %v4959
          %v5360 = vpack.c.b16 %v4968, %v4960
          %v5361 = vpack.c.b16 %v4969, %v4961
          %v5362 = vpack.c.b16 %v4970, %v4962
          %v5363 = vpack.c.b16 %v4971, %v4963
          %v5364 = vpack.c.b16 %v4972, %v4964
          %v5365 = vpack.c.b16 %v4973, %v4965
          %v5366 = vpack.c.b16 %v4982, %v4974
          %v5367 = vpack.c.b16 %v4983, %v4975
          %v5368 = vpack.c.b16 %v4984, %v4976
          %v5369 = vpack.c.b16 %v4985, %v4977
          %v5370 = vpack.c.b16 %v4986, %v4978
          %v5371 = vpack.c.b16 %v4987, %v4979
          %v5372 = vpack.c.b16 %v4988, %v4980
          %v5373 = vpack.c.b16 %v4989, %v4981
          %v5374 = vpack.c.b16 %v4998, %v4990
          %v5375 = vpack.c.b16 %v4999, %v4991
          %v5376 = vpack.c.b16 %v5000, %v4992
          %v5377 = vpack.c.b16 %v5001, %v4993
          %v5378 = vpack.c.b16 %v5002, %v4994
          %v5379 = vpack.c.b16 %v5003, %v4995
          %v5380 = vpack.c.b16 %v5004, %v4996
          %v5381 = vpack.c.b16 %v5005, %v4997
          %v5382 = vpack.c.b16 %v5014, %v5006
          %v5383 = vpack.c.b16 %v5015, %v5007
          %v5384 = vpack.c.b16 %v5016, %v5008
          %v5385 = vpack.c.b16 %v5017, %v5009
          %v5386 = vpack.c.b16 %v5018, %v5010
          %v5387 = vpack.c.b16 %v5019, %v5011
          %v5388 = vpack.c.b16 %v5020, %v5012
          %v5389 = vpack.c.b16 %v5021, %v5013
          %v5390 = vpack.c.b16 %v5030, %v5022
          %v5391 = vpack.c.b16 %v5031, %v5023
          %v5392 = vpack.c.b16 %v5032, %v5024
          %v5393 = vpack.c.b16 %v5033, %v5025
          %v5394 = vpack.c.b16 %v5034, %v5026
          %v5395 = vpack.c.b16 %v5035, %v5027
          %v5396 = vpack.c.b16 %v5036, %v5028
          %v5397 = vpack.c.b16 %v5037, %v5029
          %v5398 = vpack.c.b16 %v5046, %v5038
          %v5399 = vpack.c.b16 %v5047, %v5039
          %v5400 = vpack.c.b16 %v5048, %v5040
          %v5401 = vpack.c.b16 %v5049, %v5041
          %v5402 = vpack.c.b16 %v5050, %v5042
          %v5403 = vpack.c.b16 %v5051, %v5043
          %v5404 = vpack.c.b16 %v5052, %v5044
          %v5405 = vpack.c.b16 %v5053, %v5045
          %v5406 = vpack.c.b16 %v5062, %v5054
          %v5407 = vpack.c.b16 %v5063, %v5055
          %v5408 = vpack.c.b16 %v5064, %v5056
          %v5409 = vpack.c.b16 %v5065, %v5057
          %v5410 = vpack.c.b16 %v5066, %v5058
          %v5411 = vpack.c.b16 %v5067, %v5059
          %v5412 = vpack.c.b16 %v5068, %v5060
          %v5413 = vpack.c.b16 %v5069, %v5061
          %v5414 = vpack.c.b16 %v5078, %v5070
          %v5415 = vpack.c.b16 %v5079, %v5071
          %v5416 = vpack.c.b16 %v5080, %v5072
          %v5417 = vpack.c.b16 %v5081, %v5073
          %v5418 = vpack.c.b16 %v5082, %v5074
          %v5419 = vpack.c.b16 %v5083, %v5075
          %v5420 = vpack.c.b16 %v5084, %v5076
          %v5421 = vpack.c.b16 %v5085, %v5077
          %v5422 = vpack.c.b16 %v5094, %v5086
          %v5423 = vpack.c.b16 %v5095, %v5087
          %v5424 = vpack.c.b16 %v5096, %v5088
          %v5425 = vpack.c.b16 %v5097, %v5089
          %v5426 = vpack.c.b16 %v5098, %v5090
          %v5427 = vpack.c.b16 %v5099, %v5091
          %v5428 = vpack.c.b16 %v5100, %v5092
          %v5429 = vpack.c.b16 %v5101, %v5093
          %v5430 = vpack.c.b16 %v5110, %v5102
          %v5431 = vpack.c.b16 %v5111, %v5103
          %v5432 = vpack.c.b16 %v5112, %v5104
          %v5433 = vpack.c.b16 %v5113, %v5105
          %v5434 = vpack.c.b16 %v5114, %v5106
          %v5435 = vpack.c.b16 %v5115, %v5107
          %v5436 = vpack.c.b16 %v5116, %v5108
          %v5437 = vpack.c.b16 %v5117, %v5109
          %v5438 = vpack.c.b16 %v5126, %v5118
          %v5439 = vpack.c.b16 %v5127, %v5119
          %v5440 = vpack.c.b16 %v5128, %v5120
          %v5441 = vpack.c.b16 %v5129, %v5121
          %v5442 = vpack.c.b16 %v5130, %v5122
          %v5443 = vpack.c.b16 %v5131, %v5123
          %v5444 = vpack.c.b16 %v5132, %v5124
          %v5445 = vpack.c.b16 %v5133, %v5125
          %v5446 = vpack.c.b16 %v5142, %v5134
          %v5447 = vpack.c.b16 %v5143, %v5135
          %v5448 = vpack.c.b16 %v5144, %v5136
          %v5449 = vpack.c.b16 %v5145, %v5137
          %v5450 = vpack.c.b16 %v5146, %v5138
          %v5451 = vpack.c.b16 %v5147, %v5139
          %v5452 = vpack.c.b16 %v5148, %v5140
          %v5453 = vpack.c.b16 %v5149, %v5141
          %v5454 = vpack.c.b16 %v5158, %v5150
          %v5455 = vpack.c.b16 %v5159, %v5151
          %v5456 = vpack.c.b16 %v5160, %v5152
          %v5457 = vpack.c.b16 %v5161, %v5153
          %v5458 = vpack.c.b16 %v5162, %v5154
          %v5459 = vpack.c.b16 %v5163, %v5155
          %v5460 = vpack.c.b16 %v5164, %v5156
          %v5461 = vpack.c.b16 %v5165, %v5157
          %v5462 = vpack.c.b16 %v5174, %v5166
          %v5463 = vpack.c.b16 %v5175, %v5167
          %v5464 = vpack.c.b16 %v5176, %v5168
          %v5465 = vpack.c.b16 %v5177, %v5169
          %v5466 = vpack.c.b16 %v5178, %v5170
          %v5467 = vpack.c.b16 %v5179, %v5171
          %v5468 = vpack.c.b16 %v5180, %v5172
          %v5469 = vpack.c.b16 %v5181, %v5173
          %v5470 = vpack.c.b16 %v5190, %v5182
          %v5471 = vpack.c.b16 %v5191, %v5183
          %v5472 = vpack.c.b16 %v5192, %v5184
          %v5473 = vpack.c.b16 %v5193, %v5185
          %v5474 = vpack.c.b16 %v5194, %v5186
          %v5475 = vpack.c.b16 %v5195, %v5187
          %v5476 = vpack.c.b16 %v5196, %v5188
          %v5477 = vpack.c.b16 %v5197, %v5189
          %v5478 = vpack.c.b16 %v5206, %v5198
          %v5479 = vpack.c.b16 %v5207, %v5199
          %v5480 = vpack.c.b16 %v5208, %v5200
          %v5481 = vpack.c.b16 %v5209, %v5201
          %v5482 = vpack.c.b16 %v5210, %v5202
          %v5483 = vpack.c.b16 %v5211, %v5203
          %v5484 = vpack.c.b16 %v5212, %v5204
          %v5485 = vpack.c.b16 %v5213, %v5205
          %v5486 = vpack.c.b16 %v5222, %v5214
          %v5487 = vpack.c.b16 %v5223, %v5215
          %v5488 = vpack.c.b16 %v5224, %v5216
          %v5489 = vpack.c.b16 %v5225, %v5217
          %v5490 = vpack.c.b16 %v5226, %v5218
          %v5491 = vpack.c.b16 %v5227, %v5219
          %v5492 = vpack.c.b16 %v5228, %v5220
          %v5493 = vpack.c.b16 %v5229, %v5221
          %v5494 = vpack.c.b16 %v5238, %v5230
          %v5495 = vpack.c.b16 %v5239, %v5231
          %v5496 = vpack.c.b16 %v5240, %v5232
          %v5497 = vpack.c.b16 %v5241, %v5233
          %v5498 = vpack.c.b16 %v5242, %v5234
          %v5499 = vpack.c.b16 %v5243, %v5235
          %v5500 = vpack.c.b16 %v5244, %v5236
          %v5501 = vpack.c.b16 %v5245, %v5237
          %5758 = vmatprep.subr.bf16.mxu0 %v5303
          %5759 = vmatpush1.bf16.msra.mxu0 %v5302
          %5760 = vmatprep.subr.bf16.mxu0 %v5295
          %5761 = vmatpush1.bf16.msra.mxu0 %v5294
          %5762 = vmatprep.subr.bf16.mxu0 %v5287
          %5763 = vmatpush1.bf16.msra.mxu0 %v5286
          %5764 = vmatprep.subr.bf16.mxu0 %v5279
          %5765 = vmatpush1.bf16.msra.mxu0 %v5278
          %5766 = vmatprep.subr.bf16.mxu0 %v5271
          %5767 = vmatpush1.bf16.msra.mxu0 %v5270
          %5768 = vmatprep.subr.bf16.mxu0 %v5263
          %5769 = vmatpush1.bf16.msra.mxu0 %v5262
          %5770 = vmatprep.subr.bf16.mxu0 %v5255
          %5771 = vmatpush1.bf16.msra.mxu0 %v5254
          %5772 = vmatprep.subr.bf16.mxu0 %v5247
          %5773 = vmatpush1.bf16.msra.mxu0 %v5246
          %5774 = vmatprep.subr.bf16.mxu0 %v5367
          %5775 = vmatpush2.bf16.msra.mxu0 %v5366
          %5776 = vmatprep.subr.bf16.mxu0 %v5359
          %5777 = vmatpush2.bf16.msra.mxu0 %v5358
          %5778 = vmatprep.subr.bf16.mxu0 %v5351
          %5779 = vmatpush2.bf16.msra.mxu0 %v5350
          %5780 = vmatprep.subr.bf16.mxu0 %v5343
          %5781 = vmatpush2.bf16.msra.mxu0 %v5342
          %5782 = vmatprep.subr.bf16.mxu0 %v5335
          %5783 = vmatpush2.bf16.msra.mxu0 %v5334
          %5784 = vmatprep.subr.bf16.mxu0 %v5327
          %5785 = vmatpush2.bf16.msra.mxu0 %v5326
          %5786 = vmatprep.subr.bf16.mxu0 %v5319
          %5787 = vmatpush2.bf16.msra.mxu0 %v5318
          %5788 = vmatprep.subr.bf16.mxu0 %v5311
          %5789 = vmatpush2.bf16.msra.mxu0 %v5310
          %5790 = vmatprep.mubr.bf16.mxu0 %v4177
          %5791 = vmatmul.mubr.bf16.gmra.mxu0 %v4176
          %v5792 = vpop.f32.mrf.mxu0
          %v5793 = vadd.f32 %v4441, %v5792
          %v5794 = vpop.f32.mrf.mxu0
          %v5795 = vadd.f32 %v4445, %v5794
          %v5796 = vpop.f32.mrf.mxu0
          %v5797 = vpop.f32.mrf.mxu0
          %5798 = vdwg.mxu0
          %5799 = vmatprep.subr.bf16.mxu0 %v5431
          %5800 = vmatpush1.bf16.msra.mxu0 %v5430
          %5801 = vmatprep.subr.bf16.mxu0 %v5423
          %5802 = vmatpush1.bf16.msra.mxu0 %v5422
          %5803 = vmatprep.subr.bf16.mxu0 %v5415
          %5804 = vmatpush1.bf16.msra.mxu0 %v5414
          %5805 = vmatprep.subr.bf16.mxu0 %v5407
          %5806 = vmatpush1.bf16.msra.mxu0 %v5406
          %5807 = vmatprep.subr.bf16.mxu0 %v5399
          %5808 = vmatpush1.bf16.msra.mxu0 %v5398
          %5809 = vmatprep.subr.bf16.mxu0 %v5391
          %5810 = vmatpush1.bf16.msra.mxu0 %v5390
          %5811 = vmatprep.subr.bf16.mxu0 %v5383
          %5812 = vmatpush1.bf16.msra.mxu0 %v5382
          %5813 = vmatprep.subr.bf16.mxu0 %v5375
          %5814 = vmatpush1.bf16.msra.mxu0 %v5374
          %5815 = vmatprep.subr.bf16.mxu0 %v5495
          %5816 = vmatpush2.bf16.msra.mxu0 %v5494
          %5817 = vmatprep.subr.bf16.mxu0 %v5487
          %5818 = vmatpush2.bf16.msra.mxu0 %v5486
          %5819 = vmatprep.subr.bf16.mxu0 %v5479
          %5820 = vmatpush2.bf16.msra.mxu0 %v5478
          %5821 = vmatprep.subr.bf16.mxu0 %v5471
          %5822 = vmatpush2.bf16.msra.mxu0 %v5470
          %5823 = vmatprep.subr.bf16.mxu0 %v5463
          %5824 = vmatpush2.bf16.msra.mxu0 %v5462
          %5825 = vmatprep.subr.bf16.mxu0 %v5455
          %5826 = vmatpush2.bf16.msra.mxu0 %v5454
          %5827 = vmatprep.subr.bf16.mxu0 %v5447
          %5828 = vmatpush2.bf16.msra.mxu0 %v5446
          %5829 = vmatprep.subr.bf16.mxu0 %v5439
          %5830 = vmatpush2.bf16.msra.mxu0 %v5438
          %5831 = vmatprep.mubr.bf16.mxu0 %v4179
          %5832 = vmatmul.mubr.bf16.gmra.mxu0 %v4178
          %v5833 = vpop.f32.mrf.mxu0
          %v5834 = vadd.f32 %v5793, %v5833
          %v5835 = vpop.f32.mrf.mxu0
          %v5836 = vadd.f32 %v5795, %v5835
          %v5837 = vpop.f32.mrf.mxu0
          %v5838 = vpop.f32.mrf.mxu0
          %5839 = vdwg.mxu0
          %5840 = vmatprep.subr.bf16.mxu0 %v5305
          %5841 = vmatpush1.bf16.msra.mxu0 %v5304
          %5842 = vmatprep.subr.bf16.mxu0 %v5297
          %5843 = vmatpush1.bf16.msra.mxu0 %v5296
          %5844 = vmatprep.subr.bf16.mxu0 %v5289
          %5845 = vmatpush1.bf16.msra.mxu0 %v5288
          %5846 = vmatprep.subr.bf16.mxu0 %v5281
          %5847 = vmatpush1.bf16.msra.mxu0 %v5280
          %5848 = vmatprep.subr.bf16.mxu0 %v5273
          %5849 = vmatpush1.bf16.msra.mxu0 %v5272
          %5850 = vmatprep.subr.bf16.mxu0 %v5265
          %5851 = vmatpush1.bf16.msra.mxu0 %v5264
          %5852 = vmatprep.subr.bf16.mxu0 %v5257
          %5853 = vmatpush1.bf16.msra.mxu0 %v5256
          %5854 = vmatprep.subr.bf16.mxu0 %v5249
          %5855 = vmatpush1.bf16.msra.mxu0 %v5248
          %5856 = vmatprep.subr.bf16.mxu0 %v5369
          %5857 = vmatpush2.bf16.msra.mxu0 %v5368
          %5858 = vmatprep.subr.bf16.mxu0 %v5361
          %5859 = vmatpush2.bf16.msra.mxu0 %v5360
          %5860 = vmatprep.subr.bf16.mxu0 %v5353
          %5861 = vmatpush2.bf16.msra.mxu0 %v5352
          %5862 = vmatprep.subr.bf16.mxu0 %v5345
          %5863 = vmatpush2.bf16.msra.mxu0 %v5344
          %5864 = vmatprep.subr.bf16.mxu0 %v5337
          %5865 = vmatpush2.bf16.msra.mxu0 %v5336
          %5866 = vmatprep.subr.bf16.mxu0 %v5329
          %5867 = vmatpush2.bf16.msra.mxu0 %v5328
          %5868 = vmatprep.subr.bf16.mxu0 %v5321
          %5869 = vmatpush2.bf16.msra.mxu0 %v5320
          %5870 = vmatprep.subr.bf16.mxu0 %v5313
          %5871 = vmatpush2.bf16.msra.mxu0 %v5312
          %5872 = vmatprep.mubr.bf16.mxu0 %v4177
          %5873 = vmatmul.mubr.bf16.gmra.mxu0 %v4176
          %v5874 = vpop.f32.mrf.mxu0
          %v5875 = vadd.f32 %v4449, %v5874
          %v5876 = vpop.f32.mrf.mxu0
          %v5877 = vadd.f32 %v4453, %v5876
          %v5878 = vpop.f32.mrf.mxu0
          %v5879 = vpop.f32.mrf.mxu0
          %5880 = vdwg.mxu0
          %5881 = vmatprep.subr.bf16.mxu0 %v5433
          %5882 = vmatpush1.bf16.msra.mxu0 %v5432
          %5883 = vmatprep.subr.bf16.mxu0 %v5425
          %5884 = vmatpush1.bf16.msra.mxu0 %v5424
          %5885 = vmatprep.subr.bf16.mxu0 %v5417
          %5886 = vmatpush1.bf16.msra.mxu0 %v5416
          %5887 = vmatprep.subr.bf16.mxu0 %v5409
          %5888 = vmatpush1.bf16.msra.mxu0 %v5408
          %5889 = vmatprep.subr.bf16.mxu0 %v5401
          %5890 = vmatpush1.bf16.msra.mxu0 %v5400
          %5891 = vmatprep.subr.bf16.mxu0 %v5393
          %5892 = vmatpush1.bf16.msra.mxu0 %v5392
          %5893 = vmatprep.subr.bf16.mxu0 %v5385
          %5894 = vmatpush1.bf16.msra.mxu0 %v5384
          %5895 = vmatprep.subr.bf16.mxu0 %v5377
          %5896 = vmatpush1.bf16.msra.mxu0 %v5376
          %5897 = vmatprep.subr.bf16.mxu0 %v5497
          %5898 = vmatpush2.bf16.msra.mxu0 %v5496
          %5899 = vmatprep.subr.bf16.mxu0 %v5489
          %5900 = vmatpush2.bf16.msra.mxu0 %v5488
          %5901 = vmatprep.subr.bf16.mxu0 %v5481
          %5902 = vmatpush2.bf16.msra.mxu0 %v5480
          %5903 = vmatprep.subr.bf16.mxu0 %v5473
          %5904 = vmatpush2.bf16.msra.mxu0 %v5472
          %5905 = vmatprep.subr.bf16.mxu0 %v5465
          %5906 = vmatpush2.bf16.msra.mxu0 %v5464
          %5907 = vmatprep.subr.bf16.mxu0 %v5457
          %5908 = vmatpush2.bf16.msra.mxu0 %v5456
          %5909 = vmatprep.subr.bf16.mxu0 %v5449
          %5910 = vmatpush2.bf16.msra.mxu0 %v5448
          %5911 = vmatprep.subr.bf16.mxu0 %v5441
          %5912 = vmatpush2.bf16.msra.mxu0 %v5440
          %5913 = vmatprep.mubr.bf16.mxu0 %v4179
          %5914 = vmatmul.mubr.bf16.gmra.mxu0 %v4178
          %v5915 = vpop.f32.mrf.mxu0
          %v5916 = vadd.f32 %v5875, %v5915
          %v5917 = vpop.f32.mrf.mxu0
          %v5918 = vadd.f32 %v5877, %v5917
          %v5919 = vpop.f32.mrf.mxu0
          %v5920 = vpop.f32.mrf.mxu0
          %5921 = vdwg.mxu0
          %5922 = vmatprep.subr.bf16.mxu0 %v5307
          %5923 = vmatpush1.bf16.msra.mxu0 %v5306
          %5924 = vmatprep.subr.bf16.mxu0 %v5299
          %5925 = vmatpush1.bf16.msra.mxu0 %v5298
          %5926 = vmatprep.subr.bf16.mxu0 %v5291
          %5927 = vmatpush1.bf16.msra.mxu0 %v5290
          %5928 = vmatprep.subr.bf16.mxu0 %v5283
          %5929 = vmatpush1.bf16.msra.mxu0 %v5282
          %5930 = vmatprep.subr.bf16.mxu0 %v5275
          %5931 = vmatpush1.bf16.msra.mxu0 %v5274
          %5932 = vmatprep.subr.bf16.mxu0 %v5267
          %5933 = vmatpush1.bf16.msra.mxu0 %v5266
          %5934 = vmatprep.subr.bf16.mxu0 %v5259
          %5935 = vmatpush1.bf16.msra.mxu0 %v5258
          %5936 = vmatprep.subr.bf16.mxu0 %v5251
          %5937 = vmatpush1.bf16.msra.mxu0 %v5250
          %5938 = vmatprep.subr.bf16.mxu0 %v5371
          %5939 = vmatpush2.bf16.msra.mxu0 %v5370
          %5940 = vmatprep.subr.bf16.mxu0 %v5363
          %5941 = vmatpush2.bf16.msra.mxu0 %v5362
          %5942 = vmatprep.subr.bf16.mxu0 %v5355
          %5943 = vmatpush2.bf16.msra.mxu0 %v5354
          %5944 = vmatprep.subr.bf16.mxu0 %v5347
          %5945 = vmatpush2.bf16.msra.mxu0 %v5346
          %5946 = vmatprep.subr.bf16.mxu0 %v5339
          %5947 = vmatpush2.bf16.msra.mxu0 %v5338
          %5948 = vmatprep.subr.bf16.mxu0 %v5331
          %5949 = vmatpush2.bf16.msra.mxu0 %v5330
          %5950 = vmatprep.subr.bf16.mxu0 %v5323
          %5951 = vmatpush2.bf16.msra.mxu0 %v5322
          %5952 = vmatprep.subr.bf16.mxu0 %v5315
          %5953 = vmatpush2.bf16.msra.mxu0 %v5314
          %5954 = vmatprep.mubr.bf16.mxu0 %v4177
          %5955 = vmatmul.mubr.bf16.gmra.mxu0 %v4176
          %v5956 = vpop.f32.mrf.mxu0
          %v5957 = vadd.f32 %v4457, %v5956
          %v5958 = vpop.f32.mrf.mxu0
          %v5959 = vadd.f32 %v4461, %v5958
          %v5960 = vpop.f32.mrf.mxu0
          %v5961 = vpop.f32.mrf.mxu0
          %5962 = vdwg.mxu0
          %5963 = vmatprep.subr.bf16.mxu0 %v5435
          %5964 = vmatpush1.bf16.msra.mxu0 %v5434
          %5965 = vmatprep.subr.bf16.mxu0 %v5427
          %5966 = vmatpush1.bf16.msra.mxu0 %v5426
          %5967 = vmatprep.subr.bf16.mxu0 %v5419
          %5968 = vmatpush1.bf16.msra.mxu0 %v5418
          %5969 = vmatprep.subr.bf16.mxu0 %v5411
          %5970 = vmatpush1.bf16.msra.mxu0 %v5410
          %5971 = vmatprep.subr.bf16.mxu0 %v5403
          %5972 = vmatpush1.bf16.msra.mxu0 %v5402
          %5973 = vmatprep.subr.bf16.mxu0 %v5395
          %5974 = vmatpush1.bf16.msra.mxu0 %v5394
          %5975 = vmatprep.subr.bf16.mxu0 %v5387
          %5976 = vmatpush1.bf16.msra.mxu0 %v5386
          %5977 = vmatprep.subr.bf16.mxu0 %v5379
          %5978 = vmatpush1.bf16.msra.mxu0 %v5378
          %5979 = vmatprep.subr.bf16.mxu0 %v5499
          %5980 = vmatpush2.bf16.msra.mxu0 %v5498
          %5981 = vmatprep.subr.bf16.mxu0 %v5491
          %5982 = vmatpush2.bf16.msra.mxu0 %v5490
          %5983 = vmatprep.subr.bf16.mxu0 %v5483
          %5984 = vmatpush2.bf16.msra.mxu0 %v5482
          %5985 = vmatprep.subr.bf16.mxu0 %v5475
          %5986 = vmatpush2.bf16.msra.mxu0 %v5474
          %5987 = vmatprep.subr.bf16.mxu0 %v5467
          %5988 = vmatpush2.bf16.msra.mxu0 %v5466
          %5989 = vmatprep.subr.bf16.mxu0 %v5459
          %5990 = vmatpush2.bf16.msra.mxu0 %v5458
          %5991 = vmatprep.subr.bf16.mxu0 %v5451
          %5992 = vmatpush2.bf16.msra.mxu0 %v5450
          %5993 = vmatprep.subr.bf16.mxu0 %v5443
          %5994 = vmatpush2.bf16.msra.mxu0 %v5442
          %5995 = vmatprep.mubr.bf16.mxu0 %v4179
          %5996 = vmatmul.mubr.bf16.gmra.mxu0 %v4178
          %v5997 = vpop.f32.mrf.mxu0
          %v5998 = vadd.f32 %v5957, %v5997
          %v5999 = vpop.f32.mrf.mxu0
          %v6000 = vadd.f32 %v5959, %v5999
          %v6001 = vpop.f32.mrf.mxu0
          %v6002 = vpop.f32.mrf.mxu0
          %6003 = vdwg.mxu0
          %6004 = vmatprep.subr.bf16.mxu0 %v5309
          %6005 = vmatpush1.bf16.msra.mxu0 %v5308
          %6006 = vmatprep.subr.bf16.mxu0 %v5301
          %6007 = vmatpush1.bf16.msra.mxu0 %v5300
          %6008 = vmatprep.subr.bf16.mxu0 %v5293
          %6009 = vmatpush1.bf16.msra.mxu0 %v5292
          %6010 = vmatprep.subr.bf16.mxu0 %v5285
          %6011 = vmatpush1.bf16.msra.mxu0 %v5284
          %6012 = vmatprep.subr.bf16.mxu0 %v5277
          %6013 = vmatpush1.bf16.msra.mxu0 %v5276
          %6014 = vmatprep.subr.bf16.mxu0 %v5269
          %6015 = vmatpush1.bf16.msra.mxu0 %v5268
          %6016 = vmatprep.subr.bf16.mxu0 %v5261
          %6017 = vmatpush1.bf16.msra.mxu0 %v5260
          %6018 = vmatprep.subr.bf16.mxu0 %v5253
          %6019 = vmatpush1.bf16.msra.mxu0 %v5252
          %6020 = vmatprep.subr.bf16.mxu0 %v5373
          %6021 = vmatpush2.bf16.msra.mxu0 %v5372
          %6022 = vmatprep.subr.bf16.mxu0 %v5365
          %6023 = vmatpush2.bf16.msra.mxu0 %v5364
          %6024 = vmatprep.subr.bf16.mxu0 %v5357
          %6025 = vmatpush2.bf16.msra.mxu0 %v5356
          %6026 = vmatprep.subr.bf16.mxu0 %v5349
          %6027 = vmatpush2.bf16.msra.mxu0 %v5348
          %6028 = vmatprep.subr.bf16.mxu0 %v5341
          %6029 = vmatpush2.bf16.msra.mxu0 %v5340
          %6030 = vmatprep.subr.bf16.mxu0 %v5333
          %6031 = vmatpush2.bf16.msra.mxu0 %v5332
          %6032 = vmatprep.subr.bf16.mxu0 %v5325
          %6033 = vmatpush2.bf16.msra.mxu0 %v5324
          %6034 = vmatprep.subr.bf16.mxu0 %v5317
          %6035 = vmatpush2.bf16.msra.mxu0 %v5316
          %6036 = vmatprep.mubr.bf16.mxu0 %v4177
          %6037 = vmatmul.mubr.bf16.gmra.mxu0 %v4176
          %v6038 = vpop.f32.mrf.mxu0
          %v6039 = vadd.f32 %v4465, %v6038
          %v6040 = vpop.f32.mrf.mxu0
          %v6041 = vadd.f32 %v4469, %v6040
          %v6042 = vpop.f32.mrf.mxu0
          %v6043 = vpop.f32.mrf.mxu0
          %6044 = vdwg.mxu0
          %6045 = vmatprep.subr.bf16.mxu0 %v5437
          %6046 = vmatpush1.bf16.msra.mxu0 %v5436
          %6047 = vmatprep.subr.bf16.mxu0 %v5429
          %6048 = vmatpush1.bf16.msra.mxu0 %v5428
          %6049 = vmatprep.subr.bf16.mxu0 %v5421
          %6050 = vmatpush1.bf16.msra.mxu0 %v5420
          %6051 = vmatprep.subr.bf16.mxu0 %v5413
          %6052 = vmatpush1.bf16.msra.mxu0 %v5412
          %6053 = vmatprep.subr.bf16.mxu0 %v5405
          %6054 = vmatpush1.bf16.msra.mxu0 %v5404
          %6055 = vmatprep.subr.bf16.mxu0 %v5397
          %6056 = vmatpush1.bf16.msra.mxu0 %v5396
          %6057 = vmatprep.subr.bf16.mxu0 %v5389
          %6058 = vmatpush1.bf16.msra.mxu0 %v5388
          %6059 = vmatprep.subr.bf16.mxu0 %v5381
          %6060 = vmatpush1.bf16.msra.mxu0 %v5380
          %6061 = vmatprep.subr.bf16.mxu0 %v5501
          %6062 = vmatpush2.bf16.msra.mxu0 %v5500
          %6063 = vmatprep.subr.bf16.mxu0 %v5493
          %6064 = vmatpush2.bf16.msra.mxu0 %v5492
          %6065 = vmatprep.subr.bf16.mxu0 %v5485
          %6066 = vmatpush2.bf16.msra.mxu0 %v5484
          %6067 = vmatprep.subr.bf16.mxu0 %v5477
          %6068 = vmatpush2.bf16.msra.mxu0 %v5476
          %6069 = vmatprep.subr.bf16.mxu0 %v5469
          %6070 = vmatpush2.bf16.msra.mxu0 %v5468
          %6071 = vmatprep.subr.bf16.mxu0 %v5461
          %6072 = vmatpush2.bf16.msra.mxu0 %v5460
          %6073 = vmatprep.subr.bf16.mxu0 %v5453
          %6074 = vmatpush2.bf16.msra.mxu0 %v5452
          %6075 = vmatprep.subr.bf16.mxu0 %v5445
          %6076 = vmatpush2.bf16.msra.mxu0 %v5444
          %6077 = vmatprep.mubr.bf16.mxu0 %v4179
          %6078 = vmatmul.mubr.bf16.gmra.mxu0 %v4178
          %v6079 = vpop.f32.mrf.mxu0
          %v6080 = vadd.f32 %v6039, %v6079
          %v6081 = vpop.f32.mrf.mxu0
          %v6082 = vadd.f32 %v6041, %v6081
          %v6083 = vpop.f32.mrf.mxu0
          %v6084 = vpop.f32.mrf.mxu0
          %6085 = vdwg.mxu0
          %v6086 = vpack.c.bf16 %v5834, %v5834
          %v6087 = vpack.c.bf16 %v5836, %v5836
          %v6088 = vpack.c.bf16 %v5916, %v5916
          %v6089 = vpack.c.bf16 %v5918, %v5918
          %v6090 = vpack.c.bf16 %v5998, %v5998
          %v6091 = vpack.c.bf16 %v6000, %v6000
          %v6092 = vpack.c.bf16 %v6080, %v6080
          %v6093 = vpack.c.bf16 %v6082, %v6082
          %v6094 = vld [vmem:[#allocation13] sm:$0xff]
          %v6095 = vld [vmem:[#allocation13 + $0x8] sm:$0xff]
          %v6096 = vld [vmem:[#allocation13 + $0x10] sm:$0xff]
          %v6097 = vld [vmem:[#allocation13 + $0x18] sm:$0xff]
          %v6098 = vld [vmem:[#allocation13 + $0x20] sm:$0xff]
          %v6099 = vld [vmem:[#allocation13 + $0x28] sm:$0xff]
          %v6100 = vld [vmem:[#allocation13 + $0x30] sm:$0xff]
          %v6101 = vld [vmem:[#allocation13 + $0x38] sm:$0xff]
          %v6102 = vld [vmem:[#allocation13 + $0x40] sm:$0xff]
          %v6103 = vld [vmem:[#allocation13 + $0x48] sm:$0xff]
          %v6104 = vld [vmem:[#allocation13 + $0x50] sm:$0xff]
          %v6105 = vld [vmem:[#allocation13 + $0x58] sm:$0xff]
          %v6106 = vld [vmem:[#allocation13 + $0x60] sm:$0xff]
          %v6107 = vld [vmem:[#allocation13 + $0x68] sm:$0xff]
          %v6108 = vld [vmem:[#allocation13 + $0x70] sm:$0xff]
          %v6109 = vld [vmem:[#allocation13 + $0x78] sm:$0xff]
          %v6110 = vld [vmem:[#allocation13 + $0x80] sm:$0xff]
          %v6111 = vld [vmem:[#allocation13 + $0x88] sm:$0xff]
          %v6112 = vld [vmem:[#allocation13 + $0x90] sm:$0xff]
          %v6113 = vld [vmem:[#allocation13 + $0x98] sm:$0xff]
          %v6114 = vld [vmem:[#allocation13 + $0xa0] sm:$0xff]
          %v6115 = vld [vmem:[#allocation13 + $0xa8] sm:$0xff]
          %v6116 = vld [vmem:[#allocation13 + $0xb0] sm:$0xff]
          %v6117 = vld [vmem:[#allocation13 + $0xb8] sm:$0xff]
          %v6118 = vld [vmem:[#allocation13 + $0xc0] sm:$0xff]
          %v6119 = vld [vmem:[#allocation13 + $0xc8] sm:$0xff]
          %v6120 = vld [vmem:[#allocation13 + $0xd0] sm:$0xff]
          %v6121 = vld [vmem:[#allocation13 + $0xd8] sm:$0xff]
          %v6122 = vld [vmem:[#allocation13 + $0xe0] sm:$0xff]
          %v6123 = vld [vmem:[#allocation13 + $0xe8] sm:$0xff]
          %v6124 = vld [vmem:[#allocation13 + $0xf0] sm:$0xff]
          %v6125 = vld [vmem:[#allocation13 + $0xf8] sm:$0xff]
          %v6126 = vld [vmem:[#allocation13 + $0x100] sm:$0xff]
          %v6127 = vld [vmem:[#allocation13 + $0x108] sm:$0xff]
          %v6128 = vld [vmem:[#allocation13 + $0x110] sm:$0xff]
          %v6129 = vld [vmem:[#allocation13 + $0x118] sm:$0xff]
          %v6130 = vld [vmem:[#allocation13 + $0x120] sm:$0xff]
          %v6131 = vld [vmem:[#allocation13 + $0x128] sm:$0xff]
          %v6132 = vld [vmem:[#allocation13 + $0x130] sm:$0xff]
          %v6133 = vld [vmem:[#allocation13 + $0x138] sm:$0xff]
          %v6134 = vld [vmem:[#allocation13 + $0x140] sm:$0xff]
          %v6135 = vld [vmem:[#allocation13 + $0x148] sm:$0xff]
          %v6136 = vld [vmem:[#allocation13 + $0x150] sm:$0xff]
          %v6137 = vld [vmem:[#allocation13 + $0x158] sm:$0xff]
          %v6138 = vld [vmem:[#allocation13 + $0x160] sm:$0xff]
          %v6139 = vld [vmem:[#allocation13 + $0x168] sm:$0xff]
          %v6140 = vld [vmem:[#allocation13 + $0x170] sm:$0xff]
          %v6141 = vld [vmem:[#allocation13 + $0x178] sm:$0xff]
          %v6142 = vld [vmem:[#allocation13 + $0x180] sm:$0xff]
          %v6143 = vld [vmem:[#allocation13 + $0x188] sm:$0xff]
          %v6144 = vld [vmem:[#allocation13 + $0x190] sm:$0xff]
          %v6145 = vld [vmem:[#allocation13 + $0x198] sm:$0xff]
          %v6146 = vld [vmem:[#allocation13 + $0x1a0] sm:$0xff]
          %v6147 = vld [vmem:[#allocation13 + $0x1a8] sm:$0xff]
          %v6148 = vld [vmem:[#allocation13 + $0x1b0] sm:$0xff]
          %v6149 = vld [vmem:[#allocation13 + $0x1b8] sm:$0xff]
          %v6150 = vld [vmem:[#allocation13 + $0x1c0] sm:$0xff]
          %v6151 = vld [vmem:[#allocation13 + $0x1c8] sm:$0xff]
          %v6152 = vld [vmem:[#allocation13 + $0x1d0] sm:$0xff]
          %v6153 = vld [vmem:[#allocation13 + $0x1d8] sm:$0xff]
          %v6154 = vld [vmem:[#allocation13 + $0x1e0] sm:$0xff]
          %v6155 = vld [vmem:[#allocation13 + $0x1e8] sm:$0xff]
          %v6156 = vld [vmem:[#allocation13 + $0x1f0] sm:$0xff]
          %v6157 = vld [vmem:[#allocation13 + $0x1f8] sm:$0xff]
          %v6158 = vld [vmem:[#allocation13 + $0x200] sm:$0xff]
          %v6159 = vld [vmem:[#allocation13 + $0x208] sm:$0xff]
          %v6160 = vld [vmem:[#allocation13 + $0x210] sm:$0xff]
          %v6161 = vld [vmem:[#allocation13 + $0x218] sm:$0xff]
          %v6162 = vld [vmem:[#allocation13 + $0x220] sm:$0xff]
          %v6163 = vld [vmem:[#allocation13 + $0x228] sm:$0xff]
          %v6164 = vld [vmem:[#allocation13 + $0x230] sm:$0xff]
          %v6165 = vld [vmem:[#allocation13 + $0x238] sm:$0xff]
          %v6166 = vld [vmem:[#allocation13 + $0x240] sm:$0xff]
          %v6167 = vld [vmem:[#allocation13 + $0x248] sm:$0xff]
          %v6168 = vld [vmem:[#allocation13 + $0x250] sm:$0xff]
          %v6169 = vld [vmem:[#allocation13 + $0x258] sm:$0xff]
          %v6170 = vld [vmem:[#allocation13 + $0x260] sm:$0xff]
          %v6171 = vld [vmem:[#allocation13 + $0x268] sm:$0xff]
          %v6172 = vld [vmem:[#allocation13 + $0x270] sm:$0xff]
          %v6173 = vld [vmem:[#allocation13 + $0x278] sm:$0xff]
          %v6174 = vld [vmem:[#allocation13 + $0x280] sm:$0xff]
          %v6175 = vld [vmem:[#allocation13 + $0x288] sm:$0xff]
          %v6176 = vld [vmem:[#allocation13 + $0x290] sm:$0xff]
          %v6177 = vld [vmem:[#allocation13 + $0x298] sm:$0xff]
          %v6178 = vld [vmem:[#allocation13 + $0x2a0] sm:$0xff]
          %v6179 = vld [vmem:[#allocation13 + $0x2a8] sm:$0xff]
          %v6180 = vld [vmem:[#allocation13 + $0x2b0] sm:$0xff]
          %v6181 = vld [vmem:[#allocation13 + $0x2b8] sm:$0xff]
          %v6182 = vld [vmem:[#allocation13 + $0x2c0] sm:$0xff]
          %v6183 = vld [vmem:[#allocation13 + $0x2c8] sm:$0xff]
          %v6184 = vld [vmem:[#allocation13 + $0x2d0] sm:$0xff]
          %v6185 = vld [vmem:[#allocation13 + $0x2d8] sm:$0xff]
          %v6186 = vld [vmem:[#allocation13 + $0x2e0] sm:$0xff]
          %v6187 = vld [vmem:[#allocation13 + $0x2e8] sm:$0xff]
          %v6188 = vld [vmem:[#allocation13 + $0x2f0] sm:$0xff]
          %v6189 = vld [vmem:[#allocation13 + $0x2f8] sm:$0xff]
          %v6190 = vld [vmem:[#allocation13 + $0x300] sm:$0xff]
          %v6191 = vld [vmem:[#allocation13 + $0x308] sm:$0xff]
          %v6192 = vld [vmem:[#allocation13 + $0x310] sm:$0xff]
          %v6193 = vld [vmem:[#allocation13 + $0x318] sm:$0xff]
          %v6194 = vld [vmem:[#allocation13 + $0x320] sm:$0xff]
          %v6195 = vld [vmem:[#allocation13 + $0x328] sm:$0xff]
          %v6196 = vld [vmem:[#allocation13 + $0x330] sm:$0xff]
          %v6197 = vld [vmem:[#allocation13 + $0x338] sm:$0xff]
          %v6198 = vld [vmem:[#allocation13 + $0x340] sm:$0xff]
          %v6199 = vld [vmem:[#allocation13 + $0x348] sm:$0xff]
          %v6200 = vld [vmem:[#allocation13 + $0x350] sm:$0xff]
          %v6201 = vld [vmem:[#allocation13 + $0x358] sm:$0xff]
          %v6202 = vld [vmem:[#allocation13 + $0x360] sm:$0xff]
          %v6203 = vld [vmem:[#allocation13 + $0x368] sm:$0xff]
          %v6204 = vld [vmem:[#allocation13 + $0x370] sm:$0xff]
          %v6205 = vld [vmem:[#allocation13 + $0x378] sm:$0xff]
          %v6206 = vld [vmem:[#allocation13 + $0x380] sm:$0xff]
          %v6207 = vld [vmem:[#allocation13 + $0x388] sm:$0xff]
          %v6208 = vld [vmem:[#allocation13 + $0x390] sm:$0xff]
          %v6209 = vld [vmem:[#allocation13 + $0x398] sm:$0xff]
          %v6210 = vld [vmem:[#allocation13 + $0x3a0] sm:$0xff]
          %v6211 = vld [vmem:[#allocation13 + $0x3a8] sm:$0xff]
          %v6212 = vld [vmem:[#allocation13 + $0x3b0] sm:$0xff]
          %v6213 = vld [vmem:[#allocation13 + $0x3b8] sm:$0xff]
          %v6214 = vld [vmem:[#allocation13 + $0x3c0] sm:$0xff]
          %v6215 = vld [vmem:[#allocation13 + $0x3c8] sm:$0xff]
          %v6216 = vld [vmem:[#allocation13 + $0x3d0] sm:$0xff]
          %v6217 = vld [vmem:[#allocation13 + $0x3d8] sm:$0xff]
          %v6218 = vld [vmem:[#allocation13 + $0x3e0] sm:$0xff]
          %v6219 = vld [vmem:[#allocation13 + $0x3e8] sm:$0xff]
          %v6220 = vld [vmem:[#allocation13 + $0x3f0] sm:$0xff]
          %v6221 = vld [vmem:[#allocation13 + $0x3f8] sm:$0xff]
          %v6222 = vld [vmem:[#allocation13 + $0x400] sm:$0xff]
          %v6223 = vld [vmem:[#allocation13 + $0x408] sm:$0xff]
          %v6224 = vld [vmem:[#allocation13 + $0x410] sm:$0xff]
          %v6225 = vld [vmem:[#allocation13 + $0x418] sm:$0xff]
          %v6226 = vld [vmem:[#allocation13 + $0x420] sm:$0xff]
          %v6227 = vld [vmem:[#allocation13 + $0x428] sm:$0xff]
          %v6228 = vld [vmem:[#allocation13 + $0x430] sm:$0xff]
          %v6229 = vld [vmem:[#allocation13 + $0x438] sm:$0xff]
          %v6230 = vld [vmem:[#allocation13 + $0x440] sm:$0xff]
          %v6231 = vld [vmem:[#allocation13 + $0x448] sm:$0xff]
          %v6232 = vld [vmem:[#allocation13 + $0x450] sm:$0xff]
          %v6233 = vld [vmem:[#allocation13 + $0x458] sm:$0xff]
          %v6234 = vld [vmem:[#allocation13 + $0x460] sm:$0xff]
          %v6235 = vld [vmem:[#allocation13 + $0x468] sm:$0xff]
          %v6236 = vld [vmem:[#allocation13 + $0x470] sm:$0xff]
          %v6237 = vld [vmem:[#allocation13 + $0x478] sm:$0xff]
          %v6238 = vld [vmem:[#allocation13 + $0x480] sm:$0xff]
          %v6239 = vld [vmem:[#allocation13 + $0x488] sm:$0xff]
          %v6240 = vld [vmem:[#allocation13 + $0x490] sm:$0xff]
          %v6241 = vld [vmem:[#allocation13 + $0x498] sm:$0xff]
          %v6242 = vld [vmem:[#allocation13 + $0x4a0] sm:$0xff]
          %v6243 = vld [vmem:[#allocation13 + $0x4a8] sm:$0xff]
          %v6244 = vld [vmem:[#allocation13 + $0x4b0] sm:$0xff]
          %v6245 = vld [vmem:[#allocation13 + $0x4b8] sm:$0xff]
          %v6246 = vld [vmem:[#allocation13 + $0x4c0] sm:$0xff]
          %v6247 = vld [vmem:[#allocation13 + $0x4c8] sm:$0xff]
          %v6248 = vld [vmem:[#allocation13 + $0x4d0] sm:$0xff]
          %v6249 = vld [vmem:[#allocation13 + $0x4d8] sm:$0xff]
          %v6250 = vld [vmem:[#allocation13 + $0x4e0] sm:$0xff]
          %v6251 = vld [vmem:[#allocation13 + $0x4e8] sm:$0xff]
          %v6252 = vld [vmem:[#allocation13 + $0x4f0] sm:$0xff]
          %v6253 = vld [vmem:[#allocation13 + $0x4f8] sm:$0xff]
          %v6254 = vld [vmem:[#allocation13 + $0x500] sm:$0xff]
          %v6255 = vld [vmem:[#allocation13 + $0x508] sm:$0xff]
          %v6256 = vld [vmem:[#allocation13 + $0x510] sm:$0xff]
          %v6257 = vld [vmem:[#allocation13 + $0x518] sm:$0xff]
          %v6258 = vld [vmem:[#allocation13 + $0x520] sm:$0xff]
          %v6259 = vld [vmem:[#allocation13 + $0x528] sm:$0xff]
          %v6260 = vld [vmem:[#allocation13 + $0x530] sm:$0xff]
          %v6261 = vld [vmem:[#allocation13 + $0x538] sm:$0xff]
          %v6262 = vld [vmem:[#allocation13 + $0x540] sm:$0xff]
          %v6263 = vld [vmem:[#allocation13 + $0x548] sm:$0xff]
          %v6264 = vld [vmem:[#allocation13 + $0x550] sm:$0xff]
          %v6265 = vld [vmem:[#allocation13 + $0x558] sm:$0xff]
          %v6266 = vld [vmem:[#allocation13 + $0x560] sm:$0xff]
          %v6267 = vld [vmem:[#allocation13 + $0x568] sm:$0xff]
          %v6268 = vld [vmem:[#allocation13 + $0x570] sm:$0xff]
          %v6269 = vld [vmem:[#allocation13 + $0x578] sm:$0xff]
          %v6270 = vld [vmem:[#allocation13 + $0x580] sm:$0xff]
          %v6271 = vld [vmem:[#allocation13 + $0x588] sm:$0xff]
          %v6272 = vld [vmem:[#allocation13 + $0x590] sm:$0xff]
          %v6273 = vld [vmem:[#allocation13 + $0x598] sm:$0xff]
          %v6274 = vld [vmem:[#allocation13 + $0x5a0] sm:$0xff]
          %v6275 = vld [vmem:[#allocation13 + $0x5a8] sm:$0xff]
          %v6276 = vld [vmem:[#allocation13 + $0x5b0] sm:$0xff]
          %v6277 = vld [vmem:[#allocation13 + $0x5b8] sm:$0xff]
          %v6278 = vld [vmem:[#allocation13 + $0x5c0] sm:$0xff]
          %v6279 = vld [vmem:[#allocation13 + $0x5c8] sm:$0xff]
          %v6280 = vld [vmem:[#allocation13 + $0x5d0] sm:$0xff]
          %v6281 = vld [vmem:[#allocation13 + $0x5d8] sm:$0xff]
          %v6282 = vld [vmem:[#allocation13 + $0x5e0] sm:$0xff]
          %v6283 = vld [vmem:[#allocation13 + $0x5e8] sm:$0xff]
          %v6284 = vld [vmem:[#allocation13 + $0x5f0] sm:$0xff]
          %v6285 = vld [vmem:[#allocation13 + $0x5f8] sm:$0xff]
          %v6286 = vld [vmem:[#allocation13 + $0x600] sm:$0xff]
          %v6287 = vld [vmem:[#allocation13 + $0x608] sm:$0xff]
          %v6288 = vld [vmem:[#allocation13 + $0x610] sm:$0xff]
          %v6289 = vld [vmem:[#allocation13 + $0x618] sm:$0xff]
          %v6290 = vld [vmem:[#allocation13 + $0x620] sm:$0xff]
          %v6291 = vld [vmem:[#allocation13 + $0x628] sm:$0xff]
          %v6292 = vld [vmem:[#allocation13 + $0x630] sm:$0xff]
          %v6293 = vld [vmem:[#allocation13 + $0x638] sm:$0xff]
          %v6294 = vld [vmem:[#allocation13 + $0x640] sm:$0xff]
          %v6295 = vld [vmem:[#allocation13 + $0x648] sm:$0xff]
          %v6296 = vld [vmem:[#allocation13 + $0x650] sm:$0xff]
          %v6297 = vld [vmem:[#allocation13 + $0x658] sm:$0xff]
          %v6298 = vld [vmem:[#allocation13 + $0x660] sm:$0xff]
          %v6299 = vld [vmem:[#allocation13 + $0x668] sm:$0xff]
          %v6300 = vld [vmem:[#allocation13 + $0x670] sm:$0xff]
          %v6301 = vld [vmem:[#allocation13 + $0x678] sm:$0xff]
          %v6302 = vld [vmem:[#allocation13 + $0x680] sm:$0xff]
          %v6303 = vld [vmem:[#allocation13 + $0x688] sm:$0xff]
          %v6304 = vld [vmem:[#allocation13 + $0x690] sm:$0xff]
          %v6305 = vld [vmem:[#allocation13 + $0x698] sm:$0xff]
          %v6306 = vld [vmem:[#allocation13 + $0x6a0] sm:$0xff]
          %v6307 = vld [vmem:[#allocation13 + $0x6a8] sm:$0xff]
          %v6308 = vld [vmem:[#allocation13 + $0x6b0] sm:$0xff]
          %v6309 = vld [vmem:[#allocation13 + $0x6b8] sm:$0xff]
          %v6310 = vld [vmem:[#allocation13 + $0x6c0] sm:$0xff]
          %v6311 = vld [vmem:[#allocation13 + $0x6c8] sm:$0xff]
          %v6312 = vld [vmem:[#allocation13 + $0x6d0] sm:$0xff]
          %v6313 = vld [vmem:[#allocation13 + $0x6d8] sm:$0xff]
          %v6314 = vld [vmem:[#allocation13 + $0x6e0] sm:$0xff]
          %v6315 = vld [vmem:[#allocation13 + $0x6e8] sm:$0xff]
          %v6316 = vld [vmem:[#allocation13 + $0x6f0] sm:$0xff]
          %v6317 = vld [vmem:[#allocation13 + $0x6f8] sm:$0xff]
          %v6318 = vld [vmem:[#allocation13 + $0x700] sm:$0xff]
          %v6319 = vld [vmem:[#allocation13 + $0x708] sm:$0xff]
          %v6320 = vld [vmem:[#allocation13 + $0x710] sm:$0xff]
          %v6321 = vld [vmem:[#allocation13 + $0x718] sm:$0xff]
          %v6322 = vld [vmem:[#allocation13 + $0x720] sm:$0xff]
          %v6323 = vld [vmem:[#allocation13 + $0x728] sm:$0xff]
          %v6324 = vld [vmem:[#allocation13 + $0x730] sm:$0xff]
          %v6325 = vld [vmem:[#allocation13 + $0x738] sm:$0xff]
          %v6326 = vld [vmem:[#allocation13 + $0x740] sm:$0xff]
          %v6327 = vld [vmem:[#allocation13 + $0x748] sm:$0xff]
          %v6328 = vld [vmem:[#allocation13 + $0x750] sm:$0xff]
          %v6329 = vld [vmem:[#allocation13 + $0x758] sm:$0xff]
          %v6330 = vld [vmem:[#allocation13 + $0x760] sm:$0xff]
          %v6331 = vld [vmem:[#allocation13 + $0x768] sm:$0xff]
          %v6332 = vld [vmem:[#allocation13 + $0x770] sm:$0xff]
          %v6333 = vld [vmem:[#allocation13 + $0x778] sm:$0xff]
          %v6334 = vld [vmem:[#allocation13 + $0x780] sm:$0xff]
          %v6335 = vld [vmem:[#allocation13 + $0x788] sm:$0xff]
          %v6336 = vld [vmem:[#allocation13 + $0x790] sm:$0xff]
          %v6337 = vld [vmem:[#allocation13 + $0x798] sm:$0xff]
          %v6338 = vld [vmem:[#allocation13 + $0x7a0] sm:$0xff]
          %v6339 = vld [vmem:[#allocation13 + $0x7a8] sm:$0xff]
          %v6340 = vld [vmem:[#allocation13 + $0x7b0] sm:$0xff]
          %v6341 = vld [vmem:[#allocation13 + $0x7b8] sm:$0xff]
          %v6342 = vld [vmem:[#allocation13 + $0x7c0] sm:$0xff]
          %v6343 = vld [vmem:[#allocation13 + $0x7c8] sm:$0xff]
          %v6344 = vld [vmem:[#allocation13 + $0x7d0] sm:$0xff]
          %v6345 = vld [vmem:[#allocation13 + $0x7d8] sm:$0xff]
          %v6346 = vld [vmem:[#allocation13 + $0x7e0] sm:$0xff]
          %v6347 = vld [vmem:[#allocation13 + $0x7e8] sm:$0xff]
          %v6348 = vld [vmem:[#allocation13 + $0x7f0] sm:$0xff]
          %v6349 = vld [vmem:[#allocation13 + $0x7f8] sm:$0xff]
          %v6350 = vld [vmem:[#allocation13 + $0x800] sm:$0xff]
          %v6351 = vld [vmem:[#allocation13 + $0x808] sm:$0xff]
          %v6352 = vld [vmem:[#allocation13 + $0x810] sm:$0xff]
          %v6353 = vld [vmem:[#allocation13 + $0x818] sm:$0xff]
          %v6354 = vld [vmem:[#allocation13 + $0x820] sm:$0xff]
          %v6355 = vld [vmem:[#allocation13 + $0x828] sm:$0xff]
          %v6356 = vld [vmem:[#allocation13 + $0x830] sm:$0xff]
          %v6357 = vld [vmem:[#allocation13 + $0x838] sm:$0xff]
          %v6358 = vld [vmem:[#allocation13 + $0x840] sm:$0xff]
          %v6359 = vld [vmem:[#allocation13 + $0x848] sm:$0xff]
          %v6360 = vld [vmem:[#allocation13 + $0x850] sm:$0xff]
          %v6361 = vld [vmem:[#allocation13 + $0x858] sm:$0xff]
          %v6362 = vld [vmem:[#allocation13 + $0x860] sm:$0xff]
          %v6363 = vld [vmem:[#allocation13 + $0x868] sm:$0xff]
          %v6364 = vld [vmem:[#allocation13 + $0x870] sm:$0xff]
          %v6365 = vld [vmem:[#allocation13 + $0x878] sm:$0xff]
          %v6366 = vld [vmem:[#allocation13 + $0x880] sm:$0xff]
          %v6367 = vld [vmem:[#allocation13 + $0x888] sm:$0xff]
          %v6368 = vld [vmem:[#allocation13 + $0x890] sm:$0xff]
          %v6369 = vld [vmem:[#allocation13 + $0x898] sm:$0xff]
          %v6370 = vld [vmem:[#allocation13 + $0x8a0] sm:$0xff]
          %v6371 = vld [vmem:[#allocation13 + $0x8a8] sm:$0xff]
          %v6372 = vld [vmem:[#allocation13 + $0x8b0] sm:$0xff]
          %v6373 = vld [vmem:[#allocation13 + $0x8b8] sm:$0xff]
          %v6374 = vld [vmem:[#allocation13 + $0x8c0] sm:$0xff]
          %v6375 = vld [vmem:[#allocation13 + $0x8c8] sm:$0xff]
          %v6376 = vld [vmem:[#allocation13 + $0x8d0] sm:$0xff]
          %v6377 = vld [vmem:[#allocation13 + $0x8d8] sm:$0xff]
          %v6378 = vld [vmem:[#allocation13 + $0x8e0] sm:$0xff]
          %v6379 = vld [vmem:[#allocation13 + $0x8e8] sm:$0xff]
          %v6380 = vld [vmem:[#allocation13 + $0x8f0] sm:$0xff]
          %v6381 = vld [vmem:[#allocation13 + $0x8f8] sm:$0xff]
          %v6382 = vld [vmem:[#allocation13 + $0x900] sm:$0xff]
          %v6383 = vld [vmem:[#allocation13 + $0x908] sm:$0xff]
          %v6384 = vld [vmem:[#allocation13 + $0x910] sm:$0xff]
          %v6385 = vld [vmem:[#allocation13 + $0x918] sm:$0xff]
          %v6386 = vld [vmem:[#allocation13 + $0x920] sm:$0xff]
          %v6387 = vld [vmem:[#allocation13 + $0x928] sm:$0xff]
          %v6388 = vld [vmem:[#allocation13 + $0x930] sm:$0xff]
          %v6389 = vld [vmem:[#allocation13 + $0x938] sm:$0xff]
          %v6390 = vld [vmem:[#allocation13 + $0x940] sm:$0xff]
          %v6391 = vld [vmem:[#allocation13 + $0x948] sm:$0xff]
          %v6392 = vld [vmem:[#allocation13 + $0x950] sm:$0xff]
          %v6393 = vld [vmem:[#allocation13 + $0x958] sm:$0xff]
          %v6394 = vld [vmem:[#allocation13 + $0x960] sm:$0xff]
          %v6395 = vld [vmem:[#allocation13 + $0x968] sm:$0xff]
          %v6396 = vld [vmem:[#allocation13 + $0x970] sm:$0xff]
          %v6397 = vld [vmem:[#allocation13 + $0x978] sm:$0xff]
          %v6398 = vld [vmem:[#allocation13 + $0x980] sm:$0xff]
          %v6399 = vld [vmem:[#allocation13 + $0x988] sm:$0xff]
          %v6400 = vld [vmem:[#allocation13 + $0x990] sm:$0xff]
          %v6401 = vld [vmem:[#allocation13 + $0x998] sm:$0xff]
          %v6402 = vld [vmem:[#allocation13 + $0x9a0] sm:$0xff]
          %v6403 = vld [vmem:[#allocation13 + $0x9a8] sm:$0xff]
          %v6404 = vld [vmem:[#allocation13 + $0x9b0] sm:$0xff]
          %v6405 = vld [vmem:[#allocation13 + $0x9b8] sm:$0xff]
          %v6406 = vld [vmem:[#allocation13 + $0x9c0] sm:$0xff]
          %v6407 = vld [vmem:[#allocation13 + $0x9c8] sm:$0xff]
          %v6408 = vld [vmem:[#allocation13 + $0x9d0] sm:$0xff]
          %v6409 = vld [vmem:[#allocation13 + $0x9d8] sm:$0xff]
          %v6410 = vld [vmem:[#allocation13 + $0x9e0] sm:$0xff]
          %v6411 = vld [vmem:[#allocation13 + $0x9e8] sm:$0xff]
          %v6412 = vld [vmem:[#allocation13 + $0x9f0] sm:$0xff]
          %v6413 = vld [vmem:[#allocation13 + $0x9f8] sm:$0xff]
          %v6414 = vld [vmem:[#allocation13 + $0xa00] sm:$0xff]
          %v6415 = vld [vmem:[#allocation13 + $0xa08] sm:$0xff]
          %v6416 = vld [vmem:[#allocation13 + $0xa10] sm:$0xff]
          %v6417 = vld [vmem:[#allocation13 + $0xa18] sm:$0xff]
          %v6418 = vld [vmem:[#allocation13 + $0xa20] sm:$0xff]
          %v6419 = vld [vmem:[#allocation13 + $0xa28] sm:$0xff]
          %v6420 = vld [vmem:[#allocation13 + $0xa30] sm:$0xff]
          %v6421 = vld [vmem:[#allocation13 + $0xa38] sm:$0xff]
          %v6422 = vld [vmem:[#allocation13 + $0xa40] sm:$0xff]
          %v6423 = vld [vmem:[#allocation13 + $0xa48] sm:$0xff]
          %v6424 = vld [vmem:[#allocation13 + $0xa50] sm:$0xff]
          %v6425 = vld [vmem:[#allocation13 + $0xa58] sm:$0xff]
          %v6426 = vld [vmem:[#allocation13 + $0xa60] sm:$0xff]
          %v6427 = vld [vmem:[#allocation13 + $0xa68] sm:$0xff]
          %v6428 = vld [vmem:[#allocation13 + $0xa70] sm:$0xff]
          %v6429 = vld [vmem:[#allocation13 + $0xa78] sm:$0xff]
          %v6430 = vld [vmem:[#allocation13 + $0xa80] sm:$0xff]
          %v6431 = vld [vmem:[#allocation13 + $0xa88] sm:$0xff]
          %v6432 = vld [vmem:[#allocation13 + $0xa90] sm:$0xff]
          %v6433 = vld [vmem:[#allocation13 + $0xa98] sm:$0xff]
          %v6434 = vld [vmem:[#allocation13 + $0xaa0] sm:$0xff]
          %v6435 = vld [vmem:[#allocation13 + $0xaa8] sm:$0xff]
          %v6436 = vld [vmem:[#allocation13 + $0xab0] sm:$0xff]
          %v6437 = vld [vmem:[#allocation13 + $0xab8] sm:$0xff]
          %v6438 = vld [vmem:[#allocation13 + $0xac0] sm:$0xff]
          %v6439 = vld [vmem:[#allocation13 + $0xac8] sm:$0xff]
          %v6440 = vld [vmem:[#allocation13 + $0xad0] sm:$0xff]
          %v6441 = vld [vmem:[#allocation13 + $0xad8] sm:$0xff]
          %v6442 = vld [vmem:[#allocation13 + $0xae0] sm:$0xff]
          %v6443 = vld [vmem:[#allocation13 + $0xae8] sm:$0xff]
          %v6444 = vld [vmem:[#allocation13 + $0xaf0] sm:$0xff]
          %v6445 = vld [vmem:[#allocation13 + $0xaf8] sm:$0xff]
          %v6446 = vld [vmem:[#allocation13 + $0xb00] sm:$0xff]
          %v6447 = vld [vmem:[#allocation13 + $0xb08] sm:$0xff]
          %v6448 = vld [vmem:[#allocation13 + $0xb10] sm:$0xff]
          %v6449 = vld [vmem:[#allocation13 + $0xb18] sm:$0xff]
          %v6450 = vld [vmem:[#allocation13 + $0xb20] sm:$0xff]
          %v6451 = vld [vmem:[#allocation13 + $0xb28] sm:$0xff]
          %v6452 = vld [vmem:[#allocation13 + $0xb30] sm:$0xff]
          %v6453 = vld [vmem:[#allocation13 + $0xb38] sm:$0xff]
          %v6454 = vld [vmem:[#allocation13 + $0xb40] sm:$0xff]
          %v6455 = vld [vmem:[#allocation13 + $0xb48] sm:$0xff]
          %v6456 = vld [vmem:[#allocation13 + $0xb50] sm:$0xff]
          %v6457 = vld [vmem:[#allocation13 + $0xb58] sm:$0xff]
          %v6458 = vld [vmem:[#allocation13 + $0xb60] sm:$0xff]
          %v6459 = vld [vmem:[#allocation13 + $0xb68] sm:$0xff]
          %v6460 = vld [vmem:[#allocation13 + $0xb70] sm:$0xff]
          %v6461 = vld [vmem:[#allocation13 + $0xb78] sm:$0xff]
          %v6462 = vld [vmem:[#allocation13 + $0xb80] sm:$0xff]
          %v6463 = vld [vmem:[#allocation13 + $0xb88] sm:$0xff]
          %v6464 = vld [vmem:[#allocation13 + $0xb90] sm:$0xff]
          %v6465 = vld [vmem:[#allocation13 + $0xb98] sm:$0xff]
          %v6466 = vld [vmem:[#allocation13 + $0xba0] sm:$0xff]
          %v6467 = vld [vmem:[#allocation13 + $0xba8] sm:$0xff]
          %v6468 = vld [vmem:[#allocation13 + $0xbb0] sm:$0xff]
          %v6469 = vld [vmem:[#allocation13 + $0xbb8] sm:$0xff]
          %v6470 = vld [vmem:[#allocation13 + $0xbc0] sm:$0xff]
          %v6471 = vld [vmem:[#allocation13 + $0xbc8] sm:$0xff]
          %v6472 = vld [vmem:[#allocation13 + $0xbd0] sm:$0xff]
          %v6473 = vld [vmem:[#allocation13 + $0xbd8] sm:$0xff]
          %v6474 = vld [vmem:[#allocation13 + $0xbe0] sm:$0xff]
          %v6475 = vld [vmem:[#allocation13 + $0xbe8] sm:$0xff]
          %v6476 = vld [vmem:[#allocation13 + $0xbf0] sm:$0xff]
          %v6477 = vld [vmem:[#allocation13 + $0xbf8] sm:$0xff]
          %v6478 = vld [vmem:[#allocation13 + $0xc00] sm:$0xff]
          %v6479 = vld [vmem:[#allocation13 + $0xc08] sm:$0xff]
          %v6480 = vld [vmem:[#allocation13 + $0xc10] sm:$0xff]
          %v6481 = vld [vmem:[#allocation13 + $0xc18] sm:$0xff]
          %v6482 = vld [vmem:[#allocation13 + $0xc20] sm:$0xff]
          %v6483 = vld [vmem:[#allocation13 + $0xc28] sm:$0xff]
          %v6484 = vld [vmem:[#allocation13 + $0xc30] sm:$0xff]
          %v6485 = vld [vmem:[#allocation13 + $0xc38] sm:$0xff]
          %v6486 = vld [vmem:[#allocation13 + $0xc40] sm:$0xff]
          %v6487 = vld [vmem:[#allocation13 + $0xc48] sm:$0xff]
          %v6488 = vld [vmem:[#allocation13 + $0xc50] sm:$0xff]
          %v6489 = vld [vmem:[#allocation13 + $0xc58] sm:$0xff]
          %v6490 = vld [vmem:[#allocation13 + $0xc60] sm:$0xff]
          %v6491 = vld [vmem:[#allocation13 + $0xc68] sm:$0xff]
          %v6492 = vld [vmem:[#allocation13 + $0xc70] sm:$0xff]
          %v6493 = vld [vmem:[#allocation13 + $0xc78] sm:$0xff]
          %v6494 = vld [vmem:[#allocation13 + $0xc80] sm:$0xff]
          %v6495 = vld [vmem:[#allocation13 + $0xc88] sm:$0xff]
          %v6496 = vld [vmem:[#allocation13 + $0xc90] sm:$0xff]
          %v6497 = vld [vmem:[#allocation13 + $0xc98] sm:$0xff]
          %v6498 = vld [vmem:[#allocation13 + $0xca0] sm:$0xff]
          %v6499 = vld [vmem:[#allocation13 + $0xca8] sm:$0xff]
          %v6500 = vld [vmem:[#allocation13 + $0xcb0] sm:$0xff]
          %v6501 = vld [vmem:[#allocation13 + $0xcb8] sm:$0xff]
          %v6502 = vld [vmem:[#allocation13 + $0xcc0] sm:$0xff]
          %v6503 = vld [vmem:[#allocation13 + $0xcc8] sm:$0xff]
          %v6504 = vld [vmem:[#allocation13 + $0xcd0] sm:$0xff]
          %v6505 = vld [vmem:[#allocation13 + $0xcd8] sm:$0xff]
          %v6506 = vld [vmem:[#allocation13 + $0xce0] sm:$0xff]
          %v6507 = vld [vmem:[#allocation13 + $0xce8] sm:$0xff]
          %v6508 = vld [vmem:[#allocation13 + $0xcf0] sm:$0xff]
          %v6509 = vld [vmem:[#allocation13 + $0xcf8] sm:$0xff]
          %v6510 = vld [vmem:[#allocation13 + $0xd00] sm:$0xff]
          %v6511 = vld [vmem:[#allocation13 + $0xd08] sm:$0xff]
          %v6512 = vld [vmem:[#allocation13 + $0xd10] sm:$0xff]
          %v6513 = vld [vmem:[#allocation13 + $0xd18] sm:$0xff]
          %v6514 = vld [vmem:[#allocation13 + $0xd20] sm:$0xff]
          %v6515 = vld [vmem:[#allocation13 + $0xd28] sm:$0xff]
          %v6516 = vld [vmem:[#allocation13 + $0xd30] sm:$0xff]
          %v6517 = vld [vmem:[#allocation13 + $0xd38] sm:$0xff]
          %v6518 = vld [vmem:[#allocation13 + $0xd40] sm:$0xff]
          %v6519 = vld [vmem:[#allocation13 + $0xd48] sm:$0xff]
          %v6520 = vld [vmem:[#allocation13 + $0xd50] sm:$0xff]
          %v6521 = vld [vmem:[#allocation13 + $0xd58] sm:$0xff]
          %v6522 = vld [vmem:[#allocation13 + $0xd60] sm:$0xff]
          %v6523 = vld [vmem:[#allocation13 + $0xd68] sm:$0xff]
          %v6524 = vld [vmem:[#allocation13 + $0xd70] sm:$0xff]
          %v6525 = vld [vmem:[#allocation13 + $0xd78] sm:$0xff]
          %v6526 = vld [vmem:[#allocation13 + $0xd80] sm:$0xff]
          %v6527 = vld [vmem:[#allocation13 + $0xd88] sm:$0xff]
          %v6528 = vld [vmem:[#allocation13 + $0xd90] sm:$0xff]
          %v6529 = vld [vmem:[#allocation13 + $0xd98] sm:$0xff]
          %v6530 = vld [vmem:[#allocation13 + $0xda0] sm:$0xff]
          %v6531 = vld [vmem:[#allocation13 + $0xda8] sm:$0xff]
          %v6532 = vld [vmem:[#allocation13 + $0xdb0] sm:$0xff]
          %v6533 = vld [vmem:[#allocation13 + $0xdb8] sm:$0xff]
          %v6534 = vld [vmem:[#allocation13 + $0xdc0] sm:$0xff]
          %v6535 = vld [vmem:[#allocation13 + $0xdc8] sm:$0xff]
          %v6536 = vld [vmem:[#allocation13 + $0xdd0] sm:$0xff]
          %v6537 = vld [vmem:[#allocation13 + $0xdd8] sm:$0xff]
          %v6538 = vld [vmem:[#allocation13 + $0xde0] sm:$0xff]
          %v6539 = vld [vmem:[#allocation13 + $0xde8] sm:$0xff]
          %v6540 = vld [vmem:[#allocation13 + $0xdf0] sm:$0xff]
          %v6541 = vld [vmem:[#allocation13 + $0xdf8] sm:$0xff]
          %v6542 = vld [vmem:[#allocation13 + $0xe00] sm:$0xff]
          %v6543 = vld [vmem:[#allocation13 + $0xe08] sm:$0xff]
          %v6544 = vld [vmem:[#allocation13 + $0xe10] sm:$0xff]
          %v6545 = vld [vmem:[#allocation13 + $0xe18] sm:$0xff]
          %v6546 = vld [vmem:[#allocation13 + $0xe20] sm:$0xff]
          %v6547 = vld [vmem:[#allocation13 + $0xe28] sm:$0xff]
          %v6548 = vld [vmem:[#allocation13 + $0xe30] sm:$0xff]
          %v6549 = vld [vmem:[#allocation13 + $0xe38] sm:$0xff]
          %v6550 = vld [vmem:[#allocation13 + $0xe40] sm:$0xff]
          %v6551 = vld [vmem:[#allocation13 + $0xe48] sm:$0xff]
          %v6552 = vld [vmem:[#allocation13 + $0xe50] sm:$0xff]
          %v6553 = vld [vmem:[#allocation13 + $0xe58] sm:$0xff]
          %v6554 = vld [vmem:[#allocation13 + $0xe60] sm:$0xff]
          %v6555 = vld [vmem:[#allocation13 + $0xe68] sm:$0xff]
          %v6556 = vld [vmem:[#allocation13 + $0xe70] sm:$0xff]
          %v6557 = vld [vmem:[#allocation13 + $0xe78] sm:$0xff]
          %v6558 = vld [vmem:[#allocation13 + $0xe80] sm:$0xff]
          %v6559 = vld [vmem:[#allocation13 + $0xe88] sm:$0xff]
          %v6560 = vld [vmem:[#allocation13 + $0xe90] sm:$0xff]
          %v6561 = vld [vmem:[#allocation13 + $0xe98] sm:$0xff]
          %v6562 = vld [vmem:[#allocation13 + $0xea0] sm:$0xff]
          %v6563 = vld [vmem:[#allocation13 + $0xea8] sm:$0xff]
          %v6564 = vld [vmem:[#allocation13 + $0xeb0] sm:$0xff]
          %v6565 = vld [vmem:[#allocation13 + $0xeb8] sm:$0xff]
          %v6566 = vld [vmem:[#allocation13 + $0xec0] sm:$0xff]
          %v6567 = vld [vmem:[#allocation13 + $0xec8] sm:$0xff]
          %v6568 = vld [vmem:[#allocation13 + $0xed0] sm:$0xff]
          %v6569 = vld [vmem:[#allocation13 + $0xed8] sm:$0xff]
          %v6570 = vld [vmem:[#allocation13 + $0xee0] sm:$0xff]
          %v6571 = vld [vmem:[#allocation13 + $0xee8] sm:$0xff]
          %v6572 = vld [vmem:[#allocation13 + $0xef0] sm:$0xff]
          %v6573 = vld [vmem:[#allocation13 + $0xef8] sm:$0xff]
          %v6574 = vld [vmem:[#allocation13 + $0xf00] sm:$0xff]
          %v6575 = vld [vmem:[#allocation13 + $0xf08] sm:$0xff]
          %v6576 = vld [vmem:[#allocation13 + $0xf10] sm:$0xff]
          %v6577 = vld [vmem:[#allocation13 + $0xf18] sm:$0xff]
          %v6578 = vld [vmem:[#allocation13 + $0xf20] sm:$0xff]
          %v6579 = vld [vmem:[#allocation13 + $0xf28] sm:$0xff]
          %v6580 = vld [vmem:[#allocation13 + $0xf30] sm:$0xff]
          %v6581 = vld [vmem:[#allocation13 + $0xf38] sm:$0xff]
          %v6582 = vld [vmem:[#allocation13 + $0xf40] sm:$0xff]
          %v6583 = vld [vmem:[#allocation13 + $0xf48] sm:$0xff]
          %v6584 = vld [vmem:[#allocation13 + $0xf50] sm:$0xff]
          %v6585 = vld [vmem:[#allocation13 + $0xf58] sm:$0xff]
          %v6586 = vld [vmem:[#allocation13 + $0xf60] sm:$0xff]
          %v6587 = vld [vmem:[#allocation13 + $0xf68] sm:$0xff]
          %v6588 = vld [vmem:[#allocation13 + $0xf70] sm:$0xff]
          %v6589 = vld [vmem:[#allocation13 + $0xf78] sm:$0xff]
          %v6590 = vld [vmem:[#allocation13 + $0xf80] sm:$0xff]
          %v6591 = vld [vmem:[#allocation13 + $0xf88] sm:$0xff]
          %v6592 = vld [vmem:[#allocation13 + $0xf90] sm:$0xff]
          %v6593 = vld [vmem:[#allocation13 + $0xf98] sm:$0xff]
          %v6594 = vld [vmem:[#allocation13 + $0xfa0] sm:$0xff]
          %v6595 = vld [vmem:[#allocation13 + $0xfa8] sm:$0xff]
          %v6596 = vld [vmem:[#allocation13 + $0xfb0] sm:$0xff]
          %v6597 = vld [vmem:[#allocation13 + $0xfb8] sm:$0xff]
          %v6598 = vld [vmem:[#allocation13 + $0xfc0] sm:$0xff]
          %v6599 = vld [vmem:[#allocation13 + $0xfc8] sm:$0xff]
          %v6600 = vld [vmem:[#allocation13 + $0xfd0] sm:$0xff]
          %v6601 = vld [vmem:[#allocation13 + $0xfd8] sm:$0xff]
          %v6602 = vld [vmem:[#allocation13 + $0xfe0] sm:$0xff]
          %v6603 = vld [vmem:[#allocation13 + $0xfe8] sm:$0xff]
          %v6604 = vld [vmem:[#allocation13 + $0xff0] sm:$0xff]
          %v6605 = vld [vmem:[#allocation13 + $0xff8] sm:$0xff]
          %v6606 = vld [vmem:[#allocation14] sm:$0xff]
          %v6608 = vlaneseq
          %v6609 = vshrl.u32 %v6608, 7
          %v6610 = vsub.s32 0, %v6609
          %v6611 = vrot.slane %v6606, %v6610
          %v6612 = vlaneseq
          %v6613 = vshrl.u32 %v6612, 7
          %v6614 = vsub.s32 1, %v6613
          %v6615 = vrot.slane %v6606, %v6614
          %v6616 = vlaneseq
          %v6617 = vshrl.u32 %v6616, 7
          %v6618 = vsub.s32 2, %v6617
          %v6619 = vrot.slane %v6606, %v6618
          %v6620 = vlaneseq
          %v6621 = vshrl.u32 %v6620, 7
          %v6622 = vsub.s32 3, %v6621
          %v6623 = vrot.slane %v6606, %v6622
          %v6624 = vlaneseq
          %v6625 = vshrl.u32 %v6624, 7
          %v6626 = vsub.s32 4, %v6625
          %v6627 = vrot.slane %v6606, %v6626
          %v6628 = vlaneseq
          %v6629 = vshrl.u32 %v6628, 7
          %v6630 = vsub.s32 5, %v6629
          %v6631 = vrot.slane %v6606, %v6630
          %v6632 = vlaneseq
          %v6633 = vshrl.u32 %v6632, 7
          %v6634 = vsub.s32 6, %v6633
          %v6635 = vrot.slane %v6606, %v6634
          %v6636 = vlaneseq
          %v6637 = vshrl.u32 %v6636, 7
          %v6638 = vsub.s32 7, %v6637
          %v6639 = vrot.slane %v6606, %v6638
          %v7160 = vunpack.c.l.b16 %v6094
          %v7161 = vunpack.c.h.b16 %v6094
          %v7162 = vunpack.c.l.b16 %v6095
          %v7163 = vunpack.c.h.b16 %v6095
          %v7164 = vunpack.c.l.b16 %v6096
          %v7165 = vunpack.c.h.b16 %v6096
          %v7166 = vunpack.c.l.b16 %v6097
          %v7167 = vunpack.c.h.b16 %v6097
          %v7168 = vunpack.c.l.b16 %v6098
          %v7169 = vunpack.c.h.b16 %v6098
          %v7170 = vunpack.c.l.b16 %v6099
          %v7171 = vunpack.c.h.b16 %v6099
          %v7172 = vunpack.c.l.b16 %v6100
          %v7173 = vunpack.c.h.b16 %v6100
          %v7174 = vunpack.c.l.b16 %v6101
          %v7175 = vunpack.c.h.b16 %v6101
          %v7176 = vunpack.c.l.b16 %v6102
          %v7177 = vunpack.c.h.b16 %v6102
          %v7178 = vunpack.c.l.b16 %v6103
          %v7179 = vunpack.c.h.b16 %v6103
          %v7180 = vunpack.c.l.b16 %v6104
          %v7181 = vunpack.c.h.b16 %v6104
          %v7182 = vunpack.c.l.b16 %v6105
          %v7183 = vunpack.c.h.b16 %v6105
          %v7184 = vunpack.c.l.b16 %v6106
          %v7185 = vunpack.c.h.b16 %v6106
          %v7186 = vunpack.c.l.b16 %v6107
          %v7187 = vunpack.c.h.b16 %v6107
          %v7188 = vunpack.c.l.b16 %v6108
          %v7189 = vunpack.c.h.b16 %v6108
          %v7190 = vunpack.c.l.b16 %v6109
          %v7191 = vunpack.c.h.b16 %v6109
          %v7192 = vunpack.c.l.b16 %v6110
          %v7193 = vunpack.c.h.b16 %v6110
          %v7194 = vunpack.c.l.b16 %v6111
          %v7195 = vunpack.c.h.b16 %v6111
          %v7196 = vunpack.c.l.b16 %v6112
          %v7197 = vunpack.c.h.b16 %v6112
          %v7198 = vunpack.c.l.b16 %v6113
          %v7199 = vunpack.c.h.b16 %v6113
          %v7200 = vunpack.c.l.b16 %v6114
          %v7201 = vunpack.c.h.b16 %v6114
          %v7202 = vunpack.c.l.b16 %v6115
          %v7203 = vunpack.c.h.b16 %v6115
          %v7204 = vunpack.c.l.b16 %v6116
          %v7205 = vunpack.c.h.b16 %v6116
          %v7206 = vunpack.c.l.b16 %v6117
          %v7207 = vunpack.c.h.b16 %v6117
          %v7208 = vunpack.c.l.b16 %v6118
          %v7209 = vunpack.c.h.b16 %v6118
          %v7210 = vunpack.c.l.b16 %v6119
          %v7211 = vunpack.c.h.b16 %v6119
          %v7212 = vunpack.c.l.b16 %v6120
          %v7213 = vunpack.c.h.b16 %v6120
          %v7214 = vunpack.c.l.b16 %v6121
          %v7215 = vunpack.c.h.b16 %v6121
          %v7216 = vunpack.c.l.b16 %v6122
          %v7217 = vunpack.c.h.b16 %v6122
          %v7218 = vunpack.c.l.b16 %v6123
          %v7219 = vunpack.c.h.b16 %v6123
          %v7220 = vunpack.c.l.b16 %v6124
          %v7221 = vunpack.c.h.b16 %v6124
          %v7222 = vunpack.c.l.b16 %v6125
          %v7223 = vunpack.c.h.b16 %v6125
          %v7224 = vunpack.c.l.b16 %v6126
          %v7225 = vunpack.c.h.b16 %v6126
          %v7226 = vunpack.c.l.b16 %v6127
          %v7227 = vunpack.c.h.b16 %v6127
          %v7228 = vunpack.c.l.b16 %v6128
          %v7229 = vunpack.c.h.b16 %v6128
          %v7230 = vunpack.c.l.b16 %v6129
          %v7231 = vunpack.c.h.b16 %v6129
          %v7232 = vunpack.c.l.b16 %v6130
          %v7233 = vunpack.c.h.b16 %v6130
          %v7234 = vunpack.c.l.b16 %v6131
          %v7235 = vunpack.c.h.b16 %v6131
          %v7236 = vunpack.c.l.b16 %v6132
          %v7237 = vunpack.c.h.b16 %v6132
          %v7238 = vunpack.c.l.b16 %v6133
          %v7239 = vunpack.c.h.b16 %v6133
          %v7240 = vunpack.c.l.b16 %v6134
          %v7241 = vunpack.c.h.b16 %v6134
          %v7242 = vunpack.c.l.b16 %v6135
          %v7243 = vunpack.c.h.b16 %v6135
          %v7244 = vunpack.c.l.b16 %v6136
          %v7245 = vunpack.c.h.b16 %v6136
          %v7246 = vunpack.c.l.b16 %v6137
          %v7247 = vunpack.c.h.b16 %v6137
          %v7248 = vunpack.c.l.b16 %v6138
          %v7249 = vunpack.c.h.b16 %v6138
          %v7250 = vunpack.c.l.b16 %v6139
          %v7251 = vunpack.c.h.b16 %v6139
          %v7252 = vunpack.c.l.b16 %v6140
          %v7253 = vunpack.c.h.b16 %v6140
          %v7254 = vunpack.c.l.b16 %v6141
          %v7255 = vunpack.c.h.b16 %v6141
          %v7256 = vunpack.c.l.b16 %v6142
          %v7257 = vunpack.c.h.b16 %v6142
          %v7258 = vunpack.c.l.b16 %v6143
          %v7259 = vunpack.c.h.b16 %v6143
          %v7260 = vunpack.c.l.b16 %v6144
          %v7261 = vunpack.c.h.b16 %v6144
          %v7262 = vunpack.c.l.b16 %v6145
          %v7263 = vunpack.c.h.b16 %v6145
          %v7264 = vunpack.c.l.b16 %v6146
          %v7265 = vunpack.c.h.b16 %v6146
          %v7266 = vunpack.c.l.b16 %v6147
          %v7267 = vunpack.c.h.b16 %v6147
          %v7268 = vunpack.c.l.b16 %v6148
          %v7269 = vunpack.c.h.b16 %v6148
          %v7270 = vunpack.c.l.b16 %v6149
          %v7271 = vunpack.c.h.b16 %v6149
          %v7272 = vunpack.c.l.b16 %v6150
          %v7273 = vunpack.c.h.b16 %v6150
          %v7274 = vunpack.c.l.b16 %v6151
          %v7275 = vunpack.c.h.b16 %v6151
          %v7276 = vunpack.c.l.b16 %v6152
          %v7277 = vunpack.c.h.b16 %v6152
          %v7278 = vunpack.c.l.b16 %v6153
          %v7279 = vunpack.c.h.b16 %v6153
          %v7280 = vunpack.c.l.b16 %v6154
          %v7281 = vunpack.c.h.b16 %v6154
          %v7282 = vunpack.c.l.b16 %v6155
          %v7283 = vunpack.c.h.b16 %v6155
          %v7284 = vunpack.c.l.b16 %v6156
          %v7285 = vunpack.c.h.b16 %v6156
          %v7286 = vunpack.c.l.b16 %v6157
          %v7287 = vunpack.c.h.b16 %v6157
          %v7288 = vunpack.c.l.b16 %v6158
          %v7289 = vunpack.c.h.b16 %v6158
          %v7290 = vunpack.c.l.b16 %v6159
          %v7291 = vunpack.c.h.b16 %v6159
          %v7292 = vunpack.c.l.b16 %v6160
          %v7293 = vunpack.c.h.b16 %v6160
          %v7294 = vunpack.c.l.b16 %v6161
          %v7295 = vunpack.c.h.b16 %v6161
          %v7296 = vunpack.c.l.b16 %v6162
          %v7297 = vunpack.c.h.b16 %v6162
          %v7298 = vunpack.c.l.b16 %v6163
          %v7299 = vunpack.c.h.b16 %v6163
          %v7300 = vunpack.c.l.b16 %v6164
          %v7301 = vunpack.c.h.b16 %v6164
          %v7302 = vunpack.c.l.b16 %v6165
          %v7303 = vunpack.c.h.b16 %v6165
          %v7304 = vunpack.c.l.b16 %v6166
          %v7305 = vunpack.c.h.b16 %v6166
          %v7306 = vunpack.c.l.b16 %v6167
          %v7307 = vunpack.c.h.b16 %v6167
          %v7308 = vunpack.c.l.b16 %v6168
          %v7309 = vunpack.c.h.b16 %v6168
          %v7310 = vunpack.c.l.b16 %v6169
          %v7311 = vunpack.c.h.b16 %v6169
          %v7312 = vunpack.c.l.b16 %v6170
          %v7313 = vunpack.c.h.b16 %v6170
          %v7314 = vunpack.c.l.b16 %v6171
          %v7315 = vunpack.c.h.b16 %v6171
          %v7316 = vunpack.c.l.b16 %v6172
          %v7317 = vunpack.c.h.b16 %v6172
          %v7318 = vunpack.c.l.b16 %v6173
          %v7319 = vunpack.c.h.b16 %v6173
          %v7320 = vunpack.c.l.b16 %v6174
          %v7321 = vunpack.c.h.b16 %v6174
          %v7322 = vunpack.c.l.b16 %v6175
          %v7323 = vunpack.c.h.b16 %v6175
          %v7324 = vunpack.c.l.b16 %v6176
          %v7325 = vunpack.c.h.b16 %v6176
          %v7326 = vunpack.c.l.b16 %v6177
          %v7327 = vunpack.c.h.b16 %v6177
          %v7328 = vunpack.c.l.b16 %v6178
          %v7329 = vunpack.c.h.b16 %v6178
          %v7330 = vunpack.c.l.b16 %v6179
          %v7331 = vunpack.c.h.b16 %v6179
          %v7332 = vunpack.c.l.b16 %v6180
          %v7333 = vunpack.c.h.b16 %v6180
          %v7334 = vunpack.c.l.b16 %v6181
          %v7335 = vunpack.c.h.b16 %v6181
          %v7336 = vunpack.c.l.b16 %v6182
          %v7337 = vunpack.c.h.b16 %v6182
          %v7338 = vunpack.c.l.b16 %v6183
          %v7339 = vunpack.c.h.b16 %v6183
          %v7340 = vunpack.c.l.b16 %v6184
          %v7341 = vunpack.c.h.b16 %v6184
          %v7342 = vunpack.c.l.b16 %v6185
          %v7343 = vunpack.c.h.b16 %v6185
          %v7344 = vunpack.c.l.b16 %v6186
          %v7345 = vunpack.c.h.b16 %v6186
          %v7346 = vunpack.c.l.b16 %v6187
          %v7347 = vunpack.c.h.b16 %v6187
          %v7348 = vunpack.c.l.b16 %v6188
          %v7349 = vunpack.c.h.b16 %v6188
          %v7350 = vunpack.c.l.b16 %v6189
          %v7351 = vunpack.c.h.b16 %v6189
          %v7352 = vunpack.c.l.b16 %v6190
          %v7353 = vunpack.c.h.b16 %v6190
          %v7354 = vunpack.c.l.b16 %v6191
          %v7355 = vunpack.c.h.b16 %v6191
          %v7356 = vunpack.c.l.b16 %v6192
          %v7357 = vunpack.c.h.b16 %v6192
          %v7358 = vunpack.c.l.b16 %v6193
          %v7359 = vunpack.c.h.b16 %v6193
          %v7360 = vunpack.c.l.b16 %v6194
          %v7361 = vunpack.c.h.b16 %v6194
          %v7362 = vunpack.c.l.b16 %v6195
          %v7363 = vunpack.c.h.b16 %v6195
          %v7364 = vunpack.c.l.b16 %v6196
          %v7365 = vunpack.c.h.b16 %v6196
          %v7366 = vunpack.c.l.b16 %v6197
          %v7367 = vunpack.c.h.b16 %v6197
          %v7368 = vunpack.c.l.b16 %v6198
          %v7369 = vunpack.c.h.b16 %v6198
          %v7370 = vunpack.c.l.b16 %v6199
          %v7371 = vunpack.c.h.b16 %v6199
          %v7372 = vunpack.c.l.b16 %v6200
          %v7373 = vunpack.c.h.b16 %v6200
          %v7374 = vunpack.c.l.b16 %v6201
          %v7375 = vunpack.c.h.b16 %v6201
          %v7376 = vunpack.c.l.b16 %v6202
          %v7377 = vunpack.c.h.b16 %v6202
          %v7378 = vunpack.c.l.b16 %v6203
          %v7379 = vunpack.c.h.b16 %v6203
          %v7380 = vunpack.c.l.b16 %v6204
          %v7381 = vunpack.c.h.b16 %v6204
          %v7382 = vunpack.c.l.b16 %v6205
          %v7383 = vunpack.c.h.b16 %v6205
          %v7384 = vunpack.c.l.b16 %v6206
          %v7385 = vunpack.c.h.b16 %v6206
          %v7386 = vunpack.c.l.b16 %v6207
          %v7387 = vunpack.c.h.b16 %v6207
          %v7388 = vunpack.c.l.b16 %v6208
          %v7389 = vunpack.c.h.b16 %v6208
          %v7390 = vunpack.c.l.b16 %v6209
          %v7391 = vunpack.c.h.b16 %v6209
          %v7392 = vunpack.c.l.b16 %v6210
          %v7393 = vunpack.c.h.b16 %v6210
          %v7394 = vunpack.c.l.b16 %v6211
          %v7395 = vunpack.c.h.b16 %v6211
          %v7396 = vunpack.c.l.b16 %v6212
          %v7397 = vunpack.c.h.b16 %v6212
          %v7398 = vunpack.c.l.b16 %v6213
          %v7399 = vunpack.c.h.b16 %v6213
          %v7400 = vunpack.c.l.b16 %v6214
          %v7401 = vunpack.c.h.b16 %v6214
          %v7402 = vunpack.c.l.b16 %v6215
          %v7403 = vunpack.c.h.b16 %v6215
          %v7404 = vunpack.c.l.b16 %v6216
          %v7405 = vunpack.c.h.b16 %v6216
          %v7406 = vunpack.c.l.b16 %v6217
          %v7407 = vunpack.c.h.b16 %v6217
          %v7408 = vunpack.c.l.b16 %v6218
          %v7409 = vunpack.c.h.b16 %v6218
          %v7410 = vunpack.c.l.b16 %v6219
          %v7411 = vunpack.c.h.b16 %v6219
          %v7412 = vunpack.c.l.b16 %v6220
          %v7413 = vunpack.c.h.b16 %v6220
          %v7414 = vunpack.c.l.b16 %v6221
          %v7415 = vunpack.c.h.b16 %v6221
          %v7416 = vunpack.c.l.b16 %v6222
          %v7417 = vunpack.c.h.b16 %v6222
          %v7418 = vunpack.c.l.b16 %v6223
          %v7419 = vunpack.c.h.b16 %v6223
          %v7420 = vunpack.c.l.b16 %v6224
          %v7421 = vunpack.c.h.b16 %v6224
          %v7422 = vunpack.c.l.b16 %v6225
          %v7423 = vunpack.c.h.b16 %v6225
          %v7424 = vunpack.c.l.b16 %v6226
          %v7425 = vunpack.c.h.b16 %v6226
          %v7426 = vunpack.c.l.b16 %v6227
          %v7427 = vunpack.c.h.b16 %v6227
          %v7428 = vunpack.c.l.b16 %v6228
          %v7429 = vunpack.c.h.b16 %v6228
          %v7430 = vunpack.c.l.b16 %v6229
          %v7431 = vunpack.c.h.b16 %v6229
          %v7432 = vunpack.c.l.b16 %v6230
          %v7433 = vunpack.c.h.b16 %v6230
          %v7434 = vunpack.c.l.b16 %v6231
          %v7435 = vunpack.c.h.b16 %v6231
          %v7436 = vunpack.c.l.b16 %v6232
          %v7437 = vunpack.c.h.b16 %v6232
          %v7438 = vunpack.c.l.b16 %v6233
          %v7439 = vunpack.c.h.b16 %v6233
          %v7440 = vunpack.c.l.b16 %v6234
          %v7441 = vunpack.c.h.b16 %v6234
          %v7442 = vunpack.c.l.b16 %v6235
          %v7443 = vunpack.c.h.b16 %v6235
          %v7444 = vunpack.c.l.b16 %v6236
          %v7445 = vunpack.c.h.b16 %v6236
          %v7446 = vunpack.c.l.b16 %v6237
          %v7447 = vunpack.c.h.b16 %v6237
          %v7448 = vunpack.c.l.b16 %v6238
          %v7449 = vunpack.c.h.b16 %v6238
          %v7450 = vunpack.c.l.b16 %v6239
          %v7451 = vunpack.c.h.b16 %v6239
          %v7452 = vunpack.c.l.b16 %v6240
          %v7453 = vunpack.c.h.b16 %v6240
          %v7454 = vunpack.c.l.b16 %v6241
          %v7455 = vunpack.c.h.b16 %v6241
          %v7456 = vunpack.c.l.b16 %v6242
          %v7457 = vunpack.c.h.b16 %v6242
          %v7458 = vunpack.c.l.b16 %v6243
          %v7459 = vunpack.c.h.b16 %v6243
          %v7460 = vunpack.c.l.b16 %v6244
          %v7461 = vunpack.c.h.b16 %v6244
          %v7462 = vunpack.c.l.b16 %v6245
          %v7463 = vunpack.c.h.b16 %v6245
          %v7464 = vunpack.c.l.b16 %v6246
          %v7465 = vunpack.c.h.b16 %v6246
          %v7466 = vunpack.c.l.b16 %v6247
          %v7467 = vunpack.c.h.b16 %v6247
          %v7468 = vunpack.c.l.b16 %v6248
          %v7469 = vunpack.c.h.b16 %v6248
          %v7470 = vunpack.c.l.b16 %v6249
          %v7471 = vunpack.c.h.b16 %v6249
          %v7472 = vunpack.c.l.b16 %v6250
          %v7473 = vunpack.c.h.b16 %v6250
          %v7474 = vunpack.c.l.b16 %v6251
          %v7475 = vunpack.c.h.b16 %v6251
          %v7476 = vunpack.c.l.b16 %v6252
          %v7477 = vunpack.c.h.b16 %v6252
          %v7478 = vunpack.c.l.b16 %v6253
          %v7479 = vunpack.c.h.b16 %v6253
          %v7480 = vunpack.c.l.b16 %v6254
          %v7481 = vunpack.c.h.b16 %v6254
          %v7482 = vunpack.c.l.b16 %v6255
          %v7483 = vunpack.c.h.b16 %v6255
          %v7484 = vunpack.c.l.b16 %v6256
          %v7485 = vunpack.c.h.b16 %v6256
          %v7486 = vunpack.c.l.b16 %v6257
          %v7487 = vunpack.c.h.b16 %v6257
          %v7488 = vunpack.c.l.b16 %v6258
          %v7489 = vunpack.c.h.b16 %v6258
          %v7490 = vunpack.c.l.b16 %v6259
          %v7491 = vunpack.c.h.b16 %v6259
          %v7492 = vunpack.c.l.b16 %v6260
          %v7493 = vunpack.c.h.b16 %v6260
          %v7494 = vunpack.c.l.b16 %v6261
          %v7495 = vunpack.c.h.b16 %v6261
          %v7496 = vunpack.c.l.b16 %v6262
          %v7497 = vunpack.c.h.b16 %v6262
          %v7498 = vunpack.c.l.b16 %v6263
          %v7499 = vunpack.c.h.b16 %v6263
          %v7500 = vunpack.c.l.b16 %v6264
          %v7501 = vunpack.c.h.b16 %v6264
          %v7502 = vunpack.c.l.b16 %v6265
          %v7503 = vunpack.c.h.b16 %v6265
          %v7504 = vunpack.c.l.b16 %v6266
          %v7505 = vunpack.c.h.b16 %v6266
          %v7506 = vunpack.c.l.b16 %v6267
          %v7507 = vunpack.c.h.b16 %v6267
          %v7508 = vunpack.c.l.b16 %v6268
          %v7509 = vunpack.c.h.b16 %v6268
          %v7510 = vunpack.c.l.b16 %v6269
          %v7511 = vunpack.c.h.b16 %v6269
          %v7512 = vunpack.c.l.b16 %v6270
          %v7513 = vunpack.c.h.b16 %v6270
          %v7514 = vunpack.c.l.b16 %v6271
          %v7515 = vunpack.c.h.b16 %v6271
          %v7516 = vunpack.c.l.b16 %v6272
          %v7517 = vunpack.c.h.b16 %v6272
          %v7518 = vunpack.c.l.b16 %v6273
          %v7519 = vunpack.c.h.b16 %v6273
          %v7520 = vunpack.c.l.b16 %v6274
          %v7521 = vunpack.c.h.b16 %v6274
          %v7522 = vunpack.c.l.b16 %v6275
          %v7523 = vunpack.c.h.b16 %v6275
          %v7524 = vunpack.c.l.b16 %v6276
          %v7525 = vunpack.c.h.b16 %v6276
          %v7526 = vunpack.c.l.b16 %v6277
          %v7527 = vunpack.c.h.b16 %v6277
          %v7528 = vunpack.c.l.b16 %v6278
          %v7529 = vunpack.c.h.b16 %v6278
          %v7530 = vunpack.c.l.b16 %v6279
          %v7531 = vunpack.c.h.b16 %v6279
          %v7532 = vunpack.c.l.b16 %v6280
          %v7533 = vunpack.c.h.b16 %v6280
          %v7534 = vunpack.c.l.b16 %v6281
          %v7535 = vunpack.c.h.b16 %v6281
          %v7536 = vunpack.c.l.b16 %v6282
          %v7537 = vunpack.c.h.b16 %v6282
          %v7538 = vunpack.c.l.b16 %v6283
          %v7539 = vunpack.c.h.b16 %v6283
          %v7540 = vunpack.c.l.b16 %v6284
          %v7541 = vunpack.c.h.b16 %v6284
          %v7542 = vunpack.c.l.b16 %v6285
          %v7543 = vunpack.c.h.b16 %v6285
          %v7544 = vunpack.c.l.b16 %v6286
          %v7545 = vunpack.c.h.b16 %v6286
          %v7546 = vunpack.c.l.b16 %v6287
          %v7547 = vunpack.c.h.b16 %v6287
          %v7548 = vunpack.c.l.b16 %v6288
          %v7549 = vunpack.c.h.b16 %v6288
          %v7550 = vunpack.c.l.b16 %v6289
          %v7551 = vunpack.c.h.b16 %v6289
          %v7552 = vunpack.c.l.b16 %v6290
          %v7553 = vunpack.c.h.b16 %v6290
          %v7554 = vunpack.c.l.b16 %v6291
          %v7555 = vunpack.c.h.b16 %v6291
          %v7556 = vunpack.c.l.b16 %v6292
          %v7557 = vunpack.c.h.b16 %v6292
          %v7558 = vunpack.c.l.b16 %v6293
          %v7559 = vunpack.c.h.b16 %v6293
          %v7560 = vunpack.c.l.b16 %v6294
          %v7561 = vunpack.c.h.b16 %v6294
          %v7562 = vunpack.c.l.b16 %v6295
          %v7563 = vunpack.c.h.b16 %v6295
          %v7564 = vunpack.c.l.b16 %v6296
          %v7565 = vunpack.c.h.b16 %v6296
          %v7566 = vunpack.c.l.b16 %v6297
          %v7567 = vunpack.c.h.b16 %v6297
          %v7568 = vunpack.c.l.b16 %v6298
          %v7569 = vunpack.c.h.b16 %v6298
          %v7570 = vunpack.c.l.b16 %v6299
          %v7571 = vunpack.c.h.b16 %v6299
          %v7572 = vunpack.c.l.b16 %v6300
          %v7573 = vunpack.c.h.b16 %v6300
          %v7574 = vunpack.c.l.b16 %v6301
          %v7575 = vunpack.c.h.b16 %v6301
          %v7576 = vunpack.c.l.b16 %v6302
          %v7577 = vunpack.c.h.b16 %v6302
          %v7578 = vunpack.c.l.b16 %v6303
          %v7579 = vunpack.c.h.b16 %v6303
          %v7580 = vunpack.c.l.b16 %v6304
          %v7581 = vunpack.c.h.b16 %v6304
          %v7582 = vunpack.c.l.b16 %v6305
          %v7583 = vunpack.c.h.b16 %v6305
          %v7584 = vunpack.c.l.b16 %v6306
          %v7585 = vunpack.c.h.b16 %v6306
          %v7586 = vunpack.c.l.b16 %v6307
          %v7587 = vunpack.c.h.b16 %v6307
          %v7588 = vunpack.c.l.b16 %v6308
          %v7589 = vunpack.c.h.b16 %v6308
          %v7590 = vunpack.c.l.b16 %v6309
          %v7591 = vunpack.c.h.b16 %v6309
          %v7592 = vunpack.c.l.b16 %v6310
          %v7593 = vunpack.c.h.b16 %v6310
          %v7594 = vunpack.c.l.b16 %v6311
          %v7595 = vunpack.c.h.b16 %v6311
          %v7596 = vunpack.c.l.b16 %v6312
          %v7597 = vunpack.c.h.b16 %v6312
          %v7598 = vunpack.c.l.b16 %v6313
          %v7599 = vunpack.c.h.b16 %v6313
          %v7600 = vunpack.c.l.b16 %v6314
          %v7601 = vunpack.c.h.b16 %v6314
          %v7602 = vunpack.c.l.b16 %v6315
          %v7603 = vunpack.c.h.b16 %v6315
          %v7604 = vunpack.c.l.b16 %v6316
          %v7605 = vunpack.c.h.b16 %v6316
          %v7606 = vunpack.c.l.b16 %v6317
          %v7607 = vunpack.c.h.b16 %v6317
          %v7608 = vunpack.c.l.b16 %v6318
          %v7609 = vunpack.c.h.b16 %v6318
          %v7610 = vunpack.c.l.b16 %v6319
          %v7611 = vunpack.c.h.b16 %v6319
          %v7612 = vunpack.c.l.b16 %v6320
          %v7613 = vunpack.c.h.b16 %v6320
          %v7614 = vunpack.c.l.b16 %v6321
          %v7615 = vunpack.c.h.b16 %v6321
          %v7616 = vunpack.c.l.b16 %v6322
          %v7617 = vunpack.c.h.b16 %v6322
          %v7618 = vunpack.c.l.b16 %v6323
          %v7619 = vunpack.c.h.b16 %v6323
          %v7620 = vunpack.c.l.b16 %v6324
          %v7621 = vunpack.c.h.b16 %v6324
          %v7622 = vunpack.c.l.b16 %v6325
          %v7623 = vunpack.c.h.b16 %v6325
          %v7624 = vunpack.c.l.b16 %v6326
          %v7625 = vunpack.c.h.b16 %v6326
          %v7626 = vunpack.c.l.b16 %v6327
          %v7627 = vunpack.c.h.b16 %v6327
          %v7628 = vunpack.c.l.b16 %v6328
          %v7629 = vunpack.c.h.b16 %v6328
          %v7630 = vunpack.c.l.b16 %v6329
          %v7631 = vunpack.c.h.b16 %v6329
          %v7632 = vunpack.c.l.b16 %v6330
          %v7633 = vunpack.c.h.b16 %v6330
          %v7634 = vunpack.c.l.b16 %v6331
          %v7635 = vunpack.c.h.b16 %v6331
          %v7636 = vunpack.c.l.b16 %v6332
          %v7637 = vunpack.c.h.b16 %v6332
          %v7638 = vunpack.c.l.b16 %v6333
          %v7639 = vunpack.c.h.b16 %v6333
          %v7640 = vunpack.c.l.b16 %v6334
          %v7641 = vunpack.c.h.b16 %v6334
          %v7642 = vunpack.c.l.b16 %v6335
          %v7643 = vunpack.c.h.b16 %v6335
          %v7644 = vunpack.c.l.b16 %v6336
          %v7645 = vunpack.c.h.b16 %v6336
          %v7646 = vunpack.c.l.b16 %v6337
          %v7647 = vunpack.c.h.b16 %v6337
          %v7648 = vunpack.c.l.b16 %v6338
          %v7649 = vunpack.c.h.b16 %v6338
          %v7650 = vunpack.c.l.b16 %v6339
          %v7651 = vunpack.c.h.b16 %v6339
          %v7652 = vunpack.c.l.b16 %v6340
          %v7653 = vunpack.c.h.b16 %v6340
          %v7654 = vunpack.c.l.b16 %v6341
          %v7655 = vunpack.c.h.b16 %v6341
          %v7656 = vunpack.c.l.b16 %v6342
          %v7657 = vunpack.c.h.b16 %v6342
          %v7658 = vunpack.c.l.b16 %v6343
          %v7659 = vunpack.c.h.b16 %v6343
          %v7660 = vunpack.c.l.b16 %v6344
          %v7661 = vunpack.c.h.b16 %v6344
          %v7662 = vunpack.c.l.b16 %v6345
          %v7663 = vunpack.c.h.b16 %v6345
          %v7664 = vunpack.c.l.b16 %v6346
          %v7665 = vunpack.c.h.b16 %v6346
          %v7666 = vunpack.c.l.b16 %v6347
          %v7667 = vunpack.c.h.b16 %v6347
          %v7668 = vunpack.c.l.b16 %v6348
          %v7669 = vunpack.c.h.b16 %v6348
          %v7670 = vunpack.c.l.b16 %v6349
          %v7671 = vunpack.c.h.b16 %v6349
          %v7672 = vunpack.c.l.b16 %v6350
          %v7673 = vunpack.c.h.b16 %v6350
          %v7674 = vunpack.c.l.b16 %v6351
          %v7675 = vunpack.c.h.b16 %v6351
          %v7676 = vunpack.c.l.b16 %v6352
          %v7677 = vunpack.c.h.b16 %v6352
          %v7678 = vunpack.c.l.b16 %v6353
          %v7679 = vunpack.c.h.b16 %v6353
          %v7680 = vunpack.c.l.b16 %v6354
          %v7681 = vunpack.c.h.b16 %v6354
          %v7682 = vunpack.c.l.b16 %v6355
          %v7683 = vunpack.c.h.b16 %v6355
          %v7684 = vunpack.c.l.b16 %v6356
          %v7685 = vunpack.c.h.b16 %v6356
          %v7686 = vunpack.c.l.b16 %v6357
          %v7687 = vunpack.c.h.b16 %v6357
          %v7688 = vunpack.c.l.b16 %v6358
          %v7689 = vunpack.c.h.b16 %v6358
          %v7690 = vunpack.c.l.b16 %v6359
          %v7691 = vunpack.c.h.b16 %v6359
          %v7692 = vunpack.c.l.b16 %v6360
          %v7693 = vunpack.c.h.b16 %v6360
          %v7694 = vunpack.c.l.b16 %v6361
          %v7695 = vunpack.c.h.b16 %v6361
          %v7696 = vunpack.c.l.b16 %v6362
          %v7697 = vunpack.c.h.b16 %v6362
          %v7698 = vunpack.c.l.b16 %v6363
          %v7699 = vunpack.c.h.b16 %v6363
          %v7700 = vunpack.c.l.b16 %v6364
          %v7701 = vunpack.c.h.b16 %v6364
          %v7702 = vunpack.c.l.b16 %v6365
          %v7703 = vunpack.c.h.b16 %v6365
          %v7704 = vunpack.c.l.b16 %v6366
          %v7705 = vunpack.c.h.b16 %v6366
          %v7706 = vunpack.c.l.b16 %v6367
          %v7707 = vunpack.c.h.b16 %v6367
          %v7708 = vunpack.c.l.b16 %v6368
          %v7709 = vunpack.c.h.b16 %v6368
          %v7710 = vunpack.c.l.b16 %v6369
          %v7711 = vunpack.c.h.b16 %v6369
          %v7712 = vunpack.c.l.b16 %v6370
          %v7713 = vunpack.c.h.b16 %v6370
          %v7714 = vunpack.c.l.b16 %v6371
          %v7715 = vunpack.c.h.b16 %v6371
          %v7716 = vunpack.c.l.b16 %v6372
          %v7717 = vunpack.c.h.b16 %v6372
          %v7718 = vunpack.c.l.b16 %v6373
          %v7719 = vunpack.c.h.b16 %v6373
          %v7720 = vunpack.c.l.b16 %v6374
          %v7721 = vunpack.c.h.b16 %v6374
          %v7722 = vunpack.c.l.b16 %v6375
          %v7723 = vunpack.c.h.b16 %v6375
          %v7724 = vunpack.c.l.b16 %v6376
          %v7725 = vunpack.c.h.b16 %v6376
          %v7726 = vunpack.c.l.b16 %v6377
          %v7727 = vunpack.c.h.b16 %v6377
          %v7728 = vunpack.c.l.b16 %v6378
          %v7729 = vunpack.c.h.b16 %v6378
          %v7730 = vunpack.c.l.b16 %v6379
          %v7731 = vunpack.c.h.b16 %v6379
          %v7732 = vunpack.c.l.b16 %v6380
          %v7733 = vunpack.c.h.b16 %v6380
          %v7734 = vunpack.c.l.b16 %v6381
          %v7735 = vunpack.c.h.b16 %v6381
          %v7736 = vunpack.c.l.b16 %v6382
          %v7737 = vunpack.c.h.b16 %v6382
          %v7738 = vunpack.c.l.b16 %v6383
          %v7739 = vunpack.c.h.b16 %v6383
          %v7740 = vunpack.c.l.b16 %v6384
          %v7741 = vunpack.c.h.b16 %v6384
          %v7742 = vunpack.c.l.b16 %v6385
          %v7743 = vunpack.c.h.b16 %v6385
          %v7744 = vunpack.c.l.b16 %v6386
          %v7745 = vunpack.c.h.b16 %v6386
          %v7746 = vunpack.c.l.b16 %v6387
          %v7747 = vunpack.c.h.b16 %v6387
          %v7748 = vunpack.c.l.b16 %v6388
          %v7749 = vunpack.c.h.b16 %v6388
          %v7750 = vunpack.c.l.b16 %v6389
          %v7751 = vunpack.c.h.b16 %v6389
          %v7752 = vunpack.c.l.b16 %v6390
          %v7753 = vunpack.c.h.b16 %v6390
          %v7754 = vunpack.c.l.b16 %v6391
          %v7755 = vunpack.c.h.b16 %v6391
          %v7756 = vunpack.c.l.b16 %v6392
          %v7757 = vunpack.c.h.b16 %v6392
          %v7758 = vunpack.c.l.b16 %v6393
          %v7759 = vunpack.c.h.b16 %v6393
          %v7760 = vunpack.c.l.b16 %v6394
          %v7761 = vunpack.c.h.b16 %v6394
          %v7762 = vunpack.c.l.b16 %v6395
          %v7763 = vunpack.c.h.b16 %v6395
          %v7764 = vunpack.c.l.b16 %v6396
          %v7765 = vunpack.c.h.b16 %v6396
          %v7766 = vunpack.c.l.b16 %v6397
          %v7767 = vunpack.c.h.b16 %v6397
          %v7768 = vunpack.c.l.b16 %v6398
          %v7769 = vunpack.c.h.b16 %v6398
          %v7770 = vunpack.c.l.b16 %v6399
          %v7771 = vunpack.c.h.b16 %v6399
          %v7772 = vunpack.c.l.b16 %v6400
          %v7773 = vunpack.c.h.b16 %v6400
          %v7774 = vunpack.c.l.b16 %v6401
          %v7775 = vunpack.c.h.b16 %v6401
          %v7776 = vunpack.c.l.b16 %v6402
          %v7777 = vunpack.c.h.b16 %v6402
          %v7778 = vunpack.c.l.b16 %v6403
          %v7779 = vunpack.c.h.b16 %v6403
          %v7780 = vunpack.c.l.b16 %v6404
          %v7781 = vunpack.c.h.b16 %v6404
          %v7782 = vunpack.c.l.b16 %v6405
          %v7783 = vunpack.c.h.b16 %v6405
          %v7784 = vunpack.c.l.b16 %v6406
          %v7785 = vunpack.c.h.b16 %v6406
          %v7786 = vunpack.c.l.b16 %v6407
          %v7787 = vunpack.c.h.b16 %v6407
          %v7788 = vunpack.c.l.b16 %v6408
          %v7789 = vunpack.c.h.b16 %v6408
          %v7790 = vunpack.c.l.b16 %v6409
          %v7791 = vunpack.c.h.b16 %v6409
          %v7792 = vunpack.c.l.b16 %v6410
          %v7793 = vunpack.c.h.b16 %v6410
          %v7794 = vunpack.c.l.b16 %v6411
          %v7795 = vunpack.c.h.b16 %v6411
          %v7796 = vunpack.c.l.b16 %v6412
          %v7797 = vunpack.c.h.b16 %v6412
          %v7798 = vunpack.c.l.b16 %v6413
          %v7799 = vunpack.c.h.b16 %v6413
          %v7800 = vunpack.c.l.b16 %v6414
          %v7801 = vunpack.c.h.b16 %v6414
          %v7802 = vunpack.c.l.b16 %v6415
          %v7803 = vunpack.c.h.b16 %v6415
          %v7804 = vunpack.c.l.b16 %v6416
          %v7805 = vunpack.c.h.b16 %v6416
          %v7806 = vunpack.c.l.b16 %v6417
          %v7807 = vunpack.c.h.b16 %v6417
          %v7808 = vunpack.c.l.b16 %v6418
          %v7809 = vunpack.c.h.b16 %v6418
          %v7810 = vunpack.c.l.b16 %v6419
          %v7811 = vunpack.c.h.b16 %v6419
          %v7812 = vunpack.c.l.b16 %v6420
          %v7813 = vunpack.c.h.b16 %v6420
          %v7814 = vunpack.c.l.b16 %v6421
          %v7815 = vunpack.c.h.b16 %v6421
          %v7816 = vunpack.c.l.b16 %v6422
          %v7817 = vunpack.c.h.b16 %v6422
          %v7818 = vunpack.c.l.b16 %v6423
          %v7819 = vunpack.c.h.b16 %v6423
          %v7820 = vunpack.c.l.b16 %v6424
          %v7821 = vunpack.c.h.b16 %v6424
          %v7822 = vunpack.c.l.b16 %v6425
          %v7823 = vunpack.c.h.b16 %v6425
          %v7824 = vunpack.c.l.b16 %v6426
          %v7825 = vunpack.c.h.b16 %v6426
          %v7826 = vunpack.c.l.b16 %v6427
          %v7827 = vunpack.c.h.b16 %v6427
          %v7828 = vunpack.c.l.b16 %v6428
          %v7829 = vunpack.c.h.b16 %v6428
          %v7830 = vunpack.c.l.b16 %v6429
          %v7831 = vunpack.c.h.b16 %v6429
          %v7832 = vunpack.c.l.b16 %v6430
          %v7833 = vunpack.c.h.b16 %v6430
          %v7834 = vunpack.c.l.b16 %v6431
          %v7835 = vunpack.c.h.b16 %v6431
          %v7836 = vunpack.c.l.b16 %v6432
          %v7837 = vunpack.c.h.b16 %v6432
          %v7838 = vunpack.c.l.b16 %v6433
          %v7839 = vunpack.c.h.b16 %v6433
          %v7840 = vunpack.c.l.b16 %v6434
          %v7841 = vunpack.c.h.b16 %v6434
          %v7842 = vunpack.c.l.b16 %v6435
          %v7843 = vunpack.c.h.b16 %v6435
          %v7844 = vunpack.c.l.b16 %v6436
          %v7845 = vunpack.c.h.b16 %v6436
          %v7846 = vunpack.c.l.b16 %v6437
          %v7847 = vunpack.c.h.b16 %v6437
          %v7848 = vunpack.c.l.b16 %v6438
          %v7849 = vunpack.c.h.b16 %v6438
          %v7850 = vunpack.c.l.b16 %v6439
          %v7851 = vunpack.c.h.b16 %v6439
          %v7852 = vunpack.c.l.b16 %v6440
          %v7853 = vunpack.c.h.b16 %v6440
          %v7854 = vunpack.c.l.b16 %v6441
          %v7855 = vunpack.c.h.b16 %v6441
          %v7856 = vunpack.c.l.b16 %v6442
          %v7857 = vunpack.c.h.b16 %v6442
          %v7858 = vunpack.c.l.b16 %v6443
          %v7859 = vunpack.c.h.b16 %v6443
          %v7860 = vunpack.c.l.b16 %v6444
          %v7861 = vunpack.c.h.b16 %v6444
          %v7862 = vunpack.c.l.b16 %v6445
          %v7863 = vunpack.c.h.b16 %v6445
          %v7864 = vunpack.c.l.b16 %v6446
          %v7865 = vunpack.c.h.b16 %v6446
          %v7866 = vunpack.c.l.b16 %v6447
          %v7867 = vunpack.c.h.b16 %v6447
          %v7868 = vunpack.c.l.b16 %v6448
          %v7869 = vunpack.c.h.b16 %v6448
          %v7870 = vunpack.c.l.b16 %v6449
          %v7871 = vunpack.c.h.b16 %v6449
          %v7872 = vunpack.c.l.b16 %v6450
          %v7873 = vunpack.c.h.b16 %v6450
          %v7874 = vunpack.c.l.b16 %v6451
          %v7875 = vunpack.c.h.b16 %v6451
          %v7876 = vunpack.c.l.b16 %v6452
          %v7877 = vunpack.c.h.b16 %v6452
          %v7878 = vunpack.c.l.b16 %v6453
          %v7879 = vunpack.c.h.b16 %v6453
          %v7880 = vunpack.c.l.b16 %v6454
          %v7881 = vunpack.c.h.b16 %v6454
          %v7882 = vunpack.c.l.b16 %v6455
          %v7883 = vunpack.c.h.b16 %v6455
          %v7884 = vunpack.c.l.b16 %v6456
          %v7885 = vunpack.c.h.b16 %v6456
          %v7886 = vunpack.c.l.b16 %v6457
          %v7887 = vunpack.c.h.b16 %v6457
          %v7888 = vunpack.c.l.b16 %v6458
          %v7889 = vunpack.c.h.b16 %v6458
          %v7890 = vunpack.c.l.b16 %v6459
          %v7891 = vunpack.c.h.b16 %v6459
          %v7892 = vunpack.c.l.b16 %v6460
          %v7893 = vunpack.c.h.b16 %v6460
          %v7894 = vunpack.c.l.b16 %v6461
          %v7895 = vunpack.c.h.b16 %v6461
          %v7896 = vunpack.c.l.b16 %v6462
          %v7897 = vunpack.c.h.b16 %v6462
          %v7898 = vunpack.c.l.b16 %v6463
          %v7899 = vunpack.c.h.b16 %v6463
          %v7900 = vunpack.c.l.b16 %v6464
          %v7901 = vunpack.c.h.b16 %v6464
          %v7902 = vunpack.c.l.b16 %v6465
          %v7903 = vunpack.c.h.b16 %v6465
          %v7904 = vunpack.c.l.b16 %v6466
          %v7905 = vunpack.c.h.b16 %v6466
          %v7906 = vunpack.c.l.b16 %v6467
          %v7907 = vunpack.c.h.b16 %v6467
          %v7908 = vunpack.c.l.b16 %v6468
          %v7909 = vunpack.c.h.b16 %v6468
          %v7910 = vunpack.c.l.b16 %v6469
          %v7911 = vunpack.c.h.b16 %v6469
          %v7912 = vunpack.c.l.b16 %v6470
          %v7913 = vunpack.c.h.b16 %v6470
          %v7914 = vunpack.c.l.b16 %v6471
          %v7915 = vunpack.c.h.b16 %v6471
          %v7916 = vunpack.c.l.b16 %v6472
          %v7917 = vunpack.c.h.b16 %v6472
          %v7918 = vunpack.c.l.b16 %v6473
          %v7919 = vunpack.c.h.b16 %v6473
          %v7920 = vunpack.c.l.b16 %v6474
          %v7921 = vunpack.c.h.b16 %v6474
          %v7922 = vunpack.c.l.b16 %v6475
          %v7923 = vunpack.c.h.b16 %v6475
          %v7924 = vunpack.c.l.b16 %v6476
          %v7925 = vunpack.c.h.b16 %v6476
          %v7926 = vunpack.c.l.b16 %v6477
          %v7927 = vunpack.c.h.b16 %v6477
          %v7928 = vunpack.c.l.b16 %v6478
          %v7929 = vunpack.c.h.b16 %v6478
          %v7930 = vunpack.c.l.b16 %v6479
          %v7931 = vunpack.c.h.b16 %v6479
          %v7932 = vunpack.c.l.b16 %v6480
          %v7933 = vunpack.c.h.b16 %v6480
          %v7934 = vunpack.c.l.b16 %v6481
          %v7935 = vunpack.c.h.b16 %v6481
          %v7936 = vunpack.c.l.b16 %v6482
          %v7937 = vunpack.c.h.b16 %v6482
          %v7938 = vunpack.c.l.b16 %v6483
          %v7939 = vunpack.c.h.b16 %v6483
          %v7940 = vunpack.c.l.b16 %v6484
          %v7941 = vunpack.c.h.b16 %v6484
          %v7942 = vunpack.c.l.b16 %v6485
          %v7943 = vunpack.c.h.b16 %v6485
          %v7944 = vunpack.c.l.b16 %v6486
          %v7945 = vunpack.c.h.b16 %v6486
          %v7946 = vunpack.c.l.b16 %v6487
          %v7947 = vunpack.c.h.b16 %v6487
          %v7948 = vunpack.c.l.b16 %v6488
          %v7949 = vunpack.c.h.b16 %v6488
          %v7950 = vunpack.c.l.b16 %v6489
          %v7951 = vunpack.c.h.b16 %v6489
          %v7952 = vunpack.c.l.b16 %v6490
          %v7953 = vunpack.c.h.b16 %v6490
          %v7954 = vunpack.c.l.b16 %v6491
          %v7955 = vunpack.c.h.b16 %v6491
          %v7956 = vunpack.c.l.b16 %v6492
          %v7957 = vunpack.c.h.b16 %v6492
          %v7958 = vunpack.c.l.b16 %v6493
          %v7959 = vunpack.c.h.b16 %v6493
          %v7960 = vunpack.c.l.b16 %v6494
          %v7961 = vunpack.c.h.b16 %v6494
          %v7962 = vunpack.c.l.b16 %v6495
          %v7963 = vunpack.c.h.b16 %v6495
          %v7964 = vunpack.c.l.b16 %v6496
          %v7965 = vunpack.c.h.b16 %v6496
          %v7966 = vunpack.c.l.b16 %v6497
          %v7967 = vunpack.c.h.b16 %v6497
          %v7968 = vunpack.c.l.b16 %v6498
          %v7969 = vunpack.c.h.b16 %v6498
          %v7970 = vunpack.c.l.b16 %v6499
          %v7971 = vunpack.c.h.b16 %v6499
          %v7972 = vunpack.c.l.b16 %v6500
          %v7973 = vunpack.c.h.b16 %v6500
          %v7974 = vunpack.c.l.b16 %v6501
          %v7975 = vunpack.c.h.b16 %v6501
          %v7976 = vunpack.c.l.b16 %v6502
          %v7977 = vunpack.c.h.b16 %v6502
          %v7978 = vunpack.c.l.b16 %v6503
          %v7979 = vunpack.c.h.b16 %v6503
          %v7980 = vunpack.c.l.b16 %v6504
          %v7981 = vunpack.c.h.b16 %v6504
          %v7982 = vunpack.c.l.b16 %v6505
          %v7983 = vunpack.c.h.b16 %v6505
          %v7984 = vunpack.c.l.b16 %v6506
          %v7985 = vunpack.c.h.b16 %v6506
          %v7986 = vunpack.c.l.b16 %v6507
          %v7987 = vunpack.c.h.b16 %v6507
          %v7988 = vunpack.c.l.b16 %v6508
          %v7989 = vunpack.c.h.b16 %v6508
          %v7990 = vunpack.c.l.b16 %v6509
          %v7991 = vunpack.c.h.b16 %v6509
          %v7992 = vunpack.c.l.b16 %v6510
          %v7993 = vunpack.c.h.b16 %v6510
          %v7994 = vunpack.c.l.b16 %v6511
          %v7995 = vunpack.c.h.b16 %v6511
          %v7996 = vunpack.c.l.b16 %v6512
          %v7997 = vunpack.c.h.b16 %v6512
          %v7998 = vunpack.c.l.b16 %v6513
          %v7999 = vunpack.c.h.b16 %v6513
          %v8000 = vunpack.c.l.b16 %v6514
          %v8001 = vunpack.c.h.b16 %v6514
          %v8002 = vunpack.c.l.b16 %v6515
          %v8003 = vunpack.c.h.b16 %v6515
          %v8004 = vunpack.c.l.b16 %v6516
          %v8005 = vunpack.c.h.b16 %v6516
          %v8006 = vunpack.c.l.b16 %v6517
          %v8007 = vunpack.c.h.b16 %v6517
          %v8008 = vunpack.c.l.b16 %v6518
          %v8009 = vunpack.c.h.b16 %v6518
          %v8010 = vunpack.c.l.b16 %v6519
          %v8011 = vunpack.c.h.b16 %v6519
          %v8012 = vunpack.c.l.b16 %v6520
          %v8013 = vunpack.c.h.b16 %v6520
          %v8014 = vunpack.c.l.b16 %v6521
          %v8015 = vunpack.c.h.b16 %v6521
          %v8016 = vunpack.c.l.b16 %v6522
          %v8017 = vunpack.c.h.b16 %v6522
          %v8018 = vunpack.c.l.b16 %v6523
          %v8019 = vunpack.c.h.b16 %v6523
          %v8020 = vunpack.c.l.b16 %v6524
          %v8021 = vunpack.c.h.b16 %v6524
          %v8022 = vunpack.c.l.b16 %v6525
          %v8023 = vunpack.c.h.b16 %v6525
          %v8024 = vunpack.c.l.b16 %v6526
          %v8025 = vunpack.c.h.b16 %v6526
          %v8026 = vunpack.c.l.b16 %v6527
          %v8027 = vunpack.c.h.b16 %v6527
          %v8028 = vunpack.c.l.b16 %v6528
          %v8029 = vunpack.c.h.b16 %v6528
          %v8030 = vunpack.c.l.b16 %v6529
          %v8031 = vunpack.c.h.b16 %v6529
          %v8032 = vunpack.c.l.b16 %v6530
          %v8033 = vunpack.c.h.b16 %v6530
          %v8034 = vunpack.c.l.b16 %v6531
          %v8035 = vunpack.c.h.b16 %v6531
          %v8036 = vunpack.c.l.b16 %v6532
          %v8037 = vunpack.c.h.b16 %v6532
          %v8038 = vunpack.c.l.b16 %v6533
          %v8039 = vunpack.c.h.b16 %v6533
          %v8040 = vunpack.c.l.b16 %v6534
          %v8041 = vunpack.c.h.b16 %v6534
          %v8042 = vunpack.c.l.b16 %v6535
          %v8043 = vunpack.c.h.b16 %v6535
          %v8044 = vunpack.c.l.b16 %v6536
          %v8045 = vunpack.c.h.b16 %v6536
          %v8046 = vunpack.c.l.b16 %v6537
          %v8047 = vunpack.c.h.b16 %v6537
          %v8048 = vunpack.c.l.b16 %v6538
          %v8049 = vunpack.c.h.b16 %v6538
          %v8050 = vunpack.c.l.b16 %v6539
          %v8051 = vunpack.c.h.b16 %v6539
          %v8052 = vunpack.c.l.b16 %v6540
          %v8053 = vunpack.c.h.b16 %v6540
          %v8054 = vunpack.c.l.b16 %v6541
          %v8055 = vunpack.c.h.b16 %v6541
          %v8056 = vunpack.c.l.b16 %v6542
          %v8057 = vunpack.c.h.b16 %v6542
          %v8058 = vunpack.c.l.b16 %v6543
          %v8059 = vunpack.c.h.b16 %v6543
          %v8060 = vunpack.c.l.b16 %v6544
          %v8061 = vunpack.c.h.b16 %v6544
          %v8062 = vunpack.c.l.b16 %v6545
          %v8063 = vunpack.c.h.b16 %v6545
          %v8064 = vunpack.c.l.b16 %v6546
          %v8065 = vunpack.c.h.b16 %v6546
          %v8066 = vunpack.c.l.b16 %v6547
          %v8067 = vunpack.c.h.b16 %v6547
          %v8068 = vunpack.c.l.b16 %v6548
          %v8069 = vunpack.c.h.b16 %v6548
          %v8070 = vunpack.c.l.b16 %v6549
          %v8071 = vunpack.c.h.b16 %v6549
          %v8072 = vunpack.c.l.b16 %v6550
          %v8073 = vunpack.c.h.b16 %v6550
          %v8074 = vunpack.c.l.b16 %v6551
          %v8075 = vunpack.c.h.b16 %v6551
          %v8076 = vunpack.c.l.b16 %v6552
          %v8077 = vunpack.c.h.b16 %v6552
          %v8078 = vunpack.c.l.b16 %v6553
          %v8079 = vunpack.c.h.b16 %v6553
          %v8080 = vunpack.c.l.b16 %v6554
          %v8081 = vunpack.c.h.b16 %v6554
          %v8082 = vunpack.c.l.b16 %v6555
          %v8083 = vunpack.c.h.b16 %v6555
          %v8084 = vunpack.c.l.b16 %v6556
          %v8085 = vunpack.c.h.b16 %v6556
          %v8086 = vunpack.c.l.b16 %v6557
          %v8087 = vunpack.c.h.b16 %v6557
          %v8088 = vunpack.c.l.b16 %v6558
          %v8089 = vunpack.c.h.b16 %v6558
          %v8090 = vunpack.c.l.b16 %v6559
          %v8091 = vunpack.c.h.b16 %v6559
          %v8092 = vunpack.c.l.b16 %v6560
          %v8093 = vunpack.c.h.b16 %v6560
          %v8094 = vunpack.c.l.b16 %v6561
          %v8095 = vunpack.c.h.b16 %v6561
          %v8096 = vunpack.c.l.b16 %v6562
          %v8097 = vunpack.c.h.b16 %v6562
          %v8098 = vunpack.c.l.b16 %v6563
          %v8099 = vunpack.c.h.b16 %v6563
          %v8100 = vunpack.c.l.b16 %v6564
          %v8101 = vunpack.c.h.b16 %v6564
          %v8102 = vunpack.c.l.b16 %v6565
          %v8103 = vunpack.c.h.b16 %v6565
          %v8104 = vunpack.c.l.b16 %v6566
          %v8105 = vunpack.c.h.b16 %v6566
          %v8106 = vunpack.c.l.b16 %v6567
          %v8107 = vunpack.c.h.b16 %v6567
          %v8108 = vunpack.c.l.b16 %v6568
          %v8109 = vunpack.c.h.b16 %v6568
          %v8110 = vunpack.c.l.b16 %v6569
          %v8111 = vunpack.c.h.b16 %v6569
          %v8112 = vunpack.c.l.b16 %v6570
          %v8113 = vunpack.c.h.b16 %v6570
          %v8114 = vunpack.c.l.b16 %v6571
          %v8115 = vunpack.c.h.b16 %v6571
          %v8116 = vunpack.c.l.b16 %v6572
          %v8117 = vunpack.c.h.b16 %v6572
          %v8118 = vunpack.c.l.b16 %v6573
          %v8119 = vunpack.c.h.b16 %v6573
          %v8120 = vunpack.c.l.b16 %v6574
          %v8121 = vunpack.c.h.b16 %v6574
          %v8122 = vunpack.c.l.b16 %v6575
          %v8123 = vunpack.c.h.b16 %v6575
          %v8124 = vunpack.c.l.b16 %v6576
          %v8125 = vunpack.c.h.b16 %v6576
          %v8126 = vunpack.c.l.b16 %v6577
          %v8127 = vunpack.c.h.b16 %v6577
          %v8128 = vunpack.c.l.b16 %v6578
          %v8129 = vunpack.c.h.b16 %v6578
          %v8130 = vunpack.c.l.b16 %v6579
          %v8131 = vunpack.c.h.b16 %v6579
          %v8132 = vunpack.c.l.b16 %v6580
          %v8133 = vunpack.c.h.b16 %v6580
          %v8134 = vunpack.c.l.b16 %v6581
          %v8135 = vunpack.c.h.b16 %v6581
          %v8136 = vunpack.c.l.b16 %v6582
          %v8137 = vunpack.c.h.b16 %v6582
          %v8138 = vunpack.c.l.b16 %v6583
          %v8139 = vunpack.c.h.b16 %v6583
          %v8140 = vunpack.c.l.b16 %v6584
          %v8141 = vunpack.c.h.b16 %v6584
          %v8142 = vunpack.c.l.b16 %v6585
          %v8143 = vunpack.c.h.b16 %v6585
          %v8144 = vunpack.c.l.b16 %v6586
          %v8145 = vunpack.c.h.b16 %v6586
          %v8146 = vunpack.c.l.b16 %v6587
          %v8147 = vunpack.c.h.b16 %v6587
          %v8148 = vunpack.c.l.b16 %v6588
          %v8149 = vunpack.c.h.b16 %v6588
          %v8150 = vunpack.c.l.b16 %v6589
          %v8151 = vunpack.c.h.b16 %v6589
          %v8152 = vunpack.c.l.b16 %v6590
          %v8153 = vunpack.c.h.b16 %v6590
          %v8154 = vunpack.c.l.b16 %v6591
          %v8155 = vunpack.c.h.b16 %v6591
          %v8156 = vunpack.c.l.b16 %v6592
          %v8157 = vunpack.c.h.b16 %v6592
          %v8158 = vunpack.c.l.b16 %v6593
          %v8159 = vunpack.c.h.b16 %v6593
          %v8160 = vunpack.c.l.b16 %v6594
          %v8161 = vunpack.c.h.b16 %v6594
          %v8162 = vunpack.c.l.b16 %v6595
          %v8163 = vunpack.c.h.b16 %v6595
          %v8164 = vunpack.c.l.b16 %v6596
          %v8165 = vunpack.c.h.b16 %v6596
          %v8166 = vunpack.c.l.b16 %v6597
          %v8167 = vunpack.c.h.b16 %v6597
          %v8168 = vunpack.c.l.b16 %v6598
          %v8169 = vunpack.c.h.b16 %v6598
          %v8170 = vunpack.c.l.b16 %v6599
          %v8171 = vunpack.c.h.b16 %v6599
          %v8172 = vunpack.c.l.b16 %v6600
          %v8173 = vunpack.c.h.b16 %v6600
          %v8174 = vunpack.c.l.b16 %v6601
          %v8175 = vunpack.c.h.b16 %v6601
          %v8176 = vunpack.c.l.b16 %v6602
          %v8177 = vunpack.c.h.b16 %v6602
          %v8178 = vunpack.c.l.b16 %v6603
          %v8179 = vunpack.c.h.b16 %v6603
          %v8180 = vunpack.c.l.b16 %v6604
          %v8181 = vunpack.c.h.b16 %v6604
          %v8182 = vunpack.c.l.b16 %v6605
          %v8183 = vunpack.c.h.b16 %v6605
          %v8184 = vpack.c.b16 %v7168, %v7160
          %v8185 = vpack.c.b16 %v7169, %v7161
          %v8186 = vpack.c.b16 %v7170, %v7162
          %v8187 = vpack.c.b16 %v7171, %v7163
          %v8188 = vpack.c.b16 %v7172, %v7164
          %v8189 = vpack.c.b16 %v7173, %v7165
          %v8190 = vpack.c.b16 %v7174, %v7166
          %v8191 = vpack.c.b16 %v7175, %v7167
          %v8192 = vpack.c.b16 %v7184, %v7176
          %v8193 = vpack.c.b16 %v7185, %v7177
          %v8194 = vpack.c.b16 %v7186, %v7178
          %v8195 = vpack.c.b16 %v7187, %v7179
          %v8196 = vpack.c.b16 %v7188, %v7180
          %v8197 = vpack.c.b16 %v7189, %v7181
          %v8198 = vpack.c.b16 %v7190, %v7182
          %v8199 = vpack.c.b16 %v7191, %v7183
          %v8200 = vpack.c.b16 %v7200, %v7192
          %v8201 = vpack.c.b16 %v7201, %v7193
          %v8202 = vpack.c.b16 %v7202, %v7194
          %v8203 = vpack.c.b16 %v7203, %v7195
          %v8204 = vpack.c.b16 %v7204, %v7196
          %v8205 = vpack.c.b16 %v7205, %v7197
          %v8206 = vpack.c.b16 %v7206, %v7198
          %v8207 = vpack.c.b16 %v7207, %v7199
          %v8208 = vpack.c.b16 %v7216, %v7208
          %v8209 = vpack.c.b16 %v7217, %v7209
          %v8210 = vpack.c.b16 %v7218, %v7210
          %v8211 = vpack.c.b16 %v7219, %v7211
          %v8212 = vpack.c.b16 %v7220, %v7212
          %v8213 = vpack.c.b16 %v7221, %v7213
          %v8214 = vpack.c.b16 %v7222, %v7214
          %v8215 = vpack.c.b16 %v7223, %v7215
          %v8216 = vpack.c.b16 %v7232, %v7224
          %v8217 = vpack.c.b16 %v7233, %v7225
          %v8218 = vpack.c.b16 %v7234, %v7226
          %v8219 = vpack.c.b16 %v7235, %v7227
          %v8220 = vpack.c.b16 %v7236, %v7228
          %v8221 = vpack.c.b16 %v7237, %v7229
          %v8222 = vpack.c.b16 %v7238, %v7230
          %v8223 = vpack.c.b16 %v7239, %v7231
          %v8224 = vpack.c.b16 %v7248, %v7240
          %v8225 = vpack.c.b16 %v7249, %v7241
          %v8226 = vpack.c.b16 %v7250, %v7242
          %v8227 = vpack.c.b16 %v7251, %v7243
          %v8228 = vpack.c.b16 %v7252, %v7244
          %v8229 = vpack.c.b16 %v7253, %v7245
          %v8230 = vpack.c.b16 %v7254, %v7246
          %v8231 = vpack.c.b16 %v7255, %v7247
          %v8232 = vpack.c.b16 %v7264, %v7256
          %v8233 = vpack.c.b16 %v7265, %v7257
          %v8234 = vpack.c.b16 %v7266, %v7258
          %v8235 = vpack.c.b16 %v7267, %v7259
          %v8236 = vpack.c.b16 %v7268, %v7260
          %v8237 = vpack.c.b16 %v7269, %v7261
          %v8238 = vpack.c.b16 %v7270, %v7262
          %v8239 = vpack.c.b16 %v7271, %v7263
          %v8240 = vpack.c.b16 %v7280, %v7272
          %v8241 = vpack.c.b16 %v7281, %v7273
          %v8242 = vpack.c.b16 %v7282, %v7274
          %v8243 = vpack.c.b16 %v7283, %v7275
          %v8244 = vpack.c.b16 %v7284, %v7276
          %v8245 = vpack.c.b16 %v7285, %v7277
          %v8246 = vpack.c.b16 %v7286, %v7278
          %v8247 = vpack.c.b16 %v7287, %v7279
          %v8248 = vpack.c.b16 %v7296, %v7288
          %v8249 = vpack.c.b16 %v7297, %v7289
          %v8250 = vpack.c.b16 %v7298, %v7290
          %v8251 = vpack.c.b16 %v7299, %v7291
          %v8252 = vpack.c.b16 %v7300, %v7292
          %v8253 = vpack.c.b16 %v7301, %v7293
          %v8254 = vpack.c.b16 %v7302, %v7294
          %v8255 = vpack.c.b16 %v7303, %v7295
          %v8256 = vpack.c.b16 %v7312, %v7304
          %v8257 = vpack.c.b16 %v7313, %v7305
          %v8258 = vpack.c.b16 %v7314, %v7306
          %v8259 = vpack.c.b16 %v7315, %v7307
          %v8260 = vpack.c.b16 %v7316, %v7308
          %v8261 = vpack.c.b16 %v7317, %v7309
          %v8262 = vpack.c.b16 %v7318, %v7310
          %v8263 = vpack.c.b16 %v7319, %v7311
          %v8264 = vpack.c.b16 %v7328, %v7320
          %v8265 = vpack.c.b16 %v7329, %v7321
          %v8266 = vpack.c.b16 %v7330, %v7322
          %v8267 = vpack.c.b16 %v7331, %v7323
          %v8268 = vpack.c.b16 %v7332, %v7324
          %v8269 = vpack.c.b16 %v7333, %v7325
          %v8270 = vpack.c.b16 %v7334, %v7326
          %v8271 = vpack.c.b16 %v7335, %v7327
          %v8272 = vpack.c.b16 %v7344, %v7336
          %v8273 = vpack.c.b16 %v7345, %v7337
          %v8274 = vpack.c.b16 %v7346, %v7338
          %v8275 = vpack.c.b16 %v7347, %v7339
          %v8276 = vpack.c.b16 %v7348, %v7340
          %v8277 = vpack.c.b16 %v7349, %v7341
          %v8278 = vpack.c.b16 %v7350, %v7342
          %v8279 = vpack.c.b16 %v7351, %v7343
          %v8280 = vpack.c.b16 %v7360, %v7352
          %v8281 = vpack.c.b16 %v7361, %v7353
          %v8282 = vpack.c.b16 %v7362, %v7354
          %v8283 = vpack.c.b16 %v7363, %v7355
          %v8284 = vpack.c.b16 %v7364, %v7356
          %v8285 = vpack.c.b16 %v7365, %v7357
          %v8286 = vpack.c.b16 %v7366, %v7358
          %v8287 = vpack.c.b16 %v7367, %v7359
          %v8288 = vpack.c.b16 %v7376, %v7368
          %v8289 = vpack.c.b16 %v7377, %v7369
          %v8290 = vpack.c.b16 %v7378, %v7370
          %v8291 = vpack.c.b16 %v7379, %v7371
          %v8292 = vpack.c.b16 %v7380, %v7372
          %v8293 = vpack.c.b16 %v7381, %v7373
          %v8294 = vpack.c.b16 %v7382, %v7374
          %v8295 = vpack.c.b16 %v7383, %v7375
          %v8296 = vpack.c.b16 %v7392, %v7384
          %v8297 = vpack.c.b16 %v7393, %v7385
          %v8298 = vpack.c.b16 %v7394, %v7386
          %v8299 = vpack.c.b16 %v7395, %v7387
          %v8300 = vpack.c.b16 %v7396, %v7388
          %v8301 = vpack.c.b16 %v7397, %v7389
          %v8302 = vpack.c.b16 %v7398, %v7390
          %v8303 = vpack.c.b16 %v7399, %v7391
          %v8304 = vpack.c.b16 %v7408, %v7400
          %v8305 = vpack.c.b16 %v7409, %v7401
          %v8306 = vpack.c.b16 %v7410, %v7402
          %v8307 = vpack.c.b16 %v7411, %v7403
          %v8308 = vpack.c.b16 %v7412, %v7404
          %v8309 = vpack.c.b16 %v7413, %v7405
          %v8310 = vpack.c.b16 %v7414, %v7406
          %v8311 = vpack.c.b16 %v7415, %v7407
          %v8312 = vpack.c.b16 %v7424, %v7416
          %v8313 = vpack.c.b16 %v7425, %v7417
          %v8314 = vpack.c.b16 %v7426, %v7418
          %v8315 = vpack.c.b16 %v7427, %v7419
          %v8316 = vpack.c.b16 %v7428, %v7420
          %v8317 = vpack.c.b16 %v7429, %v7421
          %v8318 = vpack.c.b16 %v7430, %v7422
          %v8319 = vpack.c.b16 %v7431, %v7423
          %v8320 = vpack.c.b16 %v7440, %v7432
          %v8321 = vpack.c.b16 %v7441, %v7433
          %v8322 = vpack.c.b16 %v7442, %v7434
          %v8323 = vpack.c.b16 %v7443, %v7435
          %v8324 = vpack.c.b16 %v7444, %v7436
          %v8325 = vpack.c.b16 %v7445, %v7437
          %v8326 = vpack.c.b16 %v7446, %v7438
          %v8327 = vpack.c.b16 %v7447, %v7439
          %v8328 = vpack.c.b16 %v7456, %v7448
          %v8329 = vpack.c.b16 %v7457, %v7449
          %v8330 = vpack.c.b16 %v7458, %v7450
          %v8331 = vpack.c.b16 %v7459, %v7451
          %v8332 = vpack.c.b16 %v7460, %v7452
          %v8333 = vpack.c.b16 %v7461, %v7453
          %v8334 = vpack.c.b16 %v7462, %v7454
          %v8335 = vpack.c.b16 %v7463, %v7455
          %v8336 = vpack.c.b16 %v7472, %v7464
          %v8337 = vpack.c.b16 %v7473, %v7465
          %v8338 = vpack.c.b16 %v7474, %v7466
          %v8339 = vpack.c.b16 %v7475, %v7467
          %v8340 = vpack.c.b16 %v7476, %v7468
          %v8341 = vpack.c.b16 %v7477, %v7469
          %v8342 = vpack.c.b16 %v7478, %v7470
          %v8343 = vpack.c.b16 %v7479, %v7471
          %v8344 = vpack.c.b16 %v7488, %v7480
          %v8345 = vpack.c.b16 %v7489, %v7481
          %v8346 = vpack.c.b16 %v7490, %v7482
          %v8347 = vpack.c.b16 %v7491, %v7483
          %v8348 = vpack.c.b16 %v7492, %v7484
          %v8349 = vpack.c.b16 %v7493, %v7485
          %v8350 = vpack.c.b16 %v7494, %v7486
          %v8351 = vpack.c.b16 %v7495, %v7487
          %v8352 = vpack.c.b16 %v7504, %v7496
          %v8353 = vpack.c.b16 %v7505, %v7497
          %v8354 = vpack.c.b16 %v7506, %v7498
          %v8355 = vpack.c.b16 %v7507, %v7499
          %v8356 = vpack.c.b16 %v7508, %v7500
          %v8357 = vpack.c.b16 %v7509, %v7501
          %v8358 = vpack.c.b16 %v7510, %v7502
          %v8359 = vpack.c.b16 %v7511, %v7503
          %v8360 = vpack.c.b16 %v7520, %v7512
          %v8361 = vpack.c.b16 %v7521, %v7513
          %v8362 = vpack.c.b16 %v7522, %v7514
          %v8363 = vpack.c.b16 %v7523, %v7515
          %v8364 = vpack.c.b16 %v7524, %v7516
          %v8365 = vpack.c.b16 %v7525, %v7517
          %v8366 = vpack.c.b16 %v7526, %v7518
          %v8367 = vpack.c.b16 %v7527, %v7519
          %v8368 = vpack.c.b16 %v7536, %v7528
          %v8369 = vpack.c.b16 %v7537, %v7529
          %v8370 = vpack.c.b16 %v7538, %v7530
          %v8371 = vpack.c.b16 %v7539, %v7531
          %v8372 = vpack.c.b16 %v7540, %v7532
          %v8373 = vpack.c.b16 %v7541, %v7533
          %v8374 = vpack.c.b16 %v7542, %v7534
          %v8375 = vpack.c.b16 %v7543, %v7535
          %v8376 = vpack.c.b16 %v7552, %v7544
          %v8377 = vpack.c.b16 %v7553, %v7545
          %v8378 = vpack.c.b16 %v7554, %v7546
          %v8379 = vpack.c.b16 %v7555, %v7547
          %v8380 = vpack.c.b16 %v7556, %v7548
          %v8381 = vpack.c.b16 %v7557, %v7549
          %v8382 = vpack.c.b16 %v7558, %v7550
          %v8383 = vpack.c.b16 %v7559, %v7551
          %v8384 = vpack.c.b16 %v7568, %v7560
          %v8385 = vpack.c.b16 %v7569, %v7561
          %v8386 = vpack.c.b16 %v7570, %v7562
          %v8387 = vpack.c.b16 %v7571, %v7563
          %v8388 = vpack.c.b16 %v7572, %v7564
          %v8389 = vpack.c.b16 %v7573, %v7565
          %v8390 = vpack.c.b16 %v7574, %v7566
          %v8391 = vpack.c.b16 %v7575, %v7567
          %v8392 = vpack.c.b16 %v7584, %v7576
          %v8393 = vpack.c.b16 %v7585, %v7577
          %v8394 = vpack.c.b16 %v7586, %v7578
          %v8395 = vpack.c.b16 %v7587, %v7579
          %v8396 = vpack.c.b16 %v7588, %v7580
          %v8397 = vpack.c.b16 %v7589, %v7581
          %v8398 = vpack.c.b16 %v7590, %v7582
          %v8399 = vpack.c.b16 %v7591, %v7583
          %v8400 = vpack.c.b16 %v7600, %v7592
          %v8401 = vpack.c.b16 %v7601, %v7593
          %v8402 = vpack.c.b16 %v7602, %v7594
          %v8403 = vpack.c.b16 %v7603, %v7595
          %v8404 = vpack.c.b16 %v7604, %v7596
          %v8405 = vpack.c.b16 %v7605, %v7597
          %v8406 = vpack.c.b16 %v7606, %v7598
          %v8407 = vpack.c.b16 %v7607, %v7599
          %v8408 = vpack.c.b16 %v7616, %v7608
          %v8409 = vpack.c.b16 %v7617, %v7609
          %v8410 = vpack.c.b16 %v7618, %v7610
          %v8411 = vpack.c.b16 %v7619, %v7611
          %v8412 = vpack.c.b16 %v7620, %v7612
          %v8413 = vpack.c.b16 %v7621, %v7613
          %v8414 = vpack.c.b16 %v7622, %v7614
          %v8415 = vpack.c.b16 %v7623, %v7615
          %v8416 = vpack.c.b16 %v7632, %v7624
          %v8417 = vpack.c.b16 %v7633, %v7625
          %v8418 = vpack.c.b16 %v7634, %v7626
          %v8419 = vpack.c.b16 %v7635, %v7627
          %v8420 = vpack.c.b16 %v7636, %v7628
          %v8421 = vpack.c.b16 %v7637, %v7629
          %v8422 = vpack.c.b16 %v7638, %v7630
          %v8423 = vpack.c.b16 %v7639, %v7631
          %v8424 = vpack.c.b16 %v7648, %v7640
          %v8425 = vpack.c.b16 %v7649, %v7641
          %v8426 = vpack.c.b16 %v7650, %v7642
          %v8427 = vpack.c.b16 %v7651, %v7643
          %v8428 = vpack.c.b16 %v7652, %v7644
          %v8429 = vpack.c.b16 %v7653, %v7645
          %v8430 = vpack.c.b16 %v7654, %v7646
          %v8431 = vpack.c.b16 %v7655, %v7647
          %v8432 = vpack.c.b16 %v7664, %v7656
          %v8433 = vpack.c.b16 %v7665, %v7657
          %v8434 = vpack.c.b16 %v7666, %v7658
          %v8435 = vpack.c.b16 %v7667, %v7659
          %v8436 = vpack.c.b16 %v7668, %v7660
          %v8437 = vpack.c.b16 %v7669, %v7661
          %v8438 = vpack.c.b16 %v7670, %v7662
          %v8439 = vpack.c.b16 %v7671, %v7663
          %v8440 = vpack.c.b16 %v7680, %v7672
          %v8441 = vpack.c.b16 %v7681, %v7673
          %v8442 = vpack.c.b16 %v7682, %v7674
          %v8443 = vpack.c.b16 %v7683, %v7675
          %v8444 = vpack.c.b16 %v7684, %v7676
          %v8445 = vpack.c.b16 %v7685, %v7677
          %v8446 = vpack.c.b16 %v7686, %v7678
          %v8447 = vpack.c.b16 %v7687, %v7679
          %v8448 = vpack.c.b16 %v7696, %v7688
          %v8449 = vpack.c.b16 %v7697, %v7689
          %v8450 = vpack.c.b16 %v7698, %v7690
          %v8451 = vpack.c.b16 %v7699, %v7691
          %v8452 = vpack.c.b16 %v7700, %v7692
          %v8453 = vpack.c.b16 %v7701, %v7693
          %v8454 = vpack.c.b16 %v7702, %v7694
          %v8455 = vpack.c.b16 %v7703, %v7695
          %v8456 = vpack.c.b16 %v7712, %v7704
          %v8457 = vpack.c.b16 %v7713, %v7705
          %v8458 = vpack.c.b16 %v7714, %v7706
          %v8459 = vpack.c.b16 %v7715, %v7707
          %v8460 = vpack.c.b16 %v7716, %v7708
          %v8461 = vpack.c.b16 %v7717, %v7709
          %v8462 = vpack.c.b16 %v7718, %v7710
          %v8463 = vpack.c.b16 %v7719, %v7711
          %v8464 = vpack.c.b16 %v7728, %v7720
          %v8465 = vpack.c.b16 %v7729, %v7721
          %v8466 = vpack.c.b16 %v7730, %v7722
          %v8467 = vpack.c.b16 %v7731, %v7723
          %v8468 = vpack.c.b16 %v7732, %v7724
          %v8469 = vpack.c.b16 %v7733, %v7725
          %v8470 = vpack.c.b16 %v7734, %v7726
          %v8471 = vpack.c.b16 %v7735, %v7727
          %v8472 = vpack.c.b16 %v7744, %v7736
          %v8473 = vpack.c.b16 %v7745, %v7737
          %v8474 = vpack.c.b16 %v7746, %v7738
          %v8475 = vpack.c.b16 %v7747, %v7739
          %v8476 = vpack.c.b16 %v7748, %v7740
          %v8477 = vpack.c.b16 %v7749, %v7741
          %v8478 = vpack.c.b16 %v7750, %v7742
          %v8479 = vpack.c.b16 %v7751, %v7743
          %v8480 = vpack.c.b16 %v7760, %v7752
          %v8481 = vpack.c.b16 %v7761, %v7753
          %v8482 = vpack.c.b16 %v7762, %v7754
          %v8483 = vpack.c.b16 %v7763, %v7755
          %v8484 = vpack.c.b16 %v7764, %v7756
          %v8485 = vpack.c.b16 %v7765, %v7757
          %v8486 = vpack.c.b16 %v7766, %v7758
          %v8487 = vpack.c.b16 %v7767, %v7759
          %v8488 = vpack.c.b16 %v7776, %v7768
          %v8489 = vpack.c.b16 %v7777, %v7769
          %v8490 = vpack.c.b16 %v7778, %v7770
          %v8491 = vpack.c.b16 %v7779, %v7771
          %v8492 = vpack.c.b16 %v7780, %v7772
          %v8493 = vpack.c.b16 %v7781, %v7773
          %v8494 = vpack.c.b16 %v7782, %v7774
          %v8495 = vpack.c.b16 %v7783, %v7775
          %v8496 = vpack.c.b16 %v7792, %v7784
          %v8497 = vpack.c.b16 %v7793, %v7785
          %v8498 = vpack.c.b16 %v7794, %v7786
          %v8499 = vpack.c.b16 %v7795, %v7787
          %v8500 = vpack.c.b16 %v7796, %v7788
          %v8501 = vpack.c.b16 %v7797, %v7789
          %v8502 = vpack.c.b16 %v7798, %v7790
          %v8503 = vpack.c.b16 %v7799, %v7791
          %v8504 = vpack.c.b16 %v7808, %v7800
          %v8505 = vpack.c.b16 %v7809, %v7801
          %v8506 = vpack.c.b16 %v7810, %v7802
          %v8507 = vpack.c.b16 %v7811, %v7803
          %v8508 = vpack.c.b16 %v7812, %v7804
          %v8509 = vpack.c.b16 %v7813, %v7805
          %v8510 = vpack.c.b16 %v7814, %v7806
          %v8511 = vpack.c.b16 %v7815, %v7807
          %v8512 = vpack.c.b16 %v7824, %v7816
          %v8513 = vpack.c.b16 %v7825, %v7817
          %v8514 = vpack.c.b16 %v7826, %v7818
          %v8515 = vpack.c.b16 %v7827, %v7819
          %v8516 = vpack.c.b16 %v7828, %v7820
          %v8517 = vpack.c.b16 %v7829, %v7821
          %v8518 = vpack.c.b16 %v7830, %v7822
          %v8519 = vpack.c.b16 %v7831, %v7823
          %v8520 = vpack.c.b16 %v7840, %v7832
          %v8521 = vpack.c.b16 %v7841, %v7833
          %v8522 = vpack.c.b16 %v7842, %v7834
          %v8523 = vpack.c.b16 %v7843, %v7835
          %v8524 = vpack.c.b16 %v7844, %v7836
          %v8525 = vpack.c.b16 %v7845, %v7837
          %v8526 = vpack.c.b16 %v7846, %v7838
          %v8527 = vpack.c.b16 %v7847, %v7839
          %v8528 = vpack.c.b16 %v7856, %v7848
          %v8529 = vpack.c.b16 %v7857, %v7849
          %v8530 = vpack.c.b16 %v7858, %v7850
          %v8531 = vpack.c.b16 %v7859, %v7851
          %v8532 = vpack.c.b16 %v7860, %v7852
          %v8533 = vpack.c.b16 %v7861, %v7853
          %v8534 = vpack.c.b16 %v7862, %v7854
          %v8535 = vpack.c.b16 %v7863, %v7855
          %v8536 = vpack.c.b16 %v7872, %v7864
          %v8537 = vpack.c.b16 %v7873, %v7865
          %v8538 = vpack.c.b16 %v7874, %v7866
          %v8539 = vpack.c.b16 %v7875, %v7867
          %v8540 = vpack.c.b16 %v7876, %v7868
          %v8541 = vpack.c.b16 %v7877, %v7869
          %v8542 = vpack.c.b16 %v7878, %v7870
          %v8543 = vpack.c.b16 %v7879, %v7871
          %v8544 = vpack.c.b16 %v7888, %v7880
          %v8545 = vpack.c.b16 %v7889, %v7881
          %v8546 = vpack.c.b16 %v7890, %v7882
          %v8547 = vpack.c.b16 %v7891, %v7883
          %v8548 = vpack.c.b16 %v7892, %v7884
          %v8549 = vpack.c.b16 %v7893, %v7885
          %v8550 = vpack.c.b16 %v7894, %v7886
          %v8551 = vpack.c.b16 %v7895, %v7887
          %v8552 = vpack.c.b16 %v7904, %v7896
          %v8553 = vpack.c.b16 %v7905, %v7897
          %v8554 = vpack.c.b16 %v7906, %v7898
          %v8555 = vpack.c.b16 %v7907, %v7899
          %v8556 = vpack.c.b16 %v7908, %v7900
          %v8557 = vpack.c.b16 %v7909, %v7901
          %v8558 = vpack.c.b16 %v7910, %v7902
          %v8559 = vpack.c.b16 %v7911, %v7903
          %v8560 = vpack.c.b16 %v7920, %v7912
          %v8561 = vpack.c.b16 %v7921, %v7913
          %v8562 = vpack.c.b16 %v7922, %v7914
          %v8563 = vpack.c.b16 %v7923, %v7915
          %v8564 = vpack.c.b16 %v7924, %v7916
          %v8565 = vpack.c.b16 %v7925, %v7917
          %v8566 = vpack.c.b16 %v7926, %v7918
          %v8567 = vpack.c.b16 %v7927, %v7919
          %v8568 = vpack.c.b16 %v7936, %v7928
          %v8569 = vpack.c.b16 %v7937, %v7929
          %v8570 = vpack.c.b16 %v7938, %v7930
          %v8571 = vpack.c.b16 %v7939, %v7931
          %v8572 = vpack.c.b16 %v7940, %v7932
          %v8573 = vpack.c.b16 %v7941, %v7933
          %v8574 = vpack.c.b16 %v7942, %v7934
          %v8575 = vpack.c.b16 %v7943, %v7935
          %v8576 = vpack.c.b16 %v7952, %v7944
          %v8577 = vpack.c.b16 %v7953, %v7945
          %v8578 = vpack.c.b16 %v7954, %v7946
          %v8579 = vpack.c.b16 %v7955, %v7947
          %v8580 = vpack.c.b16 %v7956, %v7948
          %v8581 = vpack.c.b16 %v7957, %v7949
          %v8582 = vpack.c.b16 %v7958, %v7950
          %v8583 = vpack.c.b16 %v7959, %v7951
          %v8584 = vpack.c.b16 %v7968, %v7960
          %v8585 = vpack.c.b16 %v7969, %v7961
          %v8586 = vpack.c.b16 %v7970, %v7962
          %v8587 = vpack.c.b16 %v7971, %v7963
          %v8588 = vpack.c.b16 %v7972, %v7964
          %v8589 = vpack.c.b16 %v7973, %v7965
          %v8590 = vpack.c.b16 %v7974, %v7966
          %v8591 = vpack.c.b16 %v7975, %v7967
          %v8592 = vpack.c.b16 %v7984, %v7976
          %v8593 = vpack.c.b16 %v7985, %v7977
          %v8594 = vpack.c.b16 %v7986, %v7978
          %v8595 = vpack.c.b16 %v7987, %v7979
          %v8596 = vpack.c.b16 %v7988, %v7980
          %v8597 = vpack.c.b16 %v7989, %v7981
          %v8598 = vpack.c.b16 %v7990, %v7982
          %v8599 = vpack.c.b16 %v7991, %v7983
          %v8600 = vpack.c.b16 %v8000, %v7992
          %v8601 = vpack.c.b16 %v8001, %v7993
          %v8602 = vpack.c.b16 %v8002, %v7994
          %v8603 = vpack.c.b16 %v8003, %v7995
          %v8604 = vpack.c.b16 %v8004, %v7996
          %v8605 = vpack.c.b16 %v8005, %v7997
          %v8606 = vpack.c.b16 %v8006, %v7998
          %v8607 = vpack.c.b16 %v8007, %v7999
          %v8608 = vpack.c.b16 %v8016, %v8008
          %v8609 = vpack.c.b16 %v8017, %v8009
          %v8610 = vpack.c.b16 %v8018, %v8010
          %v8611 = vpack.c.b16 %v8019, %v8011
          %v8612 = vpack.c.b16 %v8020, %v8012
          %v8613 = vpack.c.b16 %v8021, %v8013
          %v8614 = vpack.c.b16 %v8022, %v8014
          %v8615 = vpack.c.b16 %v8023, %v8015
          %v8616 = vpack.c.b16 %v8032, %v8024
          %v8617 = vpack.c.b16 %v8033, %v8025
          %v8618 = vpack.c.b16 %v8034, %v8026
          %v8619 = vpack.c.b16 %v8035, %v8027
          %v8620 = vpack.c.b16 %v8036, %v8028
          %v8621 = vpack.c.b16 %v8037, %v8029
          %v8622 = vpack.c.b16 %v8038, %v8030
          %v8623 = vpack.c.b16 %v8039, %v8031
          %v8624 = vpack.c.b16 %v8048, %v8040
          %v8625 = vpack.c.b16 %v8049, %v8041
          %v8626 = vpack.c.b16 %v8050, %v8042
          %v8627 = vpack.c.b16 %v8051, %v8043
          %v8628 = vpack.c.b16 %v8052, %v8044
          %v8629 = vpack.c.b16 %v8053, %v8045
          %v8630 = vpack.c.b16 %v8054, %v8046
          %v8631 = vpack.c.b16 %v8055, %v8047
          %v8632 = vpack.c.b16 %v8064, %v8056
          %v8633 = vpack.c.b16 %v8065, %v8057
          %v8634 = vpack.c.b16 %v8066, %v8058
          %v8635 = vpack.c.b16 %v8067, %v8059
          %v8636 = vpack.c.b16 %v8068, %v8060
          %v8637 = vpack.c.b16 %v8069, %v8061
          %v8638 = vpack.c.b16 %v8070, %v8062
          %v8639 = vpack.c.b16 %v8071, %v8063
          %v8640 = vpack.c.b16 %v8080, %v8072
          %v8641 = vpack.c.b16 %v8081, %v8073
          %v8642 = vpack.c.b16 %v8082, %v8074
          %v8643 = vpack.c.b16 %v8083, %v8075
          %v8644 = vpack.c.b16 %v8084, %v8076
          %v8645 = vpack.c.b16 %v8085, %v8077
          %v8646 = vpack.c.b16 %v8086, %v8078
          %v8647 = vpack.c.b16 %v8087, %v8079
          %v8648 = vpack.c.b16 %v8096, %v8088
          %v8649 = vpack.c.b16 %v8097, %v8089
          %v8650 = vpack.c.b16 %v8098, %v8090
          %v8651 = vpack.c.b16 %v8099, %v8091
          %v8652 = vpack.c.b16 %v8100, %v8092
          %v8653 = vpack.c.b16 %v8101, %v8093
          %v8654 = vpack.c.b16 %v8102, %v8094
          %v8655 = vpack.c.b16 %v8103, %v8095
          %v8656 = vpack.c.b16 %v8112, %v8104
          %v8657 = vpack.c.b16 %v8113, %v8105
          %v8658 = vpack.c.b16 %v8114, %v8106
          %v8659 = vpack.c.b16 %v8115, %v8107
          %v8660 = vpack.c.b16 %v8116, %v8108
          %v8661 = vpack.c.b16 %v8117, %v8109
          %v8662 = vpack.c.b16 %v8118, %v8110
          %v8663 = vpack.c.b16 %v8119, %v8111
          %v8664 = vpack.c.b16 %v8128, %v8120
          %v8665 = vpack.c.b16 %v8129, %v8121
          %v8666 = vpack.c.b16 %v8130, %v8122
          %v8667 = vpack.c.b16 %v8131, %v8123
          %v8668 = vpack.c.b16 %v8132, %v8124
          %v8669 = vpack.c.b16 %v8133, %v8125
          %v8670 = vpack.c.b16 %v8134, %v8126
          %v8671 = vpack.c.b16 %v8135, %v8127
          %v8672 = vpack.c.b16 %v8144, %v8136
          %v8673 = vpack.c.b16 %v8145, %v8137
          %v8674 = vpack.c.b16 %v8146, %v8138
          %v8675 = vpack.c.b16 %v8147, %v8139
          %v8676 = vpack.c.b16 %v8148, %v8140
          %v8677 = vpack.c.b16 %v8149, %v8141
          %v8678 = vpack.c.b16 %v8150, %v8142
          %v8679 = vpack.c.b16 %v8151, %v8143
          %v8680 = vpack.c.b16 %v8160, %v8152
          %v8681 = vpack.c.b16 %v8161, %v8153
          %v8682 = vpack.c.b16 %v8162, %v8154
          %v8683 = vpack.c.b16 %v8163, %v8155
          %v8684 = vpack.c.b16 %v8164, %v8156
          %v8685 = vpack.c.b16 %v8165, %v8157
          %v8686 = vpack.c.b16 %v8166, %v8158
          %v8687 = vpack.c.b16 %v8167, %v8159
          %v8688 = vpack.c.b16 %v8176, %v8168
          %v8689 = vpack.c.b16 %v8177, %v8169
          %v8690 = vpack.c.b16 %v8178, %v8170
          %v8691 = vpack.c.b16 %v8179, %v8171
          %v8692 = vpack.c.b16 %v8180, %v8172
          %v8693 = vpack.c.b16 %v8181, %v8173
          %v8694 = vpack.c.b16 %v8182, %v8174
          %v8695 = vpack.c.b16 %v8183, %v8175
          %9208 = vmatprep.subr.bf16.mxu0 %v8241
          %9209 = vmatpush1.bf16.msra.mxu0 %v8240
          %9210 = vmatprep.subr.bf16.mxu0 %v8233
          %9211 = vmatpush1.bf16.msra.mxu0 %v8232
          %9212 = vmatprep.subr.bf16.mxu0 %v8225
          %9213 = vmatpush1.bf16.msra.mxu0 %v8224
          %9214 = vmatprep.subr.bf16.mxu0 %v8217
          %9215 = vmatpush1.bf16.msra.mxu0 %v8216
          %9216 = vmatprep.subr.bf16.mxu0 %v8209
          %9217 = vmatpush1.bf16.msra.mxu0 %v8208
          %9218 = vmatprep.subr.bf16.mxu0 %v8201
          %9219 = vmatpush1.bf16.msra.mxu0 %v8200
          %9220 = vmatprep.subr.bf16.mxu0 %v8193
          %9221 = vmatpush1.bf16.msra.mxu0 %v8192
          %9222 = vmatprep.subr.bf16.mxu0 %v8185
          %9223 = vmatpush1.bf16.msra.mxu0 %v8184
          %9224 = vmatprep.subr.bf16.mxu0 %v8305
          %9225 = vmatpush2.bf16.msra.mxu0 %v8304
          %9226 = vmatprep.subr.bf16.mxu0 %v8297
          %9227 = vmatpush2.bf16.msra.mxu0 %v8296
          %9228 = vmatprep.subr.bf16.mxu0 %v8289
          %9229 = vmatpush2.bf16.msra.mxu0 %v8288
          %9230 = vmatprep.subr.bf16.mxu0 %v8281
          %9231 = vmatpush2.bf16.msra.mxu0 %v8280
          %9232 = vmatprep.subr.bf16.mxu0 %v8273
          %9233 = vmatpush2.bf16.msra.mxu0 %v8272
          %9234 = vmatprep.subr.bf16.mxu0 %v8265
          %9235 = vmatpush2.bf16.msra.mxu0 %v8264
          %9236 = vmatprep.subr.bf16.mxu0 %v8257
          %9237 = vmatpush2.bf16.msra.mxu0 %v8256
          %9238 = vmatprep.subr.bf16.mxu0 %v8249
          %9239 = vmatpush2.bf16.msra.mxu0 %v8248
          %9240 = vmatprep.mubr.bf16.mxu0 %v6087
          %9241 = vmatmul.mubr.bf16.gmra.mxu0 %v6086
          %v9242 = vpop.f32.mrf.mxu0
          %v9243 = vadd.f32 %v6611, %v9242
          %v9244 = vpop.f32.mrf.mxu0
          %v9245 = vadd.f32 %v6615, %v9244
          %v9246 = vpop.f32.mrf.mxu0
          %v9247 = vpop.f32.mrf.mxu0
          %9248 = vdwg.mxu0
          %9249 = vmatprep.subr.bf16.mxu0 %v8369
          %9250 = vmatpush1.bf16.msra.mxu0 %v8368
          %9251 = vmatprep.subr.bf16.mxu0 %v8361
          %9252 = vmatpush1.bf16.msra.mxu0 %v8360
          %9253 = vmatprep.subr.bf16.mxu0 %v8353
          %9254 = vmatpush1.bf16.msra.mxu0 %v8352
          %9255 = vmatprep.subr.bf16.mxu0 %v8345
          %9256 = vmatpush1.bf16.msra.mxu0 %v8344
          %9257 = vmatprep.subr.bf16.mxu0 %v8337
          %9258 = vmatpush1.bf16.msra.mxu0 %v8336
          %9259 = vmatprep.subr.bf16.mxu0 %v8329
          %9260 = vmatpush1.bf16.msra.mxu0 %v8328
          %9261 = vmatprep.subr.bf16.mxu0 %v8321
          %9262 = vmatpush1.bf16.msra.mxu0 %v8320
          %9263 = vmatprep.subr.bf16.mxu0 %v8313
          %9264 = vmatpush1.bf16.msra.mxu0 %v8312
          %9265 = vmatprep.subr.bf16.mxu0 %v8433
          %9266 = vmatpush2.bf16.msra.mxu0 %v8432
          %9267 = vmatprep.subr.bf16.mxu0 %v8425
          %9268 = vmatpush2.bf16.msra.mxu0 %v8424
          %9269 = vmatprep.subr.bf16.mxu0 %v8417
          %9270 = vmatpush2.bf16.msra.mxu0 %v8416
          %9271 = vmatprep.subr.bf16.mxu0 %v8409
          %9272 = vmatpush2.bf16.msra.mxu0 %v8408
          %9273 = vmatprep.subr.bf16.mxu0 %v8401
          %9274 = vmatpush2.bf16.msra.mxu0 %v8400
          %9275 = vmatprep.subr.bf16.mxu0 %v8393
          %9276 = vmatpush2.bf16.msra.mxu0 %v8392
          %9277 = vmatprep.subr.bf16.mxu0 %v8385
          %9278 = vmatpush2.bf16.msra.mxu0 %v8384
          %9279 = vmatprep.subr.bf16.mxu0 %v8377
          %9280 = vmatpush2.bf16.msra.mxu0 %v8376
          %9281 = vmatprep.mubr.bf16.mxu0 %v6089
          %9282 = vmatmul.mubr.bf16.gmra.mxu0 %v6088
          %v9283 = vpop.f32.mrf.mxu0
          %v9284 = vadd.f32 %v9243, %v9283
          %v9285 = vpop.f32.mrf.mxu0
          %v9286 = vadd.f32 %v9245, %v9285
          %v9287 = vpop.f32.mrf.mxu0
          %v9288 = vpop.f32.mrf.mxu0
          %9289 = vdwg.mxu0
          %9290 = vmatprep.subr.bf16.mxu0 %v8497
          %9291 = vmatpush1.bf16.msra.mxu0 %v8496
          %9292 = vmatprep.subr.bf16.mxu0 %v8489
          %9293 = vmatpush1.bf16.msra.mxu0 %v8488
          %9294 = vmatprep.subr.bf16.mxu0 %v8481
          %9295 = vmatpush1.bf16.msra.mxu0 %v8480
          %9296 = vmatprep.subr.bf16.mxu0 %v8473
          %9297 = vmatpush1.bf16.msra.mxu0 %v8472
          %9298 = vmatprep.subr.bf16.mxu0 %v8465
          %9299 = vmatpush1.bf16.msra.mxu0 %v8464
          %9300 = vmatprep.subr.bf16.mxu0 %v8457
          %9301 = vmatpush1.bf16.msra.mxu0 %v8456
          %9302 = vmatprep.subr.bf16.mxu0 %v8449
          %9303 = vmatpush1.bf16.msra.mxu0 %v8448
          %9304 = vmatprep.subr.bf16.mxu0 %v8441
          %9305 = vmatpush1.bf16.msra.mxu0 %v8440
          %9306 = vmatprep.subr.bf16.mxu0 %v8561
          %9307 = vmatpush2.bf16.msra.mxu0 %v8560
          %9308 = vmatprep.subr.bf16.mxu0 %v8553
          %9309 = vmatpush2.bf16.msra.mxu0 %v8552
          %9310 = vmatprep.subr.bf16.mxu0 %v8545
          %9311 = vmatpush2.bf16.msra.mxu0 %v8544
          %9312 = vmatprep.subr.bf16.mxu0 %v8537
          %9313 = vmatpush2.bf16.msra.mxu0 %v8536
          %9314 = vmatprep.subr.bf16.mxu0 %v8529
          %9315 = vmatpush2.bf16.msra.mxu0 %v8528
          %9316 = vmatprep.subr.bf16.mxu0 %v8521
          %9317 = vmatpush2.bf16.msra.mxu0 %v8520
          %9318 = vmatprep.subr.bf16.mxu0 %v8513
          %9319 = vmatpush2.bf16.msra.mxu0 %v8512
          %9320 = vmatprep.subr.bf16.mxu0 %v8505
          %9321 = vmatpush2.bf16.msra.mxu0 %v8504
          %9322 = vmatprep.mubr.bf16.mxu0 %v6091
          %9323 = vmatmul.mubr.bf16.gmra.mxu0 %v6090
          %v9324 = vpop.f32.mrf.mxu0
          %v9325 = vadd.f32 %v9284, %v9324
          %v9326 = vpop.f32.mrf.mxu0
          %v9327 = vadd.f32 %v9286, %v9326
          %v9328 = vpop.f32.mrf.mxu0
          %v9329 = vpop.f32.mrf.mxu0
          %9330 = vdwg.mxu0
          %9331 = vmatprep.subr.bf16.mxu0 %v8625
          %9332 = vmatpush1.bf16.msra.mxu0 %v8624
          %9333 = vmatprep.subr.bf16.mxu0 %v8617
          %9334 = vmatpush1.bf16.msra.mxu0 %v8616
          %9335 = vmatprep.subr.bf16.mxu0 %v8609
          %9336 = vmatpush1.bf16.msra.mxu0 %v8608
          %9337 = vmatprep.subr.bf16.mxu0 %v8601
          %9338 = vmatpush1.bf16.msra.mxu0 %v8600
          %9339 = vmatprep.subr.bf16.mxu0 %v8593
          %9340 = vmatpush1.bf16.msra.mxu0 %v8592
          %9341 = vmatprep.subr.bf16.mxu0 %v8585
          %9342 = vmatpush1.bf16.msra.mxu0 %v8584
          %9343 = vmatprep.subr.bf16.mxu0 %v8577
          %9344 = vmatpush1.bf16.msra.mxu0 %v8576
          %9345 = vmatprep.subr.bf16.mxu0 %v8569
          %9346 = vmatpush1.bf16.msra.mxu0 %v8568
          %9347 = vmatprep.subr.bf16.mxu0 %v8689
          %9348 = vmatpush2.bf16.msra.mxu0 %v8688
          %9349 = vmatprep.subr.bf16.mxu0 %v8681
          %9350 = vmatpush2.bf16.msra.mxu0 %v8680
          %9351 = vmatprep.subr.bf16.mxu0 %v8673
          %9352 = vmatpush2.bf16.msra.mxu0 %v8672
          %9353 = vmatprep.subr.bf16.mxu0 %v8665
          %9354 = vmatpush2.bf16.msra.mxu0 %v8664
          %9355 = vmatprep.subr.bf16.mxu0 %v8657
          %9356 = vmatpush2.bf16.msra.mxu0 %v8656
          %9357 = vmatprep.subr.bf16.mxu0 %v8649
          %9358 = vmatpush2.bf16.msra.mxu0 %v8648
          %9359 = vmatprep.subr.bf16.mxu0 %v8641
          %9360 = vmatpush2.bf16.msra.mxu0 %v8640
          %9361 = vmatprep.subr.bf16.mxu0 %v8633
          %9362 = vmatpush2.bf16.msra.mxu0 %v8632
          %9363 = vmatprep.mubr.bf16.mxu0 %v6093
          %9364 = vmatmul.mubr.bf16.gmra.mxu0 %v6092
          %v9365 = vpop.f32.mrf.mxu0
          %v9366 = vadd.f32 %v9325, %v9365
          %v9367 = vpop.f32.mrf.mxu0
          %v9368 = vadd.f32 %v9327, %v9367
          %v9369 = vpop.f32.mrf.mxu0
          %v9370 = vpop.f32.mrf.mxu0
          %9371 = vdwg.mxu0
          %9372 = vmatprep.subr.bf16.mxu0 %v8243
          %9373 = vmatpush1.bf16.msra.mxu0 %v8242
          %9374 = vmatprep.subr.bf16.mxu0 %v8235
          %9375 = vmatpush1.bf16.msra.mxu0 %v8234
          %9376 = vmatprep.subr.bf16.mxu0 %v8227
          %9377 = vmatpush1.bf16.msra.mxu0 %v8226
          %9378 = vmatprep.subr.bf16.mxu0 %v8219
          %9379 = vmatpush1.bf16.msra.mxu0 %v8218
          %9380 = vmatprep.subr.bf16.mxu0 %v8211
          %9381 = vmatpush1.bf16.msra.mxu0 %v8210
          %9382 = vmatprep.subr.bf16.mxu0 %v8203
          %9383 = vmatpush1.bf16.msra.mxu0 %v8202
          %9384 = vmatprep.subr.bf16.mxu0 %v8195
          %9385 = vmatpush1.bf16.msra.mxu0 %v8194
          %9386 = vmatprep.subr.bf16.mxu0 %v8187
          %9387 = vmatpush1.bf16.msra.mxu0 %v8186
          %9388 = vmatprep.subr.bf16.mxu0 %v8307
          %9389 = vmatpush2.bf16.msra.mxu0 %v8306
          %9390 = vmatprep.subr.bf16.mxu0 %v8299
          %9391 = vmatpush2.bf16.msra.mxu0 %v8298
          %9392 = vmatprep.subr.bf16.mxu0 %v8291
          %9393 = vmatpush2.bf16.msra.mxu0 %v8290
          %9394 = vmatprep.subr.bf16.mxu0 %v8283
          %9395 = vmatpush2.bf16.msra.mxu0 %v8282
          %9396 = vmatprep.subr.bf16.mxu0 %v8275
          %9397 = vmatpush2.bf16.msra.mxu0 %v8274
          %9398 = vmatprep.subr.bf16.mxu0 %v8267
          %9399 = vmatpush2.bf16.msra.mxu0 %v8266
          %9400 = vmatprep.subr.bf16.mxu0 %v8259
          %9401 = vmatpush2.bf16.msra.mxu0 %v8258
          %9402 = vmatprep.subr.bf16.mxu0 %v8251
          %9403 = vmatpush2.bf16.msra.mxu0 %v8250
          %9404 = vmatprep.mubr.bf16.mxu0 %v6087
          %9405 = vmatmul.mubr.bf16.gmra.mxu0 %v6086
          %v9406 = vpop.f32.mrf.mxu0
          %v9407 = vadd.f32 %v6619, %v9406
          %v9408 = vpop.f32.mrf.mxu0
          %v9409 = vadd.f32 %v6623, %v9408
          %v9410 = vpop.f32.mrf.mxu0
          %v9411 = vpop.f32.mrf.mxu0
          %9412 = vdwg.mxu0
          %9413 = vmatprep.subr.bf16.mxu0 %v8371
          %9414 = vmatpush1.bf16.msra.mxu0 %v8370
          %9415 = vmatprep.subr.bf16.mxu0 %v8363
          %9416 = vmatpush1.bf16.msra.mxu0 %v8362
          %9417 = vmatprep.subr.bf16.mxu0 %v8355
          %9418 = vmatpush1.bf16.msra.mxu0 %v8354
          %9419 = vmatprep.subr.bf16.mxu0 %v8347
          %9420 = vmatpush1.bf16.msra.mxu0 %v8346
          %9421 = vmatprep.subr.bf16.mxu0 %v8339
          %9422 = vmatpush1.bf16.msra.mxu0 %v8338
          %9423 = vmatprep.subr.bf16.mxu0 %v8331
          %9424 = vmatpush1.bf16.msra.mxu0 %v8330
          %9425 = vmatprep.subr.bf16.mxu0 %v8323
          %9426 = vmatpush1.bf16.msra.mxu0 %v8322
          %9427 = vmatprep.subr.bf16.mxu0 %v8315
          %9428 = vmatpush1.bf16.msra.mxu0 %v8314
          %9429 = vmatprep.subr.bf16.mxu0 %v8435
          %9430 = vmatpush2.bf16.msra.mxu0 %v8434
          %9431 = vmatprep.subr.bf16.mxu0 %v8427
          %9432 = vmatpush2.bf16.msra.mxu0 %v8426
          %9433 = vmatprep.subr.bf16.mxu0 %v8419
          %9434 = vmatpush2.bf16.msra.mxu0 %v8418
          %9435 = vmatprep.subr.bf16.mxu0 %v8411
          %9436 = vmatpush2.bf16.msra.mxu0 %v8410
          %9437 = vmatprep.subr.bf16.mxu0 %v8403
          %9438 = vmatpush2.bf16.msra.mxu0 %v8402
          %9439 = vmatprep.subr.bf16.mxu0 %v8395
          %9440 = vmatpush2.bf16.msra.mxu0 %v8394
          %9441 = vmatprep.subr.bf16.mxu0 %v8387
          %9442 = vmatpush2.bf16.msra.mxu0 %v8386
          %9443 = vmatprep.subr.bf16.mxu0 %v8379
          %9444 = vmatpush2.bf16.msra.mxu0 %v8378
          %9445 = vmatprep.mubr.bf16.mxu0 %v6089
          %9446 = vmatmul.mubr.bf16.gmra.mxu0 %v6088
          %v9447 = vpop.f32.mrf.mxu0
          %v9448 = vadd.f32 %v9407, %v9447
          %v9449 = vpop.f32.mrf.mxu0
          %v9450 = vadd.f32 %v9409, %v9449
          %v9451 = vpop.f32.mrf.mxu0
          %v9452 = vpop.f32.mrf.mxu0
          %9453 = vdwg.mxu0
          %9454 = vmatprep.subr.bf16.mxu0 %v8499
          %9455 = vmatpush1.bf16.msra.mxu0 %v8498
          %9456 = vmatprep.subr.bf16.mxu0 %v8491
          %9457 = vmatpush1.bf16.msra.mxu0 %v8490
          %9458 = vmatprep.subr.bf16.mxu0 %v8483
          %9459 = vmatpush1.bf16.msra.mxu0 %v8482
          %9460 = vmatprep.subr.bf16.mxu0 %v8475
          %9461 = vmatpush1.bf16.msra.mxu0 %v8474
          %9462 = vmatprep.subr.bf16.mxu0 %v8467
          %9463 = vmatpush1.bf16.msra.mxu0 %v8466
          %9464 = vmatprep.subr.bf16.mxu0 %v8459
          %9465 = vmatpush1.bf16.msra.mxu0 %v8458
          %9466 = vmatprep.subr.bf16.mxu0 %v8451
          %9467 = vmatpush1.bf16.msra.mxu0 %v8450
          %9468 = vmatprep.subr.bf16.mxu0 %v8443
          %9469 = vmatpush1.bf16.msra.mxu0 %v8442
          %9470 = vmatprep.subr.bf16.mxu0 %v8563
          %9471 = vmatpush2.bf16.msra.mxu0 %v8562
          %9472 = vmatprep.subr.bf16.mxu0 %v8555
          %9473 = vmatpush2.bf16.msra.mxu0 %v8554
          %9474 = vmatprep.subr.bf16.mxu0 %v8547
          %9475 = vmatpush2.bf16.msra.mxu0 %v8546
          %9476 = vmatprep.subr.bf16.mxu0 %v8539
          %9477 = vmatpush2.bf16.msra.mxu0 %v8538
          %9478 = vmatprep.subr.bf16.mxu0 %v8531
          %9479 = vmatpush2.bf16.msra.mxu0 %v8530
          %9480 = vmatprep.subr.bf16.mxu0 %v8523
          %9481 = vmatpush2.bf16.msra.mxu0 %v8522
          %9482 = vmatprep.subr.bf16.mxu0 %v8515
          %9483 = vmatpush2.bf16.msra.mxu0 %v8514
          %9484 = vmatprep.subr.bf16.mxu0 %v8507
          %9485 = vmatpush2.bf16.msra.mxu0 %v8506
          %9486 = vmatprep.mubr.bf16.mxu0 %v6091
          %9487 = vmatmul.mubr.bf16.gmra.mxu0 %v6090
          %v9488 = vpop.f32.mrf.mxu0
          %v9489 = vadd.f32 %v9448, %v9488
          %v9490 = vpop.f32.mrf.mxu0
          %v9491 = vadd.f32 %v9450, %v9490
          %v9492 = vpop.f32.mrf.mxu0
          %v9493 = vpop.f32.mrf.mxu0
          %9494 = vdwg.mxu0
          %9495 = vmatprep.subr.bf16.mxu0 %v8627
          %9496 = vmatpush1.bf16.msra.mxu0 %v8626
          %9497 = vmatprep.subr.bf16.mxu0 %v8619
          %9498 = vmatpush1.bf16.msra.mxu0 %v8618
          %9499 = vmatprep.subr.bf16.mxu0 %v8611
          %9500 = vmatpush1.bf16.msra.mxu0 %v8610
          %9501 = vmatprep.subr.bf16.mxu0 %v8603
          %9502 = vmatpush1.bf16.msra.mxu0 %v8602
          %9503 = vmatprep.subr.bf16.mxu0 %v8595
          %9504 = vmatpush1.bf16.msra.mxu0 %v8594
          %9505 = vmatprep.subr.bf16.mxu0 %v8587
          %9506 = vmatpush1.bf16.msra.mxu0 %v8586
          %9507 = vmatprep.subr.bf16.mxu0 %v8579
          %9508 = vmatpush1.bf16.msra.mxu0 %v8578
          %9509 = vmatprep.subr.bf16.mxu0 %v8571
          %9510 = vmatpush1.bf16.msra.mxu0 %v8570
          %9511 = vmatprep.subr.bf16.mxu0 %v8691
          %9512 = vmatpush2.bf16.msra.mxu0 %v8690
          %9513 = vmatprep.subr.bf16.mxu0 %v8683
          %9514 = vmatpush2.bf16.msra.mxu0 %v8682
          %9515 = vmatprep.subr.bf16.mxu0 %v8675
          %9516 = vmatpush2.bf16.msra.mxu0 %v8674
          %9517 = vmatprep.subr.bf16.mxu0 %v8667
          %9518 = vmatpush2.bf16.msra.mxu0 %v8666
          %9519 = vmatprep.subr.bf16.mxu0 %v8659
          %9520 = vmatpush2.bf16.msra.mxu0 %v8658
          %9521 = vmatprep.subr.bf16.mxu0 %v8651
          %9522 = vmatpush2.bf16.msra.mxu0 %v8650
          %9523 = vmatprep.subr.bf16.mxu0 %v8643
          %9524 = vmatpush2.bf16.msra.mxu0 %v8642
          %9525 = vmatprep.subr.bf16.mxu0 %v8635
          %9526 = vmatpush2.bf16.msra.mxu0 %v8634
          %9527 = vmatprep.mubr.bf16.mxu0 %v6093
          %9528 = vmatmul.mubr.bf16.gmra.mxu0 %v6092
          %v9529 = vpop.f32.mrf.mxu0
          %v9530 = vadd.f32 %v9489, %v9529
          %v9531 = vpop.f32.mrf.mxu0
          %v9532 = vadd.f32 %v9491, %v9531
          %v9533 = vpop.f32.mrf.mxu0
          %v9534 = vpop.f32.mrf.mxu0
          %9535 = vdwg.mxu0
          %9536 = vmatprep.subr.bf16.mxu0 %v8245
          %9537 = vmatpush1.bf16.msra.mxu0 %v8244
          %9538 = vmatprep.subr.bf16.mxu0 %v8237
          %9539 = vmatpush1.bf16.msra.mxu0 %v8236
          %9540 = vmatprep.subr.bf16.mxu0 %v8229
          %9541 = vmatpush1.bf16.msra.mxu0 %v8228
          %9542 = vmatprep.subr.bf16.mxu0 %v8221
          %9543 = vmatpush1.bf16.msra.mxu0 %v8220
          %9544 = vmatprep.subr.bf16.mxu0 %v8213
          %9545 = vmatpush1.bf16.msra.mxu0 %v8212
          %9546 = vmatprep.subr.bf16.mxu0 %v8205
          %9547 = vmatpush1.bf16.msra.mxu0 %v8204
          %9548 = vmatprep.subr.bf16.mxu0 %v8197
          %9549 = vmatpush1.bf16.msra.mxu0 %v8196
          %9550 = vmatprep.subr.bf16.mxu0 %v8189
          %9551 = vmatpush1.bf16.msra.mxu0 %v8188
          %9552 = vmatprep.subr.bf16.mxu0 %v8309
          %9553 = vmatpush2.bf16.msra.mxu0 %v8308
          %9554 = vmatprep.subr.bf16.mxu0 %v8301
          %9555 = vmatpush2.bf16.msra.mxu0 %v8300
          %9556 = vmatprep.subr.bf16.mxu0 %v8293
          %9557 = vmatpush2.bf16.msra.mxu0 %v8292
          %9558 = vmatprep.subr.bf16.mxu0 %v8285
          %9559 = vmatpush2.bf16.msra.mxu0 %v8284
          %9560 = vmatprep.subr.bf16.mxu0 %v8277
          %9561 = vmatpush2.bf16.msra.mxu0 %v8276
          %9562 = vmatprep.subr.bf16.mxu0 %v8269
          %9563 = vmatpush2.bf16.msra.mxu0 %v8268
          %9564 = vmatprep.subr.bf16.mxu0 %v8261
          %9565 = vmatpush2.bf16.msra.mxu0 %v8260
          %9566 = vmatprep.subr.bf16.mxu0 %v8253
          %9567 = vmatpush2.bf16.msra.mxu0 %v8252
          %9568 = vmatprep.mubr.bf16.mxu0 %v6087
          %9569 = vmatmul.mubr.bf16.gmra.mxu0 %v6086
          %v9570 = vpop.f32.mrf.mxu0
          %v9571 = vadd.f32 %v6627, %v9570
          %v9572 = vpop.f32.mrf.mxu0
          %v9573 = vadd.f32 %v6631, %v9572
          %v9574 = vpop.f32.mrf.mxu0
          %v9575 = vpop.f32.mrf.mxu0
          %9576 = vdwg.mxu0
          %9577 = vmatprep.subr.bf16.mxu0 %v8373
          %9578 = vmatpush1.bf16.msra.mxu0 %v8372
          %9579 = vmatprep.subr.bf16.mxu0 %v8365
          %9580 = vmatpush1.bf16.msra.mxu0 %v8364
          %9581 = vmatprep.subr.bf16.mxu0 %v8357
          %9582 = vmatpush1.bf16.msra.mxu0 %v8356
          %9583 = vmatprep.subr.bf16.mxu0 %v8349
          %9584 = vmatpush1.bf16.msra.mxu0 %v8348
          %9585 = vmatprep.subr.bf16.mxu0 %v8341
          %9586 = vmatpush1.bf16.msra.mxu0 %v8340
          %9587 = vmatprep.subr.bf16.mxu0 %v8333
          %9588 = vmatpush1.bf16.msra.mxu0 %v8332
          %9589 = vmatprep.subr.bf16.mxu0 %v8325
          %9590 = vmatpush1.bf16.msra.mxu0 %v8324
          %9591 = vmatprep.subr.bf16.mxu0 %v8317
          %9592 = vmatpush1.bf16.msra.mxu0 %v8316
          %9593 = vmatprep.subr.bf16.mxu0 %v8437
          %9594 = vmatpush2.bf16.msra.mxu0 %v8436
          %9595 = vmatprep.subr.bf16.mxu0 %v8429
          %9596 = vmatpush2.bf16.msra.mxu0 %v8428
          %9597 = vmatprep.subr.bf16.mxu0 %v8421
          %9598 = vmatpush2.bf16.msra.mxu0 %v8420
          %9599 = vmatprep.subr.bf16.mxu0 %v8413
          %9600 = vmatpush2.bf16.msra.mxu0 %v8412
          %9601 = vmatprep.subr.bf16.mxu0 %v8405
          %9602 = vmatpush2.bf16.msra.mxu0 %v8404
          %9603 = vmatprep.subr.bf16.mxu0 %v8397
          %9604 = vmatpush2.bf16.msra.mxu0 %v8396
          %9605 = vmatprep.subr.bf16.mxu0 %v8389
          %9606 = vmatpush2.bf16.msra.mxu0 %v8388
          %9607 = vmatprep.subr.bf16.mxu0 %v8381
          %9608 = vmatpush2.bf16.msra.mxu0 %v8380
          %9609 = vmatprep.mubr.bf16.mxu0 %v6089
          %9610 = vmatmul.mubr.bf16.gmra.mxu0 %v6088
          %v9611 = vpop.f32.mrf.mxu0
          %v9612 = vadd.f32 %v9571, %v9611
          %v9613 = vpop.f32.mrf.mxu0
          %v9614 = vadd.f32 %v9573, %v9613
          %v9615 = vpop.f32.mrf.mxu0
          %v9616 = vpop.f32.mrf.mxu0
          %9617 = vdwg.mxu0
          %9618 = vmatprep.subr.bf16.mxu0 %v8501
          %9619 = vmatpush1.bf16.msra.mxu0 %v8500
          %9620 = vmatprep.subr.bf16.mxu0 %v8493
          %9621 = vmatpush1.bf16.msra.mxu0 %v8492
          %9622 = vmatprep.subr.bf16.mxu0 %v8485
          %9623 = vmatpush1.bf16.msra.mxu0 %v8484
          %9624 = vmatprep.subr.bf16.mxu0 %v8477
          %9625 = vmatpush1.bf16.msra.mxu0 %v8476
          %9626 = vmatprep.subr.bf16.mxu0 %v8469
          %9627 = vmatpush1.bf16.msra.mxu0 %v8468
          %9628 = vmatprep.subr.bf16.mxu0 %v8461
          %9629 = vmatpush1.bf16.msra.mxu0 %v8460
          %9630 = vmatprep.subr.bf16.mxu0 %v8453
          %9631 = vmatpush1.bf16.msra.mxu0 %v8452
          %9632 = vmatprep.subr.bf16.mxu0 %v8445
          %9633 = vmatpush1.bf16.msra.mxu0 %v8444
          %9634 = vmatprep.subr.bf16.mxu0 %v8565
          %9635 = vmatpush2.bf16.msra.mxu0 %v8564
          %9636 = vmatprep.subr.bf16.mxu0 %v8557
          %9637 = vmatpush2.bf16.msra.mxu0 %v8556
          %9638 = vmatprep.subr.bf16.mxu0 %v8549
          %9639 = vmatpush2.bf16.msra.mxu0 %v8548
          %9640 = vmatprep.subr.bf16.mxu0 %v8541
          %9641 = vmatpush2.bf16.msra.mxu0 %v8540
          %9642 = vmatprep.subr.bf16.mxu0 %v8533
          %9643 = vmatpush2.bf16.msra.mxu0 %v8532
          %9644 = vmatprep.subr.bf16.mxu0 %v8525
          %9645 = vmatpush2.bf16.msra.mxu0 %v8524
          %9646 = vmatprep.subr.bf16.mxu0 %v8517
          %9647 = vmatpush2.bf16.msra.mxu0 %v8516
          %9648 = vmatprep.subr.bf16.mxu0 %v8509
          %9649 = vmatpush2.bf16.msra.mxu0 %v8508
          %9650 = vmatprep.mubr.bf16.mxu0 %v6091
          %9651 = vmatmul.mubr.bf16.gmra.mxu0 %v6090
          %v9652 = vpop.f32.mrf.mxu0
          %v9653 = vadd.f32 %v9612, %v9652
          %v9654 = vpop.f32.mrf.mxu0
          %v9655 = vadd.f32 %v9614, %v9654
          %v9656 = vpop.f32.mrf.mxu0
          %v9657 = vpop.f32.mrf.mxu0
          %9658 = vdwg.mxu0
          %9659 = vmatprep.subr.bf16.mxu0 %v8629
          %9660 = vmatpush1.bf16.msra.mxu0 %v8628
          %9661 = vmatprep.subr.bf16.mxu0 %v8621
          %9662 = vmatpush1.bf16.msra.mxu0 %v8620
          %9663 = vmatprep.subr.bf16.mxu0 %v8613
          %9664 = vmatpush1.bf16.msra.mxu0 %v8612
          %9665 = vmatprep.subr.bf16.mxu0 %v8605
          %9666 = vmatpush1.bf16.msra.mxu0 %v8604
          %9667 = vmatprep.subr.bf16.mxu0 %v8597
          %9668 = vmatpush1.bf16.msra.mxu0 %v8596
          %9669 = vmatprep.subr.bf16.mxu0 %v8589
          %9670 = vmatpush1.bf16.msra.mxu0 %v8588
          %9671 = vmatprep.subr.bf16.mxu0 %v8581
          %9672 = vmatpush1.bf16.msra.mxu0 %v8580
          %9673 = vmatprep.subr.bf16.mxu0 %v8573
          %9674 = vmatpush1.bf16.msra.mxu0 %v8572
          %9675 = vmatprep.subr.bf16.mxu0 %v8693
          %9676 = vmatpush2.bf16.msra.mxu0 %v8692
          %9677 = vmatprep.subr.bf16.mxu0 %v8685
          %9678 = vmatpush2.bf16.msra.mxu0 %v8684
          %9679 = vmatprep.subr.bf16.mxu0 %v8677
          %9680 = vmatpush2.bf16.msra.mxu0 %v8676
          %9681 = vmatprep.subr.bf16.mxu0 %v8669
          %9682 = vmatpush2.bf16.msra.mxu0 %v8668
          %9683 = vmatprep.subr.bf16.mxu0 %v8661
          %9684 = vmatpush2.bf16.msra.mxu0 %v8660
          %9685 = vmatprep.subr.bf16.mxu0 %v8653
          %9686 = vmatpush2.bf16.msra.mxu0 %v8652
          %9687 = vmatprep.subr.bf16.mxu0 %v8645
          %9688 = vmatpush2.bf16.msra.mxu0 %v8644
          %9689 = vmatprep.subr.bf16.mxu0 %v8637
          %9690 = vmatpush2.bf16.msra.mxu0 %v8636
          %9691 = vmatprep.mubr.bf16.mxu0 %v6093
          %9692 = vmatmul.mubr.bf16.gmra.mxu0 %v6092
          %v9693 = vpop.f32.mrf.mxu0
          %v9694 = vadd.f32 %v9653, %v9693
          %v9695 = vpop.f32.mrf.mxu0
          %v9696 = vadd.f32 %v9655, %v9695
          %v9697 = vpop.f32.mrf.mxu0
          %v9698 = vpop.f32.mrf.mxu0
          %9699 = vdwg.mxu0
          %9700 = vmatprep.subr.bf16.mxu0 %v8247
          %9701 = vmatpush1.bf16.msra.mxu0 %v8246
          %9702 = vmatprep.subr.bf16.mxu0 %v8239
          %9703 = vmatpush1.bf16.msra.mxu0 %v8238
          %9704 = vmatprep.subr.bf16.mxu0 %v8231
          %9705 = vmatpush1.bf16.msra.mxu0 %v8230
          %9706 = vmatprep.subr.bf16.mxu0 %v8223
          %9707 = vmatpush1.bf16.msra.mxu0 %v8222
          %9708 = vmatprep.subr.bf16.mxu0 %v8215
          %9709 = vmatpush1.bf16.msra.mxu0 %v8214
          %9710 = vmatprep.subr.bf16.mxu0 %v8207
          %9711 = vmatpush1.bf16.msra.mxu0 %v8206
          %9712 = vmatprep.subr.bf16.mxu0 %v8199
          %9713 = vmatpush1.bf16.msra.mxu0 %v8198
          %9714 = vmatprep.subr.bf16.mxu0 %v8191
          %9715 = vmatpush1.bf16.msra.mxu0 %v8190
          %9716 = vmatprep.subr.bf16.mxu0 %v8311
          %9717 = vmatpush2.bf16.msra.mxu0 %v8310
          %9718 = vmatprep.subr.bf16.mxu0 %v8303
          %9719 = vmatpush2.bf16.msra.mxu0 %v8302
          %9720 = vmatprep.subr.bf16.mxu0 %v8295
          %9721 = vmatpush2.bf16.msra.mxu0 %v8294
          %9722 = vmatprep.subr.bf16.mxu0 %v8287
          %9723 = vmatpush2.bf16.msra.mxu0 %v8286
          %9724 = vmatprep.subr.bf16.mxu0 %v8279
          %9725 = vmatpush2.bf16.msra.mxu0 %v8278
          %9726 = vmatprep.subr.bf16.mxu0 %v8271
          %9727 = vmatpush2.bf16.msra.mxu0 %v8270
          %9728 = vmatprep.subr.bf16.mxu0 %v8263
          %9729 = vmatpush2.bf16.msra.mxu0 %v8262
          %9730 = vmatprep.subr.bf16.mxu0 %v8255
          %9731 = vmatpush2.bf16.msra.mxu0 %v8254
          %9732 = vmatprep.mubr.bf16.mxu0 %v6087
          %9733 = vmatmul.mubr.bf16.gmra.mxu0 %v6086
          %v9734 = vpop.f32.mrf.mxu0
          %v9735 = vadd.f32 %v6635, %v9734
          %v9736 = vpop.f32.mrf.mxu0
          %v9737 = vadd.f32 %v6639, %v9736
          %v9738 = vpop.f32.mrf.mxu0
          %v9739 = vpop.f32.mrf.mxu0
          %9740 = vdwg.mxu0
          %9741 = vmatprep.subr.bf16.mxu0 %v8375
          %9742 = vmatpush1.bf16.msra.mxu0 %v8374
          %9743 = vmatprep.subr.bf16.mxu0 %v8367
          %9744 = vmatpush1.bf16.msra.mxu0 %v8366
          %9745 = vmatprep.subr.bf16.mxu0 %v8359
          %9746 = vmatpush1.bf16.msra.mxu0 %v8358
          %9747 = vmatprep.subr.bf16.mxu0 %v8351
          %9748 = vmatpush1.bf16.msra.mxu0 %v8350
          %9749 = vmatprep.subr.bf16.mxu0 %v8343
          %9750 = vmatpush1.bf16.msra.mxu0 %v8342
          %9751 = vmatprep.subr.bf16.mxu0 %v8335
          %9752 = vmatpush1.bf16.msra.mxu0 %v8334
          %9753 = vmatprep.subr.bf16.mxu0 %v8327
          %9754 = vmatpush1.bf16.msra.mxu0 %v8326
          %9755 = vmatprep.subr.bf16.mxu0 %v8319
          %9756 = vmatpush1.bf16.msra.mxu0 %v8318
          %9757 = vmatprep.subr.bf16.mxu0 %v8439
          %9758 = vmatpush2.bf16.msra.mxu0 %v8438
          %9759 = vmatprep.subr.bf16.mxu0 %v8431
          %9760 = vmatpush2.bf16.msra.mxu0 %v8430
          %9761 = vmatprep.subr.bf16.mxu0 %v8423
          %9762 = vmatpush2.bf16.msra.mxu0 %v8422
          %9763 = vmatprep.subr.bf16.mxu0 %v8415
          %9764 = vmatpush2.bf16.msra.mxu0 %v8414
          %9765 = vmatprep.subr.bf16.mxu0 %v8407
          %9766 = vmatpush2.bf16.msra.mxu0 %v8406
          %9767 = vmatprep.subr.bf16.mxu0 %v8399
          %9768 = vmatpush2.bf16.msra.mxu0 %v8398
          %9769 = vmatprep.subr.bf16.mxu0 %v8391
          %9770 = vmatpush2.bf16.msra.mxu0 %v8390
          %9771 = vmatprep.subr.bf16.mxu0 %v8383
          %9772 = vmatpush2.bf16.msra.mxu0 %v8382
          %9773 = vmatprep.mubr.bf16.mxu0 %v6089
          %9774 = vmatmul.mubr.bf16.gmra.mxu0 %v6088
          %v9775 = vpop.f32.mrf.mxu0
          %v9776 = vadd.f32 %v9735, %v9775
          %v9777 = vpop.f32.mrf.mxu0
          %v9778 = vadd.f32 %v9737, %v9777
          %v9779 = vpop.f32.mrf.mxu0
          %v9780 = vpop.f32.mrf.mxu0
          %9781 = vdwg.mxu0
          %9782 = vmatprep.subr.bf16.mxu0 %v8503
          %9783 = vmatpush1.bf16.msra.mxu0 %v8502
          %9784 = vmatprep.subr.bf16.mxu0 %v8495
          %9785 = vmatpush1.bf16.msra.mxu0 %v8494
          %9786 = vmatprep.subr.bf16.mxu0 %v8487
          %9787 = vmatpush1.bf16.msra.mxu0 %v8486
          %9788 = vmatprep.subr.bf16.mxu0 %v8479
          %9789 = vmatpush1.bf16.msra.mxu0 %v8478
          %9790 = vmatprep.subr.bf16.mxu0 %v8471
          %9791 = vmatpush1.bf16.msra.mxu0 %v8470
          %9792 = vmatprep.subr.bf16.mxu0 %v8463
          %9793 = vmatpush1.bf16.msra.mxu0 %v8462
          %9794 = vmatprep.subr.bf16.mxu0 %v8455
          %9795 = vmatpush1.bf16.msra.mxu0 %v8454
          %9796 = vmatprep.subr.bf16.mxu0 %v8447
          %9797 = vmatpush1.bf16.msra.mxu0 %v8446
          %9798 = vmatprep.subr.bf16.mxu0 %v8567
          %9799 = vmatpush2.bf16.msra.mxu0 %v8566
          %9800 = vmatprep.subr.bf16.mxu0 %v8559
          %9801 = vmatpush2.bf16.msra.mxu0 %v8558
          %9802 = vmatprep.subr.bf16.mxu0 %v8551
          %9803 = vmatpush2.bf16.msra.mxu0 %v8550
          %9804 = vmatprep.subr.bf16.mxu0 %v8543
          %9805 = vmatpush2.bf16.msra.mxu0 %v8542
          %9806 = vmatprep.subr.bf16.mxu0 %v8535
          %9807 = vmatpush2.bf16.msra.mxu0 %v8534
          %9808 = vmatprep.subr.bf16.mxu0 %v8527
          %9809 = vmatpush2.bf16.msra.mxu0 %v8526
          %9810 = vmatprep.subr.bf16.mxu0 %v8519
          %9811 = vmatpush2.bf16.msra.mxu0 %v8518
          %9812 = vmatprep.subr.bf16.mxu0 %v8511
          %9813 = vmatpush2.bf16.msra.mxu0 %v8510
          %9814 = vmatprep.mubr.bf16.mxu0 %v6091
          %9815 = vmatmul.mubr.bf16.gmra.mxu0 %v6090
          %v9816 = vpop.f32.mrf.mxu0
          %v9817 = vadd.f32 %v9776, %v9816
          %v9818 = vpop.f32.mrf.mxu0
          %v9819 = vadd.f32 %v9778, %v9818
          %v9820 = vpop.f32.mrf.mxu0
          %v9821 = vpop.f32.mrf.mxu0
          %9822 = vdwg.mxu0
          %9823 = vmatprep.subr.bf16.mxu0 %v8631
          %9824 = vmatpush1.bf16.msra.mxu0 %v8630
          %9825 = vmatprep.subr.bf16.mxu0 %v8623
          %9826 = vmatpush1.bf16.msra.mxu0 %v8622
          %9827 = vmatprep.subr.bf16.mxu0 %v8615
          %9828 = vmatpush1.bf16.msra.mxu0 %v8614
          %9829 = vmatprep.subr.bf16.mxu0 %v8607
          %9830 = vmatpush1.bf16.msra.mxu0 %v8606
          %9831 = vmatprep.subr.bf16.mxu0 %v8599
          %9832 = vmatpush1.bf16.msra.mxu0 %v8598
          %9833 = vmatprep.subr.bf16.mxu0 %v8591
          %9834 = vmatpush1.bf16.msra.mxu0 %v8590
          %9835 = vmatprep.subr.bf16.mxu0 %v8583
          %9836 = vmatpush1.bf16.msra.mxu0 %v8582
          %9837 = vmatprep.subr.bf16.mxu0 %v8575
          %9838 = vmatpush1.bf16.msra.mxu0 %v8574
          %9839 = vmatprep.subr.bf16.mxu0 %v8695
          %9840 = vmatpush2.bf16.msra.mxu0 %v8694
          %9841 = vmatprep.subr.bf16.mxu0 %v8687
          %9842 = vmatpush2.bf16.msra.mxu0 %v8686
          %9843 = vmatprep.subr.bf16.mxu0 %v8679
          %9844 = vmatpush2.bf16.msra.mxu0 %v8678
          %9845 = vmatprep.subr.bf16.mxu0 %v8671
          %9846 = vmatpush2.bf16.msra.mxu0 %v8670
          %9847 = vmatprep.subr.bf16.mxu0 %v8663
          %9848 = vmatpush2.bf16.msra.mxu0 %v8662
          %9849 = vmatprep.subr.bf16.mxu0 %v8655
          %9850 = vmatpush2.bf16.msra.mxu0 %v8654
          %9851 = vmatprep.subr.bf16.mxu0 %v8647
          %9852 = vmatpush2.bf16.msra.mxu0 %v8646
          %9853 = vmatprep.subr.bf16.mxu0 %v8639
          %9854 = vmatpush2.bf16.msra.mxu0 %v8638
          %9855 = vmatprep.mubr.bf16.mxu0 %v6093
          %9856 = vmatmul.mubr.bf16.gmra.mxu0 %v6092
          %v9857 = vpop.f32.mrf.mxu0
          %v9858 = vadd.f32 %v9817, %v9857
          %v9859 = vpop.f32.mrf.mxu0
          %v9860 = vadd.f32 %v9819, %v9859
          %v9861 = vpop.f32.mrf.mxu0
          %v9862 = vpop.f32.mrf.mxu0
          %9863 = vdwg.mxu0
          %v9864 = vmax.f32 %v9366, 0.0
          %v9865 = vmax.f32 %v9368, 0.0
          %v9866 = vmax.f32 %v9530, 0.0
          %v9867 = vmax.f32 %v9532, 0.0
          %v9868 = vmax.f32 %v9694, 0.0
          %v9869 = vmax.f32 %v9696, 0.0
          %v9870 = vmax.f32 %v9858, 0.0
          %v9871 = vmax.f32 %v9860, 0.0
          %v9874 = vunpack.c.l.s4 1983009808
          %v9875 = vunpack.c.0.s8 %v9874
          %v9876 = vlaneseq
          %v9877 = vshrl.u32 %v9876, 7
          %v9878 = vsub.s32 %v9875, %v9877
          %v9879 = vrot.slane %v4152, %v9878
          %v9880 = vcombine.high %v9879, %v9879
          %v9883 = vpack.c.bf16 %v9879, %v9879
          %v9884 = vpack.c.bf16 %v9880, %v9880
          %v9885 = vld [vmem:[#allocation16] sm:$0xf]
          %v9886 = vld [vmem:[#allocation16 + $0x4] sm:$0xf]
          %v9887 = vld [vmem:[#allocation16 + $0x8] sm:$0xf]
          %v9888 = vld [vmem:[#allocation16 + $0xc] sm:$0xf]
          %v9889 = vld [vmem:[#allocation16 + $0x10] sm:$0xf]
          %v9890 = vld [vmem:[#allocation16 + $0x14] sm:$0xf]
          %v9891 = vld [vmem:[#allocation16 + $0x18] sm:$0xf]
          %v9892 = vld [vmem:[#allocation16 + $0x1c] sm:$0xf]
          %v9893 = vld [vmem:[#allocation16 + $0x20] sm:$0xf]
          %v9894 = vld [vmem:[#allocation16 + $0x24] sm:$0xf]
          %v9895 = vld [vmem:[#allocation16 + $0x28] sm:$0xf]
          %v9896 = vld [vmem:[#allocation16 + $0x2c] sm:$0xf]
          %v9897 = vld [vmem:[#allocation16 + $0x30] sm:$0xf]
          %v9898 = vld [vmem:[#allocation16 + $0x34] sm:$0xf]
          %v9899 = vld [vmem:[#allocation16 + $0x38] sm:$0xf]
          %v9900 = vld [vmem:[#allocation16 + $0x3c] sm:$0xf]
          %v9901 = vld [vmem:[#allocation16 + $0x40] sm:$0xf]
          %v9902 = vld [vmem:[#allocation16 + $0x44] sm:$0xf]
          %v9903 = vld [vmem:[#allocation16 + $0x48] sm:$0xf]
          %v9904 = vld [vmem:[#allocation16 + $0x4c] sm:$0xf]
          %v9905 = vld [vmem:[#allocation16 + $0x50] sm:$0xf]
          %v9906 = vld [vmem:[#allocation16 + $0x54] sm:$0xf]
          %v9907 = vld [vmem:[#allocation16 + $0x58] sm:$0xf]
          %v9908 = vld [vmem:[#allocation16 + $0x5c] sm:$0xf]
          %v9909 = vld [vmem:[#allocation16 + $0x60] sm:$0xf]
          %v9910 = vld [vmem:[#allocation16 + $0x64] sm:$0xf]
          %v9911 = vld [vmem:[#allocation16 + $0x68] sm:$0xf]
          %v9912 = vld [vmem:[#allocation16 + $0x6c] sm:$0xf]
          %v9913 = vld [vmem:[#allocation16 + $0x70] sm:$0xf]
          %v9914 = vld [vmem:[#allocation16 + $0x74] sm:$0xf]
          %v9915 = vld [vmem:[#allocation16 + $0x78] sm:$0xf]
          %v9916 = vld [vmem:[#allocation16 + $0x7c] sm:$0xf]
          %v9917 = vld [vmem:[#allocation17] sm:$0x1]
          %v9919 = vlaneseq
          %v9920 = vshrl.u32 %v9919, 7
          %v9921 = vsub.s32 0, %v9920
          %v9922 = vrot.slane %v9917, %v9921
          %v9956 = vunpack.c.l.b16 %v9885
          %v9957 = vunpack.c.l.b16 %v9886
          %v9958 = vunpack.c.l.b16 %v9887
          %v9959 = vunpack.c.l.b16 %v9888
          %v9960 = vunpack.c.l.b16 %v9889
          %v9961 = vunpack.c.l.b16 %v9890
          %v9962 = vunpack.c.l.b16 %v9891
          %v9963 = vunpack.c.l.b16 %v9892
          %v9964 = vunpack.c.l.b16 %v9893
          %v9965 = vunpack.c.l.b16 %v9894
          %v9966 = vunpack.c.l.b16 %v9895
          %v9967 = vunpack.c.l.b16 %v9896
          %v9968 = vunpack.c.l.b16 %v9897
          %v9969 = vunpack.c.l.b16 %v9898
          %v9970 = vunpack.c.l.b16 %v9899
          %v9971 = vunpack.c.l.b16 %v9900
          %v9972 = vunpack.c.l.b16 %v9901
          %v9973 = vunpack.c.l.b16 %v9902
          %v9974 = vunpack.c.l.b16 %v9903
          %v9975 = vunpack.c.l.b16 %v9904
          %v9976 = vunpack.c.l.b16 %v9905
          %v9977 = vunpack.c.l.b16 %v9906
          %v9978 = vunpack.c.l.b16 %v9907
          %v9979 = vunpack.c.l.b16 %v9908
          %v9980 = vunpack.c.l.b16 %v9909
          %v9981 = vunpack.c.l.b16 %v9910
          %v9982 = vunpack.c.l.b16 %v9911
          %v9983 = vunpack.c.l.b16 %v9912
          %v9984 = vunpack.c.l.b16 %v9913
          %v9985 = vunpack.c.l.b16 %v9914
          %v9986 = vunpack.c.l.b16 %v9915
          %v9987 = vunpack.c.l.b16 %v9916
          %v9988 = vpack.c.b16 %v9957, %v9956
          %v9989 = vpack.c.b16 %v9959, %v9958
          %v9990 = vpack.c.b16 %v9961, %v9960
          %v9991 = vpack.c.b16 %v9963, %v9962
          %v9992 = vpack.c.b16 %v9965, %v9964
          %v9993 = vpack.c.b16 %v9967, %v9966
          %v9994 = vpack.c.b16 %v9969, %v9968
          %v9995 = vpack.c.b16 %v9971, %v9970
          %v9996 = vpack.c.b16 %v9973, %v9972
          %v9997 = vpack.c.b16 %v9975, %v9974
          %v9998 = vpack.c.b16 %v9977, %v9976
          %v9999 = vpack.c.b16 %v9979, %v9978
          %v10000 = vpack.c.b16 %v9981, %v9980
          %v10001 = vpack.c.b16 %v9983, %v9982
          %v10002 = vpack.c.b16 %v9985, %v9984
          %v10003 = vpack.c.b16 %v9987, %v9986
          %10020 = vmatprep.subr.bf16.mxu0 0
          %10021 = vmatpush1.bf16.msra.mxu0 %v9995
          %10022 = vmatprep.subr.bf16.mxu0 0
          %10023 = vmatpush1.bf16.msra.mxu0 %v9994
          %10024 = vmatprep.subr.bf16.mxu0 0
          %10025 = vmatpush1.bf16.msra.mxu0 %v9993
          %10026 = vmatprep.subr.bf16.mxu0 0
          %10027 = vmatpush1.bf16.msra.mxu0 %v9992
          %10028 = vmatprep.subr.bf16.mxu0 0
          %10029 = vmatpush1.bf16.msra.mxu0 %v9991
          %10030 = vmatprep.subr.bf16.mxu0 0
          %10031 = vmatpush1.bf16.msra.mxu0 %v9990
          %10032 = vmatprep.subr.bf16.mxu0 0
          %10033 = vmatpush1.bf16.msra.mxu0 %v9989
          %10034 = vmatprep.subr.bf16.mxu0 0
          %10035 = vmatpush1.bf16.msra.mxu0 %v9988
          %10036 = vmatprep.subr.bf16.mxu0 0
          %10037 = vmatpush2.bf16.msra.mxu0 %v10003
          %10038 = vmatprep.subr.bf16.mxu0 0
          %10039 = vmatpush2.bf16.msra.mxu0 %v10002
          %10040 = vmatprep.subr.bf16.mxu0 0
          %10041 = vmatpush2.bf16.msra.mxu0 %v10001
          %10042 = vmatprep.subr.bf16.mxu0 0
          %10043 = vmatpush2.bf16.msra.mxu0 %v10000
          %10044 = vmatprep.subr.bf16.mxu0 0
          %10045 = vmatpush2.bf16.msra.mxu0 %v9999
          %10046 = vmatprep.subr.bf16.mxu0 0
          %10047 = vmatpush2.bf16.msra.mxu0 %v9998
          %10048 = vmatprep.subr.bf16.mxu0 0
          %10049 = vmatpush2.bf16.msra.mxu0 %v9997
          %10050 = vmatprep.subr.bf16.mxu0 0
          %10051 = vmatpush2.bf16.msra.mxu0 %v9996
          %10052 = vmatprep.mubr.bf16.mxu0 %v9884
          %10053 = vmatmul.mubr.bf16.gmra.mxu0 %v9883
          %v10054 = vpop.f32.mrf.mxu0
          %v10055 = vadd.f32 %v9922, %v10054
          %v10056 = vpop.f32.mrf.mxu0
          %v10057 = vpop.f32.mrf.mxu0
          %v10058 = vpop.f32.mrf.mxu0
          %10059 = vdwg.mxu0
          %v10060 = vld [vmem:[%s5] sm:$0x3]
          %v10061 = vpack.c.bf16 %v10060, %v10060
          %v10062 = vld [vmem:[#allocation19] sm:$0xf]
          %v10063 = vld [vmem:[#allocation19 + $0x4] sm:$0xf]
          %v10064 = vld [vmem:[#allocation19 + $0x8] sm:$0xf]
          %v10065 = vld [vmem:[#allocation19 + $0xc] sm:$0xf]
          %v10066 = vld [vmem:[#allocation19 + $0x10] sm:$0xf]
          %v10067 = vld [vmem:[#allocation19 + $0x14] sm:$0xf]
          %v10068 = vld [vmem:[#allocation19 + $0x18] sm:$0xf]
          %v10069 = vld [vmem:[#allocation19 + $0x1c] sm:$0xf]
          %v10070 = vld [vmem:[#allocation19 + $0x20] sm:$0xf]
          %v10071 = vld [vmem:[#allocation19 + $0x24] sm:$0xf]
          %v10072 = vld [vmem:[#allocation19 + $0x28] sm:$0xf]
          %v10073 = vld [vmem:[#allocation19 + $0x2c] sm:$0xf]
          %v10074 = vld [vmem:[#allocation19 + $0x30] sm:$0xf]
          %v10075 = vld [vmem:[#allocation19 + $0x34] sm:$0xf]
          %v10076 = vld [vmem:[#allocation19 + $0x38] sm:$0xf]
          %v10077 = vld [vmem:[#allocation19 + $0x3c] sm:$0xf]
          %v10078 = vpack.c.bf16 %v10055, %v10055
          %v10079 = vld [vmem:[#allocation20] sm:$0xf]
          %v10080 = vld [vmem:[#allocation20 + $0x4] sm:$0xf]
          %v10081 = vld [vmem:[#allocation20 + $0x8] sm:$0xf]
          %v10082 = vld [vmem:[#allocation20 + $0xc] sm:$0xf]
          %v10083 = vld [vmem:[#allocation20 + $0x10] sm:$0xf]
          %v10084 = vld [vmem:[#allocation20 + $0x14] sm:$0xf]
          %v10085 = vld [vmem:[#allocation20 + $0x18] sm:$0xf]
          %v10086 = vld [vmem:[#allocation20 + $0x1c] sm:$0xf]
          %v10087 = vld [vmem:[#allocation20 + $0x20] sm:$0xf]
          %v10088 = vld [vmem:[#allocation20 + $0x24] sm:$0xf]
          %v10089 = vld [vmem:[#allocation20 + $0x28] sm:$0xf]
          %v10090 = vld [vmem:[#allocation20 + $0x2c] sm:$0xf]
          %v10091 = vld [vmem:[#allocation20 + $0x30] sm:$0xf]
          %v10092 = vld [vmem:[#allocation20 + $0x34] sm:$0xf]
          %v10093 = vld [vmem:[#allocation20 + $0x38] sm:$0xf]
          %v10094 = vld [vmem:[#allocation20 + $0x3c] sm:$0xf]
          %v10111 = vunpack.c.l.b16 %v10079
          %v10112 = vunpack.c.l.b16 %v10080
          %v10113 = vunpack.c.l.b16 %v10081
          %v10114 = vunpack.c.l.b16 %v10082
          %v10115 = vunpack.c.l.b16 %v10083
          %v10116 = vunpack.c.l.b16 %v10084
          %v10117 = vunpack.c.l.b16 %v10085
          %v10118 = vunpack.c.l.b16 %v10086
          %v10119 = vunpack.c.l.b16 %v10087
          %v10120 = vunpack.c.l.b16 %v10088
          %v10121 = vunpack.c.l.b16 %v10089
          %v10122 = vunpack.c.l.b16 %v10090
          %v10123 = vunpack.c.l.b16 %v10091
          %v10124 = vunpack.c.l.b16 %v10092
          %v10125 = vunpack.c.l.b16 %v10093
          %v10126 = vunpack.c.l.b16 %v10094
          %v10127 = vpack.c.b16 %v10112, %v10111
          %v10128 = vpack.c.b16 %v10114, %v10113
          %v10129 = vpack.c.b16 %v10116, %v10115
          %v10130 = vpack.c.b16 %v10118, %v10117
          %v10131 = vpack.c.b16 %v10120, %v10119
          %v10132 = vpack.c.b16 %v10122, %v10121
          %v10133 = vpack.c.b16 %v10124, %v10123
          %v10134 = vpack.c.b16 %v10126, %v10125
          %10143 = vmatprep.subr.bf16.mxu0 0
          %10144 = vmatpush1.bf16.msra.mxu0 %v10134
          %10145 = vmatprep.subr.bf16.mxu0 0
          %10146 = vmatpush1.bf16.msra.mxu0 %v10133
          %10147 = vmatprep.subr.bf16.mxu0 0
          %10148 = vmatpush1.bf16.msra.mxu0 %v10132
          %10149 = vmatprep.subr.bf16.mxu0 0
          %10150 = vmatpush1.bf16.msra.mxu0 %v10131
          %10151 = vmatprep.subr.bf16.mxu0 0
          %10152 = vmatpush1.bf16.msra.mxu0 %v10130
          %10153 = vmatprep.subr.bf16.mxu0 0
          %10154 = vmatpush1.bf16.msra.mxu0 %v10129
          %10155 = vmatprep.subr.bf16.mxu0 0
          %10156 = vmatpush1.bf16.msra.mxu0 %v10128
          %10157 = vmatprep.subr.bf16.mxu0 0
          %10158 = vmatpush1.bf16.msra.mxu0 %v10127
          %10159 = vmatprep.subr.bf16.mxu0 0
          %10160 = vmatpush2.bf16.msra.mxu0 0
          %10161 = vmatprep.subr.bf16.mxu0 0
          %10162 = vmatpush2.bf16.msra.mxu0 0
          %10163 = vmatprep.subr.bf16.mxu0 0
          %10164 = vmatpush2.bf16.msra.mxu0 0
          %10165 = vmatprep.subr.bf16.mxu0 0
          %10166 = vmatpush2.bf16.msra.mxu0 0
          %10167 = vmatprep.subr.bf16.mxu0 0
          %10168 = vmatpush2.bf16.msra.mxu0 0
          %10169 = vmatprep.subr.bf16.mxu0 0
          %10170 = vmatpush2.bf16.msra.mxu0 0
          %10171 = vmatprep.subr.bf16.mxu0 0
          %10172 = vmatpush2.bf16.msra.mxu0 0
          %10173 = vmatprep.subr.bf16.mxu0 0
          %10174 = vmatpush2.bf16.msra.mxu0 0
          %10175 = vmatprep.mubr.bf16.mxu0 0
          %10176 = vmatmul.mubr.bf16.gmra.mxu0 %v10078
          %v10177 = vpop.f32.mrf.mxu0
          %v10178 = vadd.f32 0.0, %v10177
          %v10179 = vpop.f32.mrf.mxu0
          %v10180 = vpop.f32.mrf.mxu0
          %v10181 = vpop.f32.mrf.mxu0
          %10182 = vdwg.mxu0
          %v10199 = vunpack.c.l.b16 %v10062
          %v10200 = vunpack.c.l.b16 %v10063
          %v10201 = vunpack.c.l.b16 %v10064
          %v10202 = vunpack.c.l.b16 %v10065
          %v10203 = vunpack.c.l.b16 %v10066
          %v10204 = vunpack.c.l.b16 %v10067
          %v10205 = vunpack.c.l.b16 %v10068
          %v10206 = vunpack.c.l.b16 %v10069
          %v10207 = vunpack.c.l.b16 %v10070
          %v10208 = vunpack.c.l.b16 %v10071
          %v10209 = vunpack.c.l.b16 %v10072
          %v10210 = vunpack.c.l.b16 %v10073
          %v10211 = vunpack.c.l.b16 %v10074
          %v10212 = vunpack.c.l.b16 %v10075
          %v10213 = vunpack.c.l.b16 %v10076
          %v10214 = vunpack.c.l.b16 %v10077
          %v10215 = vpack.c.b16 %v10200, %v10199
          %v10216 = vpack.c.b16 %v10202, %v10201
          %v10217 = vpack.c.b16 %v10204, %v10203
          %v10218 = vpack.c.b16 %v10206, %v10205
          %v10219 = vpack.c.b16 %v10208, %v10207
          %v10220 = vpack.c.b16 %v10210, %v10209
          %v10221 = vpack.c.b16 %v10212, %v10211
          %v10222 = vpack.c.b16 %v10214, %v10213
          %10231 = vmatprep.subr.bf16.mxu0 0
          %10232 = vmatpush1.bf16.msra.mxu0 %v10222
          %10233 = vmatprep.subr.bf16.mxu0 0
          %10234 = vmatpush1.bf16.msra.mxu0 %v10221
          %10235 = vmatprep.subr.bf16.mxu0 0
          %10236 = vmatpush1.bf16.msra.mxu0 %v10220
          %10237 = vmatprep.subr.bf16.mxu0 0
          %10238 = vmatpush1.bf16.msra.mxu0 %v10219
          %10239 = vmatprep.subr.bf16.mxu0 0
          %10240 = vmatpush1.bf16.msra.mxu0 %v10218
          %10241 = vmatprep.subr.bf16.mxu0 0
          %10242 = vmatpush1.bf16.msra.mxu0 %v10217
          %10243 = vmatprep.subr.bf16.mxu0 0
          %10244 = vmatpush1.bf16.msra.mxu0 %v10216
          %10245 = vmatprep.subr.bf16.mxu0 0
          %10246 = vmatpush1.bf16.msra.mxu0 %v10215
          %10247 = vmatprep.subr.bf16.mxu0 0
          %10248 = vmatpush2.bf16.msra.mxu0 0
          %10249 = vmatprep.subr.bf16.mxu0 0
          %10250 = vmatpush2.bf16.msra.mxu0 0
          %10251 = vmatprep.subr.bf16.mxu0 0
          %10252 = vmatpush2.bf16.msra.mxu0 0
          %10253 = vmatprep.subr.bf16.mxu0 0
          %10254 = vmatpush2.bf16.msra.mxu0 0
          %10255 = vmatprep.subr.bf16.mxu0 0
          %10256 = vmatpush2.bf16.msra.mxu0 0
          %10257 = vmatprep.subr.bf16.mxu0 0
          %10258 = vmatpush2.bf16.msra.mxu0 0
          %10259 = vmatprep.subr.bf16.mxu0 0
          %10260 = vmatpush2.bf16.msra.mxu0 0
          %10261 = vmatprep.subr.bf16.mxu0 0
          %10262 = vmatpush2.bf16.msra.mxu0 0
          %10263 = vmatprep.mubr.bf16.mxu0 0
          %10264 = vmatmul.mubr.bf16.gmra.mxu0 %v10061
          %v10265 = vpop.f32.mrf.mxu0
          %v10266 = vadd.f32 %v10178, %v10265
          %v10267 = vpop.f32.mrf.mxu0
          %v10268 = vpop.f32.mrf.mxu0
          %v10269 = vpop.f32.mrf.mxu0
          %10270 = vdwg.mxu0
          %v10271 = vpack.c.bf16 %v9864, %v9864
          %v10272 = vpack.c.bf16 %v9865, %v9865
          %v10273 = vpack.c.bf16 %v9866, %v9866
          %v10274 = vpack.c.bf16 %v9867, %v9867
          %v10275 = vpack.c.bf16 %v9868, %v9868
          %v10276 = vpack.c.bf16 %v9869, %v9869
          %v10277 = vpack.c.bf16 %v9870, %v9870
          %v10278 = vpack.c.bf16 %v9871, %v9871
          %v10279 = vld [vmem:[#allocation22] sm:$0xf]
          %v10280 = vld [vmem:[#allocation22 + $0x4] sm:$0xf]
          %v10281 = vld [vmem:[#allocation22 + $0x8] sm:$0xf]
          %v10282 = vld [vmem:[#allocation22 + $0xc] sm:$0xf]
          %v10283 = vld [vmem:[#allocation22 + $0x10] sm:$0xf]
          %v10284 = vld [vmem:[#allocation22 + $0x14] sm:$0xf]
          %v10285 = vld [vmem:[#allocation22 + $0x18] sm:$0xf]
          %v10286 = vld [vmem:[#allocation22 + $0x1c] sm:$0xf]
          %v10287 = vld [vmem:[#allocation22 + $0x20] sm:$0xf]
          %v10288 = vld [vmem:[#allocation22 + $0x24] sm:$0xf]
          %v10289 = vld [vmem:[#allocation22 + $0x28] sm:$0xf]
          %v10290 = vld [vmem:[#allocation22 + $0x2c] sm:$0xf]
          %v10291 = vld [vmem:[#allocation22 + $0x30] sm:$0xf]
          %v10292 = vld [vmem:[#allocation22 + $0x34] sm:$0xf]
          %v10293 = vld [vmem:[#allocation22 + $0x38] sm:$0xf]
          %v10294 = vld [vmem:[#allocation22 + $0x3c] sm:$0xf]
          %v10295 = vld [vmem:[#allocation22 + $0x40] sm:$0xf]
          %v10296 = vld [vmem:[#allocation22 + $0x44] sm:$0xf]
          %v10297 = vld [vmem:[#allocation22 + $0x48] sm:$0xf]
          %v10298 = vld [vmem:[#allocation22 + $0x4c] sm:$0xf]
          %v10299 = vld [vmem:[#allocation22 + $0x50] sm:$0xf]
          %v10300 = vld [vmem:[#allocation22 + $0x54] sm:$0xf]
          %v10301 = vld [vmem:[#allocation22 + $0x58] sm:$0xf]
          %v10302 = vld [vmem:[#allocation22 + $0x5c] sm:$0xf]
          %v10303 = vld [vmem:[#allocation22 + $0x60] sm:$0xf]
          %v10304 = vld [vmem:[#allocation22 + $0x64] sm:$0xf]
          %v10305 = vld [vmem:[#allocation22 + $0x68] sm:$0xf]
          %v10306 = vld [vmem:[#allocation22 + $0x6c] sm:$0xf]
          %v10307 = vld [vmem:[#allocation22 + $0x70] sm:$0xf]
          %v10308 = vld [vmem:[#allocation22 + $0x74] sm:$0xf]
          %v10309 = vld [vmem:[#allocation22 + $0x78] sm:$0xf]
          %v10310 = vld [vmem:[#allocation22 + $0x7c] sm:$0xf]
          %v10311 = vld [vmem:[#allocation22 + $0x80] sm:$0xf]
          %v10312 = vld [vmem:[#allocation22 + $0x84] sm:$0xf]
          %v10313 = vld [vmem:[#allocation22 + $0x88] sm:$0xf]
          %v10314 = vld [vmem:[#allocation22 + $0x8c] sm:$0xf]
          %v10315 = vld [vmem:[#allocation22 + $0x90] sm:$0xf]
          %v10316 = vld [vmem:[#allocation22 + $0x94] sm:$0xf]
          %v10317 = vld [vmem:[#allocation22 + $0x98] sm:$0xf]
          %v10318 = vld [vmem:[#allocation22 + $0x9c] sm:$0xf]
          %v10319 = vld [vmem:[#allocation22 + $0xa0] sm:$0xf]
          %v10320 = vld [vmem:[#allocation22 + $0xa4] sm:$0xf]
          %v10321 = vld [vmem:[#allocation22 + $0xa8] sm:$0xf]
          %v10322 = vld [vmem:[#allocation22 + $0xac] sm:$0xf]
          %v10323 = vld [vmem:[#allocation22 + $0xb0] sm:$0xf]
          %v10324 = vld [vmem:[#allocation22 + $0xb4] sm:$0xf]
          %v10325 = vld [vmem:[#allocation22 + $0xb8] sm:$0xf]
          %v10326 = vld [vmem:[#allocation22 + $0xbc] sm:$0xf]
          %v10327 = vld [vmem:[#allocation22 + $0xc0] sm:$0xf]
          %v10328 = vld [vmem:[#allocation22 + $0xc4] sm:$0xf]
          %v10329 = vld [vmem:[#allocation22 + $0xc8] sm:$0xf]
          %v10330 = vld [vmem:[#allocation22 + $0xcc] sm:$0xf]
          %v10331 = vld [vmem:[#allocation22 + $0xd0] sm:$0xf]
          %v10332 = vld [vmem:[#allocation22 + $0xd4] sm:$0xf]
          %v10333 = vld [vmem:[#allocation22 + $0xd8] sm:$0xf]
          %v10334 = vld [vmem:[#allocation22 + $0xdc] sm:$0xf]
          %v10335 = vld [vmem:[#allocation22 + $0xe0] sm:$0xf]
          %v10336 = vld [vmem:[#allocation22 + $0xe4] sm:$0xf]
          %v10337 = vld [vmem:[#allocation22 + $0xe8] sm:$0xf]
          %v10338 = vld [vmem:[#allocation22 + $0xec] sm:$0xf]
          %v10339 = vld [vmem:[#allocation22 + $0xf0] sm:$0xf]
          %v10340 = vld [vmem:[#allocation22 + $0xf4] sm:$0xf]
          %v10341 = vld [vmem:[#allocation22 + $0xf8] sm:$0xf]
          %v10342 = vld [vmem:[#allocation22 + $0xfc] sm:$0xf]
          %v10343 = vld [vmem:[#allocation22 + $0x100] sm:$0xf]
          %v10344 = vld [vmem:[#allocation22 + $0x104] sm:$0xf]
          %v10345 = vld [vmem:[#allocation22 + $0x108] sm:$0xf]
          %v10346 = vld [vmem:[#allocation22 + $0x10c] sm:$0xf]
          %v10347 = vld [vmem:[#allocation22 + $0x110] sm:$0xf]
          %v10348 = vld [vmem:[#allocation22 + $0x114] sm:$0xf]
          %v10349 = vld [vmem:[#allocation22 + $0x118] sm:$0xf]
          %v10350 = vld [vmem:[#allocation22 + $0x11c] sm:$0xf]
          %v10351 = vld [vmem:[#allocation22 + $0x120] sm:$0xf]
          %v10352 = vld [vmem:[#allocation22 + $0x124] sm:$0xf]
          %v10353 = vld [vmem:[#allocation22 + $0x128] sm:$0xf]
          %v10354 = vld [vmem:[#allocation22 + $0x12c] sm:$0xf]
          %v10355 = vld [vmem:[#allocation22 + $0x130] sm:$0xf]
          %v10356 = vld [vmem:[#allocation22 + $0x134] sm:$0xf]
          %v10357 = vld [vmem:[#allocation22 + $0x138] sm:$0xf]
          %v10358 = vld [vmem:[#allocation22 + $0x13c] sm:$0xf]
          %v10359 = vld [vmem:[#allocation22 + $0x140] sm:$0xf]
          %v10360 = vld [vmem:[#allocation22 + $0x144] sm:$0xf]
          %v10361 = vld [vmem:[#allocation22 + $0x148] sm:$0xf]
          %v10362 = vld [vmem:[#allocation22 + $0x14c] sm:$0xf]
          %v10363 = vld [vmem:[#allocation22 + $0x150] sm:$0xf]
          %v10364 = vld [vmem:[#allocation22 + $0x154] sm:$0xf]
          %v10365 = vld [vmem:[#allocation22 + $0x158] sm:$0xf]
          %v10366 = vld [vmem:[#allocation22 + $0x15c] sm:$0xf]
          %v10367 = vld [vmem:[#allocation22 + $0x160] sm:$0xf]
          %v10368 = vld [vmem:[#allocation22 + $0x164] sm:$0xf]
          %v10369 = vld [vmem:[#allocation22 + $0x168] sm:$0xf]
          %v10370 = vld [vmem:[#allocation22 + $0x16c] sm:$0xf]
          %v10371 = vld [vmem:[#allocation22 + $0x170] sm:$0xf]
          %v10372 = vld [vmem:[#allocation22 + $0x174] sm:$0xf]
          %v10373 = vld [vmem:[#allocation22 + $0x178] sm:$0xf]
          %v10374 = vld [vmem:[#allocation22 + $0x17c] sm:$0xf]
          %v10375 = vld [vmem:[#allocation22 + $0x180] sm:$0xf]
          %v10376 = vld [vmem:[#allocation22 + $0x184] sm:$0xf]
          %v10377 = vld [vmem:[#allocation22 + $0x188] sm:$0xf]
          %v10378 = vld [vmem:[#allocation22 + $0x18c] sm:$0xf]
          %v10379 = vld [vmem:[#allocation22 + $0x190] sm:$0xf]
          %v10380 = vld [vmem:[#allocation22 + $0x194] sm:$0xf]
          %v10381 = vld [vmem:[#allocation22 + $0x198] sm:$0xf]
          %v10382 = vld [vmem:[#allocation22 + $0x19c] sm:$0xf]
          %v10383 = vld [vmem:[#allocation22 + $0x1a0] sm:$0xf]
          %v10384 = vld [vmem:[#allocation22 + $0x1a4] sm:$0xf]
          %v10385 = vld [vmem:[#allocation22 + $0x1a8] sm:$0xf]
          %v10386 = vld [vmem:[#allocation22 + $0x1ac] sm:$0xf]
          %v10387 = vld [vmem:[#allocation22 + $0x1b0] sm:$0xf]
          %v10388 = vld [vmem:[#allocation22 + $0x1b4] sm:$0xf]
          %v10389 = vld [vmem:[#allocation22 + $0x1b8] sm:$0xf]
          %v10390 = vld [vmem:[#allocation22 + $0x1bc] sm:$0xf]
          %v10391 = vld [vmem:[#allocation22 + $0x1c0] sm:$0xf]
          %v10392 = vld [vmem:[#allocation22 + $0x1c4] sm:$0xf]
          %v10393 = vld [vmem:[#allocation22 + $0x1c8] sm:$0xf]
          %v10394 = vld [vmem:[#allocation22 + $0x1cc] sm:$0xf]
          %v10395 = vld [vmem:[#allocation22 + $0x1d0] sm:$0xf]
          %v10396 = vld [vmem:[#allocation22 + $0x1d4] sm:$0xf]
          %v10397 = vld [vmem:[#allocation22 + $0x1d8] sm:$0xf]
          %v10398 = vld [vmem:[#allocation22 + $0x1dc] sm:$0xf]
          %v10399 = vld [vmem:[#allocation22 + $0x1e0] sm:$0xf]
          %v10400 = vld [vmem:[#allocation22 + $0x1e4] sm:$0xf]
          %v10401 = vld [vmem:[#allocation22 + $0x1e8] sm:$0xf]
          %v10402 = vld [vmem:[#allocation22 + $0x1ec] sm:$0xf]
          %v10403 = vld [vmem:[#allocation22 + $0x1f0] sm:$0xf]
          %v10404 = vld [vmem:[#allocation22 + $0x1f4] sm:$0xf]
          %v10405 = vld [vmem:[#allocation22 + $0x1f8] sm:$0xf]
          %v10406 = vld [vmem:[#allocation22 + $0x1fc] sm:$0xf]
          %v10535 = vunpack.c.l.b16 %v10279
          %v10536 = vunpack.c.l.b16 %v10280
          %v10537 = vunpack.c.l.b16 %v10281
          %v10538 = vunpack.c.l.b16 %v10282
          %v10539 = vunpack.c.l.b16 %v10283
          %v10540 = vunpack.c.l.b16 %v10284
          %v10541 = vunpack.c.l.b16 %v10285
          %v10542 = vunpack.c.l.b16 %v10286
          %v10543 = vunpack.c.l.b16 %v10287
          %v10544 = vunpack.c.l.b16 %v10288
          %v10545 = vunpack.c.l.b16 %v10289
          %v10546 = vunpack.c.l.b16 %v10290
          %v10547 = vunpack.c.l.b16 %v10291
          %v10548 = vunpack.c.l.b16 %v10292
          %v10549 = vunpack.c.l.b16 %v10293
          %v10550 = vunpack.c.l.b16 %v10294
          %v10551 = vunpack.c.l.b16 %v10295
          %v10552 = vunpack.c.l.b16 %v10296
          %v10553 = vunpack.c.l.b16 %v10297
          %v10554 = vunpack.c.l.b16 %v10298
          %v10555 = vunpack.c.l.b16 %v10299
          %v10556 = vunpack.c.l.b16 %v10300
          %v10557 = vunpack.c.l.b16 %v10301
          %v10558 = vunpack.c.l.b16 %v10302
          %v10559 = vunpack.c.l.b16 %v10303
          %v10560 = vunpack.c.l.b16 %v10304
          %v10561 = vunpack.c.l.b16 %v10305
          %v10562 = vunpack.c.l.b16 %v10306
          %v10563 = vunpack.c.l.b16 %v10307
          %v10564 = vunpack.c.l.b16 %v10308
          %v10565 = vunpack.c.l.b16 %v10309
          %v10566 = vunpack.c.l.b16 %v10310
          %v10567 = vunpack.c.l.b16 %v10311
          %v10568 = vunpack.c.l.b16 %v10312
          %v10569 = vunpack.c.l.b16 %v10313
          %v10570 = vunpack.c.l.b16 %v10314
          %v10571 = vunpack.c.l.b16 %v10315
          %v10572 = vunpack.c.l.b16 %v10316
          %v10573 = vunpack.c.l.b16 %v10317
          %v10574 = vunpack.c.l.b16 %v10318
          %v10575 = vunpack.c.l.b16 %v10319
          %v10576 = vunpack.c.l.b16 %v10320
          %v10577 = vunpack.c.l.b16 %v10321
          %v10578 = vunpack.c.l.b16 %v10322
          %v10579 = vunpack.c.l.b16 %v10323
          %v10580 = vunpack.c.l.b16 %v10324
          %v10581 = vunpack.c.l.b16 %v10325
          %v10582 = vunpack.c.l.b16 %v10326
          %v10583 = vunpack.c.l.b16 %v10327
          %v10584 = vunpack.c.l.b16 %v10328
          %v10585 = vunpack.c.l.b16 %v10329
          %v10586 = vunpack.c.l.b16 %v10330
          %v10587 = vunpack.c.l.b16 %v10331
          %v10588 = vunpack.c.l.b16 %v10332
          %v10589 = vunpack.c.l.b16 %v10333
          %v10590 = vunpack.c.l.b16 %v10334
          %v10591 = vunpack.c.l.b16 %v10335
          %v10592 = vunpack.c.l.b16 %v10336
          %v10593 = vunpack.c.l.b16 %v10337
          %v10594 = vunpack.c.l.b16 %v10338
          %v10595 = vunpack.c.l.b16 %v10339
          %v10596 = vunpack.c.l.b16 %v10340
          %v10597 = vunpack.c.l.b16 %v10341
          %v10598 = vunpack.c.l.b16 %v10342
          %v10599 = vunpack.c.l.b16 %v10343
          %v10600 = vunpack.c.l.b16 %v10344
          %v10601 = vunpack.c.l.b16 %v10345
          %v10602 = vunpack.c.l.b16 %v10346
          %v10603 = vunpack.c.l.b16 %v10347
          %v10604 = vunpack.c.l.b16 %v10348
          %v10605 = vunpack.c.l.b16 %v10349
          %v10606 = vunpack.c.l.b16 %v10350
          %v10607 = vunpack.c.l.b16 %v10351
          %v10608 = vunpack.c.l.b16 %v10352
          %v10609 = vunpack.c.l.b16 %v10353
          %v10610 = vunpack.c.l.b16 %v10354
          %v10611 = vunpack.c.l.b16 %v10355
          %v10612 = vunpack.c.l.b16 %v10356
          %v10613 = vunpack.c.l.b16 %v10357
          %v10614 = vunpack.c.l.b16 %v10358
          %v10615 = vunpack.c.l.b16 %v10359
          %v10616 = vunpack.c.l.b16 %v10360
          %v10617 = vunpack.c.l.b16 %v10361
          %v10618 = vunpack.c.l.b16 %v10362
          %v10619 = vunpack.c.l.b16 %v10363
          %v10620 = vunpack.c.l.b16 %v10364
          %v10621 = vunpack.c.l.b16 %v10365
          %v10622 = vunpack.c.l.b16 %v10366
          %v10623 = vunpack.c.l.b16 %v10367
          %v10624 = vunpack.c.l.b16 %v10368
          %v10625 = vunpack.c.l.b16 %v10369
          %v10626 = vunpack.c.l.b16 %v10370
          %v10627 = vunpack.c.l.b16 %v10371
          %v10628 = vunpack.c.l.b16 %v10372
          %v10629 = vunpack.c.l.b16 %v10373
          %v10630 = vunpack.c.l.b16 %v10374
          %v10631 = vunpack.c.l.b16 %v10375
          %v10632 = vunpack.c.l.b16 %v10376
          %v10633 = vunpack.c.l.b16 %v10377
          %v10634 = vunpack.c.l.b16 %v10378
          %v10635 = vunpack.c.l.b16 %v10379
          %v10636 = vunpack.c.l.b16 %v10380
          %v10637 = vunpack.c.l.b16 %v10381
          %v10638 = vunpack.c.l.b16 %v10382
          %v10639 = vunpack.c.l.b16 %v10383
          %v10640 = vunpack.c.l.b16 %v10384
          %v10641 = vunpack.c.l.b16 %v10385
          %v10642 = vunpack.c.l.b16 %v10386
          %v10643 = vunpack.c.l.b16 %v10387
          %v10644 = vunpack.c.l.b16 %v10388
          %v10645 = vunpack.c.l.b16 %v10389
          %v10646 = vunpack.c.l.b16 %v10390
          %v10647 = vunpack.c.l.b16 %v10391
          %v10648 = vunpack.c.l.b16 %v10392
          %v10649 = vunpack.c.l.b16 %v10393
          %v10650 = vunpack.c.l.b16 %v10394
          %v10651 = vunpack.c.l.b16 %v10395
          %v10652 = vunpack.c.l.b16 %v10396
          %v10653 = vunpack.c.l.b16 %v10397
          %v10654 = vunpack.c.l.b16 %v10398
          %v10655 = vunpack.c.l.b16 %v10399
          %v10656 = vunpack.c.l.b16 %v10400
          %v10657 = vunpack.c.l.b16 %v10401
          %v10658 = vunpack.c.l.b16 %v10402
          %v10659 = vunpack.c.l.b16 %v10403
          %v10660 = vunpack.c.l.b16 %v10404
          %v10661 = vunpack.c.l.b16 %v10405
          %v10662 = vunpack.c.l.b16 %v10406
          %v10663 = vpack.c.b16 %v10536, %v10535
          %v10664 = vpack.c.b16 %v10538, %v10537
          %v10665 = vpack.c.b16 %v10540, %v10539
          %v10666 = vpack.c.b16 %v10542, %v10541
          %v10667 = vpack.c.b16 %v10544, %v10543
          %v10668 = vpack.c.b16 %v10546, %v10545
          %v10669 = vpack.c.b16 %v10548, %v10547
          %v10670 = vpack.c.b16 %v10550, %v10549
          %v10671 = vpack.c.b16 %v10552, %v10551
          %v10672 = vpack.c.b16 %v10554, %v10553
          %v10673 = vpack.c.b16 %v10556, %v10555
          %v10674 = vpack.c.b16 %v10558, %v10557
          %v10675 = vpack.c.b16 %v10560, %v10559
          %v10676 = vpack.c.b16 %v10562, %v10561
          %v10677 = vpack.c.b16 %v10564, %v10563
          %v10678 = vpack.c.b16 %v10566, %v10565
          %v10679 = vpack.c.b16 %v10568, %v10567
          %v10680 = vpack.c.b16 %v10570, %v10569
          %v10681 = vpack.c.b16 %v10572, %v10571
          %v10682 = vpack.c.b16 %v10574, %v10573
          %v10683 = vpack.c.b16 %v10576, %v10575
          %v10684 = vpack.c.b16 %v10578, %v10577
          %v10685 = vpack.c.b16 %v10580, %v10579
          %v10686 = vpack.c.b16 %v10582, %v10581
          %v10687 = vpack.c.b16 %v10584, %v10583
          %v10688 = vpack.c.b16 %v10586, %v10585
          %v10689 = vpack.c.b16 %v10588, %v10587
          %v10690 = vpack.c.b16 %v10590, %v10589
          %v10691 = vpack.c.b16 %v10592, %v10591
          %v10692 = vpack.c.b16 %v10594, %v10593
          %v10693 = vpack.c.b16 %v10596, %v10595
          %v10694 = vpack.c.b16 %v10598, %v10597
          %v10695 = vpack.c.b16 %v10600, %v10599
          %v10696 = vpack.c.b16 %v10602, %v10601
          %v10697 = vpack.c.b16 %v10604, %v10603
          %v10698 = vpack.c.b16 %v10606, %v10605
          %v10699 = vpack.c.b16 %v10608, %v10607
          %v10700 = vpack.c.b16 %v10610, %v10609
          %v10701 = vpack.c.b16 %v10612, %v10611
          %v10702 = vpack.c.b16 %v10614, %v10613
          %v10703 = vpack.c.b16 %v10616, %v10615
          %v10704 = vpack.c.b16 %v10618, %v10617
          %v10705 = vpack.c.b16 %v10620, %v10619
          %v10706 = vpack.c.b16 %v10622, %v10621
          %v10707 = vpack.c.b16 %v10624, %v10623
          %v10708 = vpack.c.b16 %v10626, %v10625
          %v10709 = vpack.c.b16 %v10628, %v10627
          %v10710 = vpack.c.b16 %v10630, %v10629
          %v10711 = vpack.c.b16 %v10632, %v10631
          %v10712 = vpack.c.b16 %v10634, %v10633
          %v10713 = vpack.c.b16 %v10636, %v10635
          %v10714 = vpack.c.b16 %v10638, %v10637
          %v10715 = vpack.c.b16 %v10640, %v10639
          %v10716 = vpack.c.b16 %v10642, %v10641
          %v10717 = vpack.c.b16 %v10644, %v10643
          %v10718 = vpack.c.b16 %v10646, %v10645
          %v10719 = vpack.c.b16 %v10648, %v10647
          %v10720 = vpack.c.b16 %v10650, %v10649
          %v10721 = vpack.c.b16 %v10652, %v10651
          %v10722 = vpack.c.b16 %v10654, %v10653
          %v10723 = vpack.c.b16 %v10656, %v10655
          %v10724 = vpack.c.b16 %v10658, %v10657
          %v10725 = vpack.c.b16 %v10660, %v10659
          %v10726 = vpack.c.b16 %v10662, %v10661
          %10791 = vmatprep.subr.bf16.mxu0 0
          %10792 = vmatpush1.bf16.msra.mxu0 %v10670
          %10793 = vmatprep.subr.bf16.mxu0 0
          %10794 = vmatpush1.bf16.msra.mxu0 %v10669
          %10795 = vmatprep.subr.bf16.mxu0 0
          %10796 = vmatpush1.bf16.msra.mxu0 %v10668
          %10797 = vmatprep.subr.bf16.mxu0 0
          %10798 = vmatpush1.bf16.msra.mxu0 %v10667
          %10799 = vmatprep.subr.bf16.mxu0 0
          %10800 = vmatpush1.bf16.msra.mxu0 %v10666
          %10801 = vmatprep.subr.bf16.mxu0 0
          %10802 = vmatpush1.bf16.msra.mxu0 %v10665
          %10803 = vmatprep.subr.bf16.mxu0 0
          %10804 = vmatpush1.bf16.msra.mxu0 %v10664
          %10805 = vmatprep.subr.bf16.mxu0 0
          %10806 = vmatpush1.bf16.msra.mxu0 %v10663
          %10807 = vmatprep.subr.bf16.mxu0 0
          %10808 = vmatpush2.bf16.msra.mxu0 %v10678
          %10809 = vmatprep.subr.bf16.mxu0 0
          %10810 = vmatpush2.bf16.msra.mxu0 %v10677
          %10811 = vmatprep.subr.bf16.mxu0 0
          %10812 = vmatpush2.bf16.msra.mxu0 %v10676
          %10813 = vmatprep.subr.bf16.mxu0 0
          %10814 = vmatpush2.bf16.msra.mxu0 %v10675
          %10815 = vmatprep.subr.bf16.mxu0 0
          %10816 = vmatpush2.bf16.msra.mxu0 %v10674
          %10817 = vmatprep.subr.bf16.mxu0 0
          %10818 = vmatpush2.bf16.msra.mxu0 %v10673
          %10819 = vmatprep.subr.bf16.mxu0 0
          %10820 = vmatpush2.bf16.msra.mxu0 %v10672
          %10821 = vmatprep.subr.bf16.mxu0 0
          %10822 = vmatpush2.bf16.msra.mxu0 %v10671
          %10823 = vmatprep.mubr.bf16.mxu0 %v10272
          %10824 = vmatmul.mubr.bf16.gmra.mxu0 %v10271
          %v10825 = vpop.f32.mrf.mxu0
          %v10826 = vadd.f32 0.0, %v10825
          %v10827 = vpop.f32.mrf.mxu0
          %v10828 = vpop.f32.mrf.mxu0
          %v10829 = vpop.f32.mrf.mxu0
          %10830 = vdwg.mxu0
          %10831 = vmatprep.subr.bf16.mxu0 0
          %10832 = vmatpush1.bf16.msra.mxu0 %v10686
          %10833 = vmatprep.subr.bf16.mxu0 0
          %10834 = vmatpush1.bf16.msra.mxu0 %v10685
          %10835 = vmatprep.subr.bf16.mxu0 0
          %10836 = vmatpush1.bf16.msra.mxu0 %v10684
          %10837 = vmatprep.subr.bf16.mxu0 0
          %10838 = vmatpush1.bf16.msra.mxu0 %v10683
          %10839 = vmatprep.subr.bf16.mxu0 0
          %10840 = vmatpush1.bf16.msra.mxu0 %v10682
          %10841 = vmatprep.subr.bf16.mxu0 0
          %10842 = vmatpush1.bf16.msra.mxu0 %v10681
          %10843 = vmatprep.subr.bf16.mxu0 0
          %10844 = vmatpush1.bf16.msra.mxu0 %v10680
          %10845 = vmatprep.subr.bf16.mxu0 0
          %10846 = vmatpush1.bf16.msra.mxu0 %v10679
          %10847 = vmatprep.subr.bf16.mxu0 0
          %10848 = vmatpush2.bf16.msra.mxu0 %v10694
          %10849 = vmatprep.subr.bf16.mxu0 0
          %10850 = vmatpush2.bf16.msra.mxu0 %v10693
          %10851 = vmatprep.subr.bf16.mxu0 0
          %10852 = vmatpush2.bf16.msra.mxu0 %v10692
          %10853 = vmatprep.subr.bf16.mxu0 0
          %10854 = vmatpush2.bf16.msra.mxu0 %v10691
          %10855 = vmatprep.subr.bf16.mxu0 0
          %10856 = vmatpush2.bf16.msra.mxu0 %v10690
          %10857 = vmatprep.subr.bf16.mxu0 0
          %10858 = vmatpush2.bf16.msra.mxu0 %v10689
          %10859 = vmatprep.subr.bf16.mxu0 0
          %10860 = vmatpush2.bf16.msra.mxu0 %v10688
          %10861 = vmatprep.subr.bf16.mxu0 0
          %10862 = vmatpush2.bf16.msra.mxu0 %v10687
          %10863 = vmatprep.mubr.bf16.mxu0 %v10274
          %10864 = vmatmul.mubr.bf16.gmra.mxu0 %v10273
          %v10865 = vpop.f32.mrf.mxu0
          %v10866 = vadd.f32 %v10826, %v10865
          %v10867 = vpop.f32.mrf.mxu0
          %v10868 = vpop.f32.mrf.mxu0
          %v10869 = vpop.f32.mrf.mxu0
          %10870 = vdwg.mxu0
          %10871 = vmatprep.subr.bf16.mxu0 0
          %10872 = vmatpush1.bf16.msra.mxu0 %v10702
          %10873 = vmatprep.subr.bf16.mxu0 0
          %10874 = vmatpush1.bf16.msra.mxu0 %v10701
          %10875 = vmatprep.subr.bf16.mxu0 0
          %10876 = vmatpush1.bf16.msra.mxu0 %v10700
          %10877 = vmatprep.subr.bf16.mxu0 0
          %10878 = vmatpush1.bf16.msra.mxu0 %v10699
          %10879 = vmatprep.subr.bf16.mxu0 0
          %10880 = vmatpush1.bf16.msra.mxu0 %v10698
          %10881 = vmatprep.subr.bf16.mxu0 0
          %10882 = vmatpush1.bf16.msra.mxu0 %v10697
          %10883 = vmatprep.subr.bf16.mxu0 0
          %10884 = vmatpush1.bf16.msra.mxu0 %v10696
          %10885 = vmatprep.subr.bf16.mxu0 0
          %10886 = vmatpush1.bf16.msra.mxu0 %v10695
          %10887 = vmatprep.subr.bf16.mxu0 0
          %10888 = vmatpush2.bf16.msra.mxu0 %v10710
          %10889 = vmatprep.subr.bf16.mxu0 0
          %10890 = vmatpush2.bf16.msra.mxu0 %v10709
          %10891 = vmatprep.subr.bf16.mxu0 0
          %10892 = vmatpush2.bf16.msra.mxu0 %v10708
          %10893 = vmatprep.subr.bf16.mxu0 0
          %10894 = vmatpush2.bf16.msra.mxu0 %v10707
          %10895 = vmatprep.subr.bf16.mxu0 0
          %10896 = vmatpush2.bf16.msra.mxu0 %v10706
          %10897 = vmatprep.subr.bf16.mxu0 0
          %10898 = vmatpush2.bf16.msra.mxu0 %v10705
          %10899 = vmatprep.subr.bf16.mxu0 0
          %10900 = vmatpush2.bf16.msra.mxu0 %v10704
          %10901 = vmatprep.subr.bf16.mxu0 0
          %10902 = vmatpush2.bf16.msra.mxu0 %v10703
          %10903 = vmatprep.mubr.bf16.mxu0 %v10276
          %10904 = vmatmul.mubr.bf16.gmra.mxu0 %v10275
          %v10905 = vpop.f32.mrf.mxu0
          %v10906 = vadd.f32 %v10866, %v10905
          %v10907 = vpop.f32.mrf.mxu0
          %v10908 = vpop.f32.mrf.mxu0
          %v10909 = vpop.f32.mrf.mxu0
          %10910 = vdwg.mxu0
          %10911 = vmatprep.subr.bf16.mxu0 0
          %10912 = vmatpush1.bf16.msra.mxu0 %v10718
          %10913 = vmatprep.subr.bf16.mxu0 0
          %10914 = vmatpush1.bf16.msra.mxu0 %v10717
          %10915 = vmatprep.subr.bf16.mxu0 0
          %10916 = vmatpush1.bf16.msra.mxu0 %v10716
          %10917 = vmatprep.subr.bf16.mxu0 0
          %10918 = vmatpush1.bf16.msra.mxu0 %v10715
          %10919 = vmatprep.subr.bf16.mxu0 0
          %10920 = vmatpush1.bf16.msra.mxu0 %v10714
          %10921 = vmatprep.subr.bf16.mxu0 0
          %10922 = vmatpush1.bf16.msra.mxu0 %v10713
          %10923 = vmatprep.subr.bf16.mxu0 0
          %10924 = vmatpush1.bf16.msra.mxu0 %v10712
          %10925 = vmatprep.subr.bf16.mxu0 0
          %10926 = vmatpush1.bf16.msra.mxu0 %v10711
          %10927 = vmatprep.subr.bf16.mxu0 0
          %10928 = vmatpush2.bf16.msra.mxu0 %v10726
          %10929 = vmatprep.subr.bf16.mxu0 0
          %10930 = vmatpush2.bf16.msra.mxu0 %v10725
          %10931 = vmatprep.subr.bf16.mxu0 0
          %10932 = vmatpush2.bf16.msra.mxu0 %v10724
          %10933 = vmatprep.subr.bf16.mxu0 0
          %10934 = vmatpush2.bf16.msra.mxu0 %v10723
          %10935 = vmatprep.subr.bf16.mxu0 0
          %10936 = vmatpush2.bf16.msra.mxu0 %v10722
          %10937 = vmatprep.subr.bf16.mxu0 0
          %10938 = vmatpush2.bf16.msra.mxu0 %v10721
          %10939 = vmatprep.subr.bf16.mxu0 0
          %10940 = vmatpush2.bf16.msra.mxu0 %v10720
          %10941 = vmatprep.subr.bf16.mxu0 0
          %10942 = vmatpush2.bf16.msra.mxu0 %v10719
          %10943 = vmatprep.mubr.bf16.mxu0 %v10278
          %10944 = vmatmul.mubr.bf16.gmra.mxu0 %v10277
          %v10945 = vpop.f32.mrf.mxu0
          %v10946 = vadd.f32 %v10906, %v10945
          %v10947 = vpop.f32.mrf.mxu0
          %v10948 = vpop.f32.mrf.mxu0
          %v10949 = vpop.f32.mrf.mxu0
          %10950 = vdwg.mxu0
          %v10951 = vadd.f32 %v10266, %v10946
          %v10952 = vld [vmem:[#allocation23] sm:$0x1]
          %v10954 = vlaneseq
          %v10955 = vshrl.u32 %v10954, 7
          %v10956 = vsub.s32 0, %v10955
          %v10957 = vrot.slane %v10952, %v10956
          %v10959 = vadd.f32 %v10951, %v10957
          %v10960 = vmax.f32 %v10959, 0.0
          %v10961 = vpack.c.bf16 %v10960, %v10960
          %v10962 = vld [vmem:[#allocation25] sm:$0xf]
          %v10963 = vld [vmem:[#allocation25 + $0x4] sm:$0xf]
          %v10964 = vld [vmem:[#allocation25 + $0x8] sm:$0xf]
          %v10965 = vld [vmem:[#allocation25 + $0xc] sm:$0xf]
          %v10966 = vld [vmem:[#allocation25 + $0x10] sm:$0xf]
          %v10967 = vld [vmem:[#allocation25 + $0x14] sm:$0xf]
          %v10968 = vld [vmem:[#allocation25 + $0x18] sm:$0xf]
          %v10969 = vld [vmem:[#allocation25 + $0x1c] sm:$0xf]
          %v10970 = vld [vmem:[#allocation25 + $0x20] sm:$0xf]
          %v10971 = vld [vmem:[#allocation25 + $0x24] sm:$0xf]
          %v10972 = vld [vmem:[#allocation25 + $0x28] sm:$0xf]
          %v10973 = vld [vmem:[#allocation25 + $0x2c] sm:$0xf]
          %v10974 = vld [vmem:[#allocation25 + $0x30] sm:$0xf]
          %v10975 = vld [vmem:[#allocation25 + $0x34] sm:$0xf]
          %v10976 = vld [vmem:[#allocation25 + $0x38] sm:$0xf]
          %v10977 = vld [vmem:[#allocation25 + $0x3c] sm:$0xf]
          %v10978 = vld [vmem:[#allocation26] sm:$0x1]
          %v10980 = vlaneseq
          %v10981 = vshrl.u32 %v10980, 7
          %v10982 = vsub.s32 0, %v10981
          %v10983 = vrot.slane %v10978, %v10982
          %v11001 = vunpack.c.l.b16 %v10962
          %v11002 = vunpack.c.l.b16 %v10963
          %v11003 = vunpack.c.l.b16 %v10964
          %v11004 = vunpack.c.l.b16 %v10965
          %v11005 = vunpack.c.l.b16 %v10966
          %v11006 = vunpack.c.l.b16 %v10967
          %v11007 = vunpack.c.l.b16 %v10968
          %v11008 = vunpack.c.l.b16 %v10969
          %v11009 = vunpack.c.l.b16 %v10970
          %v11010 = vunpack.c.l.b16 %v10971
          %v11011 = vunpack.c.l.b16 %v10972
          %v11012 = vunpack.c.l.b16 %v10973
          %v11013 = vunpack.c.l.b16 %v10974
          %v11014 = vunpack.c.l.b16 %v10975
          %v11015 = vunpack.c.l.b16 %v10976
          %v11016 = vunpack.c.l.b16 %v10977
          %v11017 = vpack.c.b16 %v11002, %v11001
          %v11018 = vpack.c.b16 %v11004, %v11003
          %v11019 = vpack.c.b16 %v11006, %v11005
          %v11020 = vpack.c.b16 %v11008, %v11007
          %v11021 = vpack.c.b16 %v11010, %v11009
          %v11022 = vpack.c.b16 %v11012, %v11011
          %v11023 = vpack.c.b16 %v11014, %v11013
          %v11024 = vpack.c.b16 %v11016, %v11015
          %11033 = vmatprep.subr.bf16.mxu0 0
          %11034 = vmatpush1.bf16.msra.mxu0 %v11024
          %11035 = vmatprep.subr.bf16.mxu0 0
          %11036 = vmatpush1.bf16.msra.mxu0 %v11023
          %11037 = vmatprep.subr.bf16.mxu0 0
          %11038 = vmatpush1.bf16.msra.mxu0 %v11022
          %11039 = vmatprep.subr.bf16.mxu0 0
          %11040 = vmatpush1.bf16.msra.mxu0 %v11021
          %11041 = vmatprep.subr.bf16.mxu0 0
          %11042 = vmatpush1.bf16.msra.mxu0 %v11020
          %11043 = vmatprep.subr.bf16.mxu0 0
          %11044 = vmatpush1.bf16.msra.mxu0 %v11019
          %11045 = vmatprep.subr.bf16.mxu0 0
          %11046 = vmatpush1.bf16.msra.mxu0 %v11018
          %11047 = vmatprep.subr.bf16.mxu0 0
          %11048 = vmatpush1.bf16.msra.mxu0 %v11017
          %11049 = vmatprep.subr.bf16.mxu0 0
          %11050 = vmatpush2.bf16.msra.mxu0 0
          %11051 = vmatprep.subr.bf16.mxu0 0
          %11052 = vmatpush2.bf16.msra.mxu0 0
          %11053 = vmatprep.subr.bf16.mxu0 0
          %11054 = vmatpush2.bf16.msra.mxu0 0
          %11055 = vmatprep.subr.bf16.mxu0 0
          %11056 = vmatpush2.bf16.msra.mxu0 0
          %11057 = vmatprep.subr.bf16.mxu0 0
          %11058 = vmatpush2.bf16.msra.mxu0 0
          %11059 = vmatprep.subr.bf16.mxu0 0
          %11060 = vmatpush2.bf16.msra.mxu0 0
          %11061 = vmatprep.subr.bf16.mxu0 0
          %11062 = vmatpush2.bf16.msra.mxu0 0
          %11063 = vmatprep.subr.bf16.mxu0 0
          %11064 = vmatpush2.bf16.msra.mxu0 0
          %11065 = vmatprep.mubr.bf16.mxu0 0
          %11066 = vmatmul.mubr.bf16.gmra.mxu0 %v10961
          %v11067 = vpop.f32.mrf.mxu0
          %v11068 = vadd.f32 %v10983, %v11067
          %v11069 = vpop.f32.mrf.mxu0
          %v11070 = vpop.f32.mrf.mxu0
          %v11071 = vpop.f32.mrf.mxu0
          %11072 = vdwg.mxu0
          %v11073 = vmax.f32 %v11068, 0.0
          %11074 = vst [vmem:[%s18] sm:$0x3] %v11073
        $region164: #{nn_model_nlp_forward.1} parent=91 // pred_fallthru
          _
        // Predicated region
        $region165: #{nn_model_nlp_forward.1} parent=91 // pred_check
          %p11075 = pneg %p441
        $region166: #{nn_model_nlp_forward.1} parent=91 // pred_check_branch
          %11077 = sbr.rel (%p11075) target = $region168
        $region167: #{nn_model_nlp_forward.1} parent=91 // pred_region
          _
        $region168: #{nn_model_nlp_forward.1} parent=91 // pred_fallthru
          _
        // Predicated region
        $region169: #{nn_model_nlp_forward.1} parent=91 // pred_check
          %p11078 = pneg %p441
        $region170: #{nn_model_nlp_forward.1} parent=91 // pred_check_branch
          %11080 = sbr.rel (%p11078) target = $region172
        $region171: #{nn_model_nlp_forward.1} parent=91 // pred_region
          _
        $region172: #{nn_model_nlp_forward.1} parent=91 // pred_fallthru
          _
      $region92: #{nn_model_nlp_forward.1} parent=5 // pred_fallthru
        _
      %p11081 = scmp.le.s32.totalorder 2, %s35
      // Predicated region
      $region173: #{nn_model_nlp_forward.1} parent=5 // pred_check
        %p11082 = pneg %p11081
      $region174: #{nn_model_nlp_forward.1} parent=5 // pred_check_branch
        %11084 = sbr.rel (%p11082) target = $region176
      $region175: #{nn_model_nlp_forward.1} parent=5 // pred_region
        %s11085 = ssub.s32 %s35, 2
      $region176: #{nn_model_nlp_forward.1} parent=5 // pred_fallthru
        _
    $region6: #{nn_model_nlp_forward.1} parent=1 // loop_footer
      %s39 = sadd.s32 1, %s35
    $region7: #{nn_model_nlp_forward.1} parent=1 // loop_footer_branch
      %34 = sbr.rel target = $region3
    $region8: #{nn_model_nlp_forward.1} parent=1 // loop_exit
      _
    %11086 = vsyncpa [#allocation4], 1
    %s11087 = scalar_lea.sflag [#allocation4], 1
    %11088 = vsyncpa %s11087, 1
    %11089 = vsyncpa [#allocation6], 1
    %11090 = vsyncpa [#allocation9], 1
    %11091 = vsyncpa [#allocation12], 1
    %11092 = vsyncpa [#allocation15], 1
    %11093 = vsyncpa [#allocation18], 1
    %11094 = vsyncpa [#allocation21], 1
    %11095 = vsyncpa [#allocation24], 1
    %11096 = vsyncpa [#allocation27], 1

</llo_original>
